<compile_context>
chip_gen: v6e
topology: v6e:2x2x1
jax: 0.10.0
libtpu: 0.0.40
codegen_flags: <defaults>
</compile_context>

<pallas_src>
import functools

import jax
import jax.numpy as jnp
from jax.experimental import pallas as pl
from jax.experimental.pallas import tpu as pltpu

EPS = 1e-5                      # nn.BatchNorm2d default eps
LANE = 128                      # keep channel dims lane-dense
_MATMUL_DTYPE = jnp.bfloat16    # MXU operand / stored-intermediate dtype


def _round_up(x, m):
    return (x + m - 1) // m * m


@functools.lru_cache(maxsize=None)
def _vmem_limit_bytes():
    cap = 128 * 1024 * 1024
    try:
        info = pltpu.get_tpu_info()
        cap = int(getattr(info, "vmem_capacity_bytes", cap)) or cap
    except Exception:
        pass
    # ~60% of physical VMEM, capped: ~38 MiB on v7x (64 MiB parts), ~77 MiB on 128 MiB parts.
    return min(cap * 3 // 5, 96 * 1024 * 1024)


def _compiler_params():
    return pltpu.CompilerParams(
        dimension_semantics=("parallel",),
        vmem_limit_bytes=_vmem_limit_bytes(),
    )


# --------------------------------- kernels ------------------------------------


def _stack_stats(s, ss):
    """Pack per-channel (sum, sum_sq) into a sublane-aligned (8, C) block."""
    c = s.shape[-1]
    return jnp.concatenate(
        [s.reshape(1, c), ss.reshape(1, c), jnp.zeros((6, c), jnp.float32)], axis=0)


def _moment_rows(y):
    return _stack_stats(jnp.sum(y, axis=0), jnp.sum(y * y, axis=0))


def _conv1_proj_kernel(x_ref, w1_ref, wp_ref, y1_ref, yp_ref, s1_ref, sp_ref):
    """convBlock1 and projection 1x1 matmuls for one row tile (pre-BN) + stats."""
    x = x_ref[...]
    y1 = jnp.dot(x, w1_ref[...], preferred_element_type=jnp.float32)
    yp = jnp.dot(x, wp_ref[...], preferred_element_type=jnp.float32)
    y1_ref[...] = y1.astype(_MATMUL_DTYPE)
    yp_ref[...] = yp.astype(_MATMUL_DTYPE)
    s1_ref[...] = _moment_rows(y1)           # stats from the f32 accumulator
    sp_ref[...] = _moment_rows(yp)


def _conv3x3_kernel(wp, x_ref, scale_ref, shift_ref, w_ref, y2_ref, s2_ref, pad_ref):
    """BN1+ReLU on the (pre-BN, unpadded) conv1 output, then 3x3 conv as 9
    shifted matmuls over one image, reading taps straight out of a flat,
    width-aligned (wp % 8 == 0), zero-haloed VMEM scratch."""
    _, ho, wo, cm = x_ref.shape
    co = w_ref.shape[-1]

    # Re-zero the scratch every step (cheap; safe under megacore grid splits).
    pad_ref[...] = jnp.zeros_like(pad_ref)

    # BN1 + ReLU in f32 (per-channel scale/shift folded on host from K1 stats).
    act = jnp.maximum(x_ref[0].astype(jnp.float32) * scale_ref[0] + shift_ref[0], 0.0)

    # Scatter activation rows into the flat scratch:
    #   scratch[8 + (r+1)*wp + c] <-> 1-px-zero-padded image position (r+1, c+1)
    # (store starts are multiples of 8 -> aligned sublane stores).
    for r in range(ho):
        pad_ref[pl.ds(8 + (r + 1) * wp, wo), :] = act[r]

    # out[i, j] = sum_{kh,kw} padded[i+kh, j+kw] @ W[kh,kw]
    #           = sum_{kh,kw} scratch[(i*wp + j) + 7 + kh*wp + kw] @ W[kh,kw]
    acc = jnp.zeros((ho * wp, co), jnp.float32)
    for kh in range(3):
        for kw in range(3):
            patch = pad_ref[pl.ds(7 + kh * wp + kw, ho * wp), :]
            acc = acc + jnp.dot(patch.astype(_MATMUL_DTYPE), w_ref[kh * 3 + kw],
                                preferred_element_type=jnp.float32)

    out = acc.reshape(ho, wp, co)[:, :wo, :]          # drop width-padding columns
    y2_ref[0] = out.astype(_MATMUL_DTYPE)
    s2_ref[...] = _stack_stats(jnp.sum(jnp.sum(out, axis=0), axis=0),
                               jnp.sum(jnp.sum(out * out, axis=0), axis=0))


def _bn_relu_matmul_kernel(rows_valid, y_ref, scale_ref, shift_ref, w_ref,
                           o_ref, s_ref):
    """BN2+ReLU on the pre-BN 3x3 output, then the convBlock3 1x1 matmul + stats."""
    tm = y_ref.shape[0]
    h = jnp.maximum(y_ref[...].astype(jnp.float32) * scale_ref[...] + shift_ref[...],
                    0.0)
    # Mask row padding so it does not pollute the conv3 batch statistics.
    row = pl.program_id(0) * tm + jax.lax.broadcasted_iota(jnp.int32, (tm, 1), 0)
    h = jnp.where(row < rows_valid, h, 0.0)
    y = jnp.dot(h.astype(_MATMUL_DTYPE), w_ref[...],
                preferred_element_type=jnp.float32)
    o_ref[...] = y.astype(_MATMUL_DTYPE)
    s_ref[...] = _moment_rows(y)


def _bn_relu_residual_kernel(a_ref, sa_ref, ba_ref, b_ref, sb_ref, bb_ref, o_ref):
    """out = ReLU(BN3(conv3)) + ReLU(BNp(projection)) for one row tile (f32 out)."""
    a = jnp.maximum(a_ref[...].astype(jnp.float32) * sa_ref[...] + ba_ref[...], 0.0)
    b = jnp.maximum(b_ref[...].astype(jnp.float32) * sb_ref[...] + bb_ref[...], 0.0)
    o_ref[...] = a + b


# ----------------------------- pallas_call wrappers ----------------------------


def _call_conv1_proj(x2d, w1, wp, tm):
    m_pad, cin = x2d.shape
    cm = w1.shape[1]
    co = wp.shape[1]
    nt = m_pad // tm
    return pl.pallas_call(
        _conv1_proj_kernel,
        grid=(nt,),
        in_specs=[
            pl.BlockSpec((tm, cin), lambda i: (i, 0)),
            pl.BlockSpec((cin, cm), lambda i: (0, 0)),
            pl.BlockSpec((cin, co), lambda i: (0, 0)),
        ],
        out_specs=(
            pl.BlockSpec((tm, cm), lambda i: (i, 0)),
            pl.BlockSpec((tm, co), lambda i: (i, 0)),
            pl.BlockSpec((8, cm), lambda i: (i, 0)),
            pl.BlockSpec((8, co), lambda i: (i, 0)),
        ),
        out_shape=(
            jax.ShapeDtypeStruct((m_pad, cm), _MATMUL_DTYPE),
            jax.ShapeDtypeStruct((m_pad, co), _MATMUL_DTYPE),
            jax.ShapeDtypeStruct((nt * 8, cm), jnp.float32),
            jax.ShapeDtypeStruct((nt * 8, co), jnp.float32),
        ),
        compiler_params=_compiler_params(),
    )(x2d, w1, wp)


def _call_conv3x3(y1_img, scale1, shift1, w2):
    n, ho, wo, cm = y1_img.shape
    co = w2.shape[-1]
    wp = _round_up(wo + 2, 8)              # sublane-aligned padded width
    npad = (ho + 2) * wp + 16              # flat scratch rows (incl. leading pad)
    return pl.pallas_call(
        functools.partial(_conv3x3_kernel, wp),
        grid=(n,),
        in_specs=[
            pl.BlockSpec((1, ho, wo, cm), lambda i: (i, 0, 0, 0)),
            pl.BlockSpec((1, cm), lambda i: (0, 0)),
            pl.BlockSpec((1, cm), lambda i: (0, 0)),
            pl.BlockSpec((9, cm, co), lambda i: (0, 0, 0)),
        ],
        out_specs=(
            pl.BlockSpec((1, ho, wo, co), lambda i: (i, 0, 0, 0)),
            pl.BlockSpec((8, co), lambda i: (i, 0)),
        ),
        out_shape=(
            jax.ShapeDtypeStruct((n, ho, wo, co), _MATMUL_DTYPE),
            jax.ShapeDtypeStruct((n * 8, co), jnp.float32),
        ),
        scratch_shapes=[pltpu.VMEM((npad, cm), jnp.float32)],
        compiler_params=_compiler_params(),
    )(y1_img, scale1, shift1, w2)


def _call_bn_relu_matmul(y2d, scale, shift, w, tm, rows_valid):
    m_pad, cm = y2d.shape
    co = w.shape[1]
    nt = m_pad // tm
    return pl.pallas_call(
        functools.partial(_bn_relu_matmul_kernel, rows_valid),
        grid=(nt,),
        in_specs=[
            pl.BlockSpec((tm, cm), lambda i: (i, 0)),
            pl.BlockSpec((1, cm), lambda i: (0, 0)),
            pl.BlockSpec((1, cm), lambda i: (0, 0)),
            pl.BlockSpec((cm, co), lambda i: (0, 0)),
        ],
        out_specs=(
            pl.BlockSpec((tm, co), lambda i: (i, 0)),
            pl.BlockSpec((8, co), lambda i: (i, 0)),
        ),
        out_shape=(
            jax.ShapeDtypeStruct((m_pad, co), _MATMUL_DTYPE),
            jax.ShapeDtypeStruct((nt * 8, co), jnp.float32),
        ),
        compiler_params=_compiler_params(),
    )(y2d, scale, shift, w)


def _call_bn_relu_residual(y3, s3, b3, yp, sp, bp, tm):
    m_pad, co = y3.shape
    nt = m_pad // tm
    return pl.pallas_call(
        _bn_relu_residual_kernel,
        grid=(nt,),
        in_specs=[
            pl.BlockSpec((tm, co), lambda i: (i, 0)),
            pl.BlockSpec((1, co), lambda i: (0, 0)),
            pl.BlockSpec((1, co), lambda i: (0, 0)),
            pl.BlockSpec((tm, co), lambda i: (i, 0)),
            pl.BlockSpec((1, co), lambda i: (0, 0)),
            pl.BlockSpec((1, co), lambda i: (0, 0)),
        ],
        out_specs=pl.BlockSpec((tm, co), lambda i: (i, 0)),
        out_shape=jax.ShapeDtypeStruct((m_pad, co), jnp.float32),
        compiler_params=_compiler_params(),
    )(y3, s3, b3, yp, sp, bp)


# ------------------------------ module forward ---------------------------------


def _fold_bn(stats, count, gamma, beta):
    """Reduce per-tile (sum, sum_sq) partials into per-channel BN scale/shift."""
    st = stats.reshape(-1, 8, stats.shape[-1]).sum(axis=0)
    mean = st[0] / count
    var = jnp.maximum(st[1] / count - mean * mean, 0.0)
    scale = gamma * jax.lax.rsqrt(var + EPS)
    shift = beta - mean * scale
    return scale[None, :], shift[None, :]


@functools.partial(jax.jit, static_argnames=("stride", "row_tile"))
def bottleneck_forward(x_nchw, params, stride=1, row_tile=512):
    """BottleNeckLayer.forward with block_number == 0 (projection branch present)."""
    x = jnp.transpose(x_nchw, (0, 2, 3, 1)).astype(jnp.float32)   # NCHW -> NHWC
    n = x.shape[0]

    # 1x1 convs with stride == spatial subsampling before the channel matmul.
    xs = x[:, ::stride, ::stride, :]
    ho, wo = xs.shape[1], xs.shape[2]
    m = n * ho * wo

    cin_l, cm_l = params["w1"].shape
    co_l = params["w3"].shape[1]

    # Lane-dense channel padding and row-tile padding (masked out of BN stats).
    cin_p, cm_p, co_p = (_round_up(c, LANE) for c in (cin_l, cm_l, co_l))
    tm = min(row_tile, _round_up(m, 8))
    m_pad = _round_up(m, tm)

    def pad2(a, r, c):
        return jnp.pad(a, ((0, r - a.shape[0]), (0, c - a.shape[1])))

    def pad1(a, c):
        return jnp.pad(a, (0, c - a.shape[0]))

    xs2d = pad2(xs.reshape(m, cin_l), m_pad, cin_p).astype(_MATMUL_DTYPE)
    w1 = pad2(params["w1"], cin_p, cm_p).astype(_MATMUL_DTYPE)
    wpj = pad2(params["wp"], cin_p, co_p).astype(_MATMUL_DTYPE)
    w2 = jnp.pad(params["w2"],
                 ((0, 0), (0, cm_p - cm_l), (0, cm_p - cm_l))).astype(_MATMUL_DTYPE)
    w3 = pad2(params["w3"], cm_p, co_p).astype(_MATMUL_DTYPE)
    g1, b1 = pad1(params["g1"], cm_p), pad1(params["b1"], cm_p)
    g2, b2 = pad1(params["g2"], cm_p), pad1(params["b2"], cm_p)
    g3, b3 = pad1(params["g3"], co_p), pad1(params["b3"], co_p)
    gp, bp = pad1(params["gp"], co_p), pad1(params["bp"], co_p)

    # K1: convBlock1 + projection 1x1 matmuls (pre-BN, bf16) + partial BN stats.
    y1, yp, s1, sp = _call_conv1_proj(xs2d, w1, wpj, tm)
    scale1, shift1 = _fold_bn(s1, m, g1, b1)
    scale_p, shift_p = _fold_bn(sp, m, gp, bp)

    # K2: BN1+ReLU fused into the 3x3 conv (per-image blocks, in-kernel zero halo).
    y1_img = y1[:m].reshape(n, ho, wo, cm_p)     # free reshape when m_pad == m
    y2_img, s2 = _call_conv3x3(y1_img, scale1, shift1, w2)
    scale2, shift2 = _fold_bn(s2, m, g2, b2)

    # K3: BN2+ReLU fused into the convBlock3 1x1 matmul.
    y2 = jnp.pad(y2_img.reshape(m, cm_p), ((0, m_pad - m), (0, 0)))
    y3, s3 = _call_bn_relu_matmul(y2, scale2, shift2, w3, tm, m)
    scale3, shift3 = _fold_bn(s3, m, g3, b3)

    # K4: BN3+ReLU and BNp+ReLU, residual add:  projection(input) + x.
    out2d = _call_bn_relu_residual(y3, scale3, shift3, yp, scale_p, shift_p, tm)

    out = out2d[:m, :co_l].reshape(n, ho, wo, co_l)
    return jnp.transpose(out, (0, 3, 1, 2))                      # NHWC -> NCHW


# --------------------------- pure-JAX reference (check) ------------------------


def _reference(x_nchw, params, stride):
    x = jnp.transpose(x_nchw, (0, 2, 3, 1))
    xs = x[:, ::stride, ::stride, :]

    def bn_relu(y, gamma, beta):
        mean = jnp.mean(y, axis=(0, 1, 2))
        var = jnp.mean(jnp.square(y - mean), axis=(0, 1, 2))
        return jnp.maximum((y - mean) * jax.lax.rsqrt(var + EPS) * gamma + beta, 0.0)

    h1 = bn_relu(jnp.einsum("nhwc,cd->nhwd", xs, params["w1"]),
                 params["g1"], params["b1"])
    h1p = jnp.pad(h1, ((0, 0), (1, 1), (1, 1), (0, 0)))
    ho, wo = h1.shape[1], h1.shape[2]
    acc = jnp.zeros(h1.shape[:3] + (params["w2"].shape[-1],), jnp.float32)
    for kh in range(3):
        for kw in range(3):
            acc = acc + jnp.einsum("nhwc,cd->nhwd",
                                   h1p[:, kh:kh + ho, kw:kw + wo, :],
                                   params["w2"][kh * 3 + kw])
    h2 = bn_relu(acc, params["g2"], params["b2"])
    h3 = bn_relu(jnp.einsum("nhwc,cd->nhwd", h2, params["w3"]),
                 params["g3"], params["b3"])
    pr = bn_relu(jnp.einsum("nhwc,cd->nhwd", xs, params["wp"]),
                 params["gp"], params["bp"])
    return jnp.transpose(h3 + pr, (0, 3, 1, 2))


# ----------------------------------- main --------------------------------------


if __name__ == "__main__":
    key = jax.random.PRNGKey(0)
    k = jax.random.split(key, 5)

    # Small shapes consistent with the module: block_number=0, stride=1.
    N, C_IN, H, W = 2, 4, 16, 16
    C_MID, C_OUT, STRIDE = 8, 16, 1

    x = jax.random.normal(k[0], (N, C_IN, H, W), jnp.float32)

    # Conv weights (bias=False).  PyTorch layout [Cout, Cin, kH, kW] maps to the
    # channels-last matmul layout used here: 1x1 -> [Cin, Cout],
    # 3x3 -> [9, Cin, Cout] with tap index kh*3 + kw.
    params = {
        "w1": 0.1 * jax.random.normal(k[1], (C_IN, C_MID), jnp.float32),
        "w2": 0.1 * jax.random.normal(k[2], (9, C_MID, C_MID), jnp.float32),
        "w3": 0.1 * jax.random.normal(k[3], (C_MID, C_OUT), jnp.float32),
        "wp": 0.1 * jax.random.normal(k[4], (C_IN, C_OUT), jnp.float32),
        # BatchNorm affine params (PyTorch default init: gamma=1, beta=0).
        "g1": jnp.ones((C_MID,), jnp.float32), "b1": jnp.zeros((C_MID,), jnp.float32),
        "g2": jnp.ones((C_MID,), jnp.float32), "b2": jnp.zeros((C_MID,), jnp.float32),
        "g3": jnp.ones((C_OUT,), jnp.float32), "b3": jnp.zeros((C_OUT,), jnp.float32),
        "gp": jnp.ones((C_OUT,), jnp.float32), "bp": jnp.zeros((C_OUT,), jnp.float32),
    }

    out = bottleneck_forward(x, params, stride=STRIDE, row_tile=256)
    jax.block_until_ready(out)
    assert out.shape == (N, C_OUT, H // STRIDE, W // STRIDE), out.shape

    # Cross-check against an f32 pure-JAX reference of the same module
    # (train-mode BN).  Kernel runs the MXU / intermediates in bf16, so the
    # tolerance is bf16-level; a real bug would produce O(0.5+) errors.
    ref = _reference(x, params, STRIDE)
    max_err = float(jnp.max(jnp.abs(out - ref)))
    assert max_err < 1e-1, max_err

    print("KERNEL_OK")
</pallas_src>

<mosaic_0001>
module attributes {stable_mosaic.version = 11 : i64} {
  func.func @_conv1_proj_kernel(%arg0: i32, %arg1: memref<256x128xbf16, #tpu.memory_space<vmem>>, %arg2: memref<128x128xbf16, #tpu.memory_space<vmem>>, %arg3: memref<128x128xbf16, #tpu.memory_space<vmem>>, %arg4: memref<256x128xbf16, #tpu.memory_space<vmem>>, %arg5: memref<256x128xbf16, #tpu.memory_space<vmem>>, %arg6: memref<8x128xf32, #tpu.memory_space<vmem>>, %arg7: memref<8x128xf32, #tpu.memory_space<vmem>>) attributes {dimension_semantics = [#tpu.dimension_semantics<parallel>], iteration_bounds = array<i64: 2>, scalar_prefetch = 0 : i64, scratch_operands = 0 : i64, tpu.core_type = #tpu.core_type<tc>, window_params = [{transform_indices = @transform_0, window_bounds = array<i64: 256, 128>}, {pipeline_mode = #tpu.pipeline_mode<synchronous>, transform_indices = @transform_1, window_bounds = array<i64: 128, 128>}, {pipeline_mode = #tpu.pipeline_mode<synchronous>, transform_indices = @transform_2, window_bounds = array<i64: 128, 128>}, {transform_indices = @transform_3, window_bounds = array<i64: 256, 128>}, {transform_indices = @transform_4, window_bounds = array<i64: 256, 128>}, {transform_indices = @transform_5, window_bounds = array<i64: 8, 128>}, {transform_indices = @transform_6, window_bounds = array<i64: 8, 128>}]} {
    %c0 = arith.constant 0 : index
    %c0_0 = arith.constant 0 : index
    %0 = vector.load %arg1[%c0, %c0_0] : memref<256x128xbf16, #tpu.memory_space<vmem>>, vector<256x128xbf16>
    %c0_1 = arith.constant 0 : index
    %c0_2 = arith.constant 0 : index
    %1 = vector.load %arg2[%c0_1, %c0_2] : memref<128x128xbf16, #tpu.memory_space<vmem>>, vector<128x128xbf16>
    %cst = arith.constant dense<0.000000e+00> : vector<256x128xf32>
    %2 = tpu.matmul %0, %1, %cst {dimension_numbers = #tpu.dot_dimension_numbers<[1], [0], [0], [1], [0, 0, 1, 1], [], []>} : vector<256x128xbf16>, vector<128x128xbf16>, vector<256x128xf32> -> vector<256x128xf32>
    %c0_3 = arith.constant 0 : index
    %c0_4 = arith.constant 0 : index
    %3 = vector.load %arg3[%c0_3, %c0_4] : memref<128x128xbf16, #tpu.memory_space<vmem>>, vector<128x128xbf16>
    %cst_5 = arith.constant dense<0.000000e+00> : vector<256x128xf32>
    %4 = tpu.matmul %0, %3, %cst_5 {dimension_numbers = #tpu.dot_dimension_numbers<[1], [0], [0], [1], [0, 0, 1, 1], [], []>} : vector<256x128xbf16>, vector<128x128xbf16>, vector<256x128xf32> -> vector<256x128xf32>
    %5 = arith.truncf %2 : vector<256x128xf32> to vector<256x128xbf16>
    %c0_6 = arith.constant 0 : index
    %c0_7 = arith.constant 0 : index
    %6 = vector.load %arg4[%c0_6, %c0_7] : memref<256x128xbf16, #tpu.memory_space<vmem>>, vector<256x128xbf16>
    tpu.vector_store %arg4[%c0_6, %c0_7], %5 {strides = array<i32>} : memref<256x128xbf16, #tpu.memory_space<vmem>>, vector<256x128xbf16>,
    %7 = arith.truncf %4 : vector<256x128xf32> to vector<256x128xbf16>
    %c0_8 = arith.constant 0 : index
    %c0_9 = arith.constant 0 : index
    %8 = vector.load %arg5[%c0_8, %c0_9] : memref<256x128xbf16, #tpu.memory_space<vmem>>, vector<256x128xbf16>
    tpu.vector_store %arg5[%c0_8, %c0_9], %7 {strides = array<i32>} : memref<256x128xbf16, #tpu.memory_space<vmem>>, vector<256x128xbf16>,
    %cst_10 = arith.constant dense<0.000000e+00> : vector<128xf32>
    %9 = vector.multi_reduction <add>, %2, %cst_10 [0] : vector<256x128xf32> to vector<128xf32>
    %10 = arith.mulf %2, %2 : vector<256x128xf32>
    %cst_11 = arith.constant dense<0.000000e+00> : vector<128xf32>
    %11 = vector.multi_reduction <add>, %10, %cst_11 [0] : vector<256x128xf32> to vector<128xf32>
    %12 = vector.shape_cast %9 : vector<128xf32> to vector<1x128xf32>
    %13 = vector.shape_cast %11 : vector<128xf32> to vector<1x128xf32>
    %cst_12 = arith.constant 0.000000e+00 : f32
    %14 = vector.broadcast %cst_12 : f32 to vector<6x128xf32>
    %15 = tpu.concatenate %12, %13, %14 in 0 : vector<1x128xf32>, vector<1x128xf32>, vector<6x128xf32> -> vector<8x128xf32>
    %c0_13 = arith.constant 0 : index
    %c0_14 = arith.constant 0 : index
    %16 = vector.load %arg6[%c0_13, %c0_14] : memref<8x128xf32, #tpu.memory_space<vmem>>, vector<8x128xf32>
    tpu.vector_store %arg6[%c0_13, %c0_14], %15 {strides = array<i32>} : memref<8x128xf32, #tpu.memory_space<vmem>>, vector<8x128xf32>,
    %cst_15 = arith.constant dense<0.000000e+00> : vector<128xf32>
    %17 = vector.multi_reduction <add>, %4, %cst_15 [0] : vector<256x128xf32> to vector<128xf32>
    %18 = arith.mulf %4, %4 : vector<256x128xf32>
    %cst_16 = arith.constant dense<0.000000e+00> : vector<128xf32>
    %19 = vector.multi_reduction <add>, %18, %cst_16 [0] : vector<256x128xf32> to vector<128xf32>
    %20 = vector.shape_cast %17 : vector<128xf32> to vector<1x128xf32>
    %21 = vector.shape_cast %19 : vector<128xf32> to vector<1x128xf32>
    %cst_17 = arith.constant 0.000000e+00 : f32
    %22 = vector.broadcast %cst_17 : f32 to vector<6x128xf32>
    %23 = tpu.concatenate %20, %21, %22 in 0 : vector<1x128xf32>, vector<1x128xf32>, vector<6x128xf32> -> vector<8x128xf32>
    %c0_18 = arith.constant 0 : index
    %c0_19 = arith.constant 0 : index
    %24 = vector.load %arg7[%c0_18, %c0_19] : memref<8x128xf32, #tpu.memory_space<vmem>>, vector<8x128xf32>
    tpu.vector_store %arg7[%c0_18, %c0_19], %23 {strides = array<i32>} : memref<8x128xf32, #tpu.memory_space<vmem>>, vector<8x128xf32>,
    return
  }
  func.func @transform_0(%arg0: i32) -> (i32, i32) {
    %c0_i32 = arith.constant 0 : i32
    %c0_i32_0 = arith.constant 0 : i32
    return %arg0, %c0_i32 : i32, i32
  }
  func.func @transform_1(%arg0: i32) -> (i32, i32) {
    %c0_i32 = arith.constant 0 : i32
    %c0_i32_0 = arith.constant 0 : i32
    %c0_i32_1 = arith.constant 0 : i32
    return %c0_i32, %c0_i32_0 : i32, i32
  }
  func.func @transform_2(%arg0: i32) -> (i32, i32) {
    %c0_i32 = arith.constant 0 : i32
    %c0_i32_0 = arith.constant 0 : i32
    %c0_i32_1 = arith.constant 0 : i32
    return %c0_i32, %c0_i32_0 : i32, i32
  }
  func.func @transform_3(%arg0: i32) -> (i32, i32) {
    %c0_i32 = arith.constant 0 : i32
    %c0_i32_0 = arith.constant 0 : i32
    return %arg0, %c0_i32 : i32, i32
  }
  func.func @transform_4(%arg0: i32) -> (i32, i32) {
    %c0_i32 = arith.constant 0 : i32
    %c0_i32_0 = arith.constant 0 : i32
    return %arg0, %c0_i32 : i32, i32
  }
  func.func @transform_5(%arg0: i32) -> (i32, i32) {
    %c0_i32 = arith.constant 0 : i32
    %c0_i32_0 = arith.constant 0 : i32
    return %arg0, %c0_i32 : i32, i32
  }
  func.func @transform_6(%arg0: i32) -> (i32, i32) {
    %c0_i32 = arith.constant 0 : i32
    %c0_i32_0 = arith.constant 0 : i32
    return %arg0, %c0_i32 : i32, i32
  }
}

module attributes {stable_mosaic.version = 11 : i64} {
  func.func @_conv3x3_kernel(%arg0: i32, %arg1: memref<1x16x16x128xbf16, #tpu.memory_space<vmem>>, %arg2: memref<1x128xf32, #tpu.memory_space<vmem>>, %arg3: memref<1x128xf32, #tpu.memory_space<vmem>>, %arg4: memref<9x128x128xbf16, #tpu.memory_space<vmem>>, %arg5: memref<1x16x16x128xbf16, #tpu.memory_space<vmem>>, %arg6: memref<8x128xf32, #tpu.memory_space<vmem>>, %arg7: memref<448x128xf32, #tpu.memory_space<vmem>>) attributes {dimension_semantics = [#tpu.dimension_semantics<parallel>], iteration_bounds = array<i64: 2>, scalar_prefetch = 0 : i64, scratch_operands = 1 : i64, tpu.core_type = #tpu.core_type<tc>, window_params = [{transform_indices = @transform_0, window_bounds = array<i64: 1, 16, 16, 128>}, {pipeline_mode = #tpu.pipeline_mode<synchronous>, transform_indices = @transform_1, window_bounds = array<i64: 1, 128>}, {pipeline_mode = #tpu.pipeline_mode<synchronous>, transform_indices = @transform_2, window_bounds = array<i64: 1, 128>}, {pipeline_mode = #tpu.pipeline_mode<synchronous>, transform_indices = @transform_3, window_bounds = array<i64: 9, 128, 128>}, {transform_indices = @transform_4, window_bounds = array<i64: 1, 16, 16, 128>}, {transform_indices = @transform_5, window_bounds = array<i64: 8, 128>}]} {
    %cst = arith.constant 0.000000e+00 : f32
    %0 = vector.broadcast %cst : f32 to vector<448x128xf32>
    %c0 = arith.constant 0 : index
    %c0_0 = arith.constant 0 : index
    %1 = vector.load %arg7[%c0, %c0_0] : memref<448x128xf32, #tpu.memory_space<vmem>>, vector<448x128xf32>
    tpu.vector_store %arg7[%c0, %c0_0], %0 {strides = array<i32>} : memref<448x128xf32, #tpu.memory_space<vmem>>, vector<448x128xf32>,
    %c0_1 = arith.constant 0 : index
    %c0_2 = arith.constant 0 : index
    %c0_3 = arith.constant 0 : index
    %c0_4 = arith.constant 0 : index
    %2 = vector.load %arg1[%c0_1, %c0_2, %c0_3, %c0_4] : memref<1x16x16x128xbf16, #tpu.memory_space<vmem>>, vector<1x16x16x128xbf16>
    %3 = vector.shape_cast %2 : vector<1x16x16x128xbf16> to vector<16x16x128xbf16>
    %4 = arith.extf %3 : vector<16x16x128xbf16> to vector<16x16x128xf32>
    %c0_5 = arith.constant 0 : index
    %c0_6 = arith.constant 0 : index
    %5 = vector.load %arg2[%c0_5, %c0_6] : memref<1x128xf32, #tpu.memory_space<vmem>>, vector<1x128xf32>
    %6 = vector.shape_cast %5 : vector<1x128xf32> to vector<128xf32>
    %7 = vector.shape_cast %6 : vector<128xf32> to vector<1x1x128xf32>
    %8 = vector.broadcast %7 : vector<1x1x128xf32> to vector<16x16x128xf32>
    %9 = arith.mulf %4, %8 : vector<16x16x128xf32>
    %c0_7 = arith.constant 0 : index
    %c0_8 = arith.constant 0 : index
    %10 = vector.load %arg3[%c0_7, %c0_8] : memref<1x128xf32, #tpu.memory_space<vmem>>, vector<1x128xf32>
    %11 = vector.shape_cast %10 : vector<1x128xf32> to vector<128xf32>
    %12 = vector.shape_cast %11 : vector<128xf32> to vector<1x1x128xf32>
    %13 = vector.broadcast %12 : vector<1x1x128xf32> to vector<16x16x128xf32>
    %14 = arith.addf %9, %13 : vector<16x16x128xf32>
    %cst_9 = arith.constant 0.000000e+00 : f32
    %15 = vector.broadcast %cst_9 : f32 to vector<16x16x128xf32>
    %16 = arith.maximumf %14, %15 : vector<16x16x128xf32>
    %17 = vector.extract_strided_slice %16 {offsets = [0, 0, 0], sizes = [1, 16, 128], strides = [1, 1, 1]} : vector<16x16x128xf32> to vector<1x16x128xf32>
    %18 = vector.shape_cast %17 : vector<1x16x128xf32> to vector<16x128xf32>
    %c32 = arith.constant 32 : index
    %c0_10 = arith.constant 0 : index
    %19 = vector.load %arg7[%c32, %c0_10] : memref<448x128xf32, #tpu.memory_space<vmem>>, vector<16x128xf32>
    tpu.vector_store %arg7[%c32, %c0_10], %18 {strides = array<i32>} : memref<448x128xf32, #tpu.memory_space<vmem>>, vector<16x128xf32>,
    %20 = vector.extract_strided_slice %16 {offsets = [1, 0, 0], sizes = [1, 16, 128], strides = [1, 1, 1]} : vector<16x16x128xf32> to vector<1x16x128xf32>
    %21 = vector.shape_cast %20 : vector<1x16x128xf32> to vector<16x128xf32>
    %c56 = arith.constant 56 : index
    %c0_11 = arith.constant 0 : index
    %22 = vector.load %arg7[%c56, %c0_11] : memref<448x128xf32, #tpu.memory_space<vmem>>, vector<16x128xf32>
    tpu.vector_store %arg7[%c56, %c0_11], %21 {strides = array<i32>} : memref<448x128xf32, #tpu.memory_space<vmem>>, vector<16x128xf32>,
    %23 = vector.extract_strided_slice %16 {offsets = [2, 0, 0], sizes = [1, 16, 128], strides = [1, 1, 1]} : vector<16x16x128xf32> to vector<1x16x128xf32>
    %24 = vector.shape_cast %23 : vector<1x16x128xf32> to vector<16x128xf32>
    %c80 = arith.constant 80 : index
    %c0_12 = arith.constant 0 : index
    %25 = vector.load %arg7[%c80, %c0_12] : memref<448x128xf32, #tpu.memory_space<vmem>>, vector<16x128xf32>
    tpu.vector_store %arg7[%c80, %c0_12], %24 {strides = array<i32>} : memref<448x128xf32, #tpu.memory_space<vmem>>, vector<16x128xf32>,
    %26 = vector.extract_strided_slice %16 {offsets = [3, 0, 0], sizes = [1, 16, 128], strides = [1, 1, 1]} : vector<16x16x128xf32> to vector<1x16x128xf32>
    %27 = vector.shape_cast %26 : vector<1x16x128xf32> to vector<16x128xf32>
    %c104 = arith.constant 104 : index
    %c0_13 = arith.constant 0 : index
    %28 = vector.load %arg7[%c104, %c0_13] : memref<448x128xf32, #tpu.memory_space<vmem>>, vector<16x128xf32>
    tpu.vector_store %arg7[%c104, %c0_13], %27 {strides = array<i32>} : memref<448x128xf32, #tpu.memory_space<vmem>>, vector<16x128xf32>,
    %29 = vector.extract_strided_slice %16 {offsets = [4, 0, 0], sizes = [1, 16, 128], strides = [1, 1, 1]} : vector<16x16x128xf32> to vector<1x16x128xf32>
    %30 = vector.shape_cast %29 : vector<1x16x128xf32> to vector<16x128xf32>
    %c128 = arith.constant 128 : index
    %c0_14 = arith.constant 0 : index
    %31 = vector.load %arg7[%c128, %c0_14] : memref<448x128xf32, #tpu.memory_space<vmem>>, vector<16x128xf32>
    tpu.vector_store %arg7[%c128, %c0_14], %30 {strides = array<i32>} : memref<448x128xf32, #tpu.memory_space<vmem>>, vector<16x128xf32>,
    %32 = vector.extract_strided_slice %16 {offsets = [5, 0, 0], sizes = [1, 16, 128], strides = [1, 1, 1]} : vector<16x16x128xf32> to vector<1x16x128xf32>
    %33 = vector.shape_cast %32 : vector<1x16x128xf32> to vector<16x128xf32>
    %c152 = arith.constant 152 : index
    %c0_15 = arith.constant 0 : index
    %34 = vector.load %arg7[%c152, %c0_15] : memref<448x128xf32, #tpu.memory_space<vmem>>, vector<16x128xf32>
    tpu.vector_store %arg7[%c152, %c0_15], %33 {strides = array<i32>} : memref<448x128xf32, #tpu.memory_space<vmem>>, vector<16x128xf32>,
    %35 = vector.extract_strided_slice %16 {offsets = [6, 0, 0], sizes = [1, 16, 128], strides = [1, 1, 1]} : vector<16x16x128xf32> to vector<1x16x128xf32>
    %36 = vector.shape_cast %35 : vector<1x16x128xf32> to vector<16x128xf32>
    %c176 = arith.constant 176 : index
    %c0_16 = arith.constant 0 : index
    %37 = vector.load %arg7[%c176, %c0_16] : memref<448x128xf32, #tpu.memory_space<vmem>>, vector<16x128xf32>
    tpu.vector_store %arg7[%c176, %c0_16], %36 {strides = array<i32>} : memref<448x128xf32, #tpu.memory_space<vmem>>, vector<16x128xf32>,
    %38 = vector.extract_strided_slice %16 {offsets = [7, 0, 0], sizes = [1, 16, 128], strides = [1, 1, 1]} : vector<16x16x128xf32> to vector<1x16x128xf32>
    %39 = vector.shape_cast %38 : vector<1x16x128xf32> to vector<16x128xf32>
    %c200 = arith.constant 200 : index
    %c0_17 = arith.constant 0 : index
    %40 = vector.load %arg7[%c200, %c0_17] : memref<448x128xf32, #tpu.memory_space<vmem>>, vector<16x128xf32>
    tpu.vector_store %arg7[%c200, %c0_17], %39 {strides = array<i32>} : memref<448x128xf32, #tpu.memory_space<vmem>>, vector<16x128xf32>,
    %41 = vector.extract_strided_slice %16 {offsets = [8, 0, 0], sizes = [1, 16, 128], strides = [1, 1, 1]} : vector<16x16x128xf32> to vector<1x16x128xf32>
    %42 = vector.shape_cast %41 : vector<1x16x128xf32> to vector<16x128xf32>
    %c224 = arith.constant 224 : index
    %c0_18 = arith.constant 0 : index
    %43 = vector.load %arg7[%c224, %c0_18] : memref<448x128xf32, #tpu.memory_space<vmem>>, vector<16x128xf32>
    tpu.vector_store %arg7[%c224, %c0_18], %42 {strides = array<i32>} : memref<448x128xf32, #tpu.memory_space<vmem>>, vector<16x128xf32>,
    %44 = vector.extract_strided_slice %16 {offsets = [9, 0, 0], sizes = [1, 16, 128], strides = [1, 1, 1]} : vector<16x16x128xf32> to vector<1x16x128xf32>
    %45 = vector.shape_cast %44 : vector<1x16x128xf32> to vector<16x128xf32>
    %c248 = arith.constant 248 : index
    %c0_19 = arith.constant 0 : index
    %46 = vector.load %arg7[%c248, %c0_19] : memref<448x128xf32, #tpu.memory_space<vmem>>, vector<16x128xf32>
    tpu.vector_store %arg7[%c248, %c0_19], %45 {strides = array<i32>} : memref<448x128xf32, #tpu.memory_space<vmem>>, vector<16x128xf32>,
    %47 = vector.extract_strided_slice %16 {offsets = [10, 0, 0], sizes = [1, 16, 128], strides = [1, 1, 1]} : vector<16x16x128xf32> to vector<1x16x128xf32>
    %48 = vector.shape_cast %47 : vector<1x16x128xf32> to vector<16x128xf32>
    %c272 = arith.constant 272 : index
    %c0_20 = arith.constant 0 : index
    %49 = vector.load %arg7[%c272, %c0_20] : memref<448x128xf32, #tpu.memory_space<vmem>>, vector<16x128xf32>
    tpu.vector_store %arg7[%c272, %c0_20], %48 {strides = array<i32>} : memref<448x128xf32, #tpu.memory_space<vmem>>, vector<16x128xf32>,
    %50 = vector.extract_strided_slice %16 {offsets = [11, 0, 0], sizes = [1, 16, 128], strides = [1, 1, 1]} : vector<16x16x128xf32> to vector<1x16x128xf32>
    %51 = vector.shape_cast %50 : vector<1x16x128xf32> to vector<16x128xf32>
    %c296 = arith.constant 296 : index
    %c0_21 = arith.constant 0 : index
    %52 = vector.load %arg7[%c296, %c0_21] : memref<448x128xf32, #tpu.memory_space<vmem>>, vector<16x128xf32>
    tpu.vector_store %arg7[%c296, %c0_21], %51 {strides = array<i32>} : memref<448x128xf32, #tpu.memory_space<vmem>>, vector<16x128xf32>,
    %53 = vector.extract_strided_slice %16 {offsets = [12, 0, 0], sizes = [1, 16, 128], strides = [1, 1, 1]} : vector<16x16x128xf32> to vector<1x16x128xf32>
    %54 = vector.shape_cast %53 : vector<1x16x128xf32> to vector<16x128xf32>
    %c320 = arith.constant 320 : index
    %c0_22 = arith.constant 0 : index
    %55 = vector.load %arg7[%c320, %c0_22] : memref<448x128xf32, #tpu.memory_space<vmem>>, vector<16x128xf32>
    tpu.vector_store %arg7[%c320, %c0_22], %54 {strides = array<i32>} : memref<448x128xf32, #tpu.memory_space<vmem>>, vector<16x128xf32>,
    %56 = vector.extract_strided_slice %16 {offsets = [13, 0, 0], sizes = [1, 16, 128], strides = [1, 1, 1]} : vector<16x16x128xf32> to vector<1x16x128xf32>
    %57 = vector.shape_cast %56 : vector<1x16x128xf32> to vector<16x128xf32>
    %c344 = arith.constant 344 : index
    %c0_23 = arith.constant 0 : index
    %58 = vector.load %arg7[%c344, %c0_23] : memref<448x128xf32, #tpu.memory_space<vmem>>, vector<16x128xf32>
    tpu.vector_store %arg7[%c344, %c0_23], %57 {strides = array<i32>} : memref<448x128xf32, #tpu.memory_space<vmem>>, vector<16x128xf32>,
    %59 = vector.extract_strided_slice %16 {offsets = [14, 0, 0], sizes = [1, 16, 128], strides = [1, 1, 1]} : vector<16x16x128xf32> to vector<1x16x128xf32>
    %60 = vector.shape_cast %59 : vector<1x16x128xf32> to vector<16x128xf32>
    %c368 = arith.constant 368 : index
    %c0_24 = arith.constant 0 : index
    %61 = vector.load %arg7[%c368, %c0_24] : memref<448x128xf32, #tpu.memory_space<vmem>>, vector<16x128xf32>
    tpu.vector_store %arg7[%c368, %c0_24], %60 {strides = array<i32>} : memref<448x128xf32, #tpu.memory_space<vmem>>, vector<16x128xf32>,
    %62 = vector.extract_strided_slice %16 {offsets = [15, 0, 0], sizes = [1, 16, 128], strides = [1, 1, 1]} : vector<16x16x128xf32> to vector<1x16x128xf32>
    %63 = vector.shape_cast %62 : vector<1x16x128xf32> to vector<16x128xf32>
    %c392 = arith.constant 392 : index
    %c0_25 = arith.constant 0 : index
    %64 = vector.load %arg7[%c392, %c0_25] : memref<448x128xf32, #tpu.memory_space<vmem>>, vector<16x128xf32>
    tpu.vector_store %arg7[%c392, %c0_25], %63 {strides = array<i32>} : memref<448x128xf32, #tpu.memory_space<vmem>>, vector<16x128xf32>,
    %cst_26 = arith.constant 0.000000e+00 : f32
    %65 = vector.broadcast %cst_26 : f32 to vector<384x128xf32>
    %c7 = arith.constant 7 : index
    %c0_27 = arith.constant 0 : index
    %66 = vector.load %arg7[%c7, %c0_27] : memref<448x128xf32, #tpu.memory_space<vmem>>, vector<384x128xf32>
    %67 = arith.truncf %66 : vector<384x128xf32> to vector<384x128xbf16>
    %c0_28 = arith.constant 0 : index
    %c0_29 = arith.constant 0 : index
    %c0_30 = arith.constant 0 : index
    %68 = vector.load %arg4[%c0_28, %c0_29, %c0_30] : memref<9x128x128xbf16, #tpu.memory_space<vmem>>, vector<1x128x128xbf16>
    %69 = vector.shape_cast %68 : vector<1x128x128xbf16> to vector<128x128xbf16>
    %cst_31 = arith.constant dense<0.000000e+00> : vector<384x128xf32>
    %70 = tpu.matmul %67, %69, %cst_31 {dimension_numbers = #tpu.dot_dimension_numbers<[1], [0], [0], [1], [0, 0, 1, 1], [], []>} : vector<384x128xbf16>, vector<128x128xbf16>, vector<384x128xf32> -> vector<384x128xf32>
    %71 = arith.addf %65, %70 : vector<384x128xf32>
    %c8 = arith.constant 8 : index
    %c0_32 = arith.constant 0 : index
    %72 = vector.load %arg7[%c8, %c0_32] : memref<448x128xf32, #tpu.memory_space<vmem>>, vector<384x128xf32>
    %73 = arith.truncf %72 : vector<384x128xf32> to vector<384x128xbf16>
    %c1 = arith.constant 1 : index
    %c0_33 = arith.constant 0 : index
    %c0_34 = arith.constant 0 : index
    %74 = vector.load %arg4[%c1, %c0_33, %c0_34] : memref<9x128x128xbf16, #tpu.memory_space<vmem>>, vector<1x128x128xbf16>
    %75 = vector.shape_cast %74 : vector<1x128x128xbf16> to vector<128x128xbf16>
    %cst_35 = arith.constant dense<0.000000e+00> : vector<384x128xf32>
    %76 = tpu.matmul %73, %75, %cst_35 {dimension_numbers = #tpu.dot_dimension_numbers<[1], [0], [0], [1], [0, 0, 1, 1], [], []>} : vector<384x128xbf16>, vector<128x128xbf16>, vector<384x128xf32> -> vector<384x128xf32>
    %77 = arith.addf %71, %76 : vector<384x128xf32>
    %c9 = arith.constant 9 : index
    %c0_36 = arith.constant 0 : index
    %78 = vector.load %arg7[%c9, %c0_36] : memref<448x128xf32, #tpu.memory_space<vmem>>, vector<384x128xf32>
    %79 = arith.truncf %78 : vector<384x128xf32> to vector<384x128xbf16>
    %c2 = arith.constant 2 : index
    %c0_37 = arith.constant 0 : index
    %c0_38 = arith.constant 0 : index
    %80 = vector.load %arg4[%c2, %c0_37, %c0_38] : memref<9x128x128xbf16, #tpu.memory_space<vmem>>, vector<1x128x128xbf16>
    %81 = vector.shape_cast %80 : vector<1x128x128xbf16> to vector<128x128xbf16>
    %cst_39 = arith.constant dense<0.000000e+00> : vector<384x128xf32>
    %82 = tpu.matmul %79, %81, %cst_39 {dimension_numbers = #tpu.dot_dimension_numbers<[1], [0], [0], [1], [0, 0, 1, 1], [], []>} : vector<384x128xbf16>, vector<128x128xbf16>, vector<384x128xf32> -> vector<384x128xf32>
    %83 = arith.addf %77, %82 : vector<384x128xf32>
    %c31 = arith.constant 31 : index
    %c0_40 = arith.constant 0 : index
    %84 = vector.load %arg7[%c31, %c0_40] : memref<448x128xf32, #tpu.memory_space<vmem>>, vector<384x128xf32>
    %85 = arith.truncf %84 : vector<384x128xf32> to vector<384x128xbf16>
    %c3 = arith.constant 3 : index
    %c0_41 = arith.constant 0 : index
    %c0_42 = arith.constant 0 : index
    %86 = vector.load %arg4[%c3, %c0_41, %c0_42] : memref<9x128x128xbf16, #tpu.memory_space<vmem>>, vector<1x128x128xbf16>
    %87 = vector.shape_cast %86 : vector<1x128x128xbf16> to vector<128x128xbf16>
    %cst_43 = arith.constant dense<0.000000e+00> : vector<384x128xf32>
    %88 = tpu.matmul %85, %87, %cst_43 {dimension_numbers = #tpu.dot_dimension_numbers<[1], [0], [0], [1], [0, 0, 1, 1], [], []>} : vector<384x128xbf16>, vector<128x128xbf16>, vector<384x128xf32> -> vector<384x128xf32>
    %89 = arith.addf %83, %88 : vector<384x128xf32>
    %c32_44 = arith.constant 32 : index
    %c0_45 = arith.constant 0 : index
    %90 = vector.load %arg7[%c32_44, %c0_45] : memref<448x128xf32, #tpu.memory_space<vmem>>, vector<384x128xf32>
    %91 = arith.truncf %90 : vector<384x128xf32> to vector<384x128xbf16>
    %c4 = arith.constant 4 : index
    %c0_46 = arith.constant 0 : index
    %c0_47 = arith.constant 0 : index
    %92 = vector.load %arg4[%c4, %c0_46, %c0_47] : memref<9x128x128xbf16, #tpu.memory_space<vmem>>, vector<1x128x128xbf16>
    %93 = vector.shape_cast %92 : vector<1x128x128xbf16> to vector<128x128xbf16>
    %cst_48 = arith.constant dense<0.000000e+00> : vector<384x128xf32>
    %94 = tpu.matmul %91, %93, %cst_48 {dimension_numbers = #tpu.dot_dimension_numbers<[1], [0], [0], [1], [0, 0, 1, 1], [], []>} : vector<384x128xbf16>, vector<128x128xbf16>, vector<384x128xf32> -> vector<384x128xf32>
    %95 = arith.addf %89, %94 : vector<384x128xf32>
    %c33 = arith.constant 33 : index
    %c0_49 = arith.constant 0 : index
    %96 = vector.load %arg7[%c33, %c0_49] : memref<448x128xf32, #tpu.memory_space<vmem>>, vector<384x128xf32>
    %97 = arith.truncf %96 : vector<384x128xf32> to vector<384x128xbf16>
    %c5 = arith.constant 5 : index
    %c0_50 = arith.constant 0 : index
    %c0_51 = arith.constant 0 : index
    %98 = vector.load %arg4[%c5, %c0_50, %c0_51] : memref<9x128x128xbf16, #tpu.memory_space<vmem>>, vector<1x128x128xbf16>
    %99 = vector.shape_cast %98 : vector<1x128x128xbf16> to vector<128x128xbf16>
    %cst_52 = arith.constant dense<0.000000e+00> : vector<384x128xf32>
    %100 = tpu.matmul %97, %99, %cst_52 {dimension_numbers = #tpu.dot_dimension_numbers<[1], [0], [0], [1], [0, 0, 1, 1], [], []>} : vector<384x128xbf16>, vector<128x128xbf16>, vector<384x128xf32> -> vector<384x128xf32>
    %101 = arith.addf %95, %100 : vector<384x128xf32>
    %c55 = arith.constant 55 : index
    %c0_53 = arith.constant 0 : index
    %102 = vector.load %arg7[%c55, %c0_53] : memref<448x128xf32, #tpu.memory_space<vmem>>, vector<384x128xf32>
    %103 = arith.truncf %102 : vector<384x128xf32> to vector<384x128xbf16>
    %c6 = arith.constant 6 : index
    %c0_54 = arith.constant 0 : index
    %c0_55 = arith.constant 0 : index
    %104 = vector.load %arg4[%c6, %c0_54, %c0_55] : memref<9x128x128xbf16, #tpu.memory_space<vmem>>, vector<1x128x128xbf16>
    %105 = vector.shape_cast %104 : vector<1x128x128xbf16> to vector<128x128xbf16>
    %cst_56 = arith.constant dense<0.000000e+00> : vector<384x128xf32>
    %106 = tpu.matmul %103, %105, %cst_56 {dimension_numbers = #tpu.dot_dimension_numbers<[1], [0], [0], [1], [0, 0, 1, 1], [], []>} : vector<384x128xbf16>, vector<128x128xbf16>, vector<384x128xf32> -> vector<384x128xf32>
    %107 = arith.addf %101, %106 : vector<384x128xf32>
    %c56_57 = arith.constant 56 : index
    %c0_58 = arith.constant 0 : index
    %108 = vector.load %arg7[%c56_57, %c0_58] : memref<448x128xf32, #tpu.memory_space<vmem>>, vector<384x128xf32>
    %109 = arith.truncf %108 : vector<384x128xf32> to vector<384x128xbf16>
    %c7_59 = arith.constant 7 : index
    %c0_60 = arith.constant 0 : index
    %c0_61 = arith.constant 0 : index
    %110 = vector.load %arg4[%c7_59, %c0_60, %c0_61] : memref<9x128x128xbf16, #tpu.memory_space<vmem>>, vector<1x128x128xbf16>
    %111 = vector.shape_cast %110 : vector<1x128x128xbf16> to vector<128x128xbf16>
    %cst_62 = arith.constant dense<0.000000e+00> : vector<384x128xf32>
    %112 = tpu.matmul %109, %111, %cst_62 {dimension_numbers = #tpu.dot_dimension_numbers<[1], [0], [0], [1], [0, 0, 1, 1], [], []>} : vector<384x128xbf16>, vector<128x128xbf16>, vector<384x128xf32> -> vector<384x128xf32>
    %113 = arith.addf %107, %112 : vector<384x128xf32>
    %c57 = arith.constant 57 : index
    %c0_63 = arith.constant 0 : index
    %114 = vector.load %arg7[%c57, %c0_63] : memref<448x128xf32, #tpu.memory_space<vmem>>, vector<384x128xf32>
    %115 = arith.truncf %114 : vector<384x128xf32> to vector<384x128xbf16>
    %c8_64 = arith.constant 8 : index
    %c0_65 = arith.constant 0 : index
    %c0_66 = arith.constant 0 : index
    %116 = vector.load %arg4[%c8_64, %c0_65, %c0_66] : memref<9x128x128xbf16, #tpu.memory_space<vmem>>, vector<1x128x128xbf16>
    %117 = vector.shape_cast %116 : vector<1x128x128xbf16> to vector<128x128xbf16>
    %cst_67 = arith.constant dense<0.000000e+00> : vector<384x128xf32>
    %118 = tpu.matmul %115, %117, %cst_67 {dimension_numbers = #tpu.dot_dimension_numbers<[1], [0], [0], [1], [0, 0, 1, 1], [], []>} : vector<384x128xbf16>, vector<128x128xbf16>, vector<384x128xf32> -> vector<384x128xf32>
    %119 = arith.addf %113, %118 : vector<384x128xf32>
    %120 = vector.shape_cast %119 : vector<384x128xf32> to vector<16x24x128xf32>
    %121 = vector.extract_strided_slice %120 {offsets = [0, 0, 0], sizes = [16, 16, 128], strides = [1, 1, 1]} : vector<16x24x128xf32> to vector<16x16x128xf32>
    %122 = arith.truncf %121 : vector<16x16x128xf32> to vector<16x16x128xbf16>
    %c0_68 = arith.constant 0 : index
    %c0_69 = arith.constant 0 : index
    %c0_70 = arith.constant 0 : index
    %c0_71 = arith.constant 0 : index
    %123 = vector.load %arg5[%c0_68, %c0_69, %c0_70, %c0_71] : memref<1x16x16x128xbf16, #tpu.memory_space<vmem>>, vector<1x16x16x128xbf16>
    %124 = vector.shape_cast %123 : vector<1x16x16x128xbf16> to vector<16x16x128xbf16>
    %125 = vector.shape_cast %122 : vector<16x16x128xbf16> to vector<1x16x16x128xbf16>
    tpu.vector_store %arg5[%c0_68, %c0_69, %c0_70, %c0_71], %125 {strides = array<i32>} : memref<1x16x16x128xbf16, #tpu.memory_space<vmem>>, vector<1x16x16x128xbf16>,
    %cst_72 = arith.constant dense<0.000000e+00> : vector<16x128xf32>
    %126 = vector.multi_reduction <add>, %121, %cst_72 [0] : vector<16x16x128xf32> to vector<16x128xf32>
    %cst_73 = arith.constant dense<0.000000e+00> : vector<128xf32>
    %127 = vector.multi_reduction <add>, %126, %cst_73 [0] : vector<16x128xf32> to vector<128xf32>
    %128 = arith.mulf %121, %121 : vector<16x16x128xf32>
    %cst_74 = arith.constant dense<0.000000e+00> : vector<16x128xf32>
    %129 = vector.multi_reduction <add>, %128, %cst_74 [0] : vector<16x16x128xf32> to vector<16x128xf32>
    %cst_75 = arith.constant dense<0.000000e+00> : vector<128xf32>
    %130 = vector.multi_reduction <add>, %129, %cst_75 [0] : vector<16x128xf32> to vector<128xf32>
    %131 = vector.shape_cast %127 : vector<128xf32> to vector<1x128xf32>
    %132 = vector.shape_cast %130 : vector<128xf32> to vector<1x128xf32>
    %cst_76 = arith.constant 0.000000e+00 : f32
    %133 = vector.broadcast %cst_76 : f32 to vector<6x128xf32>
    %134 = tpu.concatenate %131, %132, %133 in 0 : vector<1x128xf32>, vector<1x128xf32>, vector<6x128xf32> -> vector<8x128xf32>
    %c0_77 = arith.constant 0 : index
    %c0_78 = arith.constant 0 : index
    %135 = vector.load %arg6[%c0_77, %c0_78] : memref<8x128xf32, #tpu.memory_space<vmem>>, vector<8x128xf32>
    tpu.vector_store %arg6[%c0_77, %c0_78], %134 {strides = array<i32>} : memref<8x128xf32, #tpu.memory_space<vmem>>, vector<8x128xf32>,
    return
  }
  func.func @transform_0(%arg0: i32) -> (i32, i32, i32, i32) {
    %c0_i32 = arith.constant 0 : i32
    %c0_i32_0 = arith.constant 0 : i32
    %c0_i32_1 = arith.constant 0 : i32
    %c0_i32_2 = arith.constant 0 : i32
    return %arg0, %c0_i32, %c0_i32_0, %c0_i32_1 : i32, i32, i32, i32
  }
  func.func @transform_1(%arg0: i32) -> (i32, i32) {
    %c0_i32 = arith.constant 0 : i32
    %c0_i32_0 = arith.constant 0 : i32
    %c0_i32_1 = arith.constant 0 : i32
    return %c0_i32, %c0_i32_0 : i32, i32
  }
  func.func @transform_2(%arg0: i32) -> (i32, i32) {
    %c0_i32 = arith.constant 0 : i32
    %c0_i32_0 = arith.constant 0 : i32
    %c0_i32_1 = arith.constant 0 : i32
    return %c0_i32, %c0_i32_0 : i32, i32
  }
  func.func @transform_3(%arg0: i32) -> (i32, i32, i32) {
    %c0_i32 = arith.constant 0 : i32
    %c0_i32_0 = arith.constant 0 : i32
    %c0_i32_1 = arith.constant 0 : i32
    %c0_i32_2 = arith.constant 0 : i32
    return %c0_i32, %c0_i32_0, %c0_i32_1 : i32, i32, i32
  }
  func.func @transform_4(%arg0: i32) -> (i32, i32, i32, i32) {
    %c0_i32 = arith.constant 0 : i32
    %c0_i32_0 = arith.constant 0 : i32
    %c0_i32_1 = arith.constant 0 : i32
    %c0_i32_2 = arith.constant 0 : i32
    return %arg0, %c0_i32, %c0_i32_0, %c0_i32_1 : i32, i32, i32, i32
  }
  func.func @transform_5(%arg0: i32) -> (i32, i32) {
    %c0_i32 = arith.constant 0 : i32
    %c0_i32_0 = arith.constant 0 : i32
    return %arg0, %c0_i32 : i32, i32
  }
}

module attributes {stable_mosaic.version = 11 : i64} {
  func.func @_bn_relu_matmul_kernel(%arg0: i32, %arg1: memref<256x128xbf16, #tpu.memory_space<vmem>>, %arg2: memref<1x128xf32, #tpu.memory_space<vmem>>, %arg3: memref<1x128xf32, #tpu.memory_space<vmem>>, %arg4: memref<128x128xbf16, #tpu.memory_space<vmem>>, %arg5: memref<256x128xbf16, #tpu.memory_space<vmem>>, %arg6: memref<8x128xf32, #tpu.memory_space<vmem>>) attributes {dimension_semantics = [#tpu.dimension_semantics<parallel>], iteration_bounds = array<i64: 2>, scalar_prefetch = 0 : i64, scratch_operands = 0 : i64, tpu.core_type = #tpu.core_type<tc>, window_params = [{transform_indices = @transform_0, window_bounds = array<i64: 256, 128>}, {pipeline_mode = #tpu.pipeline_mode<synchronous>, transform_indices = @transform_1, window_bounds = array<i64: 1, 128>}, {pipeline_mode = #tpu.pipeline_mode<synchronous>, transform_indices = @transform_2, window_bounds = array<i64: 1, 128>}, {pipeline_mode = #tpu.pipeline_mode<synchronous>, transform_indices = @transform_3, window_bounds = array<i64: 128, 128>}, {transform_indices = @transform_4, window_bounds = array<i64: 256, 128>}, {transform_indices = @transform_5, window_bounds = array<i64: 8, 128>}]} {
    %c0 = arith.constant 0 : index
    %c0_0 = arith.constant 0 : index
    %0 = vector.load %arg1[%c0, %c0_0] : memref<256x128xbf16, #tpu.memory_space<vmem>>, vector<256x128xbf16>
    %1 = arith.extf %0 : vector<256x128xbf16> to vector<256x128xf32>
    %c0_1 = arith.constant 0 : index
    %c0_2 = arith.constant 0 : index
    %2 = vector.load %arg2[%c0_1, %c0_2] : memref<1x128xf32, #tpu.memory_space<vmem>>, vector<1x128xf32>
    %3 = vector.broadcast %2 : vector<1x128xf32> to vector<256x128xf32>
    %4 = arith.mulf %1, %3 : vector<256x128xf32>
    %c0_3 = arith.constant 0 : index
    %c0_4 = arith.constant 0 : index
    %5 = vector.load %arg3[%c0_3, %c0_4] : memref<1x128xf32, #tpu.memory_space<vmem>>, vector<1x128xf32>
    %6 = vector.broadcast %5 : vector<1x128xf32> to vector<256x128xf32>
    %7 = arith.addf %4, %6 : vector<256x128xf32>
    %cst = arith.constant 0.000000e+00 : f32
    %8 = vector.broadcast %cst : f32 to vector<256x128xf32>
    %9 = arith.maximumf %7, %8 : vector<256x128xf32>
    %c256_i32 = arith.constant 256 : i32
    %10 = arith.muli %arg0, %c256_i32 : i32
    %11 = tpu.iota {dimensions = array<i32: 0>} : vector<256x1xi32>
    %12 = vector.broadcast %10 : i32 to vector<256x1xi32>
    %13 = arith.addi %12, %11 : vector<256x1xi32>
    %c512_i32 = arith.constant 512 : i32
    %14 = vector.broadcast %c512_i32 : i32 to vector<256x1xi32>
    %15 = arith.cmpi slt, %13, %14 : vector<256x1xi32>
    %cst_5 = arith.constant 0.000000e+00 : f32
    %16 = vector.shape_cast %15 : vector<256x1xi1> to vector<256x1xi1>
    %17 = vector.broadcast %16 : vector<256x1xi1> to vector<256x128xi1>
    %18 = vector.broadcast %cst_5 : f32 to vector<256x128xf32>
    %19 = arith.select %17, %9, %18 : vector<256x128xi1>, vector<256x128xf32>
    %20 = arith.truncf %19 : vector<256x128xf32> to vector<256x128xbf16>
    %c0_6 = arith.constant 0 : index
    %c0_7 = arith.constant 0 : index
    %21 = vector.load %arg4[%c0_6, %c0_7] : memref<128x128xbf16, #tpu.memory_space<vmem>>, vector<128x128xbf16>
    %cst_8 = arith.constant dense<0.000000e+00> : vector<256x128xf32>
    %22 = tpu.matmul %20, %21, %cst_8 {dimension_numbers = #tpu.dot_dimension_numbers<[1], [0], [0], [1], [0, 0, 1, 1], [], []>} : vector<256x128xbf16>, vector<128x128xbf16>, vector<256x128xf32> -> vector<256x128xf32>
    %23 = arith.truncf %22 : vector<256x128xf32> to vector<256x128xbf16>
    %c0_9 = arith.constant 0 : index
    %c0_10 = arith.constant 0 : index
    %24 = vector.load %arg5[%c0_9, %c0_10] : memref<256x128xbf16, #tpu.memory_space<vmem>>, vector<256x128xbf16>
    tpu.vector_store %arg5[%c0_9, %c0_10], %23 {strides = array<i32>} : memref<256x128xbf16, #tpu.memory_space<vmem>>, vector<256x128xbf16>,
    %cst_11 = arith.constant dense<0.000000e+00> : vector<128xf32>
    %25 = vector.multi_reduction <add>, %22, %cst_11 [0] : vector<256x128xf32> to vector<128xf32>
    %26 = arith.mulf %22, %22 : vector<256x128xf32>
    %cst_12 = arith.constant dense<0.000000e+00> : vector<128xf32>
    %27 = vector.multi_reduction <add>, %26, %cst_12 [0] : vector<256x128xf32> to vector<128xf32>
    %28 = vector.shape_cast %25 : vector<128xf32> to vector<1x128xf32>
    %29 = vector.shape_cast %27 : vector<128xf32> to vector<1x128xf32>
    %cst_13 = arith.constant 0.000000e+00 : f32
    %30 = vector.broadcast %cst_13 : f32 to vector<6x128xf32>
    %31 = tpu.concatenate %28, %29, %30 in 0 : vector<1x128xf32>, vector<1x128xf32>, vector<6x128xf32> -> vector<8x128xf32>
    %c0_14 = arith.constant 0 : index
    %c0_15 = arith.constant 0 : index
    %32 = vector.load %arg6[%c0_14, %c0_15] : memref<8x128xf32, #tpu.memory_space<vmem>>, vector<8x128xf32>
    tpu.vector_store %arg6[%c0_14, %c0_15], %31 {strides = array<i32>} : memref<8x128xf32, #tpu.memory_space<vmem>>, vector<8x128xf32>,
    return
  }
  func.func @transform_0(%arg0: i32) -> (i32, i32) {
    %c0_i32 = arith.constant 0 : i32
    %c0_i32_0 = arith.constant 0 : i32
    return %arg0, %c0_i32 : i32, i32
  }
  func.func @transform_1(%arg0: i32) -> (i32, i32) {
    %c0_i32 = arith.constant 0 : i32
    %c0_i32_0 = arith.constant 0 : i32
    %c0_i32_1 = arith.constant 0 : i32
    return %c0_i32, %c0_i32_0 : i32, i32
  }
  func.func @transform_2(%arg0: i32) -> (i32, i32) {
    %c0_i32 = arith.constant 0 : i32
    %c0_i32_0 = arith.constant 0 : i32
    %c0_i32_1 = arith.constant 0 : i32
    return %c0_i32, %c0_i32_0 : i32, i32
  }
  func.func @transform_3(%arg0: i32) -> (i32, i32) {
    %c0_i32 = arith.constant 0 : i32
    %c0_i32_0 = arith.constant 0 : i32
    %c0_i32_1 = arith.constant 0 : i32
    return %c0_i32, %c0_i32_0 : i32, i32
  }
  func.func @transform_4(%arg0: i32) -> (i32, i32) {
    %c0_i32 = arith.constant 0 : i32
    %c0_i32_0 = arith.constant 0 : i32
    return %arg0, %c0_i32 : i32, i32
  }
  func.func @transform_5(%arg0: i32) -> (i32, i32) {
    %c0_i32 = arith.constant 0 : i32
    %c0_i32_0 = arith.constant 0 : i32
    return %arg0, %c0_i32 : i32, i32
  }
}

module attributes {stable_mosaic.version = 11 : i64} {
  func.func @_bn_relu_residual_kernel(%arg0: i32, %arg1: memref<256x128xbf16, #tpu.memory_space<vmem>>, %arg2: memref<1x128xf32, #tpu.memory_space<vmem>>, %arg3: memref<1x128xf32, #tpu.memory_space<vmem>>, %arg4: memref<256x128xbf16, #tpu.memory_space<vmem>>, %arg5: memref<1x128xf32, #tpu.memory_space<vmem>>, %arg6: memref<1x128xf32, #tpu.memory_space<vmem>>, %arg7: memref<256x128xf32, #tpu.memory_space<vmem>>) attributes {dimension_semantics = [#tpu.dimension_semantics<parallel>], iteration_bounds = array<i64: 2>, scalar_prefetch = 0 : i64, scratch_operands = 0 : i64, tpu.core_type = #tpu.core_type<tc>, window_params = [{transform_indices = @transform_0, window_bounds = array<i64: 256, 128>}, {pipeline_mode = #tpu.pipeline_mode<synchronous>, transform_indices = @transform_1, window_bounds = array<i64: 1, 128>}, {pipeline_mode = #tpu.pipeline_mode<synchronous>, transform_indices = @transform_2, window_bounds = array<i64: 1, 128>}, {transform_indices = @transform_3, window_bounds = array<i64: 256, 128>}, {pipeline_mode = #tpu.pipeline_mode<synchronous>, transform_indices = @transform_4, window_bounds = array<i64: 1, 128>}, {pipeline_mode = #tpu.pipeline_mode<synchronous>, transform_indices = @transform_5, window_bounds = array<i64: 1, 128>}, {transform_indices = @transform_6, window_bounds = array<i64: 256, 128>}]} {
    %c0 = arith.constant 0 : index
    %c0_0 = arith.constant 0 : index
    %0 = vector.load %arg1[%c0, %c0_0] : memref<256x128xbf16, #tpu.memory_space<vmem>>, vector<256x128xbf16>
    %1 = arith.extf %0 : vector<256x128xbf16> to vector<256x128xf32>
    %c0_1 = arith.constant 0 : index
    %c0_2 = arith.constant 0 : index
    %2 = vector.load %arg2[%c0_1, %c0_2] : memref<1x128xf32, #tpu.memory_space<vmem>>, vector<1x128xf32>
    %3 = vector.broadcast %2 : vector<1x128xf32> to vector<256x128xf32>
    %4 = arith.mulf %1, %3 : vector<256x128xf32>
    %c0_3 = arith.constant 0 : index
    %c0_4 = arith.constant 0 : index
    %5 = vector.load %arg3[%c0_3, %c0_4] : memref<1x128xf32, #tpu.memory_space<vmem>>, vector<1x128xf32>
    %6 = vector.broadcast %5 : vector<1x128xf32> to vector<256x128xf32>
    %7 = arith.addf %4, %6 : vector<256x128xf32>
    %cst = arith.constant 0.000000e+00 : f32
    %8 = vector.broadcast %cst : f32 to vector<256x128xf32>
    %9 = arith.maximumf %7, %8 : vector<256x128xf32>
    %c0_5 = arith.constant 0 : index
    %c0_6 = arith.constant 0 : index
    %10 = vector.load %arg4[%c0_5, %c0_6] : memref<256x128xbf16, #tpu.memory_space<vmem>>, vector<256x128xbf16>
    %11 = arith.extf %10 : vector<256x128xbf16> to vector<256x128xf32>
    %c0_7 = arith.constant 0 : index
    %c0_8 = arith.constant 0 : index
    %12 = vector.load %arg5[%c0_7, %c0_8] : memref<1x128xf32, #tpu.memory_space<vmem>>, vector<1x128xf32>
    %13 = vector.broadcast %12 : vector<1x128xf32> to vector<256x128xf32>
    %14 = arith.mulf %11, %13 : vector<256x128xf32>
    %c0_9 = arith.constant 0 : index
    %c0_10 = arith.constant 0 : index
    %15 = vector.load %arg6[%c0_9, %c0_10] : memref<1x128xf32, #tpu.memory_space<vmem>>, vector<1x128xf32>
    %16 = vector.broadcast %15 : vector<1x128xf32> to vector<256x128xf32>
    %17 = arith.addf %14, %16 : vector<256x128xf32>
    %cst_11 = arith.constant 0.000000e+00 : f32
    %18 = vector.broadcast %cst_11 : f32 to vector<256x128xf32>
    %19 = arith.maximumf %17, %18 : vector<256x128xf32>
    %20 = arith.addf %9, %19 : vector<256x128xf32>
    %c0_12 = arith.constant 0 : index
    %c0_13 = arith.constant 0 : index
    %21 = vector.load %arg7[%c0_12, %c0_13] : memref<256x128xf32, #tpu.memory_space<vmem>>, vector<256x128xf32>
    tpu.vector_store %arg7[%c0_12, %c0_13], %20 {strides = array<i32>} : memref<256x128xf32, #tpu.memory_space<vmem>>, vector<256x128xf32>,
    return
  }
  func.func @transform_0(%arg0: i32) -> (i32, i32) {
    %c0_i32 = arith.constant 0 : i32
    %c0_i32_0 = arith.constant 0 : i32
    return %arg0, %c0_i32 : i32, i32
  }
  func.func @transform_1(%arg0: i32) -> (i32, i32) {
    %c0_i32 = arith.constant 0 : i32
    %c0_i32_0 = arith.constant 0 : i32
    %c0_i32_1 = arith.constant 0 : i32
    return %c0_i32, %c0_i32_0 : i32, i32
  }
  func.func @transform_2(%arg0: i32) -> (i32, i32) {
    %c0_i32 = arith.constant 0 : i32
    %c0_i32_0 = arith.constant 0 : i32
    %c0_i32_1 = arith.constant 0 : i32
    return %c0_i32, %c0_i32_0 : i32, i32
  }
  func.func @transform_3(%arg0: i32) -> (i32, i32) {
    %c0_i32 = arith.constant 0 : i32
    %c0_i32_0 = arith.constant 0 : i32
    return %arg0, %c0_i32 : i32, i32
  }
  func.func @transform_4(%arg0: i32) -> (i32, i32) {
    %c0_i32 = arith.constant 0 : i32
    %c0_i32_0 = arith.constant 0 : i32
    %c0_i32_1 = arith.constant 0 : i32
    return %c0_i32, %c0_i32_0 : i32, i32
  }
  func.func @transform_5(%arg0: i32) -> (i32, i32) {
    %c0_i32 = arith.constant 0 : i32
    %c0_i32_0 = arith.constant 0 : i32
    %c0_i32_1 = arith.constant 0 : i32
    return %c0_i32, %c0_i32_0 : i32, i32
  }
  func.func @transform_6(%arg0: i32) -> (i32, i32) {
    %c0_i32 = arith.constant 0 : i32
    %c0_i32_0 = arith.constant 0 : i32
    return %arg0, %c0_i32 : i32, i32
  }
}

</mosaic_0001>

<llo_original>
// kernel: bottleneck_forward.7
$region0: #{bottleneck_forward.7}
  #allocation0 [shape = 'u32[]', space=smem, size = 0x4, offset = 0x4, fixed_abs, tag = 'smem constant byte address 0x4 - core index']
  #allocation1 [shape = 'u32[144,128]{1,0:T(1,128)}', space=vmem, size = 0x12000, scoped, tag = 'internal scratch']
  %s0 = inlined_call_operand.vmem [shape: bf16[512,128], index: 0, kind: input, shape index: {}]
  %s1 = inlined_call_operand.vmem [shape: f32[1,128], index: 1, kind: input, shape index: {}]
  %s2 = inlined_call_operand.vmem [shape: f32[1,128], index: 2, kind: input, shape index: {}]
  %s3 = inlined_call_operand.vmem [shape: bf16[512,128], index: 3, kind: input, shape index: {}]
  %s4 = inlined_call_operand.vmem [shape: f32[1,128], index: 4, kind: input, shape index: {}]
  %s5 = inlined_call_operand.vmem [shape: f32[1,128], index: 5, kind: input, shape index: {}]
  %s6 = inlined_call_operand.vmem [shape: f32[512,128], index: 6, kind: output, shape index: {}]
  %s7 = sld [smem:[#allocation0]]
  $region57: #{bottleneck_forward.7} parent=0
    _
  %s9 = ssub.s32 1, %s7
  %s10 = scalar_select 0, %s9, %s7
  loop: start=0, step=1, limit=4
  $region2: #{bottleneck_forward.7} parent=0 // loop_pre_header
    _
  $region3: #{bottleneck_forward.7} parent=0 // loop_header
    %s12 = sphi 0, %s16
    %p13 = scmp.ge.s32.totalorder %s12, 4
    %s22 = sphi 0, %s24
    %s25 = sphi 0, %s22
    %s26 = sphi 0, %s25
    %s42 = sphi 0, %s26
    %s46 = sphi 0, %s46
    %s48 = sphi 0, %s46
    %s49 = sphi 0, %s48
    %s63 = sphi 0, %s49
    %s67 = sphi 0, %s67
    %s69 = sphi 0, %s67
    %s70 = sphi 0, %s69
    %s84 = sphi 0, %s70
    %s90 = sphi 0, %s92
    %s93 = sphi 0, %s90
    %s94 = sphi 0, %s93
    %s110 = sphi 0, %s94
    %s114 = sphi 0, %s114
    %s116 = sphi 0, %s114
    %s117 = sphi 0, %s116
    %s131 = sphi 0, %s117
    %s135 = sphi 0, %s135
    %s137 = sphi 0, %s135
    %s138 = sphi 0, %s137
    %s152 = sphi 0, %s138
    %s158 = sphi 0, %s160
    %s161 = sphi 0, %s158
    %s162 = sphi 0, %s161
    %s178 = sphi 0, %s162
  $region4: #{bottleneck_forward.7} parent=0 // loop_header_branch
    %15 = sbr.rel (%p13) target = $region8
  $region5: #{bottleneck_forward.7} parent=0 // loop_body
    %s17 = ssub.s32 %s12, 1
    %s18 = ssub.s32 %s12, 2
    %s19 = sadd.s32 %s12, 1
    %s20 = ssub.s32 %s12, %s19
    %p21 = scmp.eq.s32.totalorder %s20, 0
    %s23 = sadd.s32 %s22, 1
    %s24 = scalar_select %p21, %s22, %s23
    %p27 = pneg %p21
    %p28 = scmp.eq.s32.totalorder %s12, 1
    %p29 = por %p27, %p28
    %p30 = scmp.ne.s32.totalorder %s22, %s25
    %p31 = scmp.eq.s32.totalorder %s12, 0
    %p32 = por %p30, %p31
    %p33 = scmp.ne.s32.totalorder %s22, %s25
    %p34 = scmp.eq.s32.totalorder %s17, 1
    %p35 = por %p33, %p34
    %p36 = scmp.ne.s32.totalorder %s25, %s26
    %p37 = scmp.eq.s32.totalorder %s17, 0
    %p38 = por %p36, %p37
    %p39 = scmp.ne.s32.totalorder %s25, %s26
    %p40 = scmp.eq.s32.totalorder %s18, 1
    %p41 = por %p39, %p40
    %p43 = scmp.ne.s32.totalorder %s26, %s42
    %p44 = scmp.eq.s32.totalorder %s18, 0
    %p45 = por %p43, %p44
    %s47 = sadd.s32 %s46, 1
    %p50 = scmp.eq.s32.totalorder %s12, 1
    %p51 = scmp.ne.s32.totalorder %s46, %s48
    %p52 = scmp.eq.s32.totalorder %s12, 0
    %p53 = por %p51, %p52
    %p54 = scmp.ne.s32.totalorder %s46, %s48
    %p55 = scmp.eq.s32.totalorder %s17, 1
    %p56 = por %p54, %p55
    %p57 = scmp.ne.s32.totalorder %s48, %s49
    %p58 = scmp.eq.s32.totalorder %s17, 0
    %p59 = por %p57, %p58
    %p60 = scmp.ne.s32.totalorder %s48, %s49
    %p61 = scmp.eq.s32.totalorder %s18, 1
    %p62 = por %p60, %p61
    %p64 = scmp.ne.s32.totalorder %s49, %s63
    %p65 = scmp.eq.s32.totalorder %s18, 0
    %p66 = por %p64, %p65
    %s68 = sadd.s32 %s67, 1
    %p71 = scmp.eq.s32.totalorder %s12, 1
    %p72 = scmp.ne.s32.totalorder %s67, %s69
    %p73 = scmp.eq.s32.totalorder %s12, 0
    %p74 = por %p72, %p73
    %p75 = scmp.ne.s32.totalorder %s67, %s69
    %p76 = scmp.eq.s32.totalorder %s17, 1
    %p77 = por %p75, %p76
    %p78 = scmp.ne.s32.totalorder %s69, %s70
    %p79 = scmp.eq.s32.totalorder %s17, 0
    %p80 = por %p78, %p79
    %p81 = scmp.ne.s32.totalorder %s69, %s70
    %p82 = scmp.eq.s32.totalorder %s18, 1
    %p83 = por %p81, %p82
    %p85 = scmp.ne.s32.totalorder %s70, %s84
    %p86 = scmp.eq.s32.totalorder %s18, 0
    %p87 = por %p85, %p86
    %s88 = ssub.s32 %s12, %s19
    %p89 = scmp.eq.s32.totalorder %s88, 0
    %s91 = sadd.s32 %s90, 1
    %s92 = scalar_select %p89, %s90, %s91
    %p95 = pneg %p89
    %p96 = scmp.eq.s32.totalorder %s12, 1
    %p97 = por %p95, %p96
    %p98 = scmp.ne.s32.totalorder %s90, %s93
    %p99 = scmp.eq.s32.totalorder %s12, 0
    %p100 = por %p98, %p99
    %p101 = scmp.ne.s32.totalorder %s90, %s93
    %p102 = scmp.eq.s32.totalorder %s17, 1
    %p103 = por %p101, %p102
    %p104 = scmp.ne.s32.totalorder %s93, %s94
    %p105 = scmp.eq.s32.totalorder %s17, 0
    %p106 = por %p104, %p105
    %p107 = scmp.ne.s32.totalorder %s93, %s94
    %p108 = scmp.eq.s32.totalorder %s18, 1
    %p109 = por %p107, %p108
    %p111 = scmp.ne.s32.totalorder %s94, %s110
    %p112 = scmp.eq.s32.totalorder %s18, 0
    %p113 = por %p111, %p112
    %s115 = sadd.s32 %s114, 1
    %p118 = scmp.eq.s32.totalorder %s12, 1
    %p119 = scmp.ne.s32.totalorder %s114, %s116
    %p120 = scmp.eq.s32.totalorder %s12, 0
    %p121 = por %p119, %p120
    %p122 = scmp.ne.s32.totalorder %s114, %s116
    %p123 = scmp.eq.s32.totalorder %s17, 1
    %p124 = por %p122, %p123
    %p125 = scmp.ne.s32.totalorder %s116, %s117
    %p126 = scmp.eq.s32.totalorder %s17, 0
    %p127 = por %p125, %p126
    %p128 = scmp.ne.s32.totalorder %s116, %s117
    %p129 = scmp.eq.s32.totalorder %s18, 1
    %p130 = por %p128, %p129
    %p132 = scmp.ne.s32.totalorder %s117, %s131
    %p133 = scmp.eq.s32.totalorder %s18, 0
    %p134 = por %p132, %p133
    %s136 = sadd.s32 %s135, 1
    %p139 = scmp.eq.s32.totalorder %s12, 1
    %p140 = scmp.ne.s32.totalorder %s135, %s137
    %p141 = scmp.eq.s32.totalorder %s12, 0
    %p142 = por %p140, %p141
    %p143 = scmp.ne.s32.totalorder %s135, %s137
    %p144 = scmp.eq.s32.totalorder %s17, 1
    %p145 = por %p143, %p144
    %p146 = scmp.ne.s32.totalorder %s137, %s138
    %p147 = scmp.eq.s32.totalorder %s17, 0
    %p148 = por %p146, %p147
    %p149 = scmp.ne.s32.totalorder %s137, %s138
    %p150 = scmp.eq.s32.totalorder %s18, 1
    %p151 = por %p149, %p150
    %p153 = scmp.ne.s32.totalorder %s138, %s152
    %p154 = scmp.eq.s32.totalorder %s18, 0
    %p155 = por %p153, %p154
    %s156 = ssub.s32 %s12, %s19
    %p157 = scmp.eq.s32.totalorder %s156, 0
    %s159 = sadd.s32 %s158, 1
    %s160 = scalar_select %p157, %s158, %s159
    %p163 = pneg %p157
    %p164 = scmp.eq.s32.totalorder %s12, 1
    %p165 = por %p163, %p164
    %p166 = scmp.ne.s32.totalorder %s158, %s161
    %p167 = scmp.eq.s32.totalorder %s12, 0
    %p168 = por %p166, %p167
    %p169 = scmp.ne.s32.totalorder %s158, %s161
    %p170 = scmp.eq.s32.totalorder %s17, 1
    %p171 = por %p169, %p170
    %p172 = scmp.ne.s32.totalorder %s161, %s162
    %p173 = scmp.eq.s32.totalorder %s17, 0
    %p174 = por %p172, %p173
    %p175 = scmp.ne.s32.totalorder %s161, %s162
    %p176 = scmp.eq.s32.totalorder %s18, 1
    %p177 = por %p175, %p176
    %p179 = scmp.ne.s32.totalorder %s162, %s178
    %p180 = scmp.eq.s32.totalorder %s18, 0
    %p181 = por %p179, %p180
    %p182 = scmp.le.s32.totalorder 1, %s12
    %p183 = scmp.lt.s32.totalorder %s12, 3
    %p184 = pnand %p182, %p183
    %p185 = pneg %p184
    // Predicated region
    $region9: #{bottleneck_forward.7} parent=5 // pred_check
      _
    $region10: #{bottleneck_forward.7} parent=5 // pred_check_branch
      %187 = sbr.rel (%p184) target = $region12
    $region11: #{bottleneck_forward.7} parent=5 // pred_region
      %s188 = ssub.s32 %s12, 1
      // Predicated region
      $region13: #{bottleneck_forward.7} parent=11 // pred_check
        %p189 = pneg %p59
      $region14: #{bottleneck_forward.7} parent=11 // pred_check_branch
        %191 = sbr.rel (%p189) target = $region16
      $region15: #{bottleneck_forward.7} parent=11 // pred_region
        _
      $region16: #{bottleneck_forward.7} parent=11 // pred_fallthru
        _
      // Predicated region
      $region17: #{bottleneck_forward.7} parent=11 // pred_check
        %p192 = pneg %p80
      $region18: #{bottleneck_forward.7} parent=11 // pred_check_branch
        %194 = sbr.rel (%p192) target = $region20
      $region19: #{bottleneck_forward.7} parent=11 // pred_region
        _
      $region20: #{bottleneck_forward.7} parent=11 // pred_fallthru
        _
      // Predicated region
      $region21: #{bottleneck_forward.7} parent=11 // pred_check
        %p195 = pneg %p127
      $region22: #{bottleneck_forward.7} parent=11 // pred_check_branch
        %197 = sbr.rel (%p195) target = $region24
      $region23: #{bottleneck_forward.7} parent=11 // pred_region
        _
      $region24: #{bottleneck_forward.7} parent=11 // pred_fallthru
        _
      // Predicated region
      $region25: #{bottleneck_forward.7} parent=11 // pred_check
        %p198 = pneg %p148
      $region26: #{bottleneck_forward.7} parent=11 // pred_check_branch
        %200 = sbr.rel (%p198) target = $region28
      $region27: #{bottleneck_forward.7} parent=11 // pred_region
        _
      $region28: #{bottleneck_forward.7} parent=11 // pred_fallthru
        _
    $region12: #{bottleneck_forward.7} parent=5 // pred_fallthru
      _
    %p201 = scmp.lt.s32.totalorder %s12, 2
    // Predicated region
    $region29: #{bottleneck_forward.7} parent=5 // pred_check
      %p202 = pneg %p201
    $region30: #{bottleneck_forward.7} parent=5 // pred_check_branch
      %204 = sbr.rel (%p202) target = $region32
    $region31: #{bottleneck_forward.7} parent=5 // pred_region
      // Predicated region
      $region33: #{bottleneck_forward.7} parent=31 // pred_check
        %p205 = pneg %p32
      $region34: #{bottleneck_forward.7} parent=31 // pred_check_branch
        %207 = sbr.rel (%p205) target = $region36
      $region35: #{bottleneck_forward.7} parent=31 // pred_region
        %s208 = smul.u32 32, %s12
        %p209 = scmp.lt.s32.totalorder %s208, 63
        %s210 = scalar_select %p209, %s208, 63
        %s211 = smul.addr %s210, 4
        %s212 = scalar_lea.vmem %s0, %s211
        %s213 = smul.u32 32, %s12
      $region36: #{bottleneck_forward.7} parent=31 // pred_fallthru
        _
      // Predicated region
      $region37: #{bottleneck_forward.7} parent=31 // pred_check
        %p214 = pneg %p100
      $region38: #{bottleneck_forward.7} parent=31 // pred_check_branch
        %216 = sbr.rel (%p214) target = $region40
      $region39: #{bottleneck_forward.7} parent=31 // pred_region
        %s217 = smul.u32 32, %s12
        %p218 = scmp.lt.s32.totalorder %s217, 63
        %s219 = scalar_select %p218, %s217, 63
        %s220 = smul.addr %s219, 4
        %s221 = scalar_lea.vmem %s3, %s220
        %s222 = smul.u32 32, %s12
      $region40: #{bottleneck_forward.7} parent=31 // pred_fallthru
        _
    $region32: #{bottleneck_forward.7} parent=5 // pred_fallthru
      _
    %p223 = scmp.le.s32.totalorder 1, %s12
    %p224 = scmp.lt.s32.totalorder %s12, 3
    %p225 = pnand %p223, %p224
    %p226 = pneg %p225
    // Predicated region
    $region41: #{bottleneck_forward.7} parent=5 // pred_check
      _
    $region42: #{bottleneck_forward.7} parent=5 // pred_check_branch
      %228 = sbr.rel (%p225) target = $region44
    $region43: #{bottleneck_forward.7} parent=5 // pred_region
      %s229 = ssub.s32 %s12, 1
      %s230 = smul.u32 32, %s17
      %p231 = scmp.lt.s32.totalorder %s230, 63
      %s232 = scalar_select %p231, %s230, 63
      %s233 = smul.addr %s232, 4
      %s234 = scalar_lea.vmem %s0, %s233
      %p235 = pneg %p38
      %p236 = pneg %p35
      %p237 = pneg %p59
      %p238 = pneg %p56
      %p239 = pneg %p80
      %p240 = pneg %p77
      %s241 = smul.u32 32, %s17
      %p242 = scmp.lt.s32.totalorder %s241, 63
      %s243 = scalar_select %p242, %s241, 63
      %s244 = smul.addr %s243, 4
      %s245 = scalar_lea.vmem %s3, %s244
      %p246 = pneg %p106
      %p247 = pneg %p103
      %p248 = pneg %p127
      %p249 = pneg %p124
      %p250 = pneg %p148
      %p251 = pneg %p145
      %p252 = pneg %p174
      %p253 = pneg %p171
      %s254 = smul.u32 32, %s17
      %p255 = scmp.lt.s32.totalorder %s254, 63
      %s256 = scalar_select %p255, %s254, 63
      %s257 = smul.addr %s256, 8
      %s258 = scalar_lea.vmem %s6, %s257
      %s259 = smul.u32 32, %s17
      %p260 = scmp.lt.s32.totalorder %s259, 63
      %s261 = scalar_select %p260, %s259, 63
      %s262 = smul.addr %s261, 4
      %s263 = scalar_lea.vmem %s0, %s262
      %s264 = smul.u32 32, %s17
      %s265 = smul.u32 32, %s17
      %p266 = scmp.lt.s32.totalorder %s265, 63
      %s267 = scalar_select %p266, %s265, 63
      %s268 = smul.addr %s267, 4
      %s269 = scalar_lea.vmem %s3, %s268
      %s270 = smul.u32 32, %s17
      %s271 = smul.u32 32, %s17
      %p272 = scmp.lt.s32.totalorder %s271, 63
      %s273 = scalar_select %p272, %s271, 63
      %s274 = smul.addr %s273, 8
      %s275 = scalar_lea.vmem %s6, %s274
      %s276 = smul.u32 32, %s17
      %v277 = vld [vmem:[%s263] sm:$0xf]
      %v278 = vld [vmem:[%s263 + $0x4] sm:$0xf]
      %v279 = vld [vmem:[%s263 + $0x8] sm:$0xf]
      %v280 = vld [vmem:[%s263 + $0xc] sm:$0xf]
      %v281 = vld [vmem:[%s263 + $0x10] sm:$0xf]
      %v282 = vld [vmem:[%s263 + $0x14] sm:$0xf]
      %v283 = vld [vmem:[%s263 + $0x18] sm:$0xf]
      %v284 = vld [vmem:[%s263 + $0x1c] sm:$0xf]
      %v285 = vld [vmem:[%s263 + $0x20] sm:$0xf]
      %v286 = vld [vmem:[%s263 + $0x24] sm:$0xf]
      %v287 = vld [vmem:[%s263 + $0x28] sm:$0xf]
      %v288 = vld [vmem:[%s263 + $0x2c] sm:$0xf]
      %v289 = vld [vmem:[%s263 + $0x30] sm:$0xf]
      %v290 = vld [vmem:[%s263 + $0x34] sm:$0xf]
      %v291 = vld [vmem:[%s263 + $0x38] sm:$0xf]
      %v292 = vld [vmem:[%s263 + $0x3c] sm:$0xf]
      %v293 = vld [vmem:[%s263 + $0x40] sm:$0xf]
      %v294 = vld [vmem:[%s263 + $0x44] sm:$0xf]
      %v295 = vld [vmem:[%s263 + $0x48] sm:$0xf]
      %v296 = vld [vmem:[%s263 + $0x4c] sm:$0xf]
      %v297 = vld [vmem:[%s263 + $0x50] sm:$0xf]
      %v298 = vld [vmem:[%s263 + $0x54] sm:$0xf]
      %v299 = vld [vmem:[%s263 + $0x58] sm:$0xf]
      %v300 = vld [vmem:[%s263 + $0x5c] sm:$0xf]
      %v301 = vld [vmem:[%s263 + $0x60] sm:$0xf]
      %v302 = vld [vmem:[%s263 + $0x64] sm:$0xf]
      %v303 = vld [vmem:[%s263 + $0x68] sm:$0xf]
      %v304 = vld [vmem:[%s263 + $0x6c] sm:$0xf]
      %v305 = vld [vmem:[%s263 + $0x70] sm:$0xf]
      %v306 = vld [vmem:[%s263 + $0x74] sm:$0xf]
      %v307 = vld [vmem:[%s263 + $0x78] sm:$0xf]
      %v308 = vld [vmem:[%s263 + $0x7c] sm:$0xf]
      %v309 = vunpack.c.l.bf16 %v277
      %v310 = vunpack.c.l.bf16 %v278
      %v311 = vunpack.c.l.bf16 %v279
      %v312 = vunpack.c.l.bf16 %v280
      %v313 = vunpack.c.l.bf16 %v281
      %v314 = vunpack.c.l.bf16 %v282
      %v315 = vunpack.c.l.bf16 %v283
      %v316 = vunpack.c.l.bf16 %v284
      %v317 = vunpack.c.l.bf16 %v285
      %v318 = vunpack.c.l.bf16 %v286
      %v319 = vunpack.c.l.bf16 %v287
      %v320 = vunpack.c.l.bf16 %v288
      %v321 = vunpack.c.l.bf16 %v289
      %v322 = vunpack.c.l.bf16 %v290
      %v323 = vunpack.c.l.bf16 %v291
      %v324 = vunpack.c.l.bf16 %v292
      %v325 = vunpack.c.l.bf16 %v293
      %v326 = vunpack.c.l.bf16 %v294
      %v327 = vunpack.c.l.bf16 %v295
      %v328 = vunpack.c.l.bf16 %v296
      %v329 = vunpack.c.l.bf16 %v297
      %v330 = vunpack.c.l.bf16 %v298
      %v331 = vunpack.c.l.bf16 %v299
      %v332 = vunpack.c.l.bf16 %v300
      %v333 = vunpack.c.l.bf16 %v301
      %v334 = vunpack.c.l.bf16 %v302
      %v335 = vunpack.c.l.bf16 %v303
      %v336 = vunpack.c.l.bf16 %v304
      %v337 = vunpack.c.l.bf16 %v305
      %v338 = vunpack.c.l.bf16 %v306
      %v339 = vunpack.c.l.bf16 %v307
      %v340 = vunpack.c.l.bf16 %v308
      %v341 = vld [vmem:[%s1] sm:$0x1]
      %v343 = vlaneseq
      %v344 = vshrl.u32 %v343, 7
      %v345 = vsub.s32 0, %v344
      %v346 = vrot.slane %v341, %v345
      %v348 = vmul.f32 %v309, %v346
      %v349 = vmul.f32 %v310, %v346
      %v350 = vmul.f32 %v311, %v346
      %v351 = vmul.f32 %v312, %v346
      %v352 = vmul.f32 %v313, %v346
      %v353 = vmul.f32 %v314, %v346
      %v354 = vmul.f32 %v315, %v346
      %v355 = vmul.f32 %v316, %v346
      %v356 = vmul.f32 %v317, %v346
      %v357 = vmul.f32 %v318, %v346
      %v358 = vmul.f32 %v319, %v346
      %v359 = vmul.f32 %v320, %v346
      %v360 = vmul.f32 %v321, %v346
      %v361 = vmul.f32 %v322, %v346
      %v362 = vmul.f32 %v323, %v346
      %v363 = vmul.f32 %v324, %v346
      %v364 = vmul.f32 %v325, %v346
      %v365 = vmul.f32 %v326, %v346
      %v366 = vmul.f32 %v327, %v346
      %v367 = vmul.f32 %v328, %v346
      %v368 = vmul.f32 %v329, %v346
      %v369 = vmul.f32 %v330, %v346
      %v370 = vmul.f32 %v331, %v346
      %v371 = vmul.f32 %v332, %v346
      %v372 = vmul.f32 %v333, %v346
      %v373 = vmul.f32 %v334, %v346
      %v374 = vmul.f32 %v335, %v346
      %v375 = vmul.f32 %v336, %v346
      %v376 = vmul.f32 %v337, %v346
      %v377 = vmul.f32 %v338, %v346
      %v378 = vmul.f32 %v339, %v346
      %v379 = vmul.f32 %v340, %v346
      %v380 = vld [vmem:[%s2] sm:$0x1]
      %v382 = vlaneseq
      %v383 = vshrl.u32 %v382, 7
      %v384 = vsub.s32 0, %v383
      %v385 = vrot.slane %v380, %v384
      %v387 = vadd.f32 %v348, %v385
      %v388 = vadd.f32 %v349, %v385
      %v389 = vadd.f32 %v350, %v385
      %v390 = vadd.f32 %v351, %v385
      %v391 = vadd.f32 %v352, %v385
      %v392 = vadd.f32 %v353, %v385
      %v393 = vadd.f32 %v354, %v385
      %v394 = vadd.f32 %v355, %v385
      %v395 = vadd.f32 %v356, %v385
      %v396 = vadd.f32 %v357, %v385
      %v397 = vadd.f32 %v358, %v385
      %v398 = vadd.f32 %v359, %v385
      %v399 = vadd.f32 %v360, %v385
      %v400 = vadd.f32 %v361, %v385
      %v401 = vadd.f32 %v362, %v385
      %v402 = vadd.f32 %v363, %v385
      %v403 = vadd.f32 %v364, %v385
      %v404 = vadd.f32 %v365, %v385
      %v405 = vadd.f32 %v366, %v385
      %v406 = vadd.f32 %v367, %v385
      %v407 = vadd.f32 %v368, %v385
      %v408 = vadd.f32 %v369, %v385
      %v409 = vadd.f32 %v370, %v385
      %v410 = vadd.f32 %v371, %v385
      %v411 = vadd.f32 %v372, %v385
      %v412 = vadd.f32 %v373, %v385
      %v413 = vadd.f32 %v374, %v385
      %v414 = vadd.f32 %v375, %v385
      %v415 = vadd.f32 %v376, %v385
      %v416 = vadd.f32 %v377, %v385
      %v417 = vadd.f32 %v378, %v385
      %v418 = vadd.f32 %v379, %v385
      %v419 = vmax.f32 %v387, 0.0
      %v420 = vmax.f32 %v388, 0.0
      %v421 = vmax.f32 %v389, 0.0
      %v422 = vmax.f32 %v390, 0.0
      %v423 = vmax.f32 %v391, 0.0
      %v424 = vmax.f32 %v392, 0.0
      %v425 = vmax.f32 %v393, 0.0
      %v426 = vmax.f32 %v394, 0.0
      %v427 = vmax.f32 %v395, 0.0
      %v428 = vmax.f32 %v396, 0.0
      %v429 = vmax.f32 %v397, 0.0
      %v430 = vmax.f32 %v398, 0.0
      %v431 = vmax.f32 %v399, 0.0
      %v432 = vmax.f32 %v400, 0.0
      %v433 = vmax.f32 %v401, 0.0
      %v434 = vmax.f32 %v402, 0.0
      %v435 = vmax.f32 %v403, 0.0
      %v436 = vmax.f32 %v404, 0.0
      %v437 = vmax.f32 %v405, 0.0
      %v438 = vmax.f32 %v406, 0.0
      %v439 = vmax.f32 %v407, 0.0
      %v440 = vmax.f32 %v408, 0.0
      %v441 = vmax.f32 %v409, 0.0
      %v442 = vmax.f32 %v410, 0.0
      %v443 = vmax.f32 %v411, 0.0
      %v444 = vmax.f32 %v412, 0.0
      %v445 = vmax.f32 %v413, 0.0
      %v446 = vmax.f32 %v414, 0.0
      %v447 = vmax.f32 %v415, 0.0
      %v448 = vmax.f32 %v416, 0.0
      %v449 = vmax.f32 %v417, 0.0
      %v450 = vmax.f32 %v418, 0.0
      %v451 = vld [vmem:[%s269] sm:$0xf]
      %v452 = vld [vmem:[%s269 + $0x4] sm:$0xf]
      %v453 = vld [vmem:[%s269 + $0x8] sm:$0xf]
      %v454 = vld [vmem:[%s269 + $0xc] sm:$0xf]
      %v455 = vld [vmem:[%s269 + $0x10] sm:$0xf]
      %v456 = vld [vmem:[%s269 + $0x14] sm:$0xf]
      %v457 = vld [vmem:[%s269 + $0x18] sm:$0xf]
      %v458 = vld [vmem:[%s269 + $0x1c] sm:$0xf]
      %v459 = vld [vmem:[%s269 + $0x20] sm:$0xf]
      %v460 = vld [vmem:[%s269 + $0x24] sm:$0xf]
      %v461 = vld [vmem:[%s269 + $0x28] sm:$0xf]
      %v462 = vld [vmem:[%s269 + $0x2c] sm:$0xf]
      %v463 = vld [vmem:[%s269 + $0x30] sm:$0xf]
      %v464 = vld [vmem:[%s269 + $0x34] sm:$0xf]
      %v465 = vld [vmem:[%s269 + $0x38] sm:$0xf]
      %v466 = vld [vmem:[%s269 + $0x3c] sm:$0xf]
      %v467 = vld [vmem:[%s269 + $0x40] sm:$0xf]
      %v468 = vld [vmem:[%s269 + $0x44] sm:$0xf]
      %v469 = vld [vmem:[%s269 + $0x48] sm:$0xf]
      %v470 = vld [vmem:[%s269 + $0x4c] sm:$0xf]
      %v471 = vld [vmem:[%s269 + $0x50] sm:$0xf]
      %v472 = vld [vmem:[%s269 + $0x54] sm:$0xf]
      %v473 = vld [vmem:[%s269 + $0x58] sm:$0xf]
      %v474 = vld [vmem:[%s269 + $0x5c] sm:$0xf]
      %v475 = vld [vmem:[%s269 + $0x60] sm:$0xf]
      %v476 = vld [vmem:[%s269 + $0x64] sm:$0xf]
      %v477 = vld [vmem:[%s269 + $0x68] sm:$0xf]
      %v478 = vld [vmem:[%s269 + $0x6c] sm:$0xf]
      %v479 = vld [vmem:[%s269 + $0x70] sm:$0xf]
      %v480 = vld [vmem:[%s269 + $0x74] sm:$0xf]
      %v481 = vld [vmem:[%s269 + $0x78] sm:$0xf]
      %v482 = vld [vmem:[%s269 + $0x7c] sm:$0xf]
      %v483 = vunpack.c.l.bf16 %v451
      %v484 = vunpack.c.l.bf16 %v452
      %v485 = vunpack.c.l.bf16 %v453
      %v486 = vunpack.c.l.bf16 %v454
      %v487 = vunpack.c.l.bf16 %v455
      %v488 = vunpack.c.l.bf16 %v456
      %v489 = vunpack.c.l.bf16 %v457
      %v490 = vunpack.c.l.bf16 %v458
      %v491 = vunpack.c.l.bf16 %v459
      %v492 = vunpack.c.l.bf16 %v460
      %v493 = vunpack.c.l.bf16 %v461
      %v494 = vunpack.c.l.bf16 %v462
      %v495 = vunpack.c.l.bf16 %v463
      %v496 = vunpack.c.l.bf16 %v464
      %v497 = vunpack.c.l.bf16 %v465
      %v498 = vunpack.c.l.bf16 %v466
      %v499 = vunpack.c.l.bf16 %v467
      %v500 = vunpack.c.l.bf16 %v468
      %v501 = vunpack.c.l.bf16 %v469
      %v502 = vunpack.c.l.bf16 %v470
      %v503 = vunpack.c.l.bf16 %v471
      %v504 = vunpack.c.l.bf16 %v472
      %v505 = vunpack.c.l.bf16 %v473
      %v506 = vunpack.c.l.bf16 %v474
      %v507 = vunpack.c.l.bf16 %v475
      %v508 = vunpack.c.l.bf16 %v476
      %v509 = vunpack.c.l.bf16 %v477
      %v510 = vunpack.c.l.bf16 %v478
      %v511 = vunpack.c.l.bf16 %v479
      %v512 = vunpack.c.l.bf16 %v480
      %v513 = vunpack.c.l.bf16 %v481
      %v514 = vunpack.c.l.bf16 %v482
      %v515 = vld [vmem:[%s4] sm:$0x1]
      %v517 = vlaneseq
      %v518 = vshrl.u32 %v517, 7
      %v519 = vsub.s32 0, %v518
      %v520 = vrot.slane %v515, %v519
      %v522 = vmul.f32 %v483, %v520
      %v523 = vmul.f32 %v484, %v520
      %v524 = vmul.f32 %v485, %v520
      %v525 = vmul.f32 %v486, %v520
      %v526 = vmul.f32 %v487, %v520
      %v527 = vmul.f32 %v488, %v520
      %v528 = vmul.f32 %v489, %v520
      %v529 = vmul.f32 %v490, %v520
      %v530 = vmul.f32 %v491, %v520
      %v531 = vmul.f32 %v492, %v520
      %v532 = vmul.f32 %v493, %v520
      %v533 = vmul.f32 %v494, %v520
      %v534 = vmul.f32 %v495, %v520
      %v535 = vmul.f32 %v496, %v520
      %v536 = vmul.f32 %v497, %v520
      %v537 = vmul.f32 %v498, %v520
      %v538 = vmul.f32 %v499, %v520
      %v539 = vmul.f32 %v500, %v520
      %v540 = vmul.f32 %v501, %v520
      %v541 = vmul.f32 %v502, %v520
      %v542 = vmul.f32 %v503, %v520
      %v543 = vmul.f32 %v504, %v520
      %v544 = vmul.f32 %v505, %v520
      %v545 = vmul.f32 %v506, %v520
      %v546 = vmul.f32 %v507, %v520
      %v547 = vmul.f32 %v508, %v520
      %v548 = vmul.f32 %v509, %v520
      %v549 = vmul.f32 %v510, %v520
      %v550 = vmul.f32 %v511, %v520
      %v551 = vmul.f32 %v512, %v520
      %v552 = vmul.f32 %v513, %v520
      %v553 = vmul.f32 %v514, %v520
      %v554 = vld [vmem:[%s5] sm:$0x1]
      %v556 = vlaneseq
      %v557 = vshrl.u32 %v556, 7
      %v558 = vsub.s32 0, %v557
      %v559 = vrot.slane %v554, %v558
      %v561 = vadd.f32 %v522, %v559
      %v562 = vadd.f32 %v523, %v559
      %v563 = vadd.f32 %v524, %v559
      %v564 = vadd.f32 %v525, %v559
      %v565 = vadd.f32 %v526, %v559
      %v566 = vadd.f32 %v527, %v559
      %v567 = vadd.f32 %v528, %v559
      %v568 = vadd.f32 %v529, %v559
      %v569 = vadd.f32 %v530, %v559
      %v570 = vadd.f32 %v531, %v559
      %v571 = vadd.f32 %v532, %v559
      %v572 = vadd.f32 %v533, %v559
      %v573 = vadd.f32 %v534, %v559
      %v574 = vadd.f32 %v535, %v559
      %v575 = vadd.f32 %v536, %v559
      %v576 = vadd.f32 %v537, %v559
      %v577 = vadd.f32 %v538, %v559
      %v578 = vadd.f32 %v539, %v559
      %v579 = vadd.f32 %v540, %v559
      %v580 = vadd.f32 %v541, %v559
      %v581 = vadd.f32 %v542, %v559
      %v582 = vadd.f32 %v543, %v559
      %v583 = vadd.f32 %v544, %v559
      %v584 = vadd.f32 %v545, %v559
      %v585 = vadd.f32 %v546, %v559
      %v586 = vadd.f32 %v547, %v559
      %v587 = vadd.f32 %v548, %v559
      %v588 = vadd.f32 %v549, %v559
      %v589 = vadd.f32 %v550, %v559
      %v590 = vadd.f32 %v551, %v559
      %v591 = vadd.f32 %v552, %v559
      %v592 = vadd.f32 %v553, %v559
      %v593 = vmax.f32 %v561, 0.0
      %v594 = vmax.f32 %v562, 0.0
      %v595 = vmax.f32 %v563, 0.0
      %v596 = vmax.f32 %v564, 0.0
      %v597 = vmax.f32 %v565, 0.0
      %v598 = vmax.f32 %v566, 0.0
      %v599 = vmax.f32 %v567, 0.0
      %v600 = vmax.f32 %v568, 0.0
      %v601 = vmax.f32 %v569, 0.0
      %v602 = vmax.f32 %v570, 0.0
      %v603 = vmax.f32 %v571, 0.0
      %v604 = vmax.f32 %v572, 0.0
      %v605 = vmax.f32 %v573, 0.0
      %v606 = vmax.f32 %v574, 0.0
      %v607 = vmax.f32 %v575, 0.0
      %v608 = vmax.f32 %v576, 0.0
      %v609 = vmax.f32 %v577, 0.0
      %v610 = vmax.f32 %v578, 0.0
      %v611 = vmax.f32 %v579, 0.0
      %v612 = vmax.f32 %v580, 0.0
      %v613 = vmax.f32 %v581, 0.0
      %v614 = vmax.f32 %v582, 0.0
      %v615 = vmax.f32 %v583, 0.0
      %v616 = vmax.f32 %v584, 0.0
      %v617 = vmax.f32 %v585, 0.0
      %v618 = vmax.f32 %v586, 0.0
      %v619 = vmax.f32 %v587, 0.0
      %v620 = vmax.f32 %v588, 0.0
      %v621 = vmax.f32 %v589, 0.0
      %v622 = vmax.f32 %v590, 0.0
      %v623 = vmax.f32 %v591, 0.0
      %v624 = vmax.f32 %v592, 0.0
      %v625 = vadd.f32 %v419, %v593
      %v626 = vadd.f32 %v420, %v594
      %v627 = vadd.f32 %v421, %v595
      %v628 = vadd.f32 %v422, %v596
      %v629 = vadd.f32 %v423, %v597
      %v630 = vadd.f32 %v424, %v598
      %v631 = vadd.f32 %v425, %v599
      %v632 = vadd.f32 %v426, %v600
      %v633 = vadd.f32 %v427, %v601
      %v634 = vadd.f32 %v428, %v602
      %v635 = vadd.f32 %v429, %v603
      %v636 = vadd.f32 %v430, %v604
      %v637 = vadd.f32 %v431, %v605
      %v638 = vadd.f32 %v432, %v606
      %v639 = vadd.f32 %v433, %v607
      %v640 = vadd.f32 %v434, %v608
      %v641 = vadd.f32 %v435, %v609
      %v642 = vadd.f32 %v436, %v610
      %v643 = vadd.f32 %v437, %v611
      %v644 = vadd.f32 %v438, %v612
      %v645 = vadd.f32 %v439, %v613
      %v646 = vadd.f32 %v440, %v614
      %v647 = vadd.f32 %v441, %v615
      %v648 = vadd.f32 %v442, %v616
      %v649 = vadd.f32 %v443, %v617
      %v650 = vadd.f32 %v444, %v618
      %v651 = vadd.f32 %v445, %v619
      %v652 = vadd.f32 %v446, %v620
      %v653 = vadd.f32 %v447, %v621
      %v654 = vadd.f32 %v448, %v622
      %v655 = vadd.f32 %v449, %v623
      %v656 = vadd.f32 %v450, %v624
      %657 = vst [vmem:[%s275] sm:$0xff] %v625
      %658 = vst [vmem:[%s275 + $0x8] sm:$0xff] %v626
      %659 = vst [vmem:[%s275 + $0x10] sm:$0xff] %v627
      %660 = vst [vmem:[%s275 + $0x18] sm:$0xff] %v628
      %661 = vst [vmem:[%s275 + $0x20] sm:$0xff] %v629
      %662 = vst [vmem:[%s275 + $0x28] sm:$0xff] %v630
      %663 = vst [vmem:[%s275 + $0x30] sm:$0xff] %v631
      %664 = vst [vmem:[%s275 + $0x38] sm:$0xff] %v632
      %665 = vst [vmem:[%s275 + $0x40] sm:$0xff] %v633
      %666 = vst [vmem:[%s275 + $0x48] sm:$0xff] %v634
      %667 = vst [vmem:[%s275 + $0x50] sm:$0xff] %v635
      %668 = vst [vmem:[%s275 + $0x58] sm:$0xff] %v636
      %669 = vst [vmem:[%s275 + $0x60] sm:$0xff] %v637
      %670 = vst [vmem:[%s275 + $0x68] sm:$0xff] %v638
      %671 = vst [vmem:[%s275 + $0x70] sm:$0xff] %v639
      %672 = vst [vmem:[%s275 + $0x78] sm:$0xff] %v640
      %673 = vst [vmem:[%s275 + $0x80] sm:$0xff] %v641
      %674 = vst [vmem:[%s275 + $0x88] sm:$0xff] %v642
      %675 = vst [vmem:[%s275 + $0x90] sm:$0xff] %v643
      %676 = vst [vmem:[%s275 + $0x98] sm:$0xff] %v644
      %677 = vst [vmem:[%s275 + $0xa0] sm:$0xff] %v645
      %678 = vst [vmem:[%s275 + $0xa8] sm:$0xff] %v646
      %679 = vst [vmem:[%s275 + $0xb0] sm:$0xff] %v647
      %680 = vst [vmem:[%s275 + $0xb8] sm:$0xff] %v648
      %681 = vst [vmem:[%s275 + $0xc0] sm:$0xff] %v649
      %682 = vst [vmem:[%s275 + $0xc8] sm:$0xff] %v650
      %683 = vst [vmem:[%s275 + $0xd0] sm:$0xff] %v651
      %684 = vst [vmem:[%s275 + $0xd8] sm:$0xff] %v652
      %685 = vst [vmem:[%s275 + $0xe0] sm:$0xff] %v653
      %686 = vst [vmem:[%s275 + $0xe8] sm:$0xff] %v654
      %687 = vst [vmem:[%s275 + $0xf0] sm:$0xff] %v655
      %688 = vst [vmem:[%s275 + $0xf8] sm:$0xff] %v656
      %s689 = smul.u32 32, %s17
      %p690 = scmp.lt.s32.totalorder %s689, 63
      %s691 = scalar_select %p690, %s689, 63
      %s692 = smul.addr %s691, 8
      %s693 = scalar_lea.vmem %s6, %s692
      // Predicated region
      $region45: #{bottleneck_forward.7} parent=43 // pred_check
        %p694 = pneg %p171
      $region46: #{bottleneck_forward.7} parent=43 // pred_check_branch
        %696 = sbr.rel (%p694) target = $region48
      $region47: #{bottleneck_forward.7} parent=43 // pred_region
        %s697 = smul.u32 32, %s17
      $region48: #{bottleneck_forward.7} parent=43 // pred_fallthru
        _
    $region44: #{bottleneck_forward.7} parent=5 // pred_fallthru
      _
    %p698 = scmp.le.s32.totalorder 2, %s12
    // Predicated region
    $region49: #{bottleneck_forward.7} parent=5 // pred_check
      %p699 = pneg %p698
    $region50: #{bottleneck_forward.7} parent=5 // pred_check_branch
      %701 = sbr.rel (%p699) target = $region52
    $region51: #{bottleneck_forward.7} parent=5 // pred_region
      %s702 = ssub.s32 %s12, 2
      // Predicated region
      $region53: #{bottleneck_forward.7} parent=51 // pred_check
        %p703 = pneg %p177
      $region54: #{bottleneck_forward.7} parent=51 // pred_check_branch
        %705 = sbr.rel (%p703) target = $region56
      $region55: #{bottleneck_forward.7} parent=51 // pred_region
        %s706 = smul.u32 32, %s18
        %p707 = scmp.lt.s32.totalorder %s706, 63
        %s708 = scalar_select %p707, %s706, 63
        %s709 = smul.addr %s708, 8
        %s710 = scalar_lea.vmem %s6, %s709
      $region56: #{bottleneck_forward.7} parent=51 // pred_fallthru
        _
    $region52: #{bottleneck_forward.7} parent=5 // pred_fallthru
      _
  $region6: #{bottleneck_forward.7} parent=0 // loop_footer
    %s16 = sadd.s32 1, %s12
  $region7: #{bottleneck_forward.7} parent=0 // loop_footer_branch
    %11 = sbr.rel target = $region3
  $region8: #{bottleneck_forward.7} parent=0 // loop_exit
    _

// kernel: bottleneck_forward.4
$region0: #{bottleneck_forward.4}
  #allocation0 [shape = 'u32[]', space=smem, size = 0x4, offset = 0x4, fixed_abs, tag = 'smem constant byte address 0x4 - core index']
  #allocation1 [shape = 'u32[144,128]{1,0:T(1,128)}', space=vmem, size = 0x12000, scoped, tag = 'internal scratch']
  %s0 = inlined_call_operand.vmem [shape: bf16[512,128], index: 0, kind: input, shape index: {}]
  %s1 = inlined_call_operand.vmem [shape: bf16[128,128], index: 1, kind: input, shape index: {}]
  %s2 = inlined_call_operand.vmem [shape: bf16[128,128], index: 2, kind: input, shape index: {}]
  %s3 = inlined_call_operand.vmem [shape: bf16[512,128], index: 3, kind: output, shape index: {0}]
  %s4 = inlined_call_operand.vmem [shape: bf16[512,128], index: 4, kind: output, shape index: {1}]
  %s5 = inlined_call_operand.vmem [shape: f32[16,128], index: 5, kind: output, shape index: {2}]
  %s6 = inlined_call_operand.vmem [shape: f32[16,128], index: 6, kind: output, shape index: {3}]
  %7 = xla_tuple %s3, %s4, %s5, %s6
  %s8 = sld [smem:[#allocation0]]
  $region69: #{bottleneck_forward.4} parent=0
    _
  %s10 = ssub.s32 1, %s8
  %s11 = scalar_select 0, %s10, %s8
  loop: start=0, step=1, limit=4
  $region2: #{bottleneck_forward.4} parent=0 // loop_pre_header
    _
  $region3: #{bottleneck_forward.4} parent=0 // loop_header
    %s13 = sphi 0, %s17
    %p14 = scmp.ge.s32.totalorder %s13, 4
    %s23 = sphi 0, %s25
    %s26 = sphi 0, %s23
    %s27 = sphi 0, %s26
    %s43 = sphi 0, %s27
    %s47 = sphi 0, %s47
    %s49 = sphi 0, %s47
    %s50 = sphi 0, %s49
    %s64 = sphi 0, %s50
    %s68 = sphi 0, %s68
    %s70 = sphi 0, %s68
    %s71 = sphi 0, %s70
    %s85 = sphi 0, %s71
    %s91 = sphi 0, %s93
    %s94 = sphi 0, %s91
    %s95 = sphi 0, %s94
    %s111 = sphi 0, %s95
    %s117 = sphi 0, %s119
    %s120 = sphi 0, %s117
    %s121 = sphi 0, %s120
    %s137 = sphi 0, %s121
    %s143 = sphi 0, %s145
    %s146 = sphi 0, %s143
    %s147 = sphi 0, %s146
    %s163 = sphi 0, %s147
    %s169 = sphi 0, %s171
    %s172 = sphi 0, %s169
    %s173 = sphi 0, %s172
    %s189 = sphi 0, %s173
  $region4: #{bottleneck_forward.4} parent=0 // loop_header_branch
    %16 = sbr.rel (%p14) target = $region8
  $region5: #{bottleneck_forward.4} parent=0 // loop_body
    %s18 = ssub.s32 %s13, 1
    %s19 = ssub.s32 %s13, 2
    %s20 = sadd.s32 %s13, 1
    %s21 = ssub.s32 %s13, %s20
    %p22 = scmp.eq.s32.totalorder %s21, 0
    %s24 = sadd.s32 %s23, 1
    %s25 = scalar_select %p22, %s23, %s24
    %p28 = pneg %p22
    %p29 = scmp.eq.s32.totalorder %s13, 1
    %p30 = por %p28, %p29
    %p31 = scmp.ne.s32.totalorder %s23, %s26
    %p32 = scmp.eq.s32.totalorder %s13, 0
    %p33 = por %p31, %p32
    %p34 = scmp.ne.s32.totalorder %s23, %s26
    %p35 = scmp.eq.s32.totalorder %s18, 1
    %p36 = por %p34, %p35
    %p37 = scmp.ne.s32.totalorder %s26, %s27
    %p38 = scmp.eq.s32.totalorder %s18, 0
    %p39 = por %p37, %p38
    %p40 = scmp.ne.s32.totalorder %s26, %s27
    %p41 = scmp.eq.s32.totalorder %s19, 1
    %p42 = por %p40, %p41
    %p44 = scmp.ne.s32.totalorder %s27, %s43
    %p45 = scmp.eq.s32.totalorder %s19, 0
    %p46 = por %p44, %p45
    %s48 = sadd.s32 %s47, 1
    %p51 = scmp.eq.s32.totalorder %s13, 1
    %p52 = scmp.ne.s32.totalorder %s47, %s49
    %p53 = scmp.eq.s32.totalorder %s13, 0
    %p54 = por %p52, %p53
    %p55 = scmp.ne.s32.totalorder %s47, %s49
    %p56 = scmp.eq.s32.totalorder %s18, 1
    %p57 = por %p55, %p56
    %p58 = scmp.ne.s32.totalorder %s49, %s50
    %p59 = scmp.eq.s32.totalorder %s18, 0
    %p60 = por %p58, %p59
    %p61 = scmp.ne.s32.totalorder %s49, %s50
    %p62 = scmp.eq.s32.totalorder %s19, 1
    %p63 = por %p61, %p62
    %p65 = scmp.ne.s32.totalorder %s50, %s64
    %p66 = scmp.eq.s32.totalorder %s19, 0
    %p67 = por %p65, %p66
    %s69 = sadd.s32 %s68, 1
    %p72 = scmp.eq.s32.totalorder %s13, 1
    %p73 = scmp.ne.s32.totalorder %s68, %s70
    %p74 = scmp.eq.s32.totalorder %s13, 0
    %p75 = por %p73, %p74
    %p76 = scmp.ne.s32.totalorder %s68, %s70
    %p77 = scmp.eq.s32.totalorder %s18, 1
    %p78 = por %p76, %p77
    %p79 = scmp.ne.s32.totalorder %s70, %s71
    %p80 = scmp.eq.s32.totalorder %s18, 0
    %p81 = por %p79, %p80
    %p82 = scmp.ne.s32.totalorder %s70, %s71
    %p83 = scmp.eq.s32.totalorder %s19, 1
    %p84 = por %p82, %p83
    %p86 = scmp.ne.s32.totalorder %s71, %s85
    %p87 = scmp.eq.s32.totalorder %s19, 0
    %p88 = por %p86, %p87
    %s89 = ssub.s32 %s13, %s20
    %p90 = scmp.eq.s32.totalorder %s89, 0
    %s92 = sadd.s32 %s91, 1
    %s93 = scalar_select %p90, %s91, %s92
    %p96 = pneg %p90
    %p97 = scmp.eq.s32.totalorder %s13, 1
    %p98 = por %p96, %p97
    %p99 = scmp.ne.s32.totalorder %s91, %s94
    %p100 = scmp.eq.s32.totalorder %s13, 0
    %p101 = por %p99, %p100
    %p102 = scmp.ne.s32.totalorder %s91, %s94
    %p103 = scmp.eq.s32.totalorder %s18, 1
    %p104 = por %p102, %p103
    %p105 = scmp.ne.s32.totalorder %s94, %s95
    %p106 = scmp.eq.s32.totalorder %s18, 0
    %p107 = por %p105, %p106
    %p108 = scmp.ne.s32.totalorder %s94, %s95
    %p109 = scmp.eq.s32.totalorder %s19, 1
    %p110 = por %p108, %p109
    %p112 = scmp.ne.s32.totalorder %s95, %s111
    %p113 = scmp.eq.s32.totalorder %s19, 0
    %p114 = por %p112, %p113
    %s115 = ssub.s32 %s13, %s20
    %p116 = scmp.eq.s32.totalorder %s115, 0
    %s118 = sadd.s32 %s117, 1
    %s119 = scalar_select %p116, %s117, %s118
    %p122 = pneg %p116
    %p123 = scmp.eq.s32.totalorder %s13, 1
    %p124 = por %p122, %p123
    %p125 = scmp.ne.s32.totalorder %s117, %s120
    %p126 = scmp.eq.s32.totalorder %s13, 0
    %p127 = por %p125, %p126
    %p128 = scmp.ne.s32.totalorder %s117, %s120
    %p129 = scmp.eq.s32.totalorder %s18, 1
    %p130 = por %p128, %p129
    %p131 = scmp.ne.s32.totalorder %s120, %s121
    %p132 = scmp.eq.s32.totalorder %s18, 0
    %p133 = por %p131, %p132
    %p134 = scmp.ne.s32.totalorder %s120, %s121
    %p135 = scmp.eq.s32.totalorder %s19, 1
    %p136 = por %p134, %p135
    %p138 = scmp.ne.s32.totalorder %s121, %s137
    %p139 = scmp.eq.s32.totalorder %s19, 0
    %p140 = por %p138, %p139
    %s141 = ssub.s32 %s13, %s20
    %p142 = scmp.eq.s32.totalorder %s141, 0
    %s144 = sadd.s32 %s143, 1
    %s145 = scalar_select %p142, %s143, %s144
    %p148 = pneg %p142
    %p149 = scmp.eq.s32.totalorder %s13, 1
    %p150 = por %p148, %p149
    %p151 = scmp.ne.s32.totalorder %s143, %s146
    %p152 = scmp.eq.s32.totalorder %s13, 0
    %p153 = por %p151, %p152
    %p154 = scmp.ne.s32.totalorder %s143, %s146
    %p155 = scmp.eq.s32.totalorder %s18, 1
    %p156 = por %p154, %p155
    %p157 = scmp.ne.s32.totalorder %s146, %s147
    %p158 = scmp.eq.s32.totalorder %s18, 0
    %p159 = por %p157, %p158
    %p160 = scmp.ne.s32.totalorder %s146, %s147
    %p161 = scmp.eq.s32.totalorder %s19, 1
    %p162 = por %p160, %p161
    %p164 = scmp.ne.s32.totalorder %s147, %s163
    %p165 = scmp.eq.s32.totalorder %s19, 0
    %p166 = por %p164, %p165
    %s167 = ssub.s32 %s13, %s20
    %p168 = scmp.eq.s32.totalorder %s167, 0
    %s170 = sadd.s32 %s169, 1
    %s171 = scalar_select %p168, %s169, %s170
    %p174 = pneg %p168
    %p175 = scmp.eq.s32.totalorder %s13, 1
    %p176 = por %p174, %p175
    %p177 = scmp.ne.s32.totalorder %s169, %s172
    %p178 = scmp.eq.s32.totalorder %s13, 0
    %p179 = por %p177, %p178
    %p180 = scmp.ne.s32.totalorder %s169, %s172
    %p181 = scmp.eq.s32.totalorder %s18, 1
    %p182 = por %p180, %p181
    %p183 = scmp.ne.s32.totalorder %s172, %s173
    %p184 = scmp.eq.s32.totalorder %s18, 0
    %p185 = por %p183, %p184
    %p186 = scmp.ne.s32.totalorder %s172, %s173
    %p187 = scmp.eq.s32.totalorder %s19, 1
    %p188 = por %p186, %p187
    %p190 = scmp.ne.s32.totalorder %s173, %s189
    %p191 = scmp.eq.s32.totalorder %s19, 0
    %p192 = por %p190, %p191
    %p193 = scmp.le.s32.totalorder 1, %s13
    %p194 = scmp.lt.s32.totalorder %s13, 3
    %p195 = pnand %p193, %p194
    %p196 = pneg %p195
    // Predicated region
    $region9: #{bottleneck_forward.4} parent=5 // pred_check
      _
    $region10: #{bottleneck_forward.4} parent=5 // pred_check_branch
      %198 = sbr.rel (%p195) target = $region12
    $region11: #{bottleneck_forward.4} parent=5 // pred_region
      %s199 = ssub.s32 %s13, 1
      // Predicated region
      $region13: #{bottleneck_forward.4} parent=11 // pred_check
        %p200 = pneg %p60
      $region14: #{bottleneck_forward.4} parent=11 // pred_check_branch
        %202 = sbr.rel (%p200) target = $region16
      $region15: #{bottleneck_forward.4} parent=11 // pred_region
        _
      $region16: #{bottleneck_forward.4} parent=11 // pred_fallthru
        _
      // Predicated region
      $region17: #{bottleneck_forward.4} parent=11 // pred_check
        %p203 = pneg %p81
      $region18: #{bottleneck_forward.4} parent=11 // pred_check_branch
        %205 = sbr.rel (%p203) target = $region20
      $region19: #{bottleneck_forward.4} parent=11 // pred_region
        _
      $region20: #{bottleneck_forward.4} parent=11 // pred_fallthru
        _
    $region12: #{bottleneck_forward.4} parent=5 // pred_fallthru
      _
    %p206 = scmp.lt.s32.totalorder %s13, 2
    // Predicated region
    $region21: #{bottleneck_forward.4} parent=5 // pred_check
      %p207 = pneg %p206
    $region22: #{bottleneck_forward.4} parent=5 // pred_check_branch
      %209 = sbr.rel (%p207) target = $region24
    $region23: #{bottleneck_forward.4} parent=5 // pred_region
      // Predicated region
      $region25: #{bottleneck_forward.4} parent=23 // pred_check
        %p210 = pneg %p33
      $region26: #{bottleneck_forward.4} parent=23 // pred_check_branch
        %212 = sbr.rel (%p210) target = $region28
      $region27: #{bottleneck_forward.4} parent=23 // pred_region
        %s213 = smul.u32 32, %s13
        %p214 = scmp.lt.s32.totalorder %s213, 63
        %s215 = scalar_select %p214, %s213, 63
        %s216 = smul.addr %s215, 4
        %s217 = scalar_lea.vmem %s0, %s216
        %s218 = smul.u32 32, %s13
      $region28: #{bottleneck_forward.4} parent=23 // pred_fallthru
        _
    $region24: #{bottleneck_forward.4} parent=5 // pred_fallthru
      _
    %p219 = scmp.le.s32.totalorder 1, %s13
    %p220 = scmp.lt.s32.totalorder %s13, 3
    %p221 = pnand %p219, %p220
    %p222 = pneg %p221
    // Predicated region
    $region29: #{bottleneck_forward.4} parent=5 // pred_check
      _
    $region30: #{bottleneck_forward.4} parent=5 // pred_check_branch
      %224 = sbr.rel (%p221) target = $region32
    $region31: #{bottleneck_forward.4} parent=5 // pred_region
      %s225 = ssub.s32 %s13, 1
      %s226 = smul.u32 32, %s18
      %p227 = scmp.lt.s32.totalorder %s226, 63
      %s228 = scalar_select %p227, %s226, 63
      %s229 = smul.addr %s228, 4
      %s230 = scalar_lea.vmem %s0, %s229
      %p231 = pneg %p39
      %p232 = pneg %p36
      %p233 = pneg %p60
      %p234 = pneg %p57
      %p235 = pneg %p81
      %p236 = pneg %p78
      %p237 = pneg %p107
      %p238 = pneg %p104
      %s239 = smul.u32 32, %s18
      %p240 = scmp.lt.s32.totalorder %s239, 63
      %s241 = scalar_select %p240, %s239, 63
      %s242 = smul.addr %s241, 4
      %s243 = scalar_lea.vmem %s3, %s242
      %p244 = pneg %p133
      %p245 = pneg %p130
      %s246 = smul.u32 32, %s18
      %p247 = scmp.lt.s32.totalorder %s246, 63
      %s248 = scalar_select %p247, %s246, 63
      %s249 = smul.addr %s248, 4
      %s250 = scalar_lea.vmem %s4, %s249
      %p251 = pneg %p159
      %p252 = pneg %p156
      %p253 = scmp.lt.s32.totalorder %s18, 1
      %s254 = scalar_select %p253, %s18, 1
      %s255 = smul.addr %s254, 8
      %s256 = scalar_lea.vmem %s5, %s255
      %p257 = pneg %p185
      %p258 = pneg %p182
      %p259 = scmp.lt.s32.totalorder %s18, 1
      %s260 = scalar_select %p259, %s18, 1
      %s261 = smul.addr %s260, 8
      %s262 = scalar_lea.vmem %s6, %s261
      %s263 = smul.u32 32, %s18
      %p264 = scmp.lt.s32.totalorder %s263, 63
      %s265 = scalar_select %p264, %s263, 63
      %s266 = smul.addr %s265, 4
      %s267 = scalar_lea.vmem %s0, %s266
      %s268 = smul.u32 32, %s18
      %s269 = smul.u32 32, %s18
      %p270 = scmp.lt.s32.totalorder %s269, 63
      %s271 = scalar_select %p270, %s269, 63
      %s272 = smul.addr %s271, 4
      %s273 = scalar_lea.vmem %s3, %s272
      %s274 = smul.u32 32, %s18
      %s275 = smul.u32 32, %s18
      %p276 = scmp.lt.s32.totalorder %s275, 63
      %s277 = scalar_select %p276, %s275, 63
      %s278 = smul.addr %s277, 4
      %s279 = scalar_lea.vmem %s4, %s278
      %s280 = smul.u32 32, %s18
      %p281 = scmp.lt.s32.totalorder %s18, 1
      %s282 = scalar_select %p281, %s18, 1
      %s283 = smul.addr %s282, 8
      %s284 = scalar_lea.vmem %s5, %s283
      %p285 = scmp.lt.s32.totalorder %s18, 1
      %s286 = scalar_select %p285, %s18, 1
      %s287 = smul.addr %s286, 8
      %s288 = scalar_lea.vmem %s6, %s287
      %v290 = vld [vmem:[%s267] sm:$0xf]
      %v291 = vld [vmem:[%s267 + $0x4] sm:$0xf]
      %v292 = vld [vmem:[%s267 + $0x8] sm:$0xf]
      %v293 = vld [vmem:[%s267 + $0xc] sm:$0xf]
      %v294 = vld [vmem:[%s267 + $0x10] sm:$0xf]
      %v295 = vld [vmem:[%s267 + $0x14] sm:$0xf]
      %v296 = vld [vmem:[%s267 + $0x18] sm:$0xf]
      %v297 = vld [vmem:[%s267 + $0x1c] sm:$0xf]
      %v298 = vld [vmem:[%s267 + $0x20] sm:$0xf]
      %v299 = vld [vmem:[%s267 + $0x24] sm:$0xf]
      %v300 = vld [vmem:[%s267 + $0x28] sm:$0xf]
      %v301 = vld [vmem:[%s267 + $0x2c] sm:$0xf]
      %v302 = vld [vmem:[%s267 + $0x30] sm:$0xf]
      %v303 = vld [vmem:[%s267 + $0x34] sm:$0xf]
      %v304 = vld [vmem:[%s267 + $0x38] sm:$0xf]
      %v305 = vld [vmem:[%s267 + $0x3c] sm:$0xf]
      %v306 = vld [vmem:[%s267 + $0x40] sm:$0xf]
      %v307 = vld [vmem:[%s267 + $0x44] sm:$0xf]
      %v308 = vld [vmem:[%s267 + $0x48] sm:$0xf]
      %v309 = vld [vmem:[%s267 + $0x4c] sm:$0xf]
      %v310 = vld [vmem:[%s267 + $0x50] sm:$0xf]
      %v311 = vld [vmem:[%s267 + $0x54] sm:$0xf]
      %v312 = vld [vmem:[%s267 + $0x58] sm:$0xf]
      %v313 = vld [vmem:[%s267 + $0x5c] sm:$0xf]
      %v314 = vld [vmem:[%s267 + $0x60] sm:$0xf]
      %v315 = vld [vmem:[%s267 + $0x64] sm:$0xf]
      %v316 = vld [vmem:[%s267 + $0x68] sm:$0xf]
      %v317 = vld [vmem:[%s267 + $0x6c] sm:$0xf]
      %v318 = vld [vmem:[%s267 + $0x70] sm:$0xf]
      %v319 = vld [vmem:[%s267 + $0x74] sm:$0xf]
      %v320 = vld [vmem:[%s267 + $0x78] sm:$0xf]
      %v321 = vld [vmem:[%s267 + $0x7c] sm:$0xf]
      %v322 = vld [vmem:[%s1] sm:$0xf]
      %v323 = vld [vmem:[%s1 + $0x4] sm:$0xf]
      %v324 = vld [vmem:[%s1 + $0x8] sm:$0xf]
      %v325 = vld [vmem:[%s1 + $0xc] sm:$0xf]
      %v326 = vld [vmem:[%s1 + $0x10] sm:$0xf]
      %v327 = vld [vmem:[%s1 + $0x14] sm:$0xf]
      %v328 = vld [vmem:[%s1 + $0x18] sm:$0xf]
      %v329 = vld [vmem:[%s1 + $0x1c] sm:$0xf]
      %v330 = vld [vmem:[%s1 + $0x20] sm:$0xf]
      %v331 = vld [vmem:[%s1 + $0x24] sm:$0xf]
      %v332 = vld [vmem:[%s1 + $0x28] sm:$0xf]
      %v333 = vld [vmem:[%s1 + $0x2c] sm:$0xf]
      %v334 = vld [vmem:[%s1 + $0x30] sm:$0xf]
      %v335 = vld [vmem:[%s1 + $0x34] sm:$0xf]
      %v336 = vld [vmem:[%s1 + $0x38] sm:$0xf]
      %v337 = vld [vmem:[%s1 + $0x3c] sm:$0xf]
      %v370 = vunpack.c.l.b16 %v290
      %v371 = vunpack.c.l.b16 %v291
      %v372 = vunpack.c.l.b16 %v292
      %v373 = vunpack.c.l.b16 %v293
      %v374 = vunpack.c.l.b16 %v294
      %v375 = vunpack.c.l.b16 %v295
      %v376 = vunpack.c.l.b16 %v296
      %v377 = vunpack.c.l.b16 %v297
      %v378 = vunpack.c.l.b16 %v298
      %v379 = vunpack.c.l.b16 %v299
      %v380 = vunpack.c.l.b16 %v300
      %v381 = vunpack.c.l.b16 %v301
      %v382 = vunpack.c.l.b16 %v302
      %v383 = vunpack.c.l.b16 %v303
      %v384 = vunpack.c.l.b16 %v304
      %v385 = vunpack.c.l.b16 %v305
      %v386 = vunpack.c.l.b16 %v306
      %v387 = vunpack.c.l.b16 %v307
      %v388 = vunpack.c.l.b16 %v308
      %v389 = vunpack.c.l.b16 %v309
      %v390 = vunpack.c.l.b16 %v310
      %v391 = vunpack.c.l.b16 %v311
      %v392 = vunpack.c.l.b16 %v312
      %v393 = vunpack.c.l.b16 %v313
      %v394 = vunpack.c.l.b16 %v314
      %v395 = vunpack.c.l.b16 %v315
      %v396 = vunpack.c.l.b16 %v316
      %v397 = vunpack.c.l.b16 %v317
      %v398 = vunpack.c.l.b16 %v318
      %v399 = vunpack.c.l.b16 %v319
      %v400 = vunpack.c.l.b16 %v320
      %v401 = vunpack.c.l.b16 %v321
      %v402 = vpack.c.b16 %v371, %v370
      %v403 = vpack.c.b16 %v373, %v372
      %v404 = vpack.c.b16 %v375, %v374
      %v405 = vpack.c.b16 %v377, %v376
      %v406 = vpack.c.b16 %v379, %v378
      %v407 = vpack.c.b16 %v381, %v380
      %v408 = vpack.c.b16 %v383, %v382
      %v409 = vpack.c.b16 %v385, %v384
      %v410 = vpack.c.b16 %v387, %v386
      %v411 = vpack.c.b16 %v389, %v388
      %v412 = vpack.c.b16 %v391, %v390
      %v413 = vpack.c.b16 %v393, %v392
      %v414 = vpack.c.b16 %v395, %v394
      %v415 = vpack.c.b16 %v397, %v396
      %v416 = vpack.c.b16 %v399, %v398
      %v417 = vpack.c.b16 %v401, %v400
      %v450 = vunpack.c.l.b16 %v322
      %v451 = vunpack.c.l.b16 %v323
      %v452 = vunpack.c.l.b16 %v324
      %v453 = vunpack.c.l.b16 %v325
      %v454 = vunpack.c.l.b16 %v326
      %v455 = vunpack.c.l.b16 %v327
      %v456 = vunpack.c.l.b16 %v328
      %v457 = vunpack.c.l.b16 %v329
      %v458 = vunpack.c.l.b16 %v330
      %v459 = vunpack.c.l.b16 %v331
      %v460 = vunpack.c.l.b16 %v332
      %v461 = vunpack.c.l.b16 %v333
      %v462 = vunpack.c.l.b16 %v334
      %v463 = vunpack.c.l.b16 %v335
      %v464 = vunpack.c.l.b16 %v336
      %v465 = vunpack.c.l.b16 %v337
      %v466 = vpack.c.b16 %v451, %v450
      %v467 = vpack.c.b16 %v453, %v452
      %v468 = vpack.c.b16 %v455, %v454
      %v469 = vpack.c.b16 %v457, %v456
      %v470 = vpack.c.b16 %v459, %v458
      %v471 = vpack.c.b16 %v461, %v460
      %v472 = vpack.c.b16 %v463, %v462
      %v473 = vpack.c.b16 %v465, %v464
      %482 = vmatprep.subr.bf16.mxu0 0
      %483 = vmatpush1.bf16.msra.mxu0 %v473
      %484 = vmatprep.subr.bf16.mxu0 0
      %485 = vmatpush1.bf16.msra.mxu0 %v472
      %486 = vmatprep.subr.bf16.mxu0 0
      %487 = vmatpush1.bf16.msra.mxu0 %v471
      %488 = vmatprep.subr.bf16.mxu0 0
      %489 = vmatpush1.bf16.msra.mxu0 %v470
      %490 = vmatprep.subr.bf16.mxu0 0
      %491 = vmatpush1.bf16.msra.mxu0 %v469
      %492 = vmatprep.subr.bf16.mxu0 0
      %493 = vmatpush1.bf16.msra.mxu0 %v468
      %494 = vmatprep.subr.bf16.mxu0 0
      %495 = vmatpush1.bf16.msra.mxu0 %v467
      %496 = vmatprep.subr.bf16.mxu0 0
      %497 = vmatpush1.bf16.msra.mxu0 %v466
      %498 = vmatprep.subr.bf16.mxu0 0
      %499 = vmatpush2.bf16.msra.mxu0 0
      %500 = vmatprep.subr.bf16.mxu0 0
      %501 = vmatpush2.bf16.msra.mxu0 0
      %502 = vmatprep.subr.bf16.mxu0 0
      %503 = vmatpush2.bf16.msra.mxu0 0
      %504 = vmatprep.subr.bf16.mxu0 0
      %505 = vmatpush2.bf16.msra.mxu0 0
      %506 = vmatprep.subr.bf16.mxu0 0
      %507 = vmatpush2.bf16.msra.mxu0 0
      %508 = vmatprep.subr.bf16.mxu0 0
      %509 = vmatpush2.bf16.msra.mxu0 0
      %510 = vmatprep.subr.bf16.mxu0 0
      %511 = vmatpush2.bf16.msra.mxu0 0
      %512 = vmatprep.subr.bf16.mxu0 0
      %513 = vmatpush2.bf16.msra.mxu0 0
      %514 = vmatprep.mubr.bf16.mxu0 0
      %515 = vmatmul.mubr.bf16.gmra.mxu0 %v402
      %v516 = vpop.f32.mrf.mxu0
      %v517 = vadd.f32 0.0, %v516
      %v518 = vpop.f32.mrf.mxu0
      %v519 = vpop.f32.mrf.mxu0
      %v520 = vadd.f32 0.0, %v519
      %v521 = vpop.f32.mrf.mxu0
      %522 = vmatprep.mubr.bf16.mxu0 0
      %523 = vmatmul.mubr.bf16.gmra.mxu0 %v403
      %v524 = vpop.f32.mrf.mxu0
      %v525 = vadd.f32 0.0, %v524
      %v526 = vpop.f32.mrf.mxu0
      %v527 = vpop.f32.mrf.mxu0
      %v528 = vadd.f32 0.0, %v527
      %v529 = vpop.f32.mrf.mxu0
      %530 = vmatprep.mubr.bf16.mxu0 0
      %531 = vmatmul.mubr.bf16.gmra.mxu0 %v404
      %v532 = vpop.f32.mrf.mxu0
      %v533 = vadd.f32 0.0, %v532
      %v534 = vpop.f32.mrf.mxu0
      %v535 = vpop.f32.mrf.mxu0
      %v536 = vadd.f32 0.0, %v535
      %v537 = vpop.f32.mrf.mxu0
      %538 = vmatprep.mubr.bf16.mxu0 0
      %539 = vmatmul.mubr.bf16.gmra.mxu0 %v405
      %v540 = vpop.f32.mrf.mxu0
      %v541 = vadd.f32 0.0, %v540
      %v542 = vpop.f32.mrf.mxu0
      %v543 = vpop.f32.mrf.mxu0
      %v544 = vadd.f32 0.0, %v543
      %v545 = vpop.f32.mrf.mxu0
      %546 = vmatprep.mubr.bf16.mxu0 0
      %547 = vmatmul.mubr.bf16.gmra.mxu0 %v406
      %v548 = vpop.f32.mrf.mxu0
      %v549 = vadd.f32 0.0, %v548
      %v550 = vpop.f32.mrf.mxu0
      %v551 = vpop.f32.mrf.mxu0
      %v552 = vadd.f32 0.0, %v551
      %v553 = vpop.f32.mrf.mxu0
      %554 = vmatprep.mubr.bf16.mxu0 0
      %555 = vmatmul.mubr.bf16.gmra.mxu0 %v407
      %v556 = vpop.f32.mrf.mxu0
      %v557 = vadd.f32 0.0, %v556
      %v558 = vpop.f32.mrf.mxu0
      %v559 = vpop.f32.mrf.mxu0
      %v560 = vadd.f32 0.0, %v559
      %v561 = vpop.f32.mrf.mxu0
      %562 = vmatprep.mubr.bf16.mxu0 0
      %563 = vmatmul.mubr.bf16.gmra.mxu0 %v408
      %v564 = vpop.f32.mrf.mxu0
      %v565 = vadd.f32 0.0, %v564
      %v566 = vpop.f32.mrf.mxu0
      %v567 = vpop.f32.mrf.mxu0
      %v568 = vadd.f32 0.0, %v567
      %v569 = vpop.f32.mrf.mxu0
      %570 = vmatprep.mubr.bf16.mxu0 0
      %571 = vmatmul.mubr.bf16.gmra.mxu0 %v409
      %v572 = vpop.f32.mrf.mxu0
      %v573 = vadd.f32 0.0, %v572
      %v574 = vpop.f32.mrf.mxu0
      %v575 = vpop.f32.mrf.mxu0
      %v576 = vadd.f32 0.0, %v575
      %v577 = vpop.f32.mrf.mxu0
      %578 = vmatprep.mubr.bf16.mxu0 0
      %579 = vmatmul.mubr.bf16.gmra.mxu0 %v410
      %v580 = vpop.f32.mrf.mxu0
      %v581 = vadd.f32 0.0, %v580
      %v582 = vpop.f32.mrf.mxu0
      %v583 = vpop.f32.mrf.mxu0
      %v584 = vadd.f32 0.0, %v583
      %v585 = vpop.f32.mrf.mxu0
      %586 = vmatprep.mubr.bf16.mxu0 0
      %587 = vmatmul.mubr.bf16.gmra.mxu0 %v411
      %v588 = vpop.f32.mrf.mxu0
      %v589 = vadd.f32 0.0, %v588
      %v590 = vpop.f32.mrf.mxu0
      %v591 = vpop.f32.mrf.mxu0
      %v592 = vadd.f32 0.0, %v591
      %v593 = vpop.f32.mrf.mxu0
      %594 = vmatprep.mubr.bf16.mxu0 0
      %595 = vmatmul.mubr.bf16.gmra.mxu0 %v412
      %v596 = vpop.f32.mrf.mxu0
      %v597 = vadd.f32 0.0, %v596
      %v598 = vpop.f32.mrf.mxu0
      %v599 = vpop.f32.mrf.mxu0
      %v600 = vadd.f32 0.0, %v599
      %v601 = vpop.f32.mrf.mxu0
      %602 = vmatprep.mubr.bf16.mxu0 0
      %603 = vmatmul.mubr.bf16.gmra.mxu0 %v413
      %v604 = vpop.f32.mrf.mxu0
      %v605 = vadd.f32 0.0, %v604
      %v606 = vpop.f32.mrf.mxu0
      %v607 = vpop.f32.mrf.mxu0
      %v608 = vadd.f32 0.0, %v607
      %v609 = vpop.f32.mrf.mxu0
      %610 = vmatprep.mubr.bf16.mxu0 0
      %611 = vmatmul.mubr.bf16.gmra.mxu0 %v414
      %v612 = vpop.f32.mrf.mxu0
      %v613 = vadd.f32 0.0, %v612
      %v614 = vpop.f32.mrf.mxu0
      %v615 = vpop.f32.mrf.mxu0
      %v616 = vadd.f32 0.0, %v615
      %v617 = vpop.f32.mrf.mxu0
      %618 = vmatprep.mubr.bf16.mxu0 0
      %619 = vmatmul.mubr.bf16.gmra.mxu0 %v415
      %v620 = vpop.f32.mrf.mxu0
      %v621 = vadd.f32 0.0, %v620
      %v622 = vpop.f32.mrf.mxu0
      %v623 = vpop.f32.mrf.mxu0
      %v624 = vadd.f32 0.0, %v623
      %v625 = vpop.f32.mrf.mxu0
      %626 = vmatprep.mubr.bf16.mxu0 0
      %627 = vmatmul.mubr.bf16.gmra.mxu0 %v416
      %v628 = vpop.f32.mrf.mxu0
      %v629 = vadd.f32 0.0, %v628
      %v630 = vpop.f32.mrf.mxu0
      %v631 = vpop.f32.mrf.mxu0
      %v632 = vadd.f32 0.0, %v631
      %v633 = vpop.f32.mrf.mxu0
      %634 = vmatprep.mubr.bf16.mxu0 0
      %635 = vmatmul.mubr.bf16.gmra.mxu0 %v417
      %v636 = vpop.f32.mrf.mxu0
      %v637 = vadd.f32 0.0, %v636
      %v638 = vpop.f32.mrf.mxu0
      %v639 = vpop.f32.mrf.mxu0
      %v640 = vadd.f32 0.0, %v639
      %v641 = vpop.f32.mrf.mxu0
      %642 = vdwg.mxu0
      %v643 = vld [vmem:[%s2] sm:$0xf]
      %v644 = vld [vmem:[%s2 + $0x4] sm:$0xf]
      %v645 = vld [vmem:[%s2 + $0x8] sm:$0xf]
      %v646 = vld [vmem:[%s2 + $0xc] sm:$0xf]
      %v647 = vld [vmem:[%s2 + $0x10] sm:$0xf]
      %v648 = vld [vmem:[%s2 + $0x14] sm:$0xf]
      %v649 = vld [vmem:[%s2 + $0x18] sm:$0xf]
      %v650 = vld [vmem:[%s2 + $0x1c] sm:$0xf]
      %v651 = vld [vmem:[%s2 + $0x20] sm:$0xf]
      %v652 = vld [vmem:[%s2 + $0x24] sm:$0xf]
      %v653 = vld [vmem:[%s2 + $0x28] sm:$0xf]
      %v654 = vld [vmem:[%s2 + $0x2c] sm:$0xf]
      %v655 = vld [vmem:[%s2 + $0x30] sm:$0xf]
      %v656 = vld [vmem:[%s2 + $0x34] sm:$0xf]
      %v657 = vld [vmem:[%s2 + $0x38] sm:$0xf]
      %v658 = vld [vmem:[%s2 + $0x3c] sm:$0xf]
      %v675 = vunpack.c.l.b16 %v643
      %v676 = vunpack.c.l.b16 %v644
      %v677 = vunpack.c.l.b16 %v645
      %v678 = vunpack.c.l.b16 %v646
      %v679 = vunpack.c.l.b16 %v647
      %v680 = vunpack.c.l.b16 %v648
      %v681 = vunpack.c.l.b16 %v649
      %v682 = vunpack.c.l.b16 %v650
      %v683 = vunpack.c.l.b16 %v651
      %v684 = vunpack.c.l.b16 %v652
      %v685 = vunpack.c.l.b16 %v653
      %v686 = vunpack.c.l.b16 %v654
      %v687 = vunpack.c.l.b16 %v655
      %v688 = vunpack.c.l.b16 %v656
      %v689 = vunpack.c.l.b16 %v657
      %v690 = vunpack.c.l.b16 %v658
      %v691 = vpack.c.b16 %v676, %v675
      %v692 = vpack.c.b16 %v678, %v677
      %v693 = vpack.c.b16 %v680, %v679
      %v694 = vpack.c.b16 %v682, %v681
      %v695 = vpack.c.b16 %v684, %v683
      %v696 = vpack.c.b16 %v686, %v685
      %v697 = vpack.c.b16 %v688, %v687
      %v698 = vpack.c.b16 %v690, %v689
      %707 = vmatprep.subr.bf16.mxu0 0
      %708 = vmatpush1.bf16.msra.mxu0 %v698
      %709 = vmatprep.subr.bf16.mxu0 0
      %710 = vmatpush1.bf16.msra.mxu0 %v697
      %711 = vmatprep.subr.bf16.mxu0 0
      %712 = vmatpush1.bf16.msra.mxu0 %v696
      %713 = vmatprep.subr.bf16.mxu0 0
      %714 = vmatpush1.bf16.msra.mxu0 %v695
      %715 = vmatprep.subr.bf16.mxu0 0
      %716 = vmatpush1.bf16.msra.mxu0 %v694
      %717 = vmatprep.subr.bf16.mxu0 0
      %718 = vmatpush1.bf16.msra.mxu0 %v693
      %719 = vmatprep.subr.bf16.mxu0 0
      %720 = vmatpush1.bf16.msra.mxu0 %v692
      %721 = vmatprep.subr.bf16.mxu0 0
      %722 = vmatpush1.bf16.msra.mxu0 %v691
      %723 = vmatprep.subr.bf16.mxu0 0
      %724 = vmatpush2.bf16.msra.mxu0 0
      %725 = vmatprep.subr.bf16.mxu0 0
      %726 = vmatpush2.bf16.msra.mxu0 0
      %727 = vmatprep.subr.bf16.mxu0 0
      %728 = vmatpush2.bf16.msra.mxu0 0
      %729 = vmatprep.subr.bf16.mxu0 0
      %730 = vmatpush2.bf16.msra.mxu0 0
      %731 = vmatprep.subr.bf16.mxu0 0
      %732 = vmatpush2.bf16.msra.mxu0 0
      %733 = vmatprep.subr.bf16.mxu0 0
      %734 = vmatpush2.bf16.msra.mxu0 0
      %735 = vmatprep.subr.bf16.mxu0 0
      %736 = vmatpush2.bf16.msra.mxu0 0
      %737 = vmatprep.subr.bf16.mxu0 0
      %738 = vmatpush2.bf16.msra.mxu0 0
      %739 = vmatprep.mubr.bf16.mxu0 0
      %740 = vmatmul.mubr.bf16.gmra.mxu0 %v402
      %v741 = vpop.f32.mrf.mxu0
      %v742 = vadd.f32 0.0, %v741
      %v743 = vpop.f32.mrf.mxu0
      %v744 = vpop.f32.mrf.mxu0
      %v745 = vadd.f32 0.0, %v744
      %v746 = vpop.f32.mrf.mxu0
      %747 = vmatprep.mubr.bf16.mxu0 0
      %748 = vmatmul.mubr.bf16.gmra.mxu0 %v403
      %v749 = vpop.f32.mrf.mxu0
      %v750 = vadd.f32 0.0, %v749
      %v751 = vpop.f32.mrf.mxu0
      %v752 = vpop.f32.mrf.mxu0
      %v753 = vadd.f32 0.0, %v752
      %v754 = vpop.f32.mrf.mxu0
      %755 = vmatprep.mubr.bf16.mxu0 0
      %756 = vmatmul.mubr.bf16.gmra.mxu0 %v404
      %v757 = vpop.f32.mrf.mxu0
      %v758 = vadd.f32 0.0, %v757
      %v759 = vpop.f32.mrf.mxu0
      %v760 = vpop.f32.mrf.mxu0
      %v761 = vadd.f32 0.0, %v760
      %v762 = vpop.f32.mrf.mxu0
      %763 = vmatprep.mubr.bf16.mxu0 0
      %764 = vmatmul.mubr.bf16.gmra.mxu0 %v405
      %v765 = vpop.f32.mrf.mxu0
      %v766 = vadd.f32 0.0, %v765
      %v767 = vpop.f32.mrf.mxu0
      %v768 = vpop.f32.mrf.mxu0
      %v769 = vadd.f32 0.0, %v768
      %v770 = vpop.f32.mrf.mxu0
      %771 = vmatprep.mubr.bf16.mxu0 0
      %772 = vmatmul.mubr.bf16.gmra.mxu0 %v406
      %v773 = vpop.f32.mrf.mxu0
      %v774 = vadd.f32 0.0, %v773
      %v775 = vpop.f32.mrf.mxu0
      %v776 = vpop.f32.mrf.mxu0
      %v777 = vadd.f32 0.0, %v776
      %v778 = vpop.f32.mrf.mxu0
      %779 = vmatprep.mubr.bf16.mxu0 0
      %780 = vmatmul.mubr.bf16.gmra.mxu0 %v407
      %v781 = vpop.f32.mrf.mxu0
      %v782 = vadd.f32 0.0, %v781
      %v783 = vpop.f32.mrf.mxu0
      %v784 = vpop.f32.mrf.mxu0
      %v785 = vadd.f32 0.0, %v784
      %v786 = vpop.f32.mrf.mxu0
      %787 = vmatprep.mubr.bf16.mxu0 0
      %788 = vmatmul.mubr.bf16.gmra.mxu0 %v408
      %v789 = vpop.f32.mrf.mxu0
      %v790 = vadd.f32 0.0, %v789
      %v791 = vpop.f32.mrf.mxu0
      %v792 = vpop.f32.mrf.mxu0
      %v793 = vadd.f32 0.0, %v792
      %v794 = vpop.f32.mrf.mxu0
      %795 = vmatprep.mubr.bf16.mxu0 0
      %796 = vmatmul.mubr.bf16.gmra.mxu0 %v409
      %v797 = vpop.f32.mrf.mxu0
      %v798 = vadd.f32 0.0, %v797
      %v799 = vpop.f32.mrf.mxu0
      %v800 = vpop.f32.mrf.mxu0
      %v801 = vadd.f32 0.0, %v800
      %v802 = vpop.f32.mrf.mxu0
      %803 = vmatprep.mubr.bf16.mxu0 0
      %804 = vmatmul.mubr.bf16.gmra.mxu0 %v410
      %v805 = vpop.f32.mrf.mxu0
      %v806 = vadd.f32 0.0, %v805
      %v807 = vpop.f32.mrf.mxu0
      %v808 = vpop.f32.mrf.mxu0
      %v809 = vadd.f32 0.0, %v808
      %v810 = vpop.f32.mrf.mxu0
      %811 = vmatprep.mubr.bf16.mxu0 0
      %812 = vmatmul.mubr.bf16.gmra.mxu0 %v411
      %v813 = vpop.f32.mrf.mxu0
      %v814 = vadd.f32 0.0, %v813
      %v815 = vpop.f32.mrf.mxu0
      %v816 = vpop.f32.mrf.mxu0
      %v817 = vadd.f32 0.0, %v816
      %v818 = vpop.f32.mrf.mxu0
      %819 = vmatprep.mubr.bf16.mxu0 0
      %820 = vmatmul.mubr.bf16.gmra.mxu0 %v412
      %v821 = vpop.f32.mrf.mxu0
      %v822 = vadd.f32 0.0, %v821
      %v823 = vpop.f32.mrf.mxu0
      %v824 = vpop.f32.mrf.mxu0
      %v825 = vadd.f32 0.0, %v824
      %v826 = vpop.f32.mrf.mxu0
      %827 = vmatprep.mubr.bf16.mxu0 0
      %828 = vmatmul.mubr.bf16.gmra.mxu0 %v413
      %v829 = vpop.f32.mrf.mxu0
      %v830 = vadd.f32 0.0, %v829
      %v831 = vpop.f32.mrf.mxu0
      %v832 = vpop.f32.mrf.mxu0
      %v833 = vadd.f32 0.0, %v832
      %v834 = vpop.f32.mrf.mxu0
      %835 = vmatprep.mubr.bf16.mxu0 0
      %836 = vmatmul.mubr.bf16.gmra.mxu0 %v414
      %v837 = vpop.f32.mrf.mxu0
      %v838 = vadd.f32 0.0, %v837
      %v839 = vpop.f32.mrf.mxu0
      %v840 = vpop.f32.mrf.mxu0
      %v841 = vadd.f32 0.0, %v840
      %v842 = vpop.f32.mrf.mxu0
      %843 = vmatprep.mubr.bf16.mxu0 0
      %844 = vmatmul.mubr.bf16.gmra.mxu0 %v415
      %v845 = vpop.f32.mrf.mxu0
      %v846 = vadd.f32 0.0, %v845
      %v847 = vpop.f32.mrf.mxu0
      %v848 = vpop.f32.mrf.mxu0
      %v849 = vadd.f32 0.0, %v848
      %v850 = vpop.f32.mrf.mxu0
      %851 = vmatprep.mubr.bf16.mxu0 0
      %852 = vmatmul.mubr.bf16.gmra.mxu0 %v416
      %v853 = vpop.f32.mrf.mxu0
      %v854 = vadd.f32 0.0, %v853
      %v855 = vpop.f32.mrf.mxu0
      %v856 = vpop.f32.mrf.mxu0
      %v857 = vadd.f32 0.0, %v856
      %v858 = vpop.f32.mrf.mxu0
      %859 = vmatprep.mubr.bf16.mxu0 0
      %860 = vmatmul.mubr.bf16.gmra.mxu0 %v417
      %v861 = vpop.f32.mrf.mxu0
      %v862 = vadd.f32 0.0, %v861
      %v863 = vpop.f32.mrf.mxu0
      %v864 = vpop.f32.mrf.mxu0
      %v865 = vadd.f32 0.0, %v864
      %v866 = vpop.f32.mrf.mxu0
      %867 = vdwg.mxu0
      %v868 = vpack.c.bf16 %v520, %v517
      %v869 = vpack.c.bf16 %v528, %v525
      %v870 = vpack.c.bf16 %v536, %v533
      %v871 = vpack.c.bf16 %v544, %v541
      %v872 = vpack.c.bf16 %v552, %v549
      %v873 = vpack.c.bf16 %v560, %v557
      %v874 = vpack.c.bf16 %v568, %v565
      %v875 = vpack.c.bf16 %v576, %v573
      %v876 = vpack.c.bf16 %v584, %v581
      %v877 = vpack.c.bf16 %v592, %v589
      %v878 = vpack.c.bf16 %v600, %v597
      %v879 = vpack.c.bf16 %v608, %v605
      %v880 = vpack.c.bf16 %v616, %v613
      %v881 = vpack.c.bf16 %v624, %v621
      %v882 = vpack.c.bf16 %v632, %v629
      %v883 = vpack.c.bf16 %v640, %v637
      %v900 = vunpack.c.l.b16 %v868
      %v901 = vunpack.c.h.b16 %v868
      %v902 = vunpack.c.l.b16 %v869
      %v903 = vunpack.c.h.b16 %v869
      %v904 = vunpack.c.l.b16 %v870
      %v905 = vunpack.c.h.b16 %v870
      %v906 = vunpack.c.l.b16 %v871
      %v907 = vunpack.c.h.b16 %v871
      %v908 = vunpack.c.l.b16 %v872
      %v909 = vunpack.c.h.b16 %v872
      %v910 = vunpack.c.l.b16 %v873
      %v911 = vunpack.c.h.b16 %v873
      %v912 = vunpack.c.l.b16 %v874
      %v913 = vunpack.c.h.b16 %v874
      %v914 = vunpack.c.l.b16 %v875
      %v915 = vunpack.c.h.b16 %v875
      %v916 = vunpack.c.l.b16 %v876
      %v917 = vunpack.c.h.b16 %v876
      %v918 = vunpack.c.l.b16 %v877
      %v919 = vunpack.c.h.b16 %v877
      %v920 = vunpack.c.l.b16 %v878
      %v921 = vunpack.c.h.b16 %v878
      %v922 = vunpack.c.l.b16 %v879
      %v923 = vunpack.c.h.b16 %v879
      %v924 = vunpack.c.l.b16 %v880
      %v925 = vunpack.c.h.b16 %v880
      %v926 = vunpack.c.l.b16 %v881
      %v927 = vunpack.c.h.b16 %v881
      %v928 = vunpack.c.l.b16 %v882
      %v929 = vunpack.c.h.b16 %v882
      %v930 = vunpack.c.l.b16 %v883
      %v931 = vunpack.c.h.b16 %v883
      %v932 = vpack.c.b16 %v900, %v900
      %v933 = vpack.c.b16 %v901, %v901
      %v934 = vpack.c.b16 %v902, %v902
      %v935 = vpack.c.b16 %v903, %v903
      %v936 = vpack.c.b16 %v904, %v904
      %v937 = vpack.c.b16 %v905, %v905
      %v938 = vpack.c.b16 %v906, %v906
      %v939 = vpack.c.b16 %v907, %v907
      %v940 = vpack.c.b16 %v908, %v908
      %v941 = vpack.c.b16 %v909, %v909
      %v942 = vpack.c.b16 %v910, %v910
      %v943 = vpack.c.b16 %v911, %v911
      %v944 = vpack.c.b16 %v912, %v912
      %v945 = vpack.c.b16 %v913, %v913
      %v946 = vpack.c.b16 %v914, %v914
      %v947 = vpack.c.b16 %v915, %v915
      %v948 = vpack.c.b16 %v916, %v916
      %v949 = vpack.c.b16 %v917, %v917
      %v950 = vpack.c.b16 %v918, %v918
      %v951 = vpack.c.b16 %v919, %v919
      %v952 = vpack.c.b16 %v920, %v920
      %v953 = vpack.c.b16 %v921, %v921
      %v954 = vpack.c.b16 %v922, %v922
      %v955 = vpack.c.b16 %v923, %v923
      %v956 = vpack.c.b16 %v924, %v924
      %v957 = vpack.c.b16 %v925, %v925
      %v958 = vpack.c.b16 %v926, %v926
      %v959 = vpack.c.b16 %v927, %v927
      %v960 = vpack.c.b16 %v928, %v928
      %v961 = vpack.c.b16 %v929, %v929
      %v962 = vpack.c.b16 %v930, %v930
      %v963 = vpack.c.b16 %v931, %v931
      %996 = vst [vmem:[%s273] sm:$0xf] %v932
      %997 = vst [vmem:[%s273 + $0x4] sm:$0xf] %v933
      %998 = vst [vmem:[%s273 + $0x8] sm:$0xf] %v934
      %999 = vst [vmem:[%s273 + $0xc] sm:$0xf] %v935
      %1000 = vst [vmem:[%s273 + $0x10] sm:$0xf] %v936
      %1001 = vst [vmem:[%s273 + $0x14] sm:$0xf] %v937
      %1002 = vst [vmem:[%s273 + $0x18] sm:$0xf] %v938
      %1003 = vst [vmem:[%s273 + $0x1c] sm:$0xf] %v939
      %1004 = vst [vmem:[%s273 + $0x20] sm:$0xf] %v940
      %1005 = vst [vmem:[%s273 + $0x24] sm:$0xf] %v941
      %1006 = vst [vmem:[%s273 + $0x28] sm:$0xf] %v942
      %1007 = vst [vmem:[%s273 + $0x2c] sm:$0xf] %v943
      %1008 = vst [vmem:[%s273 + $0x30] sm:$0xf] %v944
      %1009 = vst [vmem:[%s273 + $0x34] sm:$0xf] %v945
      %1010 = vst [vmem:[%s273 + $0x38] sm:$0xf] %v946
      %1011 = vst [vmem:[%s273 + $0x3c] sm:$0xf] %v947
      %1012 = vst [vmem:[%s273 + $0x40] sm:$0xf] %v948
      %1013 = vst [vmem:[%s273 + $0x44] sm:$0xf] %v949
      %1014 = vst [vmem:[%s273 + $0x48] sm:$0xf] %v950
      %1015 = vst [vmem:[%s273 + $0x4c] sm:$0xf] %v951
      %1016 = vst [vmem:[%s273 + $0x50] sm:$0xf] %v952
      %1017 = vst [vmem:[%s273 + $0x54] sm:$0xf] %v953
      %1018 = vst [vmem:[%s273 + $0x58] sm:$0xf] %v954
      %1019 = vst [vmem:[%s273 + $0x5c] sm:$0xf] %v955
      %1020 = vst [vmem:[%s273 + $0x60] sm:$0xf] %v956
      %1021 = vst [vmem:[%s273 + $0x64] sm:$0xf] %v957
      %1022 = vst [vmem:[%s273 + $0x68] sm:$0xf] %v958
      %1023 = vst [vmem:[%s273 + $0x6c] sm:$0xf] %v959
      %1024 = vst [vmem:[%s273 + $0x70] sm:$0xf] %v960
      %1025 = vst [vmem:[%s273 + $0x74] sm:$0xf] %v961
      %1026 = vst [vmem:[%s273 + $0x78] sm:$0xf] %v962
      %1027 = vst [vmem:[%s273 + $0x7c] sm:$0xf] %v963
      %v1028 = vpack.c.bf16 %v745, %v742
      %v1029 = vpack.c.bf16 %v753, %v750
      %v1030 = vpack.c.bf16 %v761, %v758
      %v1031 = vpack.c.bf16 %v769, %v766
      %v1032 = vpack.c.bf16 %v777, %v774
      %v1033 = vpack.c.bf16 %v785, %v782
      %v1034 = vpack.c.bf16 %v793, %v790
      %v1035 = vpack.c.bf16 %v801, %v798
      %v1036 = vpack.c.bf16 %v809, %v806
      %v1037 = vpack.c.bf16 %v817, %v814
      %v1038 = vpack.c.bf16 %v825, %v822
      %v1039 = vpack.c.bf16 %v833, %v830
      %v1040 = vpack.c.bf16 %v841, %v838
      %v1041 = vpack.c.bf16 %v849, %v846
      %v1042 = vpack.c.bf16 %v857, %v854
      %v1043 = vpack.c.bf16 %v865, %v862
      %v1060 = vunpack.c.l.b16 %v1028
      %v1061 = vunpack.c.h.b16 %v1028
      %v1062 = vunpack.c.l.b16 %v1029
      %v1063 = vunpack.c.h.b16 %v1029
      %v1064 = vunpack.c.l.b16 %v1030
      %v1065 = vunpack.c.h.b16 %v1030
      %v1066 = vunpack.c.l.b16 %v1031
      %v1067 = vunpack.c.h.b16 %v1031
      %v1068 = vunpack.c.l.b16 %v1032
      %v1069 = vunpack.c.h.b16 %v1032
      %v1070 = vunpack.c.l.b16 %v1033
      %v1071 = vunpack.c.h.b16 %v1033
      %v1072 = vunpack.c.l.b16 %v1034
      %v1073 = vunpack.c.h.b16 %v1034
      %v1074 = vunpack.c.l.b16 %v1035
      %v1075 = vunpack.c.h.b16 %v1035
      %v1076 = vunpack.c.l.b16 %v1036
      %v1077 = vunpack.c.h.b16 %v1036
      %v1078 = vunpack.c.l.b16 %v1037
      %v1079 = vunpack.c.h.b16 %v1037
      %v1080 = vunpack.c.l.b16 %v1038
      %v1081 = vunpack.c.h.b16 %v1038
      %v1082 = vunpack.c.l.b16 %v1039
      %v1083 = vunpack.c.h.b16 %v1039
      %v1084 = vunpack.c.l.b16 %v1040
      %v1085 = vunpack.c.h.b16 %v1040
      %v1086 = vunpack.c.l.b16 %v1041
      %v1087 = vunpack.c.h.b16 %v1041
      %v1088 = vunpack.c.l.b16 %v1042
      %v1089 = vunpack.c.h.b16 %v1042
      %v1090 = vunpack.c.l.b16 %v1043
      %v1091 = vunpack.c.h.b16 %v1043
      %v1092 = vpack.c.b16 %v1060, %v1060
      %v1093 = vpack.c.b16 %v1061, %v1061
      %v1094 = vpack.c.b16 %v1062, %v1062
      %v1095 = vpack.c.b16 %v1063, %v1063
      %v1096 = vpack.c.b16 %v1064, %v1064
      %v1097 = vpack.c.b16 %v1065, %v1065
      %v1098 = vpack.c.b16 %v1066, %v1066
      %v1099 = vpack.c.b16 %v1067, %v1067
      %v1100 = vpack.c.b16 %v1068, %v1068
      %v1101 = vpack.c.b16 %v1069, %v1069
      %v1102 = vpack.c.b16 %v1070, %v1070
      %v1103 = vpack.c.b16 %v1071, %v1071
      %v1104 = vpack.c.b16 %v1072, %v1072
      %v1105 = vpack.c.b16 %v1073, %v1073
      %v1106 = vpack.c.b16 %v1074, %v1074
      %v1107 = vpack.c.b16 %v1075, %v1075
      %v1108 = vpack.c.b16 %v1076, %v1076
      %v1109 = vpack.c.b16 %v1077, %v1077
      %v1110 = vpack.c.b16 %v1078, %v1078
      %v1111 = vpack.c.b16 %v1079, %v1079
      %v1112 = vpack.c.b16 %v1080, %v1080
      %v1113 = vpack.c.b16 %v1081, %v1081
      %v1114 = vpack.c.b16 %v1082, %v1082
      %v1115 = vpack.c.b16 %v1083, %v1083
      %v1116 = vpack.c.b16 %v1084, %v1084
      %v1117 = vpack.c.b16 %v1085, %v1085
      %v1118 = vpack.c.b16 %v1086, %v1086
      %v1119 = vpack.c.b16 %v1087, %v1087
      %v1120 = vpack.c.b16 %v1088, %v1088
      %v1121 = vpack.c.b16 %v1089, %v1089
      %v1122 = vpack.c.b16 %v1090, %v1090
      %v1123 = vpack.c.b16 %v1091, %v1091
      %1156 = vst [vmem:[%s279] sm:$0xf] %v1092
      %1157 = vst [vmem:[%s279 + $0x4] sm:$0xf] %v1093
      %1158 = vst [vmem:[%s279 + $0x8] sm:$0xf] %v1094
      %1159 = vst [vmem:[%s279 + $0xc] sm:$0xf] %v1095
      %1160 = vst [vmem:[%s279 + $0x10] sm:$0xf] %v1096
      %1161 = vst [vmem:[%s279 + $0x14] sm:$0xf] %v1097
      %1162 = vst [vmem:[%s279 + $0x18] sm:$0xf] %v1098
      %1163 = vst [vmem:[%s279 + $0x1c] sm:$0xf] %v1099
      %1164 = vst [vmem:[%s279 + $0x20] sm:$0xf] %v1100
      %1165 = vst [vmem:[%s279 + $0x24] sm:$0xf] %v1101
      %1166 = vst [vmem:[%s279 + $0x28] sm:$0xf] %v1102
      %1167 = vst [vmem:[%s279 + $0x2c] sm:$0xf] %v1103
      %1168 = vst [vmem:[%s279 + $0x30] sm:$0xf] %v1104
      %1169 = vst [vmem:[%s279 + $0x34] sm:$0xf] %v1105
      %1170 = vst [vmem:[%s279 + $0x38] sm:$0xf] %v1106
      %1171 = vst [vmem:[%s279 + $0x3c] sm:$0xf] %v1107
      %1172 = vst [vmem:[%s279 + $0x40] sm:$0xf] %v1108
      %1173 = vst [vmem:[%s279 + $0x44] sm:$0xf] %v1109
      %1174 = vst [vmem:[%s279 + $0x48] sm:$0xf] %v1110
      %1175 = vst [vmem:[%s279 + $0x4c] sm:$0xf] %v1111
      %1176 = vst [vmem:[%s279 + $0x50] sm:$0xf] %v1112
      %1177 = vst [vmem:[%s279 + $0x54] sm:$0xf] %v1113
      %1178 = vst [vmem:[%s279 + $0x58] sm:$0xf] %v1114
      %1179 = vst [vmem:[%s279 + $0x5c] sm:$0xf] %v1115
      %1180 = vst [vmem:[%s279 + $0x60] sm:$0xf] %v1116
      %1181 = vst [vmem:[%s279 + $0x64] sm:$0xf] %v1117
      %1182 = vst [vmem:[%s279 + $0x68] sm:$0xf] %v1118
      %1183 = vst [vmem:[%s279 + $0x6c] sm:$0xf] %v1119
      %1184 = vst [vmem:[%s279 + $0x70] sm:$0xf] %v1120
      %1185 = vst [vmem:[%s279 + $0x74] sm:$0xf] %v1121
      %1186 = vst [vmem:[%s279 + $0x78] sm:$0xf] %v1122
      %1187 = vst [vmem:[%s279 + $0x7c] sm:$0xf] %v1123
      %v1188 = vadd.f32 %v517, %v520
      %v1189 = vadd.f32 %v1188, %v525
      %v1190 = vadd.f32 %v1189, %v528
      %v1191 = vadd.f32 %v1190, %v533
      %v1192 = vadd.f32 %v1191, %v536
      %v1193 = vadd.f32 %v1192, %v541
      %v1194 = vadd.f32 %v1193, %v544
      %v1195 = vadd.f32 %v1194, %v549
      %v1196 = vadd.f32 %v1195, %v552
      %v1197 = vadd.f32 %v1196, %v557
      %v1198 = vadd.f32 %v1197, %v560
      %v1199 = vadd.f32 %v1198, %v565
      %v1200 = vadd.f32 %v1199, %v568
      %v1201 = vadd.f32 %v1200, %v573
      %v1202 = vadd.f32 %v1201, %v576
      %v1203 = vadd.f32 %v1202, %v581
      %v1204 = vadd.f32 %v1203, %v584
      %v1205 = vadd.f32 %v1204, %v589
      %v1206 = vadd.f32 %v1205, %v592
      %v1207 = vadd.f32 %v1206, %v597
      %v1208 = vadd.f32 %v1207, %v600
      %v1209 = vadd.f32 %v1208, %v605
      %v1210 = vadd.f32 %v1209, %v608
      %v1211 = vadd.f32 %v1210, %v613
      %v1212 = vadd.f32 %v1211, %v616
      %v1213 = vadd.f32 %v1212, %v621
      %v1214 = vadd.f32 %v1213, %v624
      %v1215 = vadd.f32 %v1214, %v629
      %v1216 = vadd.f32 %v1215, %v632
      %v1217 = vadd.f32 %v1216, %v637
      %v1218 = vadd.f32 %v1217, %v640
      %v1219 = vrot.slane %v1218, 4
      %v1220 = vadd.f32 %v1218, %v1219
      %v1221 = vrot.slane %v1220, 2
      %v1222 = vadd.f32 %v1220, %v1221
      %v1223 = vrot.slane %v1222, 1
      %v1224 = vadd.f32 %v1222, %v1223
      %v1225 = vmul.f32 %v517, %v517
      %v1226 = vmul.f32 %v520, %v520
      %v1227 = vmul.f32 %v525, %v525
      %v1228 = vmul.f32 %v528, %v528
      %v1229 = vmul.f32 %v533, %v533
      %v1230 = vmul.f32 %v536, %v536
      %v1231 = vmul.f32 %v541, %v541
      %v1232 = vmul.f32 %v544, %v544
      %v1233 = vmul.f32 %v549, %v549
      %v1234 = vmul.f32 %v552, %v552
      %v1235 = vmul.f32 %v557, %v557
      %v1236 = vmul.f32 %v560, %v560
      %v1237 = vmul.f32 %v565, %v565
      %v1238 = vmul.f32 %v568, %v568
      %v1239 = vmul.f32 %v573, %v573
      %v1240 = vmul.f32 %v576, %v576
      %v1241 = vmul.f32 %v581, %v581
      %v1242 = vmul.f32 %v584, %v584
      %v1243 = vmul.f32 %v589, %v589
      %v1244 = vmul.f32 %v592, %v592
      %v1245 = vmul.f32 %v597, %v597
      %v1246 = vmul.f32 %v600, %v600
      %v1247 = vmul.f32 %v605, %v605
      %v1248 = vmul.f32 %v608, %v608
      %v1249 = vmul.f32 %v613, %v613
      %v1250 = vmul.f32 %v616, %v616
      %v1251 = vmul.f32 %v621, %v621
      %v1252 = vmul.f32 %v624, %v624
      %v1253 = vmul.f32 %v629, %v629
      %v1254 = vmul.f32 %v632, %v632
      %v1255 = vmul.f32 %v637, %v637
      %v1256 = vmul.f32 %v640, %v640
      %v1257 = vadd.f32 %v1225, %v1226
      %v1258 = vadd.f32 %v1257, %v1227
      %v1259 = vadd.f32 %v1258, %v1228
      %v1260 = vadd.f32 %v1259, %v1229
      %v1261 = vadd.f32 %v1260, %v1230
      %v1262 = vadd.f32 %v1261, %v1231
      %v1263 = vadd.f32 %v1262, %v1232
      %v1264 = vadd.f32 %v1263, %v1233
      %v1265 = vadd.f32 %v1264, %v1234
      %v1266 = vadd.f32 %v1265, %v1235
      %v1267 = vadd.f32 %v1266, %v1236
      %v1268 = vadd.f32 %v1267, %v1237
      %v1269 = vadd.f32 %v1268, %v1238
      %v1270 = vadd.f32 %v1269, %v1239
      %v1271 = vadd.f32 %v1270, %v1240
      %v1272 = vadd.f32 %v1271, %v1241
      %v1273 = vadd.f32 %v1272, %v1242
      %v1274 = vadd.f32 %v1273, %v1243
      %v1275 = vadd.f32 %v1274, %v1244
      %v1276 = vadd.f32 %v1275, %v1245
      %v1277 = vadd.f32 %v1276, %v1246
      %v1278 = vadd.f32 %v1277, %v1247
      %v1279 = vadd.f32 %v1278, %v1248
      %v1280 = vadd.f32 %v1279, %v1249
      %v1281 = vadd.f32 %v1280, %v1250
      %v1282 = vadd.f32 %v1281, %v1251
      %v1283 = vadd.f32 %v1282, %v1252
      %v1284 = vadd.f32 %v1283, %v1253
      %v1285 = vadd.f32 %v1284, %v1254
      %v1286 = vadd.f32 %v1285, %v1255
      %v1287 = vadd.f32 %v1286, %v1256
      %v1288 = vrot.slane %v1287, 4
      %v1289 = vadd.f32 %v1287, %v1288
      %v1290 = vrot.slane %v1289, 2
      %v1291 = vadd.f32 %v1289, %v1290
      %v1292 = vrot.slane %v1291, 1
      %v1293 = vadd.f32 %v1291, %v1292
      %vm1294 = vcmask 1040384
      %v1295 = vsel %vm1294, %v1224, %v1293
      %vm1296 = vcmask 1041408
      %v1297 = vsel %vm1296, %v1295, 0.0
      %1298 = vst [vmem:[%s284] sm:$0xff] %v1297
      %v1299 = vadd.f32 %v742, %v745
      %v1300 = vadd.f32 %v1299, %v750
      %v1301 = vadd.f32 %v1300, %v753
      %v1302 = vadd.f32 %v1301, %v758
      %v1303 = vadd.f32 %v1302, %v761
      %v1304 = vadd.f32 %v1303, %v766
      %v1305 = vadd.f32 %v1304, %v769
      %v1306 = vadd.f32 %v1305, %v774
      %v1307 = vadd.f32 %v1306, %v777
      %v1308 = vadd.f32 %v1307, %v782
      %v1309 = vadd.f32 %v1308, %v785
      %v1310 = vadd.f32 %v1309, %v790
      %v1311 = vadd.f32 %v1310, %v793
      %v1312 = vadd.f32 %v1311, %v798
      %v1313 = vadd.f32 %v1312, %v801
      %v1314 = vadd.f32 %v1313, %v806
      %v1315 = vadd.f32 %v1314, %v809
      %v1316 = vadd.f32 %v1315, %v814
      %v1317 = vadd.f32 %v1316, %v817
      %v1318 = vadd.f32 %v1317, %v822
      %v1319 = vadd.f32 %v1318, %v825
      %v1320 = vadd.f32 %v1319, %v830
      %v1321 = vadd.f32 %v1320, %v833
      %v1322 = vadd.f32 %v1321, %v838
      %v1323 = vadd.f32 %v1322, %v841
      %v1324 = vadd.f32 %v1323, %v846
      %v1325 = vadd.f32 %v1324, %v849
      %v1326 = vadd.f32 %v1325, %v854
      %v1327 = vadd.f32 %v1326, %v857
      %v1328 = vadd.f32 %v1327, %v862
      %v1329 = vadd.f32 %v1328, %v865
      %v1330 = vrot.slane %v1329, 4
      %v1331 = vadd.f32 %v1329, %v1330
      %v1332 = vrot.slane %v1331, 2
      %v1333 = vadd.f32 %v1331, %v1332
      %v1334 = vrot.slane %v1333, 1
      %v1335 = vadd.f32 %v1333, %v1334
      %v1336 = vmul.f32 %v742, %v742
      %v1337 = vmul.f32 %v745, %v745
      %v1338 = vmul.f32 %v750, %v750
      %v1339 = vmul.f32 %v753, %v753
      %v1340 = vmul.f32 %v758, %v758
      %v1341 = vmul.f32 %v761, %v761
      %v1342 = vmul.f32 %v766, %v766
      %v1343 = vmul.f32 %v769, %v769
      %v1344 = vmul.f32 %v774, %v774
      %v1345 = vmul.f32 %v777, %v777
      %v1346 = vmul.f32 %v782, %v782
      %v1347 = vmul.f32 %v785, %v785
      %v1348 = vmul.f32 %v790, %v790
      %v1349 = vmul.f32 %v793, %v793
      %v1350 = vmul.f32 %v798, %v798
      %v1351 = vmul.f32 %v801, %v801
      %v1352 = vmul.f32 %v806, %v806
      %v1353 = vmul.f32 %v809, %v809
      %v1354 = vmul.f32 %v814, %v814
      %v1355 = vmul.f32 %v817, %v817
      %v1356 = vmul.f32 %v822, %v822
      %v1357 = vmul.f32 %v825, %v825
      %v1358 = vmul.f32 %v830, %v830
      %v1359 = vmul.f32 %v833, %v833
      %v1360 = vmul.f32 %v838, %v838
      %v1361 = vmul.f32 %v841, %v841
      %v1362 = vmul.f32 %v846, %v846
      %v1363 = vmul.f32 %v849, %v849
      %v1364 = vmul.f32 %v854, %v854
      %v1365 = vmul.f32 %v857, %v857
      %v1366 = vmul.f32 %v862, %v862
      %v1367 = vmul.f32 %v865, %v865
      %v1368 = vadd.f32 %v1336, %v1337
      %v1369 = vadd.f32 %v1368, %v1338
      %v1370 = vadd.f32 %v1369, %v1339
      %v1371 = vadd.f32 %v1370, %v1340
      %v1372 = vadd.f32 %v1371, %v1341
      %v1373 = vadd.f32 %v1372, %v1342
      %v1374 = vadd.f32 %v1373, %v1343
      %v1375 = vadd.f32 %v1374, %v1344
      %v1376 = vadd.f32 %v1375, %v1345
      %v1377 = vadd.f32 %v1376, %v1346
      %v1378 = vadd.f32 %v1377, %v1347
      %v1379 = vadd.f32 %v1378, %v1348
      %v1380 = vadd.f32 %v1379, %v1349
      %v1381 = vadd.f32 %v1380, %v1350
      %v1382 = vadd.f32 %v1381, %v1351
      %v1383 = vadd.f32 %v1382, %v1352
      %v1384 = vadd.f32 %v1383, %v1353
      %v1385 = vadd.f32 %v1384, %v1354
      %v1386 = vadd.f32 %v1385, %v1355
      %v1387 = vadd.f32 %v1386, %v1356
      %v1388 = vadd.f32 %v1387, %v1357
      %v1389 = vadd.f32 %v1388, %v1358
      %v1390 = vadd.f32 %v1389, %v1359
      %v1391 = vadd.f32 %v1390, %v1360
      %v1392 = vadd.f32 %v1391, %v1361
      %v1393 = vadd.f32 %v1392, %v1362
      %v1394 = vadd.f32 %v1393, %v1363
      %v1395 = vadd.f32 %v1394, %v1364
      %v1396 = vadd.f32 %v1395, %v1365
      %v1397 = vadd.f32 %v1396, %v1366
      %v1398 = vadd.f32 %v1397, %v1367
      %v1399 = vrot.slane %v1398, 4
      %v1400 = vadd.f32 %v1398, %v1399
      %v1401 = vrot.slane %v1400, 2
      %v1402 = vadd.f32 %v1400, %v1401
      %v1403 = vrot.slane %v1402, 1
      %v1404 = vadd.f32 %v1402, %v1403
      %v1405 = vsel %vm1294, %v1335, %v1404
      %v1406 = vsel %vm1296, %v1405, 0.0
      %1407 = vst [vmem:[%s288] sm:$0xff] %v1406
      %s1408 = smul.u32 32, %s18
      %p1409 = scmp.lt.s32.totalorder %s1408, 63
      %s1410 = scalar_select %p1409, %s1408, 63
      %s1411 = smul.addr %s1410, 4
      %s1412 = scalar_lea.vmem %s3, %s1411
      %s1413 = smul.u32 32, %s18
      %p1414 = scmp.lt.s32.totalorder %s1413, 63
      %s1415 = scalar_select %p1414, %s1413, 63
      %s1416 = smul.addr %s1415, 4
      %s1417 = scalar_lea.vmem %s4, %s1416
      %p1418 = scmp.lt.s32.totalorder %s18, 1
      %s1419 = scalar_select %p1418, %s18, 1
      %s1420 = smul.addr %s1419, 8
      %s1421 = scalar_lea.vmem %s5, %s1420
      %p1422 = scmp.lt.s32.totalorder %s18, 1
      %s1423 = scalar_select %p1422, %s18, 1
      %s1424 = smul.addr %s1423, 8
      %s1425 = scalar_lea.vmem %s6, %s1424
      // Predicated region
      $region33: #{bottleneck_forward.4} parent=31 // pred_check
        %p1426 = pneg %p104
      $region34: #{bottleneck_forward.4} parent=31 // pred_check_branch
        %1428 = sbr.rel (%p1426) target = $region36
      $region35: #{bottleneck_forward.4} parent=31 // pred_region
        %s1429 = smul.u32 32, %s18
      $region36: #{bottleneck_forward.4} parent=31 // pred_fallthru
        _
      // Predicated region
      $region37: #{bottleneck_forward.4} parent=31 // pred_check
        %p1430 = pneg %p130
      $region38: #{bottleneck_forward.4} parent=31 // pred_check_branch
        %1432 = sbr.rel (%p1430) target = $region40
      $region39: #{bottleneck_forward.4} parent=31 // pred_region
        %s1433 = smul.u32 32, %s18
      $region40: #{bottleneck_forward.4} parent=31 // pred_fallthru
        _
      // Predicated region
      $region41: #{bottleneck_forward.4} parent=31 // pred_check
        %p1434 = pneg %p156
      $region42: #{bottleneck_forward.4} parent=31 // pred_check_branch
        %1436 = sbr.rel (%p1434) target = $region44
      $region43: #{bottleneck_forward.4} parent=31 // pred_region
        _
      $region44: #{bottleneck_forward.4} parent=31 // pred_fallthru
        _
      // Predicated region
      $region45: #{bottleneck_forward.4} parent=31 // pred_check
        %p1437 = pneg %p182
      $region46: #{bottleneck_forward.4} parent=31 // pred_check_branch
        %1439 = sbr.rel (%p1437) target = $region48
      $region47: #{bottleneck_forward.4} parent=31 // pred_region
        _
      $region48: #{bottleneck_forward.4} parent=31 // pred_fallthru
        _
    $region32: #{bottleneck_forward.4} parent=5 // pred_fallthru
      _
    %p1440 = scmp.le.s32.totalorder 2, %s13
    // Predicated region
    $region49: #{bottleneck_forward.4} parent=5 // pred_check
      %p1441 = pneg %p1440
    $region50: #{bottleneck_forward.4} parent=5 // pred_check_branch
      %1443 = sbr.rel (%p1441) target = $region52
    $region51: #{bottleneck_forward.4} parent=5 // pred_region
      %s1444 = ssub.s32 %s13, 2
      // Predicated region
      $region53: #{bottleneck_forward.4} parent=51 // pred_check
        %p1445 = pneg %p110
      $region54: #{bottleneck_forward.4} parent=51 // pred_check_branch
        %1447 = sbr.rel (%p1445) target = $region56
      $region55: #{bottleneck_forward.4} parent=51 // pred_region
        %s1448 = smul.u32 32, %s19
        %p1449 = scmp.lt.s32.totalorder %s1448, 63
        %s1450 = scalar_select %p1449, %s1448, 63
        %s1451 = smul.addr %s1450, 4
        %s1452 = scalar_lea.vmem %s3, %s1451
      $region56: #{bottleneck_forward.4} parent=51 // pred_fallthru
        _
      // Predicated region
      $region57: #{bottleneck_forward.4} parent=51 // pred_check
        %p1453 = pneg %p136
      $region58: #{bottleneck_forward.4} parent=51 // pred_check_branch
        %1455 = sbr.rel (%p1453) target = $region60
      $region59: #{bottleneck_forward.4} parent=51 // pred_region
        %s1456 = smul.u32 32, %s19
        %p1457 = scmp.lt.s32.totalorder %s1456, 63
        %s1458 = scalar_select %p1457, %s1456, 63
        %s1459 = smul.addr %s1458, 4
        %s1460 = scalar_lea.vmem %s4, %s1459
      $region60: #{bottleneck_forward.4} parent=51 // pred_fallthru
        _
      // Predicated region
      $region61: #{bottleneck_forward.4} parent=51 // pred_check
        %p1461 = pneg %p162
      $region62: #{bottleneck_forward.4} parent=51 // pred_check_branch
        %1463 = sbr.rel (%p1461) target = $region64
      $region63: #{bottleneck_forward.4} parent=51 // pred_region
        %p1464 = scmp.lt.s32.totalorder %s19, 1
        %s1465 = scalar_select %p1464, %s19, 1
        %s1466 = smul.addr %s1465, 8
        %s1467 = scalar_lea.vmem %s5, %s1466
      $region64: #{bottleneck_forward.4} parent=51 // pred_fallthru
        _
      // Predicated region
      $region65: #{bottleneck_forward.4} parent=51 // pred_check
        %p1468 = pneg %p188
      $region66: #{bottleneck_forward.4} parent=51 // pred_check_branch
        %1470 = sbr.rel (%p1468) target = $region68
      $region67: #{bottleneck_forward.4} parent=51 // pred_region
        %p1471 = scmp.lt.s32.totalorder %s19, 1
        %s1472 = scalar_select %p1471, %s19, 1
        %s1473 = smul.addr %s1472, 8
        %s1474 = scalar_lea.vmem %s6, %s1473
      $region68: #{bottleneck_forward.4} parent=51 // pred_fallthru
        _
    $region52: #{bottleneck_forward.4} parent=5 // pred_fallthru
      _
  $region6: #{bottleneck_forward.4} parent=0 // loop_footer
    %s17 = sadd.s32 1, %s13
  $region7: #{bottleneck_forward.4} parent=0 // loop_footer_branch
    %12 = sbr.rel target = $region3
  $region8: #{bottleneck_forward.4} parent=0 // loop_exit
    _

// kernel: bottleneck_forward.6
$region0: #{bottleneck_forward.6}
  #allocation0 [shape = 'u32[]', space=smem, size = 0x4, offset = 0x4, fixed_abs, tag = 'smem constant byte address 0x4 - core index']
  #allocation1 [shape = 'u32[144,128]{1,0:T(1,128)}', space=vmem, size = 0x12000, scoped, tag = 'internal scratch']
  %s0 = inlined_call_operand.vmem [shape: bf16[512,128], index: 0, kind: input, shape index: {}]
  %s1 = inlined_call_operand.vmem [shape: f32[1,128], index: 1, kind: input, shape index: {}]
  %s2 = inlined_call_operand.vmem [shape: f32[1,128], index: 2, kind: input, shape index: {}]
  %s3 = inlined_call_operand.vmem [shape: bf16[128,128], index: 3, kind: input, shape index: {}]
  %s4 = inlined_call_operand.vmem [shape: bf16[512,128], index: 4, kind: output, shape index: {0}]
  %s5 = inlined_call_operand.vmem [shape: f32[16,128], index: 5, kind: output, shape index: {1}]
  %6 = xla_tuple %s4, %s5
  %s7 = sld [smem:[#allocation0]]
  $region57: #{bottleneck_forward.6} parent=0
    _
  %s9 = ssub.s32 1, %s7
  %s10 = scalar_select 0, %s9, %s7
  loop: start=0, step=1, limit=4
  $region2: #{bottleneck_forward.6} parent=0 // loop_pre_header
    _
  $region3: #{bottleneck_forward.6} parent=0 // loop_header
    %s12 = sphi 0, %s16
    %p13 = scmp.ge.s32.totalorder %s12, 4
    %s22 = sphi 0, %s24
    %s25 = sphi 0, %s22
    %s26 = sphi 0, %s25
    %s42 = sphi 0, %s26
    %s46 = sphi 0, %s46
    %s48 = sphi 0, %s46
    %s49 = sphi 0, %s48
    %s63 = sphi 0, %s49
    %s67 = sphi 0, %s67
    %s69 = sphi 0, %s67
    %s70 = sphi 0, %s69
    %s84 = sphi 0, %s70
    %s88 = sphi 0, %s88
    %s90 = sphi 0, %s88
    %s91 = sphi 0, %s90
    %s105 = sphi 0, %s91
    %s111 = sphi 0, %s113
    %s114 = sphi 0, %s111
    %s115 = sphi 0, %s114
    %s131 = sphi 0, %s115
    %s137 = sphi 0, %s139
    %s140 = sphi 0, %s137
    %s141 = sphi 0, %s140
    %s157 = sphi 0, %s141
  $region4: #{bottleneck_forward.6} parent=0 // loop_header_branch
    %15 = sbr.rel (%p13) target = $region8
  $region5: #{bottleneck_forward.6} parent=0 // loop_body
    %s17 = ssub.s32 %s12, 1
    %s18 = ssub.s32 %s12, 2
    %s19 = sadd.s32 %s12, 1
    %s20 = ssub.s32 %s12, %s19
    %p21 = scmp.eq.s32.totalorder %s20, 0
    %s23 = sadd.s32 %s22, 1
    %s24 = scalar_select %p21, %s22, %s23
    %p27 = pneg %p21
    %p28 = scmp.eq.s32.totalorder %s12, 1
    %p29 = por %p27, %p28
    %p30 = scmp.ne.s32.totalorder %s22, %s25
    %p31 = scmp.eq.s32.totalorder %s12, 0
    %p32 = por %p30, %p31
    %p33 = scmp.ne.s32.totalorder %s22, %s25
    %p34 = scmp.eq.s32.totalorder %s17, 1
    %p35 = por %p33, %p34
    %p36 = scmp.ne.s32.totalorder %s25, %s26
    %p37 = scmp.eq.s32.totalorder %s17, 0
    %p38 = por %p36, %p37
    %p39 = scmp.ne.s32.totalorder %s25, %s26
    %p40 = scmp.eq.s32.totalorder %s18, 1
    %p41 = por %p39, %p40
    %p43 = scmp.ne.s32.totalorder %s26, %s42
    %p44 = scmp.eq.s32.totalorder %s18, 0
    %p45 = por %p43, %p44
    %s47 = sadd.s32 %s46, 1
    %p50 = scmp.eq.s32.totalorder %s12, 1
    %p51 = scmp.ne.s32.totalorder %s46, %s48
    %p52 = scmp.eq.s32.totalorder %s12, 0
    %p53 = por %p51, %p52
    %p54 = scmp.ne.s32.totalorder %s46, %s48
    %p55 = scmp.eq.s32.totalorder %s17, 1
    %p56 = por %p54, %p55
    %p57 = scmp.ne.s32.totalorder %s48, %s49
    %p58 = scmp.eq.s32.totalorder %s17, 0
    %p59 = por %p57, %p58
    %p60 = scmp.ne.s32.totalorder %s48, %s49
    %p61 = scmp.eq.s32.totalorder %s18, 1
    %p62 = por %p60, %p61
    %p64 = scmp.ne.s32.totalorder %s49, %s63
    %p65 = scmp.eq.s32.totalorder %s18, 0
    %p66 = por %p64, %p65
    %s68 = sadd.s32 %s67, 1
    %p71 = scmp.eq.s32.totalorder %s12, 1
    %p72 = scmp.ne.s32.totalorder %s67, %s69
    %p73 = scmp.eq.s32.totalorder %s12, 0
    %p74 = por %p72, %p73
    %p75 = scmp.ne.s32.totalorder %s67, %s69
    %p76 = scmp.eq.s32.totalorder %s17, 1
    %p77 = por %p75, %p76
    %p78 = scmp.ne.s32.totalorder %s69, %s70
    %p79 = scmp.eq.s32.totalorder %s17, 0
    %p80 = por %p78, %p79
    %p81 = scmp.ne.s32.totalorder %s69, %s70
    %p82 = scmp.eq.s32.totalorder %s18, 1
    %p83 = por %p81, %p82
    %p85 = scmp.ne.s32.totalorder %s70, %s84
    %p86 = scmp.eq.s32.totalorder %s18, 0
    %p87 = por %p85, %p86
    %s89 = sadd.s32 %s88, 1
    %p92 = scmp.eq.s32.totalorder %s12, 1
    %p93 = scmp.ne.s32.totalorder %s88, %s90
    %p94 = scmp.eq.s32.totalorder %s12, 0
    %p95 = por %p93, %p94
    %p96 = scmp.ne.s32.totalorder %s88, %s90
    %p97 = scmp.eq.s32.totalorder %s17, 1
    %p98 = por %p96, %p97
    %p99 = scmp.ne.s32.totalorder %s90, %s91
    %p100 = scmp.eq.s32.totalorder %s17, 0
    %p101 = por %p99, %p100
    %p102 = scmp.ne.s32.totalorder %s90, %s91
    %p103 = scmp.eq.s32.totalorder %s18, 1
    %p104 = por %p102, %p103
    %p106 = scmp.ne.s32.totalorder %s91, %s105
    %p107 = scmp.eq.s32.totalorder %s18, 0
    %p108 = por %p106, %p107
    %s109 = ssub.s32 %s12, %s19
    %p110 = scmp.eq.s32.totalorder %s109, 0
    %s112 = sadd.s32 %s111, 1
    %s113 = scalar_select %p110, %s111, %s112
    %p116 = pneg %p110
    %p117 = scmp.eq.s32.totalorder %s12, 1
    %p118 = por %p116, %p117
    %p119 = scmp.ne.s32.totalorder %s111, %s114
    %p120 = scmp.eq.s32.totalorder %s12, 0
    %p121 = por %p119, %p120
    %p122 = scmp.ne.s32.totalorder %s111, %s114
    %p123 = scmp.eq.s32.totalorder %s17, 1
    %p124 = por %p122, %p123
    %p125 = scmp.ne.s32.totalorder %s114, %s115
    %p126 = scmp.eq.s32.totalorder %s17, 0
    %p127 = por %p125, %p126
    %p128 = scmp.ne.s32.totalorder %s114, %s115
    %p129 = scmp.eq.s32.totalorder %s18, 1
    %p130 = por %p128, %p129
    %p132 = scmp.ne.s32.totalorder %s115, %s131
    %p133 = scmp.eq.s32.totalorder %s18, 0
    %p134 = por %p132, %p133
    %s135 = ssub.s32 %s12, %s19
    %p136 = scmp.eq.s32.totalorder %s135, 0
    %s138 = sadd.s32 %s137, 1
    %s139 = scalar_select %p136, %s137, %s138
    %p142 = pneg %p136
    %p143 = scmp.eq.s32.totalorder %s12, 1
    %p144 = por %p142, %p143
    %p145 = scmp.ne.s32.totalorder %s137, %s140
    %p146 = scmp.eq.s32.totalorder %s12, 0
    %p147 = por %p145, %p146
    %p148 = scmp.ne.s32.totalorder %s137, %s140
    %p149 = scmp.eq.s32.totalorder %s17, 1
    %p150 = por %p148, %p149
    %p151 = scmp.ne.s32.totalorder %s140, %s141
    %p152 = scmp.eq.s32.totalorder %s17, 0
    %p153 = por %p151, %p152
    %p154 = scmp.ne.s32.totalorder %s140, %s141
    %p155 = scmp.eq.s32.totalorder %s18, 1
    %p156 = por %p154, %p155
    %p158 = scmp.ne.s32.totalorder %s141, %s157
    %p159 = scmp.eq.s32.totalorder %s18, 0
    %p160 = por %p158, %p159
    %p161 = scmp.le.s32.totalorder 1, %s12
    %p162 = scmp.lt.s32.totalorder %s12, 3
    %p163 = pnand %p161, %p162
    %p164 = pneg %p163
    // Predicated region
    $region9: #{bottleneck_forward.6} parent=5 // pred_check
      _
    $region10: #{bottleneck_forward.6} parent=5 // pred_check_branch
      %166 = sbr.rel (%p163) target = $region12
    $region11: #{bottleneck_forward.6} parent=5 // pred_region
      %s167 = ssub.s32 %s12, 1
      // Predicated region
      $region13: #{bottleneck_forward.6} parent=11 // pred_check
        %p168 = pneg %p59
      $region14: #{bottleneck_forward.6} parent=11 // pred_check_branch
        %170 = sbr.rel (%p168) target = $region16
      $region15: #{bottleneck_forward.6} parent=11 // pred_region
        _
      $region16: #{bottleneck_forward.6} parent=11 // pred_fallthru
        _
      // Predicated region
      $region17: #{bottleneck_forward.6} parent=11 // pred_check
        %p171 = pneg %p80
      $region18: #{bottleneck_forward.6} parent=11 // pred_check_branch
        %173 = sbr.rel (%p171) target = $region20
      $region19: #{bottleneck_forward.6} parent=11 // pred_region
        _
      $region20: #{bottleneck_forward.6} parent=11 // pred_fallthru
        _
      // Predicated region
      $region21: #{bottleneck_forward.6} parent=11 // pred_check
        %p174 = pneg %p101
      $region22: #{bottleneck_forward.6} parent=11 // pred_check_branch
        %176 = sbr.rel (%p174) target = $region24
      $region23: #{bottleneck_forward.6} parent=11 // pred_region
        _
      $region24: #{bottleneck_forward.6} parent=11 // pred_fallthru
        _
    $region12: #{bottleneck_forward.6} parent=5 // pred_fallthru
      _
    %p177 = scmp.lt.s32.totalorder %s12, 2
    // Predicated region
    $region25: #{bottleneck_forward.6} parent=5 // pred_check
      %p178 = pneg %p177
    $region26: #{bottleneck_forward.6} parent=5 // pred_check_branch
      %180 = sbr.rel (%p178) target = $region28
    $region27: #{bottleneck_forward.6} parent=5 // pred_region
      // Predicated region
      $region29: #{bottleneck_forward.6} parent=27 // pred_check
        %p181 = pneg %p32
      $region30: #{bottleneck_forward.6} parent=27 // pred_check_branch
        %183 = sbr.rel (%p181) target = $region32
      $region31: #{bottleneck_forward.6} parent=27 // pred_region
        %s184 = smul.u32 32, %s12
        %p185 = scmp.lt.s32.totalorder %s184, 63
        %s186 = scalar_select %p185, %s184, 63
        %s187 = smul.addr %s186, 4
        %s188 = scalar_lea.vmem %s0, %s187
        %s189 = smul.u32 32, %s12
      $region32: #{bottleneck_forward.6} parent=27 // pred_fallthru
        _
    $region28: #{bottleneck_forward.6} parent=5 // pred_fallthru
      _
    %p190 = scmp.le.s32.totalorder 1, %s12
    %p191 = scmp.lt.s32.totalorder %s12, 3
    %p192 = pnand %p190, %p191
    %p193 = pneg %p192
    // Predicated region
    $region33: #{bottleneck_forward.6} parent=5 // pred_check
      _
    $region34: #{bottleneck_forward.6} parent=5 // pred_check_branch
      %195 = sbr.rel (%p192) target = $region36
    $region35: #{bottleneck_forward.6} parent=5 // pred_region
      %s196 = ssub.s32 %s12, 1
      %s197 = smul.u32 32, %s17
      %p198 = scmp.lt.s32.totalorder %s197, 63
      %s199 = scalar_select %p198, %s197, 63
      %s200 = smul.addr %s199, 4
      %s201 = scalar_lea.vmem %s0, %s200
      %p202 = pneg %p38
      %p203 = pneg %p35
      %p204 = pneg %p59
      %p205 = pneg %p56
      %p206 = pneg %p80
      %p207 = pneg %p77
      %p208 = pneg %p101
      %p209 = pneg %p98
      %p210 = pneg %p127
      %p211 = pneg %p124
      %s212 = smul.u32 32, %s17
      %p213 = scmp.lt.s32.totalorder %s212, 63
      %s214 = scalar_select %p213, %s212, 63
      %s215 = smul.addr %s214, 4
      %s216 = scalar_lea.vmem %s4, %s215
      %p217 = pneg %p153
      %p218 = pneg %p150
      %p219 = scmp.lt.s32.totalorder %s17, 1
      %s220 = scalar_select %p219, %s17, 1
      %s221 = smul.addr %s220, 8
      %s222 = scalar_lea.vmem %s5, %s221
      %s223 = smul.u32 32, %s17
      %p224 = scmp.lt.s32.totalorder %s223, 63
      %s225 = scalar_select %p224, %s223, 63
      %s226 = smul.addr %s225, 4
      %s227 = scalar_lea.vmem %s0, %s226
      %s228 = smul.u32 32, %s17
      %s229 = smul.u32 32, %s17
      %p230 = scmp.lt.s32.totalorder %s229, 63
      %s231 = scalar_select %p230, %s229, 63
      %s232 = smul.addr %s231, 4
      %s233 = scalar_lea.vmem %s4, %s232
      %s234 = smul.u32 32, %s17
      %p235 = scmp.lt.s32.totalorder %s17, 1
      %s236 = scalar_select %p235, %s17, 1
      %s237 = smul.addr %s236, 8
      %s238 = scalar_lea.vmem %s5, %s237
      %v240 = vld [vmem:[%s227] sm:$0xf]
      %v241 = vld [vmem:[%s227 + $0x4] sm:$0xf]
      %v242 = vld [vmem:[%s227 + $0x8] sm:$0xf]
      %v243 = vld [vmem:[%s227 + $0xc] sm:$0xf]
      %v244 = vld [vmem:[%s227 + $0x10] sm:$0xf]
      %v245 = vld [vmem:[%s227 + $0x14] sm:$0xf]
      %v246 = vld [vmem:[%s227 + $0x18] sm:$0xf]
      %v247 = vld [vmem:[%s227 + $0x1c] sm:$0xf]
      %v248 = vld [vmem:[%s227 + $0x20] sm:$0xf]
      %v249 = vld [vmem:[%s227 + $0x24] sm:$0xf]
      %v250 = vld [vmem:[%s227 + $0x28] sm:$0xf]
      %v251 = vld [vmem:[%s227 + $0x2c] sm:$0xf]
      %v252 = vld [vmem:[%s227 + $0x30] sm:$0xf]
      %v253 = vld [vmem:[%s227 + $0x34] sm:$0xf]
      %v254 = vld [vmem:[%s227 + $0x38] sm:$0xf]
      %v255 = vld [vmem:[%s227 + $0x3c] sm:$0xf]
      %v256 = vld [vmem:[%s227 + $0x40] sm:$0xf]
      %v257 = vld [vmem:[%s227 + $0x44] sm:$0xf]
      %v258 = vld [vmem:[%s227 + $0x48] sm:$0xf]
      %v259 = vld [vmem:[%s227 + $0x4c] sm:$0xf]
      %v260 = vld [vmem:[%s227 + $0x50] sm:$0xf]
      %v261 = vld [vmem:[%s227 + $0x54] sm:$0xf]
      %v262 = vld [vmem:[%s227 + $0x58] sm:$0xf]
      %v263 = vld [vmem:[%s227 + $0x5c] sm:$0xf]
      %v264 = vld [vmem:[%s227 + $0x60] sm:$0xf]
      %v265 = vld [vmem:[%s227 + $0x64] sm:$0xf]
      %v266 = vld [vmem:[%s227 + $0x68] sm:$0xf]
      %v267 = vld [vmem:[%s227 + $0x6c] sm:$0xf]
      %v268 = vld [vmem:[%s227 + $0x70] sm:$0xf]
      %v269 = vld [vmem:[%s227 + $0x74] sm:$0xf]
      %v270 = vld [vmem:[%s227 + $0x78] sm:$0xf]
      %v271 = vld [vmem:[%s227 + $0x7c] sm:$0xf]
      %v272 = vunpack.c.l.bf16 %v240
      %v273 = vunpack.c.l.bf16 %v241
      %v274 = vunpack.c.l.bf16 %v242
      %v275 = vunpack.c.l.bf16 %v243
      %v276 = vunpack.c.l.bf16 %v244
      %v277 = vunpack.c.l.bf16 %v245
      %v278 = vunpack.c.l.bf16 %v246
      %v279 = vunpack.c.l.bf16 %v247
      %v280 = vunpack.c.l.bf16 %v248
      %v281 = vunpack.c.l.bf16 %v249
      %v282 = vunpack.c.l.bf16 %v250
      %v283 = vunpack.c.l.bf16 %v251
      %v284 = vunpack.c.l.bf16 %v252
      %v285 = vunpack.c.l.bf16 %v253
      %v286 = vunpack.c.l.bf16 %v254
      %v287 = vunpack.c.l.bf16 %v255
      %v288 = vunpack.c.l.bf16 %v256
      %v289 = vunpack.c.l.bf16 %v257
      %v290 = vunpack.c.l.bf16 %v258
      %v291 = vunpack.c.l.bf16 %v259
      %v292 = vunpack.c.l.bf16 %v260
      %v293 = vunpack.c.l.bf16 %v261
      %v294 = vunpack.c.l.bf16 %v262
      %v295 = vunpack.c.l.bf16 %v263
      %v296 = vunpack.c.l.bf16 %v264
      %v297 = vunpack.c.l.bf16 %v265
      %v298 = vunpack.c.l.bf16 %v266
      %v299 = vunpack.c.l.bf16 %v267
      %v300 = vunpack.c.l.bf16 %v268
      %v301 = vunpack.c.l.bf16 %v269
      %v302 = vunpack.c.l.bf16 %v270
      %v303 = vunpack.c.l.bf16 %v271
      %v304 = vld [vmem:[%s1] sm:$0x1]
      %v306 = vlaneseq
      %v307 = vshrl.u32 %v306, 7
      %v308 = vsub.s32 0, %v307
      %v309 = vrot.slane %v304, %v308
      %v311 = vmul.f32 %v272, %v309
      %v312 = vmul.f32 %v273, %v309
      %v313 = vmul.f32 %v274, %v309
      %v314 = vmul.f32 %v275, %v309
      %v315 = vmul.f32 %v276, %v309
      %v316 = vmul.f32 %v277, %v309
      %v317 = vmul.f32 %v278, %v309
      %v318 = vmul.f32 %v279, %v309
      %v319 = vmul.f32 %v280, %v309
      %v320 = vmul.f32 %v281, %v309
      %v321 = vmul.f32 %v282, %v309
      %v322 = vmul.f32 %v283, %v309
      %v323 = vmul.f32 %v284, %v309
      %v324 = vmul.f32 %v285, %v309
      %v325 = vmul.f32 %v286, %v309
      %v326 = vmul.f32 %v287, %v309
      %v327 = vmul.f32 %v288, %v309
      %v328 = vmul.f32 %v289, %v309
      %v329 = vmul.f32 %v290, %v309
      %v330 = vmul.f32 %v291, %v309
      %v331 = vmul.f32 %v292, %v309
      %v332 = vmul.f32 %v293, %v309
      %v333 = vmul.f32 %v294, %v309
      %v334 = vmul.f32 %v295, %v309
      %v335 = vmul.f32 %v296, %v309
      %v336 = vmul.f32 %v297, %v309
      %v337 = vmul.f32 %v298, %v309
      %v338 = vmul.f32 %v299, %v309
      %v339 = vmul.f32 %v300, %v309
      %v340 = vmul.f32 %v301, %v309
      %v341 = vmul.f32 %v302, %v309
      %v342 = vmul.f32 %v303, %v309
      %v343 = vld [vmem:[%s2] sm:$0x1]
      %v345 = vlaneseq
      %v346 = vshrl.u32 %v345, 7
      %v347 = vsub.s32 0, %v346
      %v348 = vrot.slane %v343, %v347
      %v350 = vadd.f32 %v311, %v348
      %v351 = vadd.f32 %v312, %v348
      %v352 = vadd.f32 %v313, %v348
      %v353 = vadd.f32 %v314, %v348
      %v354 = vadd.f32 %v315, %v348
      %v355 = vadd.f32 %v316, %v348
      %v356 = vadd.f32 %v317, %v348
      %v357 = vadd.f32 %v318, %v348
      %v358 = vadd.f32 %v319, %v348
      %v359 = vadd.f32 %v320, %v348
      %v360 = vadd.f32 %v321, %v348
      %v361 = vadd.f32 %v322, %v348
      %v362 = vadd.f32 %v323, %v348
      %v363 = vadd.f32 %v324, %v348
      %v364 = vadd.f32 %v325, %v348
      %v365 = vadd.f32 %v326, %v348
      %v366 = vadd.f32 %v327, %v348
      %v367 = vadd.f32 %v328, %v348
      %v368 = vadd.f32 %v329, %v348
      %v369 = vadd.f32 %v330, %v348
      %v370 = vadd.f32 %v331, %v348
      %v371 = vadd.f32 %v332, %v348
      %v372 = vadd.f32 %v333, %v348
      %v373 = vadd.f32 %v334, %v348
      %v374 = vadd.f32 %v335, %v348
      %v375 = vadd.f32 %v336, %v348
      %v376 = vadd.f32 %v337, %v348
      %v377 = vadd.f32 %v338, %v348
      %v378 = vadd.f32 %v339, %v348
      %v379 = vadd.f32 %v340, %v348
      %v380 = vadd.f32 %v341, %v348
      %v381 = vadd.f32 %v342, %v348
      %v382 = vmax.f32 %v350, 0.0
      %v383 = vmax.f32 %v351, 0.0
      %v384 = vmax.f32 %v352, 0.0
      %v385 = vmax.f32 %v353, 0.0
      %v386 = vmax.f32 %v354, 0.0
      %v387 = vmax.f32 %v355, 0.0
      %v388 = vmax.f32 %v356, 0.0
      %v389 = vmax.f32 %v357, 0.0
      %v390 = vmax.f32 %v358, 0.0
      %v391 = vmax.f32 %v359, 0.0
      %v392 = vmax.f32 %v360, 0.0
      %v393 = vmax.f32 %v361, 0.0
      %v394 = vmax.f32 %v362, 0.0
      %v395 = vmax.f32 %v363, 0.0
      %v396 = vmax.f32 %v364, 0.0
      %v397 = vmax.f32 %v365, 0.0
      %v398 = vmax.f32 %v366, 0.0
      %v399 = vmax.f32 %v367, 0.0
      %v400 = vmax.f32 %v368, 0.0
      %v401 = vmax.f32 %v369, 0.0
      %v402 = vmax.f32 %v370, 0.0
      %v403 = vmax.f32 %v371, 0.0
      %v404 = vmax.f32 %v372, 0.0
      %v405 = vmax.f32 %v373, 0.0
      %v406 = vmax.f32 %v374, 0.0
      %v407 = vmax.f32 %v375, 0.0
      %v408 = vmax.f32 %v376, 0.0
      %v409 = vmax.f32 %v377, 0.0
      %v410 = vmax.f32 %v378, 0.0
      %v411 = vmax.f32 %v379, 0.0
      %v412 = vmax.f32 %v380, 0.0
      %v413 = vmax.f32 %v381, 0.0
      %s414 = smul.u32 %s17, 256
      %v415 = vlaneseq
      %v416 = vshrl.u32 %v415, 7
      %v417 = vadd.s32 %v416, 8
      %v418 = vadd.s32 %v416, 16
      %v419 = vadd.s32 %v416, 24
      %v420 = vadd.s32 %v416, 32
      %v421 = vadd.s32 %v416, 40
      %v422 = vadd.s32 %v416, 48
      %v423 = vadd.s32 %v416, 56
      %v424 = vadd.s32 %v416, 64
      %v425 = vadd.s32 %v416, 72
      %v426 = vadd.s32 %v416, 80
      %v427 = vadd.s32 %v416, 88
      %v428 = vadd.s32 %v416, 96
      %v429 = vadd.s32 %v416, 104
      %v430 = vadd.s32 %v416, 112
      %v431 = vadd.s32 %v416, 120
      %v432 = vadd.s32 %v416, 128
      %v433 = vadd.s32 %v416, 136
      %v434 = vadd.s32 %v416, 144
      %v435 = vadd.s32 %v416, 152
      %v436 = vadd.s32 %v416, 160
      %v437 = vadd.s32 %v416, 168
      %v438 = vadd.s32 %v416, 176
      %v439 = vadd.s32 %v416, 184
      %v440 = vadd.s32 %v416, 192
      %v441 = vadd.s32 %v416, 200
      %v442 = vadd.s32 %v416, 208
      %v443 = vadd.s32 %v416, 216
      %v444 = vadd.s32 %v416, 224
      %v445 = vadd.s32 %v416, 232
      %v446 = vadd.s32 %v416, 240
      %v447 = vadd.s32 %v416, 248
      %v448 = vstv %s414
      %v449 = vadd.s32 %v448, %v416
      %v450 = vadd.s32 %v448, %v417
      %v451 = vadd.s32 %v448, %v418
      %v452 = vadd.s32 %v448, %v419
      %v453 = vadd.s32 %v448, %v420
      %v454 = vadd.s32 %v448, %v421
      %v455 = vadd.s32 %v448, %v422
      %v456 = vadd.s32 %v448, %v423
      %v457 = vadd.s32 %v448, %v424
      %v458 = vadd.s32 %v448, %v425
      %v459 = vadd.s32 %v448, %v426
      %v460 = vadd.s32 %v448, %v427
      %v461 = vadd.s32 %v448, %v428
      %v462 = vadd.s32 %v448, %v429
      %v463 = vadd.s32 %v448, %v430
      %v464 = vadd.s32 %v448, %v431
      %v465 = vadd.s32 %v448, %v432
      %v466 = vadd.s32 %v448, %v433
      %v467 = vadd.s32 %v448, %v434
      %v468 = vadd.s32 %v448, %v435
      %v469 = vadd.s32 %v448, %v436
      %v470 = vadd.s32 %v448, %v437
      %v471 = vadd.s32 %v448, %v438
      %v472 = vadd.s32 %v448, %v439
      %v473 = vadd.s32 %v448, %v440
      %v474 = vadd.s32 %v448, %v441
      %v475 = vadd.s32 %v448, %v442
      %v476 = vadd.s32 %v448, %v443
      %v477 = vadd.s32 %v448, %v444
      %v478 = vadd.s32 %v448, %v445
      %v479 = vadd.s32 %v448, %v446
      %v480 = vadd.s32 %v448, %v447
      %vm481 = vcmp.lt.s32.totalorder %v449, 512
      %vm482 = vcmp.lt.s32.totalorder %v450, 512
      %vm483 = vcmp.lt.s32.totalorder %v451, 512
      %vm484 = vcmp.lt.s32.totalorder %v452, 512
      %vm485 = vcmp.lt.s32.totalorder %v453, 512
      %vm486 = vcmp.lt.s32.totalorder %v454, 512
      %vm487 = vcmp.lt.s32.totalorder %v455, 512
      %vm488 = vcmp.lt.s32.totalorder %v456, 512
      %vm489 = vcmp.lt.s32.totalorder %v457, 512
      %vm490 = vcmp.lt.s32.totalorder %v458, 512
      %vm491 = vcmp.lt.s32.totalorder %v459, 512
      %vm492 = vcmp.lt.s32.totalorder %v460, 512
      %vm493 = vcmp.lt.s32.totalorder %v461, 512
      %vm494 = vcmp.lt.s32.totalorder %v462, 512
      %vm495 = vcmp.lt.s32.totalorder %v463, 512
      %vm496 = vcmp.lt.s32.totalorder %v464, 512
      %vm497 = vcmp.lt.s32.totalorder %v465, 512
      %vm498 = vcmp.lt.s32.totalorder %v466, 512
      %vm499 = vcmp.lt.s32.totalorder %v467, 512
      %vm500 = vcmp.lt.s32.totalorder %v468, 512
      %vm501 = vcmp.lt.s32.totalorder %v469, 512
      %vm502 = vcmp.lt.s32.totalorder %v470, 512
      %vm503 = vcmp.lt.s32.totalorder %v471, 512
      %vm504 = vcmp.lt.s32.totalorder %v472, 512
      %vm505 = vcmp.lt.s32.totalorder %v473, 512
      %vm506 = vcmp.lt.s32.totalorder %v474, 512
      %vm507 = vcmp.lt.s32.totalorder %v475, 512
      %vm508 = vcmp.lt.s32.totalorder %v476, 512
      %vm509 = vcmp.lt.s32.totalorder %v477, 512
      %vm510 = vcmp.lt.s32.totalorder %v478, 512
      %vm511 = vcmp.lt.s32.totalorder %v479, 512
      %vm512 = vcmp.lt.s32.totalorder %v480, 512
      %v513 = vsel %vm481, 1, 0
      %v514 = vsel %vm482, 1, 0
      %v515 = vsel %vm483, 1, 0
      %v516 = vsel %vm484, 1, 0
      %v517 = vsel %vm485, 1, 0
      %v518 = vsel %vm486, 1, 0
      %v519 = vsel %vm487, 1, 0
      %v520 = vsel %vm488, 1, 0
      %v521 = vsel %vm489, 1, 0
      %v522 = vsel %vm490, 1, 0
      %v523 = vsel %vm491, 1, 0
      %v524 = vsel %vm492, 1, 0
      %v525 = vsel %vm493, 1, 0
      %v526 = vsel %vm494, 1, 0
      %v527 = vsel %vm495, 1, 0
      %v528 = vsel %vm496, 1, 0
      %v529 = vsel %vm497, 1, 0
      %v530 = vsel %vm498, 1, 0
      %v531 = vsel %vm499, 1, 0
      %v532 = vsel %vm500, 1, 0
      %v533 = vsel %vm501, 1, 0
      %v534 = vsel %vm502, 1, 0
      %v535 = vsel %vm503, 1, 0
      %v536 = vsel %vm504, 1, 0
      %v537 = vsel %vm505, 1, 0
      %v538 = vsel %vm506, 1, 0
      %v539 = vsel %vm507, 1, 0
      %v540 = vsel %vm508, 1, 0
      %v541 = vsel %vm509, 1, 0
      %v542 = vsel %vm510, 1, 0
      %v543 = vsel %vm511, 1, 0
      %v544 = vsel %vm512, 1, 0
      %vm545 = vcmp.eq.s32.totalorder %v513, 1
      %vm546 = vcmp.eq.s32.totalorder %v514, 1
      %vm547 = vcmp.eq.s32.totalorder %v515, 1
      %vm548 = vcmp.eq.s32.totalorder %v516, 1
      %vm549 = vcmp.eq.s32.totalorder %v517, 1
      %vm550 = vcmp.eq.s32.totalorder %v518, 1
      %vm551 = vcmp.eq.s32.totalorder %v519, 1
      %vm552 = vcmp.eq.s32.totalorder %v520, 1
      %vm553 = vcmp.eq.s32.totalorder %v521, 1
      %vm554 = vcmp.eq.s32.totalorder %v522, 1
      %vm555 = vcmp.eq.s32.totalorder %v523, 1
      %vm556 = vcmp.eq.s32.totalorder %v524, 1
      %vm557 = vcmp.eq.s32.totalorder %v525, 1
      %vm558 = vcmp.eq.s32.totalorder %v526, 1
      %vm559 = vcmp.eq.s32.totalorder %v527, 1
      %vm560 = vcmp.eq.s32.totalorder %v528, 1
      %vm561 = vcmp.eq.s32.totalorder %v529, 1
      %vm562 = vcmp.eq.s32.totalorder %v530, 1
      %vm563 = vcmp.eq.s32.totalorder %v531, 1
      %vm564 = vcmp.eq.s32.totalorder %v532, 1
      %vm565 = vcmp.eq.s32.totalorder %v533, 1
      %vm566 = vcmp.eq.s32.totalorder %v534, 1
      %vm567 = vcmp.eq.s32.totalorder %v535, 1
      %vm568 = vcmp.eq.s32.totalorder %v536, 1
      %vm569 = vcmp.eq.s32.totalorder %v537, 1
      %vm570 = vcmp.eq.s32.totalorder %v538, 1
      %vm571 = vcmp.eq.s32.totalorder %v539, 1
      %vm572 = vcmp.eq.s32.totalorder %v540, 1
      %vm573 = vcmp.eq.s32.totalorder %v541, 1
      %vm574 = vcmp.eq.s32.totalorder %v542, 1
      %vm575 = vcmp.eq.s32.totalorder %v543, 1
      %vm576 = vcmp.eq.s32.totalorder %v544, 1
      %v577 = vsel %vm545, %v382, 0.0
      %v578 = vsel %vm546, %v383, 0.0
      %v579 = vsel %vm547, %v384, 0.0
      %v580 = vsel %vm548, %v385, 0.0
      %v581 = vsel %vm549, %v386, 0.0
      %v582 = vsel %vm550, %v387, 0.0
      %v583 = vsel %vm551, %v388, 0.0
      %v584 = vsel %vm552, %v389, 0.0
      %v585 = vsel %vm553, %v390, 0.0
      %v586 = vsel %vm554, %v391, 0.0
      %v587 = vsel %vm555, %v392, 0.0
      %v588 = vsel %vm556, %v393, 0.0
      %v589 = vsel %vm557, %v394, 0.0
      %v590 = vsel %vm558, %v395, 0.0
      %v591 = vsel %vm559, %v396, 0.0
      %v592 = vsel %vm560, %v397, 0.0
      %v593 = vsel %vm561, %v398, 0.0
      %v594 = vsel %vm562, %v399, 0.0
      %v595 = vsel %vm563, %v400, 0.0
      %v596 = vsel %vm564, %v401, 0.0
      %v597 = vsel %vm565, %v402, 0.0
      %v598 = vsel %vm566, %v403, 0.0
      %v599 = vsel %vm567, %v404, 0.0
      %v600 = vsel %vm568, %v405, 0.0
      %v601 = vsel %vm569, %v406, 0.0
      %v602 = vsel %vm570, %v407, 0.0
      %v603 = vsel %vm571, %v408, 0.0
      %v604 = vsel %vm572, %v409, 0.0
      %v605 = vsel %vm573, %v410, 0.0
      %v606 = vsel %vm574, %v411, 0.0
      %v607 = vsel %vm575, %v412, 0.0
      %v608 = vsel %vm576, %v413, 0.0
      %v609 = vpack.c.bf16 %v578, %v577
      %v610 = vpack.c.bf16 %v580, %v579
      %v611 = vpack.c.bf16 %v582, %v581
      %v612 = vpack.c.bf16 %v584, %v583
      %v613 = vpack.c.bf16 %v586, %v585
      %v614 = vpack.c.bf16 %v588, %v587
      %v615 = vpack.c.bf16 %v590, %v589
      %v616 = vpack.c.bf16 %v592, %v591
      %v617 = vpack.c.bf16 %v594, %v593
      %v618 = vpack.c.bf16 %v596, %v595
      %v619 = vpack.c.bf16 %v598, %v597
      %v620 = vpack.c.bf16 %v600, %v599
      %v621 = vpack.c.bf16 %v602, %v601
      %v622 = vpack.c.bf16 %v604, %v603
      %v623 = vpack.c.bf16 %v606, %v605
      %v624 = vpack.c.bf16 %v608, %v607
      %v625 = vld [vmem:[%s3] sm:$0xf]
      %v626 = vld [vmem:[%s3 + $0x4] sm:$0xf]
      %v627 = vld [vmem:[%s3 + $0x8] sm:$0xf]
      %v628 = vld [vmem:[%s3 + $0xc] sm:$0xf]
      %v629 = vld [vmem:[%s3 + $0x10] sm:$0xf]
      %v630 = vld [vmem:[%s3 + $0x14] sm:$0xf]
      %v631 = vld [vmem:[%s3 + $0x18] sm:$0xf]
      %v632 = vld [vmem:[%s3 + $0x1c] sm:$0xf]
      %v633 = vld [vmem:[%s3 + $0x20] sm:$0xf]
      %v634 = vld [vmem:[%s3 + $0x24] sm:$0xf]
      %v635 = vld [vmem:[%s3 + $0x28] sm:$0xf]
      %v636 = vld [vmem:[%s3 + $0x2c] sm:$0xf]
      %v637 = vld [vmem:[%s3 + $0x30] sm:$0xf]
      %v638 = vld [vmem:[%s3 + $0x34] sm:$0xf]
      %v639 = vld [vmem:[%s3 + $0x38] sm:$0xf]
      %v640 = vld [vmem:[%s3 + $0x3c] sm:$0xf]
      %v657 = vunpack.c.l.b16 %v625
      %v658 = vunpack.c.l.b16 %v626
      %v659 = vunpack.c.l.b16 %v627
      %v660 = vunpack.c.l.b16 %v628
      %v661 = vunpack.c.l.b16 %v629
      %v662 = vunpack.c.l.b16 %v630
      %v663 = vunpack.c.l.b16 %v631
      %v664 = vunpack.c.l.b16 %v632
      %v665 = vunpack.c.l.b16 %v633
      %v666 = vunpack.c.l.b16 %v634
      %v667 = vunpack.c.l.b16 %v635
      %v668 = vunpack.c.l.b16 %v636
      %v669 = vunpack.c.l.b16 %v637
      %v670 = vunpack.c.l.b16 %v638
      %v671 = vunpack.c.l.b16 %v639
      %v672 = vunpack.c.l.b16 %v640
      %v673 = vpack.c.b16 %v658, %v657
      %v674 = vpack.c.b16 %v660, %v659
      %v675 = vpack.c.b16 %v662, %v661
      %v676 = vpack.c.b16 %v664, %v663
      %v677 = vpack.c.b16 %v666, %v665
      %v678 = vpack.c.b16 %v668, %v667
      %v679 = vpack.c.b16 %v670, %v669
      %v680 = vpack.c.b16 %v672, %v671
      %689 = vmatprep.subr.bf16.mxu0 0
      %690 = vmatpush1.bf16.msra.mxu0 %v680
      %691 = vmatprep.subr.bf16.mxu0 0
      %692 = vmatpush1.bf16.msra.mxu0 %v679
      %693 = vmatprep.subr.bf16.mxu0 0
      %694 = vmatpush1.bf16.msra.mxu0 %v678
      %695 = vmatprep.subr.bf16.mxu0 0
      %696 = vmatpush1.bf16.msra.mxu0 %v677
      %697 = vmatprep.subr.bf16.mxu0 0
      %698 = vmatpush1.bf16.msra.mxu0 %v676
      %699 = vmatprep.subr.bf16.mxu0 0
      %700 = vmatpush1.bf16.msra.mxu0 %v675
      %701 = vmatprep.subr.bf16.mxu0 0
      %702 = vmatpush1.bf16.msra.mxu0 %v674
      %703 = vmatprep.subr.bf16.mxu0 0
      %704 = vmatpush1.bf16.msra.mxu0 %v673
      %705 = vmatprep.subr.bf16.mxu0 0
      %706 = vmatpush2.bf16.msra.mxu0 0
      %707 = vmatprep.subr.bf16.mxu0 0
      %708 = vmatpush2.bf16.msra.mxu0 0
      %709 = vmatprep.subr.bf16.mxu0 0
      %710 = vmatpush2.bf16.msra.mxu0 0
      %711 = vmatprep.subr.bf16.mxu0 0
      %712 = vmatpush2.bf16.msra.mxu0 0
      %713 = vmatprep.subr.bf16.mxu0 0
      %714 = vmatpush2.bf16.msra.mxu0 0
      %715 = vmatprep.subr.bf16.mxu0 0
      %716 = vmatpush2.bf16.msra.mxu0 0
      %717 = vmatprep.subr.bf16.mxu0 0
      %718 = vmatpush2.bf16.msra.mxu0 0
      %719 = vmatprep.subr.bf16.mxu0 0
      %720 = vmatpush2.bf16.msra.mxu0 0
      %721 = vmatprep.mubr.bf16.mxu0 0
      %722 = vmatmul.mubr.bf16.gmra.mxu0 %v609
      %v723 = vpop.f32.mrf.mxu0
      %v724 = vadd.f32 0.0, %v723
      %v725 = vpop.f32.mrf.mxu0
      %v726 = vpop.f32.mrf.mxu0
      %v727 = vadd.f32 0.0, %v726
      %v728 = vpop.f32.mrf.mxu0
      %729 = vmatprep.mubr.bf16.mxu0 0
      %730 = vmatmul.mubr.bf16.gmra.mxu0 %v610
      %v731 = vpop.f32.mrf.mxu0
      %v732 = vadd.f32 0.0, %v731
      %v733 = vpop.f32.mrf.mxu0
      %v734 = vpop.f32.mrf.mxu0
      %v735 = vadd.f32 0.0, %v734
      %v736 = vpop.f32.mrf.mxu0
      %737 = vmatprep.mubr.bf16.mxu0 0
      %738 = vmatmul.mubr.bf16.gmra.mxu0 %v611
      %v739 = vpop.f32.mrf.mxu0
      %v740 = vadd.f32 0.0, %v739
      %v741 = vpop.f32.mrf.mxu0
      %v742 = vpop.f32.mrf.mxu0
      %v743 = vadd.f32 0.0, %v742
      %v744 = vpop.f32.mrf.mxu0
      %745 = vmatprep.mubr.bf16.mxu0 0
      %746 = vmatmul.mubr.bf16.gmra.mxu0 %v612
      %v747 = vpop.f32.mrf.mxu0
      %v748 = vadd.f32 0.0, %v747
      %v749 = vpop.f32.mrf.mxu0
      %v750 = vpop.f32.mrf.mxu0
      %v751 = vadd.f32 0.0, %v750
      %v752 = vpop.f32.mrf.mxu0
      %753 = vmatprep.mubr.bf16.mxu0 0
      %754 = vmatmul.mubr.bf16.gmra.mxu0 %v613
      %v755 = vpop.f32.mrf.mxu0
      %v756 = vadd.f32 0.0, %v755
      %v757 = vpop.f32.mrf.mxu0
      %v758 = vpop.f32.mrf.mxu0
      %v759 = vadd.f32 0.0, %v758
      %v760 = vpop.f32.mrf.mxu0
      %761 = vmatprep.mubr.bf16.mxu0 0
      %762 = vmatmul.mubr.bf16.gmra.mxu0 %v614
      %v763 = vpop.f32.mrf.mxu0
      %v764 = vadd.f32 0.0, %v763
      %v765 = vpop.f32.mrf.mxu0
      %v766 = vpop.f32.mrf.mxu0
      %v767 = vadd.f32 0.0, %v766
      %v768 = vpop.f32.mrf.mxu0
      %769 = vmatprep.mubr.bf16.mxu0 0
      %770 = vmatmul.mubr.bf16.gmra.mxu0 %v615
      %v771 = vpop.f32.mrf.mxu0
      %v772 = vadd.f32 0.0, %v771
      %v773 = vpop.f32.mrf.mxu0
      %v774 = vpop.f32.mrf.mxu0
      %v775 = vadd.f32 0.0, %v774
      %v776 = vpop.f32.mrf.mxu0
      %777 = vmatprep.mubr.bf16.mxu0 0
      %778 = vmatmul.mubr.bf16.gmra.mxu0 %v616
      %v779 = vpop.f32.mrf.mxu0
      %v780 = vadd.f32 0.0, %v779
      %v781 = vpop.f32.mrf.mxu0
      %v782 = vpop.f32.mrf.mxu0
      %v783 = vadd.f32 0.0, %v782
      %v784 = vpop.f32.mrf.mxu0
      %785 = vmatprep.mubr.bf16.mxu0 0
      %786 = vmatmul.mubr.bf16.gmra.mxu0 %v617
      %v787 = vpop.f32.mrf.mxu0
      %v788 = vadd.f32 0.0, %v787
      %v789 = vpop.f32.mrf.mxu0
      %v790 = vpop.f32.mrf.mxu0
      %v791 = vadd.f32 0.0, %v790
      %v792 = vpop.f32.mrf.mxu0
      %793 = vmatprep.mubr.bf16.mxu0 0
      %794 = vmatmul.mubr.bf16.gmra.mxu0 %v618
      %v795 = vpop.f32.mrf.mxu0
      %v796 = vadd.f32 0.0, %v795
      %v797 = vpop.f32.mrf.mxu0
      %v798 = vpop.f32.mrf.mxu0
      %v799 = vadd.f32 0.0, %v798
      %v800 = vpop.f32.mrf.mxu0
      %801 = vmatprep.mubr.bf16.mxu0 0
      %802 = vmatmul.mubr.bf16.gmra.mxu0 %v619
      %v803 = vpop.f32.mrf.mxu0
      %v804 = vadd.f32 0.0, %v803
      %v805 = vpop.f32.mrf.mxu0
      %v806 = vpop.f32.mrf.mxu0
      %v807 = vadd.f32 0.0, %v806
      %v808 = vpop.f32.mrf.mxu0
      %809 = vmatprep.mubr.bf16.mxu0 0
      %810 = vmatmul.mubr.bf16.gmra.mxu0 %v620
      %v811 = vpop.f32.mrf.mxu0
      %v812 = vadd.f32 0.0, %v811
      %v813 = vpop.f32.mrf.mxu0
      %v814 = vpop.f32.mrf.mxu0
      %v815 = vadd.f32 0.0, %v814
      %v816 = vpop.f32.mrf.mxu0
      %817 = vmatprep.mubr.bf16.mxu0 0
      %818 = vmatmul.mubr.bf16.gmra.mxu0 %v621
      %v819 = vpop.f32.mrf.mxu0
      %v820 = vadd.f32 0.0, %v819
      %v821 = vpop.f32.mrf.mxu0
      %v822 = vpop.f32.mrf.mxu0
      %v823 = vadd.f32 0.0, %v822
      %v824 = vpop.f32.mrf.mxu0
      %825 = vmatprep.mubr.bf16.mxu0 0
      %826 = vmatmul.mubr.bf16.gmra.mxu0 %v622
      %v827 = vpop.f32.mrf.mxu0
      %v828 = vadd.f32 0.0, %v827
      %v829 = vpop.f32.mrf.mxu0
      %v830 = vpop.f32.mrf.mxu0
      %v831 = vadd.f32 0.0, %v830
      %v832 = vpop.f32.mrf.mxu0
      %833 = vmatprep.mubr.bf16.mxu0 0
      %834 = vmatmul.mubr.bf16.gmra.mxu0 %v623
      %v835 = vpop.f32.mrf.mxu0
      %v836 = vadd.f32 0.0, %v835
      %v837 = vpop.f32.mrf.mxu0
      %v838 = vpop.f32.mrf.mxu0
      %v839 = vadd.f32 0.0, %v838
      %v840 = vpop.f32.mrf.mxu0
      %841 = vmatprep.mubr.bf16.mxu0 0
      %842 = vmatmul.mubr.bf16.gmra.mxu0 %v624
      %v843 = vpop.f32.mrf.mxu0
      %v844 = vadd.f32 0.0, %v843
      %v845 = vpop.f32.mrf.mxu0
      %v846 = vpop.f32.mrf.mxu0
      %v847 = vadd.f32 0.0, %v846
      %v848 = vpop.f32.mrf.mxu0
      %849 = vdwg.mxu0
      %v850 = vpack.c.bf16 %v727, %v724
      %v851 = vpack.c.bf16 %v735, %v732
      %v852 = vpack.c.bf16 %v743, %v740
      %v853 = vpack.c.bf16 %v751, %v748
      %v854 = vpack.c.bf16 %v759, %v756
      %v855 = vpack.c.bf16 %v767, %v764
      %v856 = vpack.c.bf16 %v775, %v772
      %v857 = vpack.c.bf16 %v783, %v780
      %v858 = vpack.c.bf16 %v791, %v788
      %v859 = vpack.c.bf16 %v799, %v796
      %v860 = vpack.c.bf16 %v807, %v804
      %v861 = vpack.c.bf16 %v815, %v812
      %v862 = vpack.c.bf16 %v823, %v820
      %v863 = vpack.c.bf16 %v831, %v828
      %v864 = vpack.c.bf16 %v839, %v836
      %v865 = vpack.c.bf16 %v847, %v844
      %v882 = vunpack.c.l.b16 %v850
      %v883 = vunpack.c.h.b16 %v850
      %v884 = vunpack.c.l.b16 %v851
      %v885 = vunpack.c.h.b16 %v851
      %v886 = vunpack.c.l.b16 %v852
      %v887 = vunpack.c.h.b16 %v852
      %v888 = vunpack.c.l.b16 %v853
      %v889 = vunpack.c.h.b16 %v853
      %v890 = vunpack.c.l.b16 %v854
      %v891 = vunpack.c.h.b16 %v854
      %v892 = vunpack.c.l.b16 %v855
      %v893 = vunpack.c.h.b16 %v855
      %v894 = vunpack.c.l.b16 %v856
      %v895 = vunpack.c.h.b16 %v856
      %v896 = vunpack.c.l.b16 %v857
      %v897 = vunpack.c.h.b16 %v857
      %v898 = vunpack.c.l.b16 %v858
      %v899 = vunpack.c.h.b16 %v858
      %v900 = vunpack.c.l.b16 %v859
      %v901 = vunpack.c.h.b16 %v859
      %v902 = vunpack.c.l.b16 %v860
      %v903 = vunpack.c.h.b16 %v860
      %v904 = vunpack.c.l.b16 %v861
      %v905 = vunpack.c.h.b16 %v861
      %v906 = vunpack.c.l.b16 %v862
      %v907 = vunpack.c.h.b16 %v862
      %v908 = vunpack.c.l.b16 %v863
      %v909 = vunpack.c.h.b16 %v863
      %v910 = vunpack.c.l.b16 %v864
      %v911 = vunpack.c.h.b16 %v864
      %v912 = vunpack.c.l.b16 %v865
      %v913 = vunpack.c.h.b16 %v865
      %v914 = vpack.c.b16 %v882, %v882
      %v915 = vpack.c.b16 %v883, %v883
      %v916 = vpack.c.b16 %v884, %v884
      %v917 = vpack.c.b16 %v885, %v885
      %v918 = vpack.c.b16 %v886, %v886
      %v919 = vpack.c.b16 %v887, %v887
      %v920 = vpack.c.b16 %v888, %v888
      %v921 = vpack.c.b16 %v889, %v889
      %v922 = vpack.c.b16 %v890, %v890
      %v923 = vpack.c.b16 %v891, %v891
      %v924 = vpack.c.b16 %v892, %v892
      %v925 = vpack.c.b16 %v893, %v893
      %v926 = vpack.c.b16 %v894, %v894
      %v927 = vpack.c.b16 %v895, %v895
      %v928 = vpack.c.b16 %v896, %v896
      %v929 = vpack.c.b16 %v897, %v897
      %v930 = vpack.c.b16 %v898, %v898
      %v931 = vpack.c.b16 %v899, %v899
      %v932 = vpack.c.b16 %v900, %v900
      %v933 = vpack.c.b16 %v901, %v901
      %v934 = vpack.c.b16 %v902, %v902
      %v935 = vpack.c.b16 %v903, %v903
      %v936 = vpack.c.b16 %v904, %v904
      %v937 = vpack.c.b16 %v905, %v905
      %v938 = vpack.c.b16 %v906, %v906
      %v939 = vpack.c.b16 %v907, %v907
      %v940 = vpack.c.b16 %v908, %v908
      %v941 = vpack.c.b16 %v909, %v909
      %v942 = vpack.c.b16 %v910, %v910
      %v943 = vpack.c.b16 %v911, %v911
      %v944 = vpack.c.b16 %v912, %v912
      %v945 = vpack.c.b16 %v913, %v913
      %978 = vst [vmem:[%s233] sm:$0xf] %v914
      %979 = vst [vmem:[%s233 + $0x4] sm:$0xf] %v915
      %980 = vst [vmem:[%s233 + $0x8] sm:$0xf] %v916
      %981 = vst [vmem:[%s233 + $0xc] sm:$0xf] %v917
      %982 = vst [vmem:[%s233 + $0x10] sm:$0xf] %v918
      %983 = vst [vmem:[%s233 + $0x14] sm:$0xf] %v919
      %984 = vst [vmem:[%s233 + $0x18] sm:$0xf] %v920
      %985 = vst [vmem:[%s233 + $0x1c] sm:$0xf] %v921
      %986 = vst [vmem:[%s233 + $0x20] sm:$0xf] %v922
      %987 = vst [vmem:[%s233 + $0x24] sm:$0xf] %v923
      %988 = vst [vmem:[%s233 + $0x28] sm:$0xf] %v924
      %989 = vst [vmem:[%s233 + $0x2c] sm:$0xf] %v925
      %990 = vst [vmem:[%s233 + $0x30] sm:$0xf] %v926
      %991 = vst [vmem:[%s233 + $0x34] sm:$0xf] %v927
      %992 = vst [vmem:[%s233 + $0x38] sm:$0xf] %v928
      %993 = vst [vmem:[%s233 + $0x3c] sm:$0xf] %v929
      %994 = vst [vmem:[%s233 + $0x40] sm:$0xf] %v930
      %995 = vst [vmem:[%s233 + $0x44] sm:$0xf] %v931
      %996 = vst [vmem:[%s233 + $0x48] sm:$0xf] %v932
      %997 = vst [vmem:[%s233 + $0x4c] sm:$0xf] %v933
      %998 = vst [vmem:[%s233 + $0x50] sm:$0xf] %v934
      %999 = vst [vmem:[%s233 + $0x54] sm:$0xf] %v935
      %1000 = vst [vmem:[%s233 + $0x58] sm:$0xf] %v936
      %1001 = vst [vmem:[%s233 + $0x5c] sm:$0xf] %v937
      %1002 = vst [vmem:[%s233 + $0x60] sm:$0xf] %v938
      %1003 = vst [vmem:[%s233 + $0x64] sm:$0xf] %v939
      %1004 = vst [vmem:[%s233 + $0x68] sm:$0xf] %v940
      %1005 = vst [vmem:[%s233 + $0x6c] sm:$0xf] %v941
      %1006 = vst [vmem:[%s233 + $0x70] sm:$0xf] %v942
      %1007 = vst [vmem:[%s233 + $0x74] sm:$0xf] %v943
      %1008 = vst [vmem:[%s233 + $0x78] sm:$0xf] %v944
      %1009 = vst [vmem:[%s233 + $0x7c] sm:$0xf] %v945
      %v1010 = vadd.f32 %v724, %v727
      %v1011 = vadd.f32 %v1010, %v732
      %v1012 = vadd.f32 %v1011, %v735
      %v1013 = vadd.f32 %v1012, %v740
      %v1014 = vadd.f32 %v1013, %v743
      %v1015 = vadd.f32 %v1014, %v748
      %v1016 = vadd.f32 %v1015, %v751
      %v1017 = vadd.f32 %v1016, %v756
      %v1018 = vadd.f32 %v1017, %v759
      %v1019 = vadd.f32 %v1018, %v764
      %v1020 = vadd.f32 %v1019, %v767
      %v1021 = vadd.f32 %v1020, %v772
      %v1022 = vadd.f32 %v1021, %v775
      %v1023 = vadd.f32 %v1022, %v780
      %v1024 = vadd.f32 %v1023, %v783
      %v1025 = vadd.f32 %v1024, %v788
      %v1026 = vadd.f32 %v1025, %v791
      %v1027 = vadd.f32 %v1026, %v796
      %v1028 = vadd.f32 %v1027, %v799
      %v1029 = vadd.f32 %v1028, %v804
      %v1030 = vadd.f32 %v1029, %v807
      %v1031 = vadd.f32 %v1030, %v812
      %v1032 = vadd.f32 %v1031, %v815
      %v1033 = vadd.f32 %v1032, %v820
      %v1034 = vadd.f32 %v1033, %v823
      %v1035 = vadd.f32 %v1034, %v828
      %v1036 = vadd.f32 %v1035, %v831
      %v1037 = vadd.f32 %v1036, %v836
      %v1038 = vadd.f32 %v1037, %v839
      %v1039 = vadd.f32 %v1038, %v844
      %v1040 = vadd.f32 %v1039, %v847
      %v1041 = vrot.slane %v1040, 4
      %v1042 = vadd.f32 %v1040, %v1041
      %v1043 = vrot.slane %v1042, 2
      %v1044 = vadd.f32 %v1042, %v1043
      %v1045 = vrot.slane %v1044, 1
      %v1046 = vadd.f32 %v1044, %v1045
      %v1047 = vmul.f32 %v724, %v724
      %v1048 = vmul.f32 %v727, %v727
      %v1049 = vmul.f32 %v732, %v732
      %v1050 = vmul.f32 %v735, %v735
      %v1051 = vmul.f32 %v740, %v740
      %v1052 = vmul.f32 %v743, %v743
      %v1053 = vmul.f32 %v748, %v748
      %v1054 = vmul.f32 %v751, %v751
      %v1055 = vmul.f32 %v756, %v756
      %v1056 = vmul.f32 %v759, %v759
      %v1057 = vmul.f32 %v764, %v764
      %v1058 = vmul.f32 %v767, %v767
      %v1059 = vmul.f32 %v772, %v772
      %v1060 = vmul.f32 %v775, %v775
      %v1061 = vmul.f32 %v780, %v780
      %v1062 = vmul.f32 %v783, %v783
      %v1063 = vmul.f32 %v788, %v788
      %v1064 = vmul.f32 %v791, %v791
      %v1065 = vmul.f32 %v796, %v796
      %v1066 = vmul.f32 %v799, %v799
      %v1067 = vmul.f32 %v804, %v804
      %v1068 = vmul.f32 %v807, %v807
      %v1069 = vmul.f32 %v812, %v812
      %v1070 = vmul.f32 %v815, %v815
      %v1071 = vmul.f32 %v820, %v820
      %v1072 = vmul.f32 %v823, %v823
      %v1073 = vmul.f32 %v828, %v828
      %v1074 = vmul.f32 %v831, %v831
      %v1075 = vmul.f32 %v836, %v836
      %v1076 = vmul.f32 %v839, %v839
      %v1077 = vmul.f32 %v844, %v844
      %v1078 = vmul.f32 %v847, %v847
      %v1079 = vadd.f32 %v1047, %v1048
      %v1080 = vadd.f32 %v1079, %v1049
      %v1081 = vadd.f32 %v1080, %v1050
      %v1082 = vadd.f32 %v1081, %v1051
      %v1083 = vadd.f32 %v1082, %v1052
      %v1084 = vadd.f32 %v1083, %v1053
      %v1085 = vadd.f32 %v1084, %v1054
      %v1086 = vadd.f32 %v1085, %v1055
      %v1087 = vadd.f32 %v1086, %v1056
      %v1088 = vadd.f32 %v1087, %v1057
      %v1089 = vadd.f32 %v1088, %v1058
      %v1090 = vadd.f32 %v1089, %v1059
      %v1091 = vadd.f32 %v1090, %v1060
      %v1092 = vadd.f32 %v1091, %v1061
      %v1093 = vadd.f32 %v1092, %v1062
      %v1094 = vadd.f32 %v1093, %v1063
      %v1095 = vadd.f32 %v1094, %v1064
      %v1096 = vadd.f32 %v1095, %v1065
      %v1097 = vadd.f32 %v1096, %v1066
      %v1098 = vadd.f32 %v1097, %v1067
      %v1099 = vadd.f32 %v1098, %v1068
      %v1100 = vadd.f32 %v1099, %v1069
      %v1101 = vadd.f32 %v1100, %v1070
      %v1102 = vadd.f32 %v1101, %v1071
      %v1103 = vadd.f32 %v1102, %v1072
      %v1104 = vadd.f32 %v1103, %v1073
      %v1105 = vadd.f32 %v1104, %v1074
      %v1106 = vadd.f32 %v1105, %v1075
      %v1107 = vadd.f32 %v1106, %v1076
      %v1108 = vadd.f32 %v1107, %v1077
      %v1109 = vadd.f32 %v1108, %v1078
      %v1110 = vrot.slane %v1109, 4
      %v1111 = vadd.f32 %v1109, %v1110
      %v1112 = vrot.slane %v1111, 2
      %v1113 = vadd.f32 %v1111, %v1112
      %v1114 = vrot.slane %v1113, 1
      %v1115 = vadd.f32 %v1113, %v1114
      %vm1116 = vcmask 1040384
      %v1117 = vsel %vm1116, %v1046, %v1115
      %vm1118 = vcmask 1041408
      %v1119 = vsel %vm1118, %v1117, 0.0
      %1120 = vst [vmem:[%s238] sm:$0xff] %v1119
      %s1121 = smul.u32 32, %s17
      %p1122 = scmp.lt.s32.totalorder %s1121, 63
      %s1123 = scalar_select %p1122, %s1121, 63
      %s1124 = smul.addr %s1123, 4
      %s1125 = scalar_lea.vmem %s4, %s1124
      %p1126 = scmp.lt.s32.totalorder %s17, 1
      %s1127 = scalar_select %p1126, %s17, 1
      %s1128 = smul.addr %s1127, 8
      %s1129 = scalar_lea.vmem %s5, %s1128
      // Predicated region
      $region37: #{bottleneck_forward.6} parent=35 // pred_check
        %p1130 = pneg %p124
      $region38: #{bottleneck_forward.6} parent=35 // pred_check_branch
        %1132 = sbr.rel (%p1130) target = $region40
      $region39: #{bottleneck_forward.6} parent=35 // pred_region
        %s1133 = smul.u32 32, %s17
      $region40: #{bottleneck_forward.6} parent=35 // pred_fallthru
        _
      // Predicated region
      $region41: #{bottleneck_forward.6} parent=35 // pred_check
        %p1134 = pneg %p150
      $region42: #{bottleneck_forward.6} parent=35 // pred_check_branch
        %1136 = sbr.rel (%p1134) target = $region44
      $region43: #{bottleneck_forward.6} parent=35 // pred_region
        _
      $region44: #{bottleneck_forward.6} parent=35 // pred_fallthru
        _
    $region36: #{bottleneck_forward.6} parent=5 // pred_fallthru
      _
    %p1137 = scmp.le.s32.totalorder 2, %s12
    // Predicated region
    $region45: #{bottleneck_forward.6} parent=5 // pred_check
      %p1138 = pneg %p1137
    $region46: #{bottleneck_forward.6} parent=5 // pred_check_branch
      %1140 = sbr.rel (%p1138) target = $region48
    $region47: #{bottleneck_forward.6} parent=5 // pred_region
      %s1141 = ssub.s32 %s12, 2
      // Predicated region
      $region49: #{bottleneck_forward.6} parent=47 // pred_check
        %p1142 = pneg %p130
      $region50: #{bottleneck_forward.6} parent=47 // pred_check_branch
        %1144 = sbr.rel (%p1142) target = $region52
      $region51: #{bottleneck_forward.6} parent=47 // pred_region
        %s1145 = smul.u32 32, %s18
        %p1146 = scmp.lt.s32.totalorder %s1145, 63
        %s1147 = scalar_select %p1146, %s1145, 63
        %s1148 = smul.addr %s1147, 4
        %s1149 = scalar_lea.vmem %s4, %s1148
      $region52: #{bottleneck_forward.6} parent=47 // pred_fallthru
        _
      // Predicated region
      $region53: #{bottleneck_forward.6} parent=47 // pred_check
        %p1150 = pneg %p156
      $region54: #{bottleneck_forward.6} parent=47 // pred_check_branch
        %1152 = sbr.rel (%p1150) target = $region56
      $region55: #{bottleneck_forward.6} parent=47 // pred_region
        %p1153 = scmp.lt.s32.totalorder %s18, 1
        %s1154 = scalar_select %p1153, %s18, 1
        %s1155 = smul.addr %s1154, 8
        %s1156 = scalar_lea.vmem %s5, %s1155
      $region56: #{bottleneck_forward.6} parent=47 // pred_fallthru
        _
    $region48: #{bottleneck_forward.6} parent=5 // pred_fallthru
      _
  $region6: #{bottleneck_forward.6} parent=0 // loop_footer
    %s16 = sadd.s32 1, %s12
  $region7: #{bottleneck_forward.6} parent=0 // loop_footer_branch
    %11 = sbr.rel target = $region3
  $region8: #{bottleneck_forward.6} parent=0 // loop_exit
    _

// kernel: bottleneck_forward.5
$region0: #{bottleneck_forward.5}
  #allocation0 [shape = 'u32[]', space=smem, size = 0x4, offset = 0x4, fixed_abs, tag = 'smem constant byte address 0x4 - core index']
  #allocation1 [shape = 'u32[144,128]{1,0:T(1,128)}', space=vmem, size = 0x12000, scoped, tag = 'internal scratch']
  #allocation2 [shape = 'f32[448,128]{1,0:T(8,128)}', space=vmem, size = 0x38000, scoped, tag = 'scratch operand']
  %s0 = inlined_call_operand.vmem [shape: bf16[2,16,16,128], index: 0, kind: input, shape index: {}]
  %s1 = inlined_call_operand.vmem [shape: f32[1,128], index: 1, kind: input, shape index: {}]
  %s2 = inlined_call_operand.vmem [shape: f32[1,128], index: 2, kind: input, shape index: {}]
  %s3 = inlined_call_operand.vmem [shape: bf16[9,128,128], index: 3, kind: input, shape index: {}]
  %s4 = inlined_call_operand.vmem [shape: bf16[2,16,16,128], index: 4, kind: output, shape index: {0}]
  %s5 = inlined_call_operand.vmem [shape: f32[16,128], index: 5, kind: output, shape index: {1}]
  %6 = xla_tuple %s4, %s5
  %s7 = sld [smem:[#allocation0]]
  $region57: #{bottleneck_forward.5} parent=0
    _
  %s9 = ssub.s32 1, %s7
  %s10 = scalar_select 0, %s9, %s7
  loop: start=0, step=1, limit=4
  $region2: #{bottleneck_forward.5} parent=0 // loop_pre_header
    _
  $region3: #{bottleneck_forward.5} parent=0 // loop_header
    %s12 = sphi 0, %s16
    %p13 = scmp.ge.s32.totalorder %s12, 4
    %s22 = sphi 0, %s24
    %s25 = sphi 0, %s22
    %s26 = sphi 0, %s25
    %s42 = sphi 0, %s26
    %s46 = sphi 0, %s46
    %s48 = sphi 0, %s46
    %s49 = sphi 0, %s48
    %s63 = sphi 0, %s49
    %s67 = sphi 0, %s67
    %s69 = sphi 0, %s67
    %s70 = sphi 0, %s69
    %s84 = sphi 0, %s70
    %s88 = sphi 0, %s88
    %s90 = sphi 0, %s88
    %s91 = sphi 0, %s90
    %s105 = sphi 0, %s91
    %s111 = sphi 0, %s113
    %s114 = sphi 0, %s111
    %s115 = sphi 0, %s114
    %s131 = sphi 0, %s115
    %s137 = sphi 0, %s139
    %s140 = sphi 0, %s137
    %s141 = sphi 0, %s140
    %s157 = sphi 0, %s141
  $region4: #{bottleneck_forward.5} parent=0 // loop_header_branch
    %15 = sbr.rel (%p13) target = $region8
  $region5: #{bottleneck_forward.5} parent=0 // loop_body
    %s17 = ssub.s32 %s12, 1
    %s18 = ssub.s32 %s12, 2
    %s19 = sadd.s32 %s12, 1
    %s20 = ssub.s32 %s12, %s19
    %p21 = scmp.eq.s32.totalorder %s20, 0
    %s23 = sadd.s32 %s22, 1
    %s24 = scalar_select %p21, %s22, %s23
    %p27 = pneg %p21
    %p28 = scmp.eq.s32.totalorder %s12, 1
    %p29 = por %p27, %p28
    %p30 = scmp.ne.s32.totalorder %s22, %s25
    %p31 = scmp.eq.s32.totalorder %s12, 0
    %p32 = por %p30, %p31
    %p33 = scmp.ne.s32.totalorder %s22, %s25
    %p34 = scmp.eq.s32.totalorder %s17, 1
    %p35 = por %p33, %p34
    %p36 = scmp.ne.s32.totalorder %s25, %s26
    %p37 = scmp.eq.s32.totalorder %s17, 0
    %p38 = por %p36, %p37
    %p39 = scmp.ne.s32.totalorder %s25, %s26
    %p40 = scmp.eq.s32.totalorder %s18, 1
    %p41 = por %p39, %p40
    %p43 = scmp.ne.s32.totalorder %s26, %s42
    %p44 = scmp.eq.s32.totalorder %s18, 0
    %p45 = por %p43, %p44
    %s47 = sadd.s32 %s46, 1
    %p50 = scmp.eq.s32.totalorder %s12, 1
    %p51 = scmp.ne.s32.totalorder %s46, %s48
    %p52 = scmp.eq.s32.totalorder %s12, 0
    %p53 = por %p51, %p52
    %p54 = scmp.ne.s32.totalorder %s46, %s48
    %p55 = scmp.eq.s32.totalorder %s17, 1
    %p56 = por %p54, %p55
    %p57 = scmp.ne.s32.totalorder %s48, %s49
    %p58 = scmp.eq.s32.totalorder %s17, 0
    %p59 = por %p57, %p58
    %p60 = scmp.ne.s32.totalorder %s48, %s49
    %p61 = scmp.eq.s32.totalorder %s18, 1
    %p62 = por %p60, %p61
    %p64 = scmp.ne.s32.totalorder %s49, %s63
    %p65 = scmp.eq.s32.totalorder %s18, 0
    %p66 = por %p64, %p65
    %s68 = sadd.s32 %s67, 1
    %p71 = scmp.eq.s32.totalorder %s12, 1
    %p72 = scmp.ne.s32.totalorder %s67, %s69
    %p73 = scmp.eq.s32.totalorder %s12, 0
    %p74 = por %p72, %p73
    %p75 = scmp.ne.s32.totalorder %s67, %s69
    %p76 = scmp.eq.s32.totalorder %s17, 1
    %p77 = por %p75, %p76
    %p78 = scmp.ne.s32.totalorder %s69, %s70
    %p79 = scmp.eq.s32.totalorder %s17, 0
    %p80 = por %p78, %p79
    %p81 = scmp.ne.s32.totalorder %s69, %s70
    %p82 = scmp.eq.s32.totalorder %s18, 1
    %p83 = por %p81, %p82
    %p85 = scmp.ne.s32.totalorder %s70, %s84
    %p86 = scmp.eq.s32.totalorder %s18, 0
    %p87 = por %p85, %p86
    %s89 = sadd.s32 %s88, 1
    %p92 = scmp.eq.s32.totalorder %s12, 1
    %p93 = scmp.ne.s32.totalorder %s88, %s90
    %p94 = scmp.eq.s32.totalorder %s12, 0
    %p95 = por %p93, %p94
    %p96 = scmp.ne.s32.totalorder %s88, %s90
    %p97 = scmp.eq.s32.totalorder %s17, 1
    %p98 = por %p96, %p97
    %p99 = scmp.ne.s32.totalorder %s90, %s91
    %p100 = scmp.eq.s32.totalorder %s17, 0
    %p101 = por %p99, %p100
    %p102 = scmp.ne.s32.totalorder %s90, %s91
    %p103 = scmp.eq.s32.totalorder %s18, 1
    %p104 = por %p102, %p103
    %p106 = scmp.ne.s32.totalorder %s91, %s105
    %p107 = scmp.eq.s32.totalorder %s18, 0
    %p108 = por %p106, %p107
    %s109 = ssub.s32 %s12, %s19
    %p110 = scmp.eq.s32.totalorder %s109, 0
    %s112 = sadd.s32 %s111, 1
    %s113 = scalar_select %p110, %s111, %s112
    %p116 = pneg %p110
    %p117 = scmp.eq.s32.totalorder %s12, 1
    %p118 = por %p116, %p117
    %p119 = scmp.ne.s32.totalorder %s111, %s114
    %p120 = scmp.eq.s32.totalorder %s12, 0
    %p121 = por %p119, %p120
    %p122 = scmp.ne.s32.totalorder %s111, %s114
    %p123 = scmp.eq.s32.totalorder %s17, 1
    %p124 = por %p122, %p123
    %p125 = scmp.ne.s32.totalorder %s114, %s115
    %p126 = scmp.eq.s32.totalorder %s17, 0
    %p127 = por %p125, %p126
    %p128 = scmp.ne.s32.totalorder %s114, %s115
    %p129 = scmp.eq.s32.totalorder %s18, 1
    %p130 = por %p128, %p129
    %p132 = scmp.ne.s32.totalorder %s115, %s131
    %p133 = scmp.eq.s32.totalorder %s18, 0
    %p134 = por %p132, %p133
    %s135 = ssub.s32 %s12, %s19
    %p136 = scmp.eq.s32.totalorder %s135, 0
    %s138 = sadd.s32 %s137, 1
    %s139 = scalar_select %p136, %s137, %s138
    %p142 = pneg %p136
    %p143 = scmp.eq.s32.totalorder %s12, 1
    %p144 = por %p142, %p143
    %p145 = scmp.ne.s32.totalorder %s137, %s140
    %p146 = scmp.eq.s32.totalorder %s12, 0
    %p147 = por %p145, %p146
    %p148 = scmp.ne.s32.totalorder %s137, %s140
    %p149 = scmp.eq.s32.totalorder %s17, 1
    %p150 = por %p148, %p149
    %p151 = scmp.ne.s32.totalorder %s140, %s141
    %p152 = scmp.eq.s32.totalorder %s17, 0
    %p153 = por %p151, %p152
    %p154 = scmp.ne.s32.totalorder %s140, %s141
    %p155 = scmp.eq.s32.totalorder %s18, 1
    %p156 = por %p154, %p155
    %p158 = scmp.ne.s32.totalorder %s141, %s157
    %p159 = scmp.eq.s32.totalorder %s18, 0
    %p160 = por %p158, %p159
    %p161 = scmp.le.s32.totalorder 1, %s12
    %p162 = scmp.lt.s32.totalorder %s12, 3
    %p163 = pnand %p161, %p162
    %p164 = pneg %p163
    // Predicated region
    $region9: #{bottleneck_forward.5} parent=5 // pred_check
      _
    $region10: #{bottleneck_forward.5} parent=5 // pred_check_branch
      %166 = sbr.rel (%p163) target = $region12
    $region11: #{bottleneck_forward.5} parent=5 // pred_region
      %s167 = ssub.s32 %s12, 1
      // Predicated region
      $region13: #{bottleneck_forward.5} parent=11 // pred_check
        %p168 = pneg %p59
      $region14: #{bottleneck_forward.5} parent=11 // pred_check_branch
        %170 = sbr.rel (%p168) target = $region16
      $region15: #{bottleneck_forward.5} parent=11 // pred_region
        _
      $region16: #{bottleneck_forward.5} parent=11 // pred_fallthru
        _
      // Predicated region
      $region17: #{bottleneck_forward.5} parent=11 // pred_check
        %p171 = pneg %p80
      $region18: #{bottleneck_forward.5} parent=11 // pred_check_branch
        %173 = sbr.rel (%p171) target = $region20
      $region19: #{bottleneck_forward.5} parent=11 // pred_region
        _
      $region20: #{bottleneck_forward.5} parent=11 // pred_fallthru
        _
      // Predicated region
      $region21: #{bottleneck_forward.5} parent=11 // pred_check
        %p174 = pneg %p101
      $region22: #{bottleneck_forward.5} parent=11 // pred_check_branch
        %176 = sbr.rel (%p174) target = $region24
      $region23: #{bottleneck_forward.5} parent=11 // pred_region
        _
      $region24: #{bottleneck_forward.5} parent=11 // pred_fallthru
        _
    $region12: #{bottleneck_forward.5} parent=5 // pred_fallthru
      _
    %p177 = scmp.lt.s32.totalorder %s12, 2
    // Predicated region
    $region25: #{bottleneck_forward.5} parent=5 // pred_check
      %p178 = pneg %p177
    $region26: #{bottleneck_forward.5} parent=5 // pred_check_branch
      %180 = sbr.rel (%p178) target = $region28
    $region27: #{bottleneck_forward.5} parent=5 // pred_region
      // Predicated region
      $region29: #{bottleneck_forward.5} parent=27 // pred_check
        %p181 = pneg %p32
      $region30: #{bottleneck_forward.5} parent=27 // pred_check_branch
        %183 = sbr.rel (%p181) target = $region32
      $region31: #{bottleneck_forward.5} parent=27 // pred_region
        %p184 = scmp.lt.s32.totalorder %s12, 1
        %s185 = scalar_select %p184, %s12, 1
        %s186 = smul.addr %s185, 32
        %s187 = smul.addr %s186, 4
        %s188 = scalar_lea.vmem %s0, %s187
      $region32: #{bottleneck_forward.5} parent=27 // pred_fallthru
        _
    $region28: #{bottleneck_forward.5} parent=5 // pred_fallthru
      _
    %p189 = scmp.le.s32.totalorder 1, %s12
    %p190 = scmp.lt.s32.totalorder %s12, 3
    %p191 = pnand %p189, %p190
    %p192 = pneg %p191
    // Predicated region
    $region33: #{bottleneck_forward.5} parent=5 // pred_check
      _
    $region34: #{bottleneck_forward.5} parent=5 // pred_check_branch
      %194 = sbr.rel (%p191) target = $region36
    $region35: #{bottleneck_forward.5} parent=5 // pred_region
      %s195 = ssub.s32 %s12, 1
      %p196 = scmp.lt.s32.totalorder %s17, 1
      %s197 = scalar_select %p196, %s17, 1
      %s198 = smul.addr %s197, 32
      %s199 = smul.addr %s198, 4
      %s200 = scalar_lea.vmem %s0, %s199
      %p201 = pneg %p38
      %p202 = pneg %p35
      %p203 = pneg %p59
      %p204 = pneg %p56
      %p205 = pneg %p80
      %p206 = pneg %p77
      %p207 = pneg %p101
      %p208 = pneg %p98
      %p209 = pneg %p127
      %p210 = pneg %p124
      %p211 = scmp.lt.s32.totalorder %s17, 1
      %s212 = scalar_select %p211, %s17, 1
      %s213 = smul.addr %s212, 32
      %s214 = smul.addr %s213, 4
      %s215 = scalar_lea.vmem %s4, %s214
      %p216 = pneg %p153
      %p217 = pneg %p150
      %p218 = scmp.lt.s32.totalorder %s17, 1
      %s219 = scalar_select %p218, %s17, 1
      %s220 = smul.addr %s219, 8
      %s221 = scalar_lea.vmem %s5, %s220
      %p222 = scmp.lt.s32.totalorder %s17, 1
      %s223 = scalar_select %p222, %s17, 1
      %s224 = smul.addr %s223, 32
      %s225 = smul.addr %s224, 4
      %s226 = scalar_lea.vmem %s0, %s225
      %p227 = scmp.lt.s32.totalorder %s17, 1
      %s228 = scalar_select %p227, %s17, 1
      %s229 = smul.addr %s228, 32
      %s230 = smul.addr %s229, 4
      %s231 = scalar_lea.vmem %s4, %s230
      %p232 = scmp.lt.s32.totalorder %s17, 1
      %s233 = scalar_select %p232, %s17, 1
      %s234 = smul.addr %s233, 8
      %s235 = scalar_lea.vmem %s5, %s234
      %237 = vst [vmem:[#allocation2] sm:$0xff] 0.0
      %238 = vst [vmem:[#allocation2 + $0x8] sm:$0xff] 0.0
      %239 = vst [vmem:[#allocation2 + $0x10] sm:$0xff] 0.0
      %240 = vst [vmem:[#allocation2 + $0x18] sm:$0xff] 0.0
      %241 = vst [vmem:[#allocation2 + $0x20] sm:$0xff] 0.0
      %242 = vst [vmem:[#allocation2 + $0x28] sm:$0xff] 0.0
      %243 = vst [vmem:[#allocation2 + $0x30] sm:$0xff] 0.0
      %244 = vst [vmem:[#allocation2 + $0x38] sm:$0xff] 0.0
      %245 = vst [vmem:[#allocation2 + $0x40] sm:$0xff] 0.0
      %246 = vst [vmem:[#allocation2 + $0x48] sm:$0xff] 0.0
      %247 = vst [vmem:[#allocation2 + $0x50] sm:$0xff] 0.0
      %248 = vst [vmem:[#allocation2 + $0x58] sm:$0xff] 0.0
      %249 = vst [vmem:[#allocation2 + $0x60] sm:$0xff] 0.0
      %250 = vst [vmem:[#allocation2 + $0x68] sm:$0xff] 0.0
      %251 = vst [vmem:[#allocation2 + $0x70] sm:$0xff] 0.0
      %252 = vst [vmem:[#allocation2 + $0x78] sm:$0xff] 0.0
      %253 = vst [vmem:[#allocation2 + $0x80] sm:$0xff] 0.0
      %254 = vst [vmem:[#allocation2 + $0x88] sm:$0xff] 0.0
      %255 = vst [vmem:[#allocation2 + $0x90] sm:$0xff] 0.0
      %256 = vst [vmem:[#allocation2 + $0x98] sm:$0xff] 0.0
      %257 = vst [vmem:[#allocation2 + $0xa0] sm:$0xff] 0.0
      %258 = vst [vmem:[#allocation2 + $0xa8] sm:$0xff] 0.0
      %259 = vst [vmem:[#allocation2 + $0xb0] sm:$0xff] 0.0
      %260 = vst [vmem:[#allocation2 + $0xb8] sm:$0xff] 0.0
      %261 = vst [vmem:[#allocation2 + $0xc0] sm:$0xff] 0.0
      %262 = vst [vmem:[#allocation2 + $0xc8] sm:$0xff] 0.0
      %263 = vst [vmem:[#allocation2 + $0xd0] sm:$0xff] 0.0
      %264 = vst [vmem:[#allocation2 + $0xd8] sm:$0xff] 0.0
      %265 = vst [vmem:[#allocation2 + $0xe0] sm:$0xff] 0.0
      %266 = vst [vmem:[#allocation2 + $0xe8] sm:$0xff] 0.0
      %267 = vst [vmem:[#allocation2 + $0xf0] sm:$0xff] 0.0
      %268 = vst [vmem:[#allocation2 + $0xf8] sm:$0xff] 0.0
      %269 = vst [vmem:[#allocation2 + $0x100] sm:$0xff] 0.0
      %270 = vst [vmem:[#allocation2 + $0x108] sm:$0xff] 0.0
      %271 = vst [vmem:[#allocation2 + $0x110] sm:$0xff] 0.0
      %272 = vst [vmem:[#allocation2 + $0x118] sm:$0xff] 0.0
      %273 = vst [vmem:[#allocation2 + $0x120] sm:$0xff] 0.0
      %274 = vst [vmem:[#allocation2 + $0x128] sm:$0xff] 0.0
      %275 = vst [vmem:[#allocation2 + $0x130] sm:$0xff] 0.0
      %276 = vst [vmem:[#allocation2 + $0x138] sm:$0xff] 0.0
      %277 = vst [vmem:[#allocation2 + $0x140] sm:$0xff] 0.0
      %278 = vst [vmem:[#allocation2 + $0x148] sm:$0xff] 0.0
      %279 = vst [vmem:[#allocation2 + $0x150] sm:$0xff] 0.0
      %280 = vst [vmem:[#allocation2 + $0x158] sm:$0xff] 0.0
      %281 = vst [vmem:[#allocation2 + $0x160] sm:$0xff] 0.0
      %282 = vst [vmem:[#allocation2 + $0x168] sm:$0xff] 0.0
      %283 = vst [vmem:[#allocation2 + $0x170] sm:$0xff] 0.0
      %284 = vst [vmem:[#allocation2 + $0x178] sm:$0xff] 0.0
      %285 = vst [vmem:[#allocation2 + $0x180] sm:$0xff] 0.0
      %286 = vst [vmem:[#allocation2 + $0x188] sm:$0xff] 0.0
      %287 = vst [vmem:[#allocation2 + $0x190] sm:$0xff] 0.0
      %288 = vst [vmem:[#allocation2 + $0x198] sm:$0xff] 0.0
      %289 = vst [vmem:[#allocation2 + $0x1a0] sm:$0xff] 0.0
      %290 = vst [vmem:[#allocation2 + $0x1a8] sm:$0xff] 0.0
      %291 = vst [vmem:[#allocation2 + $0x1b0] sm:$0xff] 0.0
      %292 = vst [vmem:[#allocation2 + $0x1b8] sm:$0xff] 0.0
      %v293 = vld [vmem:[%s226] sm:$0xf]
      %v294 = vld [vmem:[%s226 + $0x4] sm:$0xf]
      %v295 = vld [vmem:[%s226 + $0x8] sm:$0xf]
      %v296 = vld [vmem:[%s226 + $0xc] sm:$0xf]
      %v297 = vld [vmem:[%s226 + $0x10] sm:$0xf]
      %v298 = vld [vmem:[%s226 + $0x14] sm:$0xf]
      %v299 = vld [vmem:[%s226 + $0x18] sm:$0xf]
      %v300 = vld [vmem:[%s226 + $0x1c] sm:$0xf]
      %v301 = vld [vmem:[%s226 + $0x20] sm:$0xf]
      %v302 = vld [vmem:[%s226 + $0x24] sm:$0xf]
      %v303 = vld [vmem:[%s226 + $0x28] sm:$0xf]
      %v304 = vld [vmem:[%s226 + $0x2c] sm:$0xf]
      %v305 = vld [vmem:[%s226 + $0x30] sm:$0xf]
      %v306 = vld [vmem:[%s226 + $0x34] sm:$0xf]
      %v307 = vld [vmem:[%s226 + $0x38] sm:$0xf]
      %v308 = vld [vmem:[%s226 + $0x3c] sm:$0xf]
      %v309 = vld [vmem:[%s226 + $0x40] sm:$0xf]
      %v310 = vld [vmem:[%s226 + $0x44] sm:$0xf]
      %v311 = vld [vmem:[%s226 + $0x48] sm:$0xf]
      %v312 = vld [vmem:[%s226 + $0x4c] sm:$0xf]
      %v313 = vld [vmem:[%s226 + $0x50] sm:$0xf]
      %v314 = vld [vmem:[%s226 + $0x54] sm:$0xf]
      %v315 = vld [vmem:[%s226 + $0x58] sm:$0xf]
      %v316 = vld [vmem:[%s226 + $0x5c] sm:$0xf]
      %v317 = vld [vmem:[%s226 + $0x60] sm:$0xf]
      %v318 = vld [vmem:[%s226 + $0x64] sm:$0xf]
      %v319 = vld [vmem:[%s226 + $0x68] sm:$0xf]
      %v320 = vld [vmem:[%s226 + $0x6c] sm:$0xf]
      %v321 = vld [vmem:[%s226 + $0x70] sm:$0xf]
      %v322 = vld [vmem:[%s226 + $0x74] sm:$0xf]
      %v323 = vld [vmem:[%s226 + $0x78] sm:$0xf]
      %v324 = vld [vmem:[%s226 + $0x7c] sm:$0xf]
      %v325 = vunpack.c.l.bf16 %v293
      %v326 = vunpack.c.l.bf16 %v294
      %v327 = vunpack.c.l.bf16 %v295
      %v328 = vunpack.c.l.bf16 %v296
      %v329 = vunpack.c.l.bf16 %v297
      %v330 = vunpack.c.l.bf16 %v298
      %v331 = vunpack.c.l.bf16 %v299
      %v332 = vunpack.c.l.bf16 %v300
      %v333 = vunpack.c.l.bf16 %v301
      %v334 = vunpack.c.l.bf16 %v302
      %v335 = vunpack.c.l.bf16 %v303
      %v336 = vunpack.c.l.bf16 %v304
      %v337 = vunpack.c.l.bf16 %v305
      %v338 = vunpack.c.l.bf16 %v306
      %v339 = vunpack.c.l.bf16 %v307
      %v340 = vunpack.c.l.bf16 %v308
      %v341 = vunpack.c.l.bf16 %v309
      %v342 = vunpack.c.l.bf16 %v310
      %v343 = vunpack.c.l.bf16 %v311
      %v344 = vunpack.c.l.bf16 %v312
      %v345 = vunpack.c.l.bf16 %v313
      %v346 = vunpack.c.l.bf16 %v314
      %v347 = vunpack.c.l.bf16 %v315
      %v348 = vunpack.c.l.bf16 %v316
      %v349 = vunpack.c.l.bf16 %v317
      %v350 = vunpack.c.l.bf16 %v318
      %v351 = vunpack.c.l.bf16 %v319
      %v352 = vunpack.c.l.bf16 %v320
      %v353 = vunpack.c.l.bf16 %v321
      %v354 = vunpack.c.l.bf16 %v322
      %v355 = vunpack.c.l.bf16 %v323
      %v356 = vunpack.c.l.bf16 %v324
      %v357 = vld [vmem:[%s1] sm:$0x1]
      %v359 = vlaneseq
      %v360 = vshrl.u32 %v359, 7
      %v361 = vsub.s32 0, %v360
      %v362 = vrot.slane %v357, %v361
      %v364 = vmul.f32 %v325, %v362
      %v365 = vmul.f32 %v326, %v362
      %v366 = vmul.f32 %v327, %v362
      %v367 = vmul.f32 %v328, %v362
      %v368 = vmul.f32 %v329, %v362
      %v369 = vmul.f32 %v330, %v362
      %v370 = vmul.f32 %v331, %v362
      %v371 = vmul.f32 %v332, %v362
      %v372 = vmul.f32 %v333, %v362
      %v373 = vmul.f32 %v334, %v362
      %v374 = vmul.f32 %v335, %v362
      %v375 = vmul.f32 %v336, %v362
      %v376 = vmul.f32 %v337, %v362
      %v377 = vmul.f32 %v338, %v362
      %v378 = vmul.f32 %v339, %v362
      %v379 = vmul.f32 %v340, %v362
      %v380 = vmul.f32 %v341, %v362
      %v381 = vmul.f32 %v342, %v362
      %v382 = vmul.f32 %v343, %v362
      %v383 = vmul.f32 %v344, %v362
      %v384 = vmul.f32 %v345, %v362
      %v385 = vmul.f32 %v346, %v362
      %v386 = vmul.f32 %v347, %v362
      %v387 = vmul.f32 %v348, %v362
      %v388 = vmul.f32 %v349, %v362
      %v389 = vmul.f32 %v350, %v362
      %v390 = vmul.f32 %v351, %v362
      %v391 = vmul.f32 %v352, %v362
      %v392 = vmul.f32 %v353, %v362
      %v393 = vmul.f32 %v354, %v362
      %v394 = vmul.f32 %v355, %v362
      %v395 = vmul.f32 %v356, %v362
      %v396 = vld [vmem:[%s2] sm:$0x1]
      %v398 = vlaneseq
      %v399 = vshrl.u32 %v398, 7
      %v400 = vsub.s32 0, %v399
      %v401 = vrot.slane %v396, %v400
      %v403 = vadd.f32 %v364, %v401
      %v404 = vadd.f32 %v365, %v401
      %v405 = vadd.f32 %v366, %v401
      %v406 = vadd.f32 %v367, %v401
      %v407 = vadd.f32 %v368, %v401
      %v408 = vadd.f32 %v369, %v401
      %v409 = vadd.f32 %v370, %v401
      %v410 = vadd.f32 %v371, %v401
      %v411 = vadd.f32 %v372, %v401
      %v412 = vadd.f32 %v373, %v401
      %v413 = vadd.f32 %v374, %v401
      %v414 = vadd.f32 %v375, %v401
      %v415 = vadd.f32 %v376, %v401
      %v416 = vadd.f32 %v377, %v401
      %v417 = vadd.f32 %v378, %v401
      %v418 = vadd.f32 %v379, %v401
      %v419 = vadd.f32 %v380, %v401
      %v420 = vadd.f32 %v381, %v401
      %v421 = vadd.f32 %v382, %v401
      %v422 = vadd.f32 %v383, %v401
      %v423 = vadd.f32 %v384, %v401
      %v424 = vadd.f32 %v385, %v401
      %v425 = vadd.f32 %v386, %v401
      %v426 = vadd.f32 %v387, %v401
      %v427 = vadd.f32 %v388, %v401
      %v428 = vadd.f32 %v389, %v401
      %v429 = vadd.f32 %v390, %v401
      %v430 = vadd.f32 %v391, %v401
      %v431 = vadd.f32 %v392, %v401
      %v432 = vadd.f32 %v393, %v401
      %v433 = vadd.f32 %v394, %v401
      %v434 = vadd.f32 %v395, %v401
      %v435 = vmax.f32 %v403, 0.0
      %v436 = vmax.f32 %v404, 0.0
      %v437 = vmax.f32 %v405, 0.0
      %v438 = vmax.f32 %v406, 0.0
      %v439 = vmax.f32 %v407, 0.0
      %v440 = vmax.f32 %v408, 0.0
      %v441 = vmax.f32 %v409, 0.0
      %v442 = vmax.f32 %v410, 0.0
      %v443 = vmax.f32 %v411, 0.0
      %v444 = vmax.f32 %v412, 0.0
      %v445 = vmax.f32 %v413, 0.0
      %v446 = vmax.f32 %v414, 0.0
      %v447 = vmax.f32 %v415, 0.0
      %v448 = vmax.f32 %v416, 0.0
      %v449 = vmax.f32 %v417, 0.0
      %v450 = vmax.f32 %v418, 0.0
      %v451 = vmax.f32 %v419, 0.0
      %v452 = vmax.f32 %v420, 0.0
      %v453 = vmax.f32 %v421, 0.0
      %v454 = vmax.f32 %v422, 0.0
      %v455 = vmax.f32 %v423, 0.0
      %v456 = vmax.f32 %v424, 0.0
      %v457 = vmax.f32 %v425, 0.0
      %v458 = vmax.f32 %v426, 0.0
      %v459 = vmax.f32 %v427, 0.0
      %v460 = vmax.f32 %v428, 0.0
      %v461 = vmax.f32 %v429, 0.0
      %v462 = vmax.f32 %v430, 0.0
      %v463 = vmax.f32 %v431, 0.0
      %v464 = vmax.f32 %v432, 0.0
      %v465 = vmax.f32 %v433, 0.0
      %v466 = vmax.f32 %v434, 0.0
      %467 = vst [vmem:[#allocation2 + $0x20] sm:$0xff] %v435
      %468 = vst [vmem:[#allocation2 + $0x28] sm:$0xff] %v436
      %469 = vst [vmem:[#allocation2 + $0x38] sm:$0xff] %v437
      %470 = vst [vmem:[#allocation2 + $0x40] sm:$0xff] %v438
      %471 = vst [vmem:[#allocation2 + $0x50] sm:$0xff] %v439
      %472 = vst [vmem:[#allocation2 + $0x58] sm:$0xff] %v440
      %473 = vst [vmem:[#allocation2 + $0x68] sm:$0xff] %v441
      %474 = vst [vmem:[#allocation2 + $0x70] sm:$0xff] %v442
      %475 = vst [vmem:[#allocation2 + $0x80] sm:$0xff] %v443
      %476 = vst [vmem:[#allocation2 + $0x88] sm:$0xff] %v444
      %477 = vst [vmem:[#allocation2 + $0x98] sm:$0xff] %v445
      %478 = vst [vmem:[#allocation2 + $0xa0] sm:$0xff] %v446
      %479 = vst [vmem:[#allocation2 + $0xb0] sm:$0xff] %v447
      %480 = vst [vmem:[#allocation2 + $0xb8] sm:$0xff] %v448
      %481 = vst [vmem:[#allocation2 + $0xc8] sm:$0xff] %v449
      %482 = vst [vmem:[#allocation2 + $0xd0] sm:$0xff] %v450
      %483 = vst [vmem:[#allocation2 + $0xe0] sm:$0xff] %v451
      %484 = vst [vmem:[#allocation2 + $0xe8] sm:$0xff] %v452
      %485 = vst [vmem:[#allocation2 + $0xf8] sm:$0xff] %v453
      %486 = vst [vmem:[#allocation2 + $0x100] sm:$0xff] %v454
      %487 = vst [vmem:[#allocation2 + $0x110] sm:$0xff] %v455
      %488 = vst [vmem:[#allocation2 + $0x118] sm:$0xff] %v456
      %489 = vst [vmem:[#allocation2 + $0x128] sm:$0xff] %v457
      %490 = vst [vmem:[#allocation2 + $0x130] sm:$0xff] %v458
      %491 = vst [vmem:[#allocation2 + $0x140] sm:$0xff] %v459
      %492 = vst [vmem:[#allocation2 + $0x148] sm:$0xff] %v460
      %493 = vst [vmem:[#allocation2 + $0x158] sm:$0xff] %v461
      %494 = vst [vmem:[#allocation2 + $0x160] sm:$0xff] %v462
      %495 = vst [vmem:[#allocation2 + $0x170] sm:$0xff] %v463
      %496 = vst [vmem:[#allocation2 + $0x178] sm:$0xff] %v464
      %497 = vst [vmem:[#allocation2 + $0x188] sm:$0xff] %v465
      %498 = vst [vmem:[#allocation2 + $0x190] sm:$0xff] %v466
      %v499 = vld [vmem:[#allocation2 + $0x7] sm:$0xff]
      %v500 = vld [vmem:[#allocation2 + $0xf] sm:$0xff]
      %v501 = vld [vmem:[#allocation2 + $0x17] sm:$0xff]
      %v502 = vld [vmem:[#allocation2 + $0x1f] sm:$0xff]
      %v503 = vld [vmem:[#allocation2 + $0x27] sm:$0xff]
      %v504 = vld [vmem:[#allocation2 + $0x2f] sm:$0xff]
      %v505 = vld [vmem:[#allocation2 + $0x37] sm:$0xff]
      %v506 = vld [vmem:[#allocation2 + $0x3f] sm:$0xff]
      %v507 = vld [vmem:[#allocation2 + $0x47] sm:$0xff]
      %v508 = vld [vmem:[#allocation2 + $0x4f] sm:$0xff]
      %v509 = vld [vmem:[#allocation2 + $0x57] sm:$0xff]
      %v510 = vld [vmem:[#allocation2 + $0x5f] sm:$0xff]
      %v511 = vld [vmem:[#allocation2 + $0x67] sm:$0xff]
      %v512 = vld [vmem:[#allocation2 + $0x6f] sm:$0xff]
      %v513 = vld [vmem:[#allocation2 + $0x77] sm:$0xff]
      %v514 = vld [vmem:[#allocation2 + $0x7f] sm:$0xff]
      %v515 = vld [vmem:[#allocation2 + $0x87] sm:$0xff]
      %v516 = vld [vmem:[#allocation2 + $0x8f] sm:$0xff]
      %v517 = vld [vmem:[#allocation2 + $0x97] sm:$0xff]
      %v518 = vld [vmem:[#allocation2 + $0x9f] sm:$0xff]
      %v519 = vld [vmem:[#allocation2 + $0xa7] sm:$0xff]
      %v520 = vld [vmem:[#allocation2 + $0xaf] sm:$0xff]
      %v521 = vld [vmem:[#allocation2 + $0xb7] sm:$0xff]
      %v522 = vld [vmem:[#allocation2 + $0xbf] sm:$0xff]
      %v523 = vld [vmem:[#allocation2 + $0xc7] sm:$0xff]
      %v524 = vld [vmem:[#allocation2 + $0xcf] sm:$0xff]
      %v525 = vld [vmem:[#allocation2 + $0xd7] sm:$0xff]
      %v526 = vld [vmem:[#allocation2 + $0xdf] sm:$0xff]
      %v527 = vld [vmem:[#allocation2 + $0xe7] sm:$0xff]
      %v528 = vld [vmem:[#allocation2 + $0xef] sm:$0xff]
      %v529 = vld [vmem:[#allocation2 + $0xf7] sm:$0xff]
      %v530 = vld [vmem:[#allocation2 + $0xff] sm:$0xff]
      %v531 = vld [vmem:[#allocation2 + $0x107] sm:$0xff]
      %v532 = vld [vmem:[#allocation2 + $0x10f] sm:$0xff]
      %v533 = vld [vmem:[#allocation2 + $0x117] sm:$0xff]
      %v534 = vld [vmem:[#allocation2 + $0x11f] sm:$0xff]
      %v535 = vld [vmem:[#allocation2 + $0x127] sm:$0xff]
      %v536 = vld [vmem:[#allocation2 + $0x12f] sm:$0xff]
      %v537 = vld [vmem:[#allocation2 + $0x137] sm:$0xff]
      %v538 = vld [vmem:[#allocation2 + $0x13f] sm:$0xff]
      %v539 = vld [vmem:[#allocation2 + $0x147] sm:$0xff]
      %v540 = vld [vmem:[#allocation2 + $0x14f] sm:$0xff]
      %v541 = vld [vmem:[#allocation2 + $0x157] sm:$0xff]
      %v542 = vld [vmem:[#allocation2 + $0x15f] sm:$0xff]
      %v543 = vld [vmem:[#allocation2 + $0x167] sm:$0xff]
      %v544 = vld [vmem:[#allocation2 + $0x16f] sm:$0xff]
      %v545 = vld [vmem:[#allocation2 + $0x177] sm:$0xff]
      %v546 = vld [vmem:[#allocation2 + $0x17f] sm:$0xff]
      %v547 = vpack.c.bf16 %v500, %v499
      %v548 = vpack.c.bf16 %v502, %v501
      %v549 = vpack.c.bf16 %v504, %v503
      %v550 = vpack.c.bf16 %v506, %v505
      %v551 = vpack.c.bf16 %v508, %v507
      %v552 = vpack.c.bf16 %v510, %v509
      %v553 = vpack.c.bf16 %v512, %v511
      %v554 = vpack.c.bf16 %v514, %v513
      %v555 = vpack.c.bf16 %v516, %v515
      %v556 = vpack.c.bf16 %v518, %v517
      %v557 = vpack.c.bf16 %v520, %v519
      %v558 = vpack.c.bf16 %v522, %v521
      %v559 = vpack.c.bf16 %v524, %v523
      %v560 = vpack.c.bf16 %v526, %v525
      %v561 = vpack.c.bf16 %v528, %v527
      %v562 = vpack.c.bf16 %v530, %v529
      %v563 = vpack.c.bf16 %v532, %v531
      %v564 = vpack.c.bf16 %v534, %v533
      %v565 = vpack.c.bf16 %v536, %v535
      %v566 = vpack.c.bf16 %v538, %v537
      %v567 = vpack.c.bf16 %v540, %v539
      %v568 = vpack.c.bf16 %v542, %v541
      %v569 = vpack.c.bf16 %v544, %v543
      %v570 = vpack.c.bf16 %v546, %v545
      %v571 = vld [vmem:[%s3] sm:$0xf]
      %v572 = vld [vmem:[%s3 + $0x4] sm:$0xf]
      %v573 = vld [vmem:[%s3 + $0x8] sm:$0xf]
      %v574 = vld [vmem:[%s3 + $0xc] sm:$0xf]
      %v575 = vld [vmem:[%s3 + $0x10] sm:$0xf]
      %v576 = vld [vmem:[%s3 + $0x14] sm:$0xf]
      %v577 = vld [vmem:[%s3 + $0x18] sm:$0xf]
      %v578 = vld [vmem:[%s3 + $0x1c] sm:$0xf]
      %v579 = vld [vmem:[%s3 + $0x20] sm:$0xf]
      %v580 = vld [vmem:[%s3 + $0x24] sm:$0xf]
      %v581 = vld [vmem:[%s3 + $0x28] sm:$0xf]
      %v582 = vld [vmem:[%s3 + $0x2c] sm:$0xf]
      %v583 = vld [vmem:[%s3 + $0x30] sm:$0xf]
      %v584 = vld [vmem:[%s3 + $0x34] sm:$0xf]
      %v585 = vld [vmem:[%s3 + $0x38] sm:$0xf]
      %v586 = vld [vmem:[%s3 + $0x3c] sm:$0xf]
      %v587 = vld [vmem:[#allocation2 + $0x8] sm:$0xff]
      %v588 = vld [vmem:[#allocation2 + $0x10] sm:$0xff]
      %v589 = vld [vmem:[#allocation2 + $0x18] sm:$0xff]
      %v590 = vld [vmem:[#allocation2 + $0x20] sm:$0xff]
      %v591 = vld [vmem:[#allocation2 + $0x28] sm:$0xff]
      %v592 = vld [vmem:[#allocation2 + $0x30] sm:$0xff]
      %v593 = vld [vmem:[#allocation2 + $0x38] sm:$0xff]
      %v594 = vld [vmem:[#allocation2 + $0x40] sm:$0xff]
      %v595 = vld [vmem:[#allocation2 + $0x48] sm:$0xff]
      %v596 = vld [vmem:[#allocation2 + $0x50] sm:$0xff]
      %v597 = vld [vmem:[#allocation2 + $0x58] sm:$0xff]
      %v598 = vld [vmem:[#allocation2 + $0x60] sm:$0xff]
      %v599 = vld [vmem:[#allocation2 + $0x68] sm:$0xff]
      %v600 = vld [vmem:[#allocation2 + $0x70] sm:$0xff]
      %v601 = vld [vmem:[#allocation2 + $0x78] sm:$0xff]
      %v602 = vld [vmem:[#allocation2 + $0x80] sm:$0xff]
      %v603 = vld [vmem:[#allocation2 + $0x88] sm:$0xff]
      %v604 = vld [vmem:[#allocation2 + $0x90] sm:$0xff]
      %v605 = vld [vmem:[#allocation2 + $0x98] sm:$0xff]
      %v606 = vld [vmem:[#allocation2 + $0xa0] sm:$0xff]
      %v607 = vld [vmem:[#allocation2 + $0xa8] sm:$0xff]
      %v608 = vld [vmem:[#allocation2 + $0xb0] sm:$0xff]
      %v609 = vld [vmem:[#allocation2 + $0xb8] sm:$0xff]
      %v610 = vld [vmem:[#allocation2 + $0xc0] sm:$0xff]
      %v611 = vld [vmem:[#allocation2 + $0xc8] sm:$0xff]
      %v612 = vld [vmem:[#allocation2 + $0xd0] sm:$0xff]
      %v613 = vld [vmem:[#allocation2 + $0xd8] sm:$0xff]
      %v614 = vld [vmem:[#allocation2 + $0xe0] sm:$0xff]
      %v615 = vld [vmem:[#allocation2 + $0xe8] sm:$0xff]
      %v616 = vld [vmem:[#allocation2 + $0xf0] sm:$0xff]
      %v617 = vld [vmem:[#allocation2 + $0xf8] sm:$0xff]
      %v618 = vld [vmem:[#allocation2 + $0x100] sm:$0xff]
      %v619 = vld [vmem:[#allocation2 + $0x108] sm:$0xff]
      %v620 = vld [vmem:[#allocation2 + $0x110] sm:$0xff]
      %v621 = vld [vmem:[#allocation2 + $0x118] sm:$0xff]
      %v622 = vld [vmem:[#allocation2 + $0x120] sm:$0xff]
      %v623 = vld [vmem:[#allocation2 + $0x128] sm:$0xff]
      %v624 = vld [vmem:[#allocation2 + $0x130] sm:$0xff]
      %v625 = vld [vmem:[#allocation2 + $0x138] sm:$0xff]
      %v626 = vld [vmem:[#allocation2 + $0x140] sm:$0xff]
      %v627 = vld [vmem:[#allocation2 + $0x148] sm:$0xff]
      %v628 = vld [vmem:[#allocation2 + $0x150] sm:$0xff]
      %v629 = vld [vmem:[#allocation2 + $0x158] sm:$0xff]
      %v630 = vld [vmem:[#allocation2 + $0x160] sm:$0xff]
      %v631 = vld [vmem:[#allocation2 + $0x168] sm:$0xff]
      %v632 = vld [vmem:[#allocation2 + $0x170] sm:$0xff]
      %v633 = vld [vmem:[#allocation2 + $0x178] sm:$0xff]
      %v634 = vld [vmem:[#allocation2 + $0x180] sm:$0xff]
      %v635 = vpack.c.bf16 %v588, %v587
      %v636 = vpack.c.bf16 %v590, %v589
      %v637 = vpack.c.bf16 %v592, %v591
      %v638 = vpack.c.bf16 %v594, %v593
      %v639 = vpack.c.bf16 %v596, %v595
      %v640 = vpack.c.bf16 %v598, %v597
      %v641 = vpack.c.bf16 %v600, %v599
      %v642 = vpack.c.bf16 %v602, %v601
      %v643 = vpack.c.bf16 %v604, %v603
      %v644 = vpack.c.bf16 %v606, %v605
      %v645 = vpack.c.bf16 %v608, %v607
      %v646 = vpack.c.bf16 %v610, %v609
      %v647 = vpack.c.bf16 %v612, %v611
      %v648 = vpack.c.bf16 %v614, %v613
      %v649 = vpack.c.bf16 %v616, %v615
      %v650 = vpack.c.bf16 %v618, %v617
      %v651 = vpack.c.bf16 %v620, %v619
      %v652 = vpack.c.bf16 %v622, %v621
      %v653 = vpack.c.bf16 %v624, %v623
      %v654 = vpack.c.bf16 %v626, %v625
      %v655 = vpack.c.bf16 %v628, %v627
      %v656 = vpack.c.bf16 %v630, %v629
      %v657 = vpack.c.bf16 %v632, %v631
      %v658 = vpack.c.bf16 %v634, %v633
      %s659 = scalar_lea.vmem %s3, 64
      %v660 = vld [vmem:[%s659] sm:$0xf]
      %v661 = vld [vmem:[%s659 + $0x4] sm:$0xf]
      %v662 = vld [vmem:[%s659 + $0x8] sm:$0xf]
      %v663 = vld [vmem:[%s659 + $0xc] sm:$0xf]
      %v664 = vld [vmem:[%s659 + $0x10] sm:$0xf]
      %v665 = vld [vmem:[%s659 + $0x14] sm:$0xf]
      %v666 = vld [vmem:[%s659 + $0x18] sm:$0xf]
      %v667 = vld [vmem:[%s659 + $0x1c] sm:$0xf]
      %v668 = vld [vmem:[%s659 + $0x20] sm:$0xf]
      %v669 = vld [vmem:[%s659 + $0x24] sm:$0xf]
      %v670 = vld [vmem:[%s659 + $0x28] sm:$0xf]
      %v671 = vld [vmem:[%s659 + $0x2c] sm:$0xf]
      %v672 = vld [vmem:[%s659 + $0x30] sm:$0xf]
      %v673 = vld [vmem:[%s659 + $0x34] sm:$0xf]
      %v674 = vld [vmem:[%s659 + $0x38] sm:$0xf]
      %v675 = vld [vmem:[%s659 + $0x3c] sm:$0xf]
      %v692 = vunpack.c.l.b16 %v660
      %v693 = vunpack.c.l.b16 %v661
      %v694 = vunpack.c.l.b16 %v662
      %v695 = vunpack.c.l.b16 %v663
      %v696 = vunpack.c.l.b16 %v664
      %v697 = vunpack.c.l.b16 %v665
      %v698 = vunpack.c.l.b16 %v666
      %v699 = vunpack.c.l.b16 %v667
      %v700 = vunpack.c.l.b16 %v668
      %v701 = vunpack.c.l.b16 %v669
      %v702 = vunpack.c.l.b16 %v670
      %v703 = vunpack.c.l.b16 %v671
      %v704 = vunpack.c.l.b16 %v672
      %v705 = vunpack.c.l.b16 %v673
      %v706 = vunpack.c.l.b16 %v674
      %v707 = vunpack.c.l.b16 %v675
      %v708 = vpack.c.b16 %v693, %v692
      %v709 = vpack.c.b16 %v695, %v694
      %v710 = vpack.c.b16 %v697, %v696
      %v711 = vpack.c.b16 %v699, %v698
      %v712 = vpack.c.b16 %v701, %v700
      %v713 = vpack.c.b16 %v703, %v702
      %v714 = vpack.c.b16 %v705, %v704
      %v715 = vpack.c.b16 %v707, %v706
      %724 = vmatprep.subr.bf16.mxu0 0
      %725 = vmatpush1.bf16.msra.mxu0 %v715
      %726 = vmatprep.subr.bf16.mxu0 0
      %727 = vmatpush1.bf16.msra.mxu0 %v714
      %728 = vmatprep.subr.bf16.mxu0 0
      %729 = vmatpush1.bf16.msra.mxu0 %v713
      %730 = vmatprep.subr.bf16.mxu0 0
      %731 = vmatpush1.bf16.msra.mxu0 %v712
      %732 = vmatprep.subr.bf16.mxu0 0
      %733 = vmatpush1.bf16.msra.mxu0 %v711
      %734 = vmatprep.subr.bf16.mxu0 0
      %735 = vmatpush1.bf16.msra.mxu0 %v710
      %736 = vmatprep.subr.bf16.mxu0 0
      %737 = vmatpush1.bf16.msra.mxu0 %v709
      %738 = vmatprep.subr.bf16.mxu0 0
      %739 = vmatpush1.bf16.msra.mxu0 %v708
      %740 = vmatprep.subr.bf16.mxu0 0
      %741 = vmatpush2.bf16.msra.mxu0 0
      %742 = vmatprep.subr.bf16.mxu0 0
      %743 = vmatpush2.bf16.msra.mxu0 0
      %744 = vmatprep.subr.bf16.mxu0 0
      %745 = vmatpush2.bf16.msra.mxu0 0
      %746 = vmatprep.subr.bf16.mxu0 0
      %747 = vmatpush2.bf16.msra.mxu0 0
      %748 = vmatprep.subr.bf16.mxu0 0
      %749 = vmatpush2.bf16.msra.mxu0 0
      %750 = vmatprep.subr.bf16.mxu0 0
      %751 = vmatpush2.bf16.msra.mxu0 0
      %752 = vmatprep.subr.bf16.mxu0 0
      %753 = vmatpush2.bf16.msra.mxu0 0
      %754 = vmatprep.subr.bf16.mxu0 0
      %755 = vmatpush2.bf16.msra.mxu0 0
      %756 = vmatprep.mubr.bf16.mxu0 0
      %757 = vmatmul.mubr.bf16.gmra.mxu0 %v635
      %v758 = vpop.f32.mrf.mxu0
      %v759 = vadd.f32 0.0, %v758
      %v760 = vpop.f32.mrf.mxu0
      %v761 = vpop.f32.mrf.mxu0
      %v762 = vadd.f32 0.0, %v761
      %v763 = vpop.f32.mrf.mxu0
      %764 = vmatprep.mubr.bf16.mxu0 0
      %765 = vmatmul.mubr.bf16.gmra.mxu0 %v636
      %v766 = vpop.f32.mrf.mxu0
      %v767 = vpop.f32.mrf.mxu0
      %v768 = vpop.f32.mrf.mxu0
      %v769 = vadd.f32 0.0, %v768
      %v770 = vpop.f32.mrf.mxu0
      %771 = vmatprep.mubr.bf16.mxu0 0
      %772 = vmatmul.mubr.bf16.gmra.mxu0 %v637
      %v773 = vpop.f32.mrf.mxu0
      %v774 = vadd.f32 0.0, %v773
      %v775 = vpop.f32.mrf.mxu0
      %v776 = vpop.f32.mrf.mxu0
      %v777 = vpop.f32.mrf.mxu0
      %778 = vmatprep.mubr.bf16.mxu0 0
      %779 = vmatmul.mubr.bf16.gmra.mxu0 %v638
      %v780 = vpop.f32.mrf.mxu0
      %v781 = vadd.f32 0.0, %v780
      %v782 = vpop.f32.mrf.mxu0
      %v783 = vpop.f32.mrf.mxu0
      %v784 = vadd.f32 0.0, %v783
      %v785 = vpop.f32.mrf.mxu0
      %786 = vmatprep.mubr.bf16.mxu0 0
      %787 = vmatmul.mubr.bf16.gmra.mxu0 %v639
      %v788 = vpop.f32.mrf.mxu0
      %v789 = vpop.f32.mrf.mxu0
      %v790 = vpop.f32.mrf.mxu0
      %v791 = vadd.f32 0.0, %v790
      %v792 = vpop.f32.mrf.mxu0
      %793 = vmatprep.mubr.bf16.mxu0 0
      %794 = vmatmul.mubr.bf16.gmra.mxu0 %v640
      %v795 = vpop.f32.mrf.mxu0
      %v796 = vadd.f32 0.0, %v795
      %v797 = vpop.f32.mrf.mxu0
      %v798 = vpop.f32.mrf.mxu0
      %v799 = vpop.f32.mrf.mxu0
      %800 = vmatprep.mubr.bf16.mxu0 0
      %801 = vmatmul.mubr.bf16.gmra.mxu0 %v641
      %v802 = vpop.f32.mrf.mxu0
      %v803 = vadd.f32 0.0, %v802
      %v804 = vpop.f32.mrf.mxu0
      %v805 = vpop.f32.mrf.mxu0
      %v806 = vadd.f32 0.0, %v805
      %v807 = vpop.f32.mrf.mxu0
      %808 = vmatprep.mubr.bf16.mxu0 0
      %809 = vmatmul.mubr.bf16.gmra.mxu0 %v642
      %v810 = vpop.f32.mrf.mxu0
      %v811 = vpop.f32.mrf.mxu0
      %v812 = vpop.f32.mrf.mxu0
      %v813 = vadd.f32 0.0, %v812
      %v814 = vpop.f32.mrf.mxu0
      %815 = vmatprep.mubr.bf16.mxu0 0
      %816 = vmatmul.mubr.bf16.gmra.mxu0 %v643
      %v817 = vpop.f32.mrf.mxu0
      %v818 = vadd.f32 0.0, %v817
      %v819 = vpop.f32.mrf.mxu0
      %v820 = vpop.f32.mrf.mxu0
      %v821 = vpop.f32.mrf.mxu0
      %822 = vmatprep.mubr.bf16.mxu0 0
      %823 = vmatmul.mubr.bf16.gmra.mxu0 %v644
      %v824 = vpop.f32.mrf.mxu0
      %v825 = vadd.f32 0.0, %v824
      %v826 = vpop.f32.mrf.mxu0
      %v827 = vpop.f32.mrf.mxu0
      %v828 = vadd.f32 0.0, %v827
      %v829 = vpop.f32.mrf.mxu0
      %830 = vmatprep.mubr.bf16.mxu0 0
      %831 = vmatmul.mubr.bf16.gmra.mxu0 %v645
      %v832 = vpop.f32.mrf.mxu0
      %v833 = vpop.f32.mrf.mxu0
      %v834 = vpop.f32.mrf.mxu0
      %v835 = vadd.f32 0.0, %v834
      %v836 = vpop.f32.mrf.mxu0
      %837 = vmatprep.mubr.bf16.mxu0 0
      %838 = vmatmul.mubr.bf16.gmra.mxu0 %v646
      %v839 = vpop.f32.mrf.mxu0
      %v840 = vadd.f32 0.0, %v839
      %v841 = vpop.f32.mrf.mxu0
      %v842 = vpop.f32.mrf.mxu0
      %v843 = vpop.f32.mrf.mxu0
      %844 = vmatprep.mubr.bf16.mxu0 0
      %845 = vmatmul.mubr.bf16.gmra.mxu0 %v647
      %v846 = vpop.f32.mrf.mxu0
      %v847 = vadd.f32 0.0, %v846
      %v848 = vpop.f32.mrf.mxu0
      %v849 = vpop.f32.mrf.mxu0
      %v850 = vadd.f32 0.0, %v849
      %v851 = vpop.f32.mrf.mxu0
      %852 = vmatprep.mubr.bf16.mxu0 0
      %853 = vmatmul.mubr.bf16.gmra.mxu0 %v648
      %v854 = vpop.f32.mrf.mxu0
      %v855 = vpop.f32.mrf.mxu0
      %v856 = vpop.f32.mrf.mxu0
      %v857 = vadd.f32 0.0, %v856
      %v858 = vpop.f32.mrf.mxu0
      %859 = vmatprep.mubr.bf16.mxu0 0
      %860 = vmatmul.mubr.bf16.gmra.mxu0 %v649
      %v861 = vpop.f32.mrf.mxu0
      %v862 = vadd.f32 0.0, %v861
      %v863 = vpop.f32.mrf.mxu0
      %v864 = vpop.f32.mrf.mxu0
      %v865 = vpop.f32.mrf.mxu0
      %866 = vmatprep.mubr.bf16.mxu0 0
      %867 = vmatmul.mubr.bf16.gmra.mxu0 %v650
      %v868 = vpop.f32.mrf.mxu0
      %v869 = vadd.f32 0.0, %v868
      %v870 = vpop.f32.mrf.mxu0
      %v871 = vpop.f32.mrf.mxu0
      %v872 = vadd.f32 0.0, %v871
      %v873 = vpop.f32.mrf.mxu0
      %874 = vmatprep.mubr.bf16.mxu0 0
      %875 = vmatmul.mubr.bf16.gmra.mxu0 %v651
      %v876 = vpop.f32.mrf.mxu0
      %v877 = vpop.f32.mrf.mxu0
      %v878 = vpop.f32.mrf.mxu0
      %v879 = vadd.f32 0.0, %v878
      %v880 = vpop.f32.mrf.mxu0
      %881 = vmatprep.mubr.bf16.mxu0 0
      %882 = vmatmul.mubr.bf16.gmra.mxu0 %v652
      %v883 = vpop.f32.mrf.mxu0
      %v884 = vadd.f32 0.0, %v883
      %v885 = vpop.f32.mrf.mxu0
      %v886 = vpop.f32.mrf.mxu0
      %v887 = vpop.f32.mrf.mxu0
      %888 = vmatprep.mubr.bf16.mxu0 0
      %889 = vmatmul.mubr.bf16.gmra.mxu0 %v653
      %v890 = vpop.f32.mrf.mxu0
      %v891 = vadd.f32 0.0, %v890
      %v892 = vpop.f32.mrf.mxu0
      %v893 = vpop.f32.mrf.mxu0
      %v894 = vadd.f32 0.0, %v893
      %v895 = vpop.f32.mrf.mxu0
      %896 = vmatprep.mubr.bf16.mxu0 0
      %897 = vmatmul.mubr.bf16.gmra.mxu0 %v654
      %v898 = vpop.f32.mrf.mxu0
      %v899 = vpop.f32.mrf.mxu0
      %v900 = vpop.f32.mrf.mxu0
      %v901 = vadd.f32 0.0, %v900
      %v902 = vpop.f32.mrf.mxu0
      %903 = vmatprep.mubr.bf16.mxu0 0
      %904 = vmatmul.mubr.bf16.gmra.mxu0 %v655
      %v905 = vpop.f32.mrf.mxu0
      %v906 = vadd.f32 0.0, %v905
      %v907 = vpop.f32.mrf.mxu0
      %v908 = vpop.f32.mrf.mxu0
      %v909 = vpop.f32.mrf.mxu0
      %910 = vmatprep.mubr.bf16.mxu0 0
      %911 = vmatmul.mubr.bf16.gmra.mxu0 %v656
      %v912 = vpop.f32.mrf.mxu0
      %v913 = vadd.f32 0.0, %v912
      %v914 = vpop.f32.mrf.mxu0
      %v915 = vpop.f32.mrf.mxu0
      %v916 = vadd.f32 0.0, %v915
      %v917 = vpop.f32.mrf.mxu0
      %918 = vmatprep.mubr.bf16.mxu0 0
      %919 = vmatmul.mubr.bf16.gmra.mxu0 %v657
      %v920 = vpop.f32.mrf.mxu0
      %v921 = vpop.f32.mrf.mxu0
      %v922 = vpop.f32.mrf.mxu0
      %v923 = vadd.f32 0.0, %v922
      %v924 = vpop.f32.mrf.mxu0
      %925 = vmatprep.mubr.bf16.mxu0 0
      %926 = vmatmul.mubr.bf16.gmra.mxu0 %v658
      %v927 = vpop.f32.mrf.mxu0
      %v928 = vadd.f32 0.0, %v927
      %v929 = vpop.f32.mrf.mxu0
      %v930 = vpop.f32.mrf.mxu0
      %v931 = vpop.f32.mrf.mxu0
      %932 = vdwg.mxu0
      %v949 = vunpack.c.l.b16 %v571
      %v950 = vunpack.c.l.b16 %v572
      %v951 = vunpack.c.l.b16 %v573
      %v952 = vunpack.c.l.b16 %v574
      %v953 = vunpack.c.l.b16 %v575
      %v954 = vunpack.c.l.b16 %v576
      %v955 = vunpack.c.l.b16 %v577
      %v956 = vunpack.c.l.b16 %v578
      %v957 = vunpack.c.l.b16 %v579
      %v958 = vunpack.c.l.b16 %v580
      %v959 = vunpack.c.l.b16 %v581
      %v960 = vunpack.c.l.b16 %v582
      %v961 = vunpack.c.l.b16 %v583
      %v962 = vunpack.c.l.b16 %v584
      %v963 = vunpack.c.l.b16 %v585
      %v964 = vunpack.c.l.b16 %v586
      %v965 = vpack.c.b16 %v950, %v949
      %v966 = vpack.c.b16 %v952, %v951
      %v967 = vpack.c.b16 %v954, %v953
      %v968 = vpack.c.b16 %v956, %v955
      %v969 = vpack.c.b16 %v958, %v957
      %v970 = vpack.c.b16 %v960, %v959
      %v971 = vpack.c.b16 %v962, %v961
      %v972 = vpack.c.b16 %v964, %v963
      %981 = vmatprep.subr.bf16.mxu0 0
      %982 = vmatpush1.bf16.msra.mxu0 %v972
      %983 = vmatprep.subr.bf16.mxu0 0
      %984 = vmatpush1.bf16.msra.mxu0 %v971
      %985 = vmatprep.subr.bf16.mxu0 0
      %986 = vmatpush1.bf16.msra.mxu0 %v970
      %987 = vmatprep.subr.bf16.mxu0 0
      %988 = vmatpush1.bf16.msra.mxu0 %v969
      %989 = vmatprep.subr.bf16.mxu0 0
      %990 = vmatpush1.bf16.msra.mxu0 %v968
      %991 = vmatprep.subr.bf16.mxu0 0
      %992 = vmatpush1.bf16.msra.mxu0 %v967
      %993 = vmatprep.subr.bf16.mxu0 0
      %994 = vmatpush1.bf16.msra.mxu0 %v966
      %995 = vmatprep.subr.bf16.mxu0 0
      %996 = vmatpush1.bf16.msra.mxu0 %v965
      %997 = vmatprep.subr.bf16.mxu0 0
      %998 = vmatpush2.bf16.msra.mxu0 0
      %999 = vmatprep.subr.bf16.mxu0 0
      %1000 = vmatpush2.bf16.msra.mxu0 0
      %1001 = vmatprep.subr.bf16.mxu0 0
      %1002 = vmatpush2.bf16.msra.mxu0 0
      %1003 = vmatprep.subr.bf16.mxu0 0
      %1004 = vmatpush2.bf16.msra.mxu0 0
      %1005 = vmatprep.subr.bf16.mxu0 0
      %1006 = vmatpush2.bf16.msra.mxu0 0
      %1007 = vmatprep.subr.bf16.mxu0 0
      %1008 = vmatpush2.bf16.msra.mxu0 0
      %1009 = vmatprep.subr.bf16.mxu0 0
      %1010 = vmatpush2.bf16.msra.mxu0 0
      %1011 = vmatprep.subr.bf16.mxu0 0
      %1012 = vmatpush2.bf16.msra.mxu0 0
      %1013 = vmatprep.mubr.bf16.mxu0 0
      %1014 = vmatmul.mubr.bf16.gmra.mxu0 %v547
      %v1015 = vpop.f32.mrf.mxu0
      %v1016 = vadd.f32 %v759, %v1015
      %v1017 = vpop.f32.mrf.mxu0
      %v1018 = vpop.f32.mrf.mxu0
      %v1019 = vadd.f32 %v762, %v1018
      %v1020 = vpop.f32.mrf.mxu0
      %1021 = vmatprep.mubr.bf16.mxu0 0
      %1022 = vmatmul.mubr.bf16.gmra.mxu0 %v548
      %v1023 = vpop.f32.mrf.mxu0
      %v1024 = vpop.f32.mrf.mxu0
      %v1025 = vpop.f32.mrf.mxu0
      %v1026 = vadd.f32 %v769, %v1025
      %v1027 = vpop.f32.mrf.mxu0
      %1028 = vmatprep.mubr.bf16.mxu0 0
      %1029 = vmatmul.mubr.bf16.gmra.mxu0 %v549
      %v1030 = vpop.f32.mrf.mxu0
      %v1031 = vadd.f32 %v774, %v1030
      %v1032 = vpop.f32.mrf.mxu0
      %v1033 = vpop.f32.mrf.mxu0
      %v1034 = vpop.f32.mrf.mxu0
      %1035 = vmatprep.mubr.bf16.mxu0 0
      %1036 = vmatmul.mubr.bf16.gmra.mxu0 %v550
      %v1037 = vpop.f32.mrf.mxu0
      %v1038 = vadd.f32 %v781, %v1037
      %v1039 = vpop.f32.mrf.mxu0
      %v1040 = vpop.f32.mrf.mxu0
      %v1041 = vadd.f32 %v784, %v1040
      %v1042 = vpop.f32.mrf.mxu0
      %1043 = vmatprep.mubr.bf16.mxu0 0
      %1044 = vmatmul.mubr.bf16.gmra.mxu0 %v551
      %v1045 = vpop.f32.mrf.mxu0
      %v1046 = vpop.f32.mrf.mxu0
      %v1047 = vpop.f32.mrf.mxu0
      %v1048 = vadd.f32 %v791, %v1047
      %v1049 = vpop.f32.mrf.mxu0
      %1050 = vmatprep.mubr.bf16.mxu0 0
      %1051 = vmatmul.mubr.bf16.gmra.mxu0 %v552
      %v1052 = vpop.f32.mrf.mxu0
      %v1053 = vadd.f32 %v796, %v1052
      %v1054 = vpop.f32.mrf.mxu0
      %v1055 = vpop.f32.mrf.mxu0
      %v1056 = vpop.f32.mrf.mxu0
      %1057 = vmatprep.mubr.bf16.mxu0 0
      %1058 = vmatmul.mubr.bf16.gmra.mxu0 %v553
      %v1059 = vpop.f32.mrf.mxu0
      %v1060 = vadd.f32 %v803, %v1059
      %v1061 = vpop.f32.mrf.mxu0
      %v1062 = vpop.f32.mrf.mxu0
      %v1063 = vadd.f32 %v806, %v1062
      %v1064 = vpop.f32.mrf.mxu0
      %1065 = vmatprep.mubr.bf16.mxu0 0
      %1066 = vmatmul.mubr.bf16.gmra.mxu0 %v554
      %v1067 = vpop.f32.mrf.mxu0
      %v1068 = vpop.f32.mrf.mxu0
      %v1069 = vpop.f32.mrf.mxu0
      %v1070 = vadd.f32 %v813, %v1069
      %v1071 = vpop.f32.mrf.mxu0
      %1072 = vmatprep.mubr.bf16.mxu0 0
      %1073 = vmatmul.mubr.bf16.gmra.mxu0 %v555
      %v1074 = vpop.f32.mrf.mxu0
      %v1075 = vadd.f32 %v818, %v1074
      %v1076 = vpop.f32.mrf.mxu0
      %v1077 = vpop.f32.mrf.mxu0
      %v1078 = vpop.f32.mrf.mxu0
      %1079 = vmatprep.mubr.bf16.mxu0 0
      %1080 = vmatmul.mubr.bf16.gmra.mxu0 %v556
      %v1081 = vpop.f32.mrf.mxu0
      %v1082 = vadd.f32 %v825, %v1081
      %v1083 = vpop.f32.mrf.mxu0
      %v1084 = vpop.f32.mrf.mxu0
      %v1085 = vadd.f32 %v828, %v1084
      %v1086 = vpop.f32.mrf.mxu0
      %1087 = vmatprep.mubr.bf16.mxu0 0
      %1088 = vmatmul.mubr.bf16.gmra.mxu0 %v557
      %v1089 = vpop.f32.mrf.mxu0
      %v1090 = vpop.f32.mrf.mxu0
      %v1091 = vpop.f32.mrf.mxu0
      %v1092 = vadd.f32 %v835, %v1091
      %v1093 = vpop.f32.mrf.mxu0
      %1094 = vmatprep.mubr.bf16.mxu0 0
      %1095 = vmatmul.mubr.bf16.gmra.mxu0 %v558
      %v1096 = vpop.f32.mrf.mxu0
      %v1097 = vadd.f32 %v840, %v1096
      %v1098 = vpop.f32.mrf.mxu0
      %v1099 = vpop.f32.mrf.mxu0
      %v1100 = vpop.f32.mrf.mxu0
      %1101 = vmatprep.mubr.bf16.mxu0 0
      %1102 = vmatmul.mubr.bf16.gmra.mxu0 %v559
      %v1103 = vpop.f32.mrf.mxu0
      %v1104 = vadd.f32 %v847, %v1103
      %v1105 = vpop.f32.mrf.mxu0
      %v1106 = vpop.f32.mrf.mxu0
      %v1107 = vadd.f32 %v850, %v1106
      %v1108 = vpop.f32.mrf.mxu0
      %1109 = vmatprep.mubr.bf16.mxu0 0
      %1110 = vmatmul.mubr.bf16.gmra.mxu0 %v560
      %v1111 = vpop.f32.mrf.mxu0
      %v1112 = vpop.f32.mrf.mxu0
      %v1113 = vpop.f32.mrf.mxu0
      %v1114 = vadd.f32 %v857, %v1113
      %v1115 = vpop.f32.mrf.mxu0
      %1116 = vmatprep.mubr.bf16.mxu0 0
      %1117 = vmatmul.mubr.bf16.gmra.mxu0 %v561
      %v1118 = vpop.f32.mrf.mxu0
      %v1119 = vadd.f32 %v862, %v1118
      %v1120 = vpop.f32.mrf.mxu0
      %v1121 = vpop.f32.mrf.mxu0
      %v1122 = vpop.f32.mrf.mxu0
      %1123 = vmatprep.mubr.bf16.mxu0 0
      %1124 = vmatmul.mubr.bf16.gmra.mxu0 %v562
      %v1125 = vpop.f32.mrf.mxu0
      %v1126 = vadd.f32 %v869, %v1125
      %v1127 = vpop.f32.mrf.mxu0
      %v1128 = vpop.f32.mrf.mxu0
      %v1129 = vadd.f32 %v872, %v1128
      %v1130 = vpop.f32.mrf.mxu0
      %1131 = vmatprep.mubr.bf16.mxu0 0
      %1132 = vmatmul.mubr.bf16.gmra.mxu0 %v563
      %v1133 = vpop.f32.mrf.mxu0
      %v1134 = vpop.f32.mrf.mxu0
      %v1135 = vpop.f32.mrf.mxu0
      %v1136 = vadd.f32 %v879, %v1135
      %v1137 = vpop.f32.mrf.mxu0
      %1138 = vmatprep.mubr.bf16.mxu0 0
      %1139 = vmatmul.mubr.bf16.gmra.mxu0 %v564
      %v1140 = vpop.f32.mrf.mxu0
      %v1141 = vadd.f32 %v884, %v1140
      %v1142 = vpop.f32.mrf.mxu0
      %v1143 = vpop.f32.mrf.mxu0
      %v1144 = vpop.f32.mrf.mxu0
      %1145 = vmatprep.mubr.bf16.mxu0 0
      %1146 = vmatmul.mubr.bf16.gmra.mxu0 %v565
      %v1147 = vpop.f32.mrf.mxu0
      %v1148 = vadd.f32 %v891, %v1147
      %v1149 = vpop.f32.mrf.mxu0
      %v1150 = vpop.f32.mrf.mxu0
      %v1151 = vadd.f32 %v894, %v1150
      %v1152 = vpop.f32.mrf.mxu0
      %1153 = vmatprep.mubr.bf16.mxu0 0
      %1154 = vmatmul.mubr.bf16.gmra.mxu0 %v566
      %v1155 = vpop.f32.mrf.mxu0
      %v1156 = vpop.f32.mrf.mxu0
      %v1157 = vpop.f32.mrf.mxu0
      %v1158 = vadd.f32 %v901, %v1157
      %v1159 = vpop.f32.mrf.mxu0
      %1160 = vmatprep.mubr.bf16.mxu0 0
      %1161 = vmatmul.mubr.bf16.gmra.mxu0 %v567
      %v1162 = vpop.f32.mrf.mxu0
      %v1163 = vadd.f32 %v906, %v1162
      %v1164 = vpop.f32.mrf.mxu0
      %v1165 = vpop.f32.mrf.mxu0
      %v1166 = vpop.f32.mrf.mxu0
      %1167 = vmatprep.mubr.bf16.mxu0 0
      %1168 = vmatmul.mubr.bf16.gmra.mxu0 %v568
      %v1169 = vpop.f32.mrf.mxu0
      %v1170 = vadd.f32 %v913, %v1169
      %v1171 = vpop.f32.mrf.mxu0
      %v1172 = vpop.f32.mrf.mxu0
      %v1173 = vadd.f32 %v916, %v1172
      %v1174 = vpop.f32.mrf.mxu0
      %1175 = vmatprep.mubr.bf16.mxu0 0
      %1176 = vmatmul.mubr.bf16.gmra.mxu0 %v569
      %v1177 = vpop.f32.mrf.mxu0
      %v1178 = vpop.f32.mrf.mxu0
      %v1179 = vpop.f32.mrf.mxu0
      %v1180 = vadd.f32 %v923, %v1179
      %v1181 = vpop.f32.mrf.mxu0
      %1182 = vmatprep.mubr.bf16.mxu0 0
      %1183 = vmatmul.mubr.bf16.gmra.mxu0 %v570
      %v1184 = vpop.f32.mrf.mxu0
      %v1185 = vadd.f32 %v928, %v1184
      %v1186 = vpop.f32.mrf.mxu0
      %v1187 = vpop.f32.mrf.mxu0
      %v1188 = vpop.f32.mrf.mxu0
      %1189 = vdwg.mxu0
      %v1190 = vld [vmem:[#allocation2 + $0x9] sm:$0xff]
      %v1191 = vld [vmem:[#allocation2 + $0x11] sm:$0xff]
      %v1192 = vld [vmem:[#allocation2 + $0x19] sm:$0xff]
      %v1193 = vld [vmem:[#allocation2 + $0x21] sm:$0xff]
      %v1194 = vld [vmem:[#allocation2 + $0x29] sm:$0xff]
      %v1195 = vld [vmem:[#allocation2 + $0x31] sm:$0xff]
      %v1196 = vld [vmem:[#allocation2 + $0x39] sm:$0xff]
      %v1197 = vld [vmem:[#allocation2 + $0x41] sm:$0xff]
      %v1198 = vld [vmem:[#allocation2 + $0x49] sm:$0xff]
      %v1199 = vld [vmem:[#allocation2 + $0x51] sm:$0xff]
      %v1200 = vld [vmem:[#allocation2 + $0x59] sm:$0xff]
      %v1201 = vld [vmem:[#allocation2 + $0x61] sm:$0xff]
      %v1202 = vld [vmem:[#allocation2 + $0x69] sm:$0xff]
      %v1203 = vld [vmem:[#allocation2 + $0x71] sm:$0xff]
      %v1204 = vld [vmem:[#allocation2 + $0x79] sm:$0xff]
      %v1205 = vld [vmem:[#allocation2 + $0x81] sm:$0xff]
      %v1206 = vld [vmem:[#allocation2 + $0x89] sm:$0xff]
      %v1207 = vld [vmem:[#allocation2 + $0x91] sm:$0xff]
      %v1208 = vld [vmem:[#allocation2 + $0x99] sm:$0xff]
      %v1209 = vld [vmem:[#allocation2 + $0xa1] sm:$0xff]
      %v1210 = vld [vmem:[#allocation2 + $0xa9] sm:$0xff]
      %v1211 = vld [vmem:[#allocation2 + $0xb1] sm:$0xff]
      %v1212 = vld [vmem:[#allocation2 + $0xb9] sm:$0xff]
      %v1213 = vld [vmem:[#allocation2 + $0xc1] sm:$0xff]
      %v1214 = vld [vmem:[#allocation2 + $0xc9] sm:$0xff]
      %v1215 = vld [vmem:[#allocation2 + $0xd1] sm:$0xff]
      %v1216 = vld [vmem:[#allocation2 + $0xd9] sm:$0xff]
      %v1217 = vld [vmem:[#allocation2 + $0xe1] sm:$0xff]
      %v1218 = vld [vmem:[#allocation2 + $0xe9] sm:$0xff]
      %v1219 = vld [vmem:[#allocation2 + $0xf1] sm:$0xff]
      %v1220 = vld [vmem:[#allocation2 + $0xf9] sm:$0xff]
      %v1221 = vld [vmem:[#allocation2 + $0x101] sm:$0xff]
      %v1222 = vld [vmem:[#allocation2 + $0x109] sm:$0xff]
      %v1223 = vld [vmem:[#allocation2 + $0x111] sm:$0xff]
      %v1224 = vld [vmem:[#allocation2 + $0x119] sm:$0xff]
      %v1225 = vld [vmem:[#allocation2 + $0x121] sm:$0xff]
      %v1226 = vld [vmem:[#allocation2 + $0x129] sm:$0xff]
      %v1227 = vld [vmem:[#allocation2 + $0x131] sm:$0xff]
      %v1228 = vld [vmem:[#allocation2 + $0x139] sm:$0xff]
      %v1229 = vld [vmem:[#allocation2 + $0x141] sm:$0xff]
      %v1230 = vld [vmem:[#allocation2 + $0x149] sm:$0xff]
      %v1231 = vld [vmem:[#allocation2 + $0x151] sm:$0xff]
      %v1232 = vld [vmem:[#allocation2 + $0x159] sm:$0xff]
      %v1233 = vld [vmem:[#allocation2 + $0x161] sm:$0xff]
      %v1234 = vld [vmem:[#allocation2 + $0x169] sm:$0xff]
      %v1235 = vld [vmem:[#allocation2 + $0x171] sm:$0xff]
      %v1236 = vld [vmem:[#allocation2 + $0x179] sm:$0xff]
      %v1237 = vld [vmem:[#allocation2 + $0x181] sm:$0xff]
      %v1238 = vpack.c.bf16 %v1191, %v1190
      %v1239 = vpack.c.bf16 %v1193, %v1192
      %v1240 = vpack.c.bf16 %v1195, %v1194
      %v1241 = vpack.c.bf16 %v1197, %v1196
      %v1242 = vpack.c.bf16 %v1199, %v1198
      %v1243 = vpack.c.bf16 %v1201, %v1200
      %v1244 = vpack.c.bf16 %v1203, %v1202
      %v1245 = vpack.c.bf16 %v1205, %v1204
      %v1246 = vpack.c.bf16 %v1207, %v1206
      %v1247 = vpack.c.bf16 %v1209, %v1208
      %v1248 = vpack.c.bf16 %v1211, %v1210
      %v1249 = vpack.c.bf16 %v1213, %v1212
      %v1250 = vpack.c.bf16 %v1215, %v1214
      %v1251 = vpack.c.bf16 %v1217, %v1216
      %v1252 = vpack.c.bf16 %v1219, %v1218
      %v1253 = vpack.c.bf16 %v1221, %v1220
      %v1254 = vpack.c.bf16 %v1223, %v1222
      %v1255 = vpack.c.bf16 %v1225, %v1224
      %v1256 = vpack.c.bf16 %v1227, %v1226
      %v1257 = vpack.c.bf16 %v1229, %v1228
      %v1258 = vpack.c.bf16 %v1231, %v1230
      %v1259 = vpack.c.bf16 %v1233, %v1232
      %v1260 = vpack.c.bf16 %v1235, %v1234
      %v1261 = vpack.c.bf16 %v1237, %v1236
      %s1262 = scalar_lea.vmem %s3, 128
      %v1263 = vld [vmem:[%s1262] sm:$0xf]
      %v1264 = vld [vmem:[%s1262 + $0x4] sm:$0xf]
      %v1265 = vld [vmem:[%s1262 + $0x8] sm:$0xf]
      %v1266 = vld [vmem:[%s1262 + $0xc] sm:$0xf]
      %v1267 = vld [vmem:[%s1262 + $0x10] sm:$0xf]
      %v1268 = vld [vmem:[%s1262 + $0x14] sm:$0xf]
      %v1269 = vld [vmem:[%s1262 + $0x18] sm:$0xf]
      %v1270 = vld [vmem:[%s1262 + $0x1c] sm:$0xf]
      %v1271 = vld [vmem:[%s1262 + $0x20] sm:$0xf]
      %v1272 = vld [vmem:[%s1262 + $0x24] sm:$0xf]
      %v1273 = vld [vmem:[%s1262 + $0x28] sm:$0xf]
      %v1274 = vld [vmem:[%s1262 + $0x2c] sm:$0xf]
      %v1275 = vld [vmem:[%s1262 + $0x30] sm:$0xf]
      %v1276 = vld [vmem:[%s1262 + $0x34] sm:$0xf]
      %v1277 = vld [vmem:[%s1262 + $0x38] sm:$0xf]
      %v1278 = vld [vmem:[%s1262 + $0x3c] sm:$0xf]
      %v1295 = vunpack.c.l.b16 %v1263
      %v1296 = vunpack.c.l.b16 %v1264
      %v1297 = vunpack.c.l.b16 %v1265
      %v1298 = vunpack.c.l.b16 %v1266
      %v1299 = vunpack.c.l.b16 %v1267
      %v1300 = vunpack.c.l.b16 %v1268
      %v1301 = vunpack.c.l.b16 %v1269
      %v1302 = vunpack.c.l.b16 %v1270
      %v1303 = vunpack.c.l.b16 %v1271
      %v1304 = vunpack.c.l.b16 %v1272
      %v1305 = vunpack.c.l.b16 %v1273
      %v1306 = vunpack.c.l.b16 %v1274
      %v1307 = vunpack.c.l.b16 %v1275
      %v1308 = vunpack.c.l.b16 %v1276
      %v1309 = vunpack.c.l.b16 %v1277
      %v1310 = vunpack.c.l.b16 %v1278
      %v1311 = vpack.c.b16 %v1296, %v1295
      %v1312 = vpack.c.b16 %v1298, %v1297
      %v1313 = vpack.c.b16 %v1300, %v1299
      %v1314 = vpack.c.b16 %v1302, %v1301
      %v1315 = vpack.c.b16 %v1304, %v1303
      %v1316 = vpack.c.b16 %v1306, %v1305
      %v1317 = vpack.c.b16 %v1308, %v1307
      %v1318 = vpack.c.b16 %v1310, %v1309
      %1327 = vmatprep.subr.bf16.mxu0 0
      %1328 = vmatpush1.bf16.msra.mxu0 %v1318
      %1329 = vmatprep.subr.bf16.mxu0 0
      %1330 = vmatpush1.bf16.msra.mxu0 %v1317
      %1331 = vmatprep.subr.bf16.mxu0 0
      %1332 = vmatpush1.bf16.msra.mxu0 %v1316
      %1333 = vmatprep.subr.bf16.mxu0 0
      %1334 = vmatpush1.bf16.msra.mxu0 %v1315
      %1335 = vmatprep.subr.bf16.mxu0 0
      %1336 = vmatpush1.bf16.msra.mxu0 %v1314
      %1337 = vmatprep.subr.bf16.mxu0 0
      %1338 = vmatpush1.bf16.msra.mxu0 %v1313
      %1339 = vmatprep.subr.bf16.mxu0 0
      %1340 = vmatpush1.bf16.msra.mxu0 %v1312
      %1341 = vmatprep.subr.bf16.mxu0 0
      %1342 = vmatpush1.bf16.msra.mxu0 %v1311
      %1343 = vmatprep.subr.bf16.mxu0 0
      %1344 = vmatpush2.bf16.msra.mxu0 0
      %1345 = vmatprep.subr.bf16.mxu0 0
      %1346 = vmatpush2.bf16.msra.mxu0 0
      %1347 = vmatprep.subr.bf16.mxu0 0
      %1348 = vmatpush2.bf16.msra.mxu0 0
      %1349 = vmatprep.subr.bf16.mxu0 0
      %1350 = vmatpush2.bf16.msra.mxu0 0
      %1351 = vmatprep.subr.bf16.mxu0 0
      %1352 = vmatpush2.bf16.msra.mxu0 0
      %1353 = vmatprep.subr.bf16.mxu0 0
      %1354 = vmatpush2.bf16.msra.mxu0 0
      %1355 = vmatprep.subr.bf16.mxu0 0
      %1356 = vmatpush2.bf16.msra.mxu0 0
      %1357 = vmatprep.subr.bf16.mxu0 0
      %1358 = vmatpush2.bf16.msra.mxu0 0
      %1359 = vmatprep.mubr.bf16.mxu0 0
      %1360 = vmatmul.mubr.bf16.gmra.mxu0 %v1238
      %v1361 = vpop.f32.mrf.mxu0
      %v1362 = vadd.f32 0.0, %v1361
      %v1363 = vpop.f32.mrf.mxu0
      %v1364 = vpop.f32.mrf.mxu0
      %v1365 = vadd.f32 0.0, %v1364
      %v1366 = vpop.f32.mrf.mxu0
      %1367 = vmatprep.mubr.bf16.mxu0 0
      %1368 = vmatmul.mubr.bf16.gmra.mxu0 %v1239
      %v1369 = vpop.f32.mrf.mxu0
      %v1370 = vpop.f32.mrf.mxu0
      %v1371 = vpop.f32.mrf.mxu0
      %v1372 = vadd.f32 0.0, %v1371
      %v1373 = vpop.f32.mrf.mxu0
      %1374 = vmatprep.mubr.bf16.mxu0 0
      %1375 = vmatmul.mubr.bf16.gmra.mxu0 %v1240
      %v1376 = vpop.f32.mrf.mxu0
      %v1377 = vadd.f32 0.0, %v1376
      %v1378 = vpop.f32.mrf.mxu0
      %v1379 = vpop.f32.mrf.mxu0
      %v1380 = vpop.f32.mrf.mxu0
      %1381 = vmatprep.mubr.bf16.mxu0 0
      %1382 = vmatmul.mubr.bf16.gmra.mxu0 %v1241
      %v1383 = vpop.f32.mrf.mxu0
      %v1384 = vadd.f32 0.0, %v1383
      %v1385 = vpop.f32.mrf.mxu0
      %v1386 = vpop.f32.mrf.mxu0
      %v1387 = vadd.f32 0.0, %v1386
      %v1388 = vpop.f32.mrf.mxu0
      %1389 = vmatprep.mubr.bf16.mxu0 0
      %1390 = vmatmul.mubr.bf16.gmra.mxu0 %v1242
      %v1391 = vpop.f32.mrf.mxu0
      %v1392 = vpop.f32.mrf.mxu0
      %v1393 = vpop.f32.mrf.mxu0
      %v1394 = vadd.f32 0.0, %v1393
      %v1395 = vpop.f32.mrf.mxu0
      %1396 = vmatprep.mubr.bf16.mxu0 0
      %1397 = vmatmul.mubr.bf16.gmra.mxu0 %v1243
      %v1398 = vpop.f32.mrf.mxu0
      %v1399 = vadd.f32 0.0, %v1398
      %v1400 = vpop.f32.mrf.mxu0
      %v1401 = vpop.f32.mrf.mxu0
      %v1402 = vpop.f32.mrf.mxu0
      %1403 = vmatprep.mubr.bf16.mxu0 0
      %1404 = vmatmul.mubr.bf16.gmra.mxu0 %v1244
      %v1405 = vpop.f32.mrf.mxu0
      %v1406 = vadd.f32 0.0, %v1405
      %v1407 = vpop.f32.mrf.mxu0
      %v1408 = vpop.f32.mrf.mxu0
      %v1409 = vadd.f32 0.0, %v1408
      %v1410 = vpop.f32.mrf.mxu0
      %1411 = vmatprep.mubr.bf16.mxu0 0
      %1412 = vmatmul.mubr.bf16.gmra.mxu0 %v1245
      %v1413 = vpop.f32.mrf.mxu0
      %v1414 = vpop.f32.mrf.mxu0
      %v1415 = vpop.f32.mrf.mxu0
      %v1416 = vadd.f32 0.0, %v1415
      %v1417 = vpop.f32.mrf.mxu0
      %1418 = vmatprep.mubr.bf16.mxu0 0
      %1419 = vmatmul.mubr.bf16.gmra.mxu0 %v1246
      %v1420 = vpop.f32.mrf.mxu0
      %v1421 = vadd.f32 0.0, %v1420
      %v1422 = vpop.f32.mrf.mxu0
      %v1423 = vpop.f32.mrf.mxu0
      %v1424 = vpop.f32.mrf.mxu0
      %1425 = vmatprep.mubr.bf16.mxu0 0
      %1426 = vmatmul.mubr.bf16.gmra.mxu0 %v1247
      %v1427 = vpop.f32.mrf.mxu0
      %v1428 = vadd.f32 0.0, %v1427
      %v1429 = vpop.f32.mrf.mxu0
      %v1430 = vpop.f32.mrf.mxu0
      %v1431 = vadd.f32 0.0, %v1430
      %v1432 = vpop.f32.mrf.mxu0
      %1433 = vmatprep.mubr.bf16.mxu0 0
      %1434 = vmatmul.mubr.bf16.gmra.mxu0 %v1248
      %v1435 = vpop.f32.mrf.mxu0
      %v1436 = vpop.f32.mrf.mxu0
      %v1437 = vpop.f32.mrf.mxu0
      %v1438 = vadd.f32 0.0, %v1437
      %v1439 = vpop.f32.mrf.mxu0
      %1440 = vmatprep.mubr.bf16.mxu0 0
      %1441 = vmatmul.mubr.bf16.gmra.mxu0 %v1249
      %v1442 = vpop.f32.mrf.mxu0
      %v1443 = vadd.f32 0.0, %v1442
      %v1444 = vpop.f32.mrf.mxu0
      %v1445 = vpop.f32.mrf.mxu0
      %v1446 = vpop.f32.mrf.mxu0
      %1447 = vmatprep.mubr.bf16.mxu0 0
      %1448 = vmatmul.mubr.bf16.gmra.mxu0 %v1250
      %v1449 = vpop.f32.mrf.mxu0
      %v1450 = vadd.f32 0.0, %v1449
      %v1451 = vpop.f32.mrf.mxu0
      %v1452 = vpop.f32.mrf.mxu0
      %v1453 = vadd.f32 0.0, %v1452
      %v1454 = vpop.f32.mrf.mxu0
      %1455 = vmatprep.mubr.bf16.mxu0 0
      %1456 = vmatmul.mubr.bf16.gmra.mxu0 %v1251
      %v1457 = vpop.f32.mrf.mxu0
      %v1458 = vpop.f32.mrf.mxu0
      %v1459 = vpop.f32.mrf.mxu0
      %v1460 = vadd.f32 0.0, %v1459
      %v1461 = vpop.f32.mrf.mxu0
      %1462 = vmatprep.mubr.bf16.mxu0 0
      %1463 = vmatmul.mubr.bf16.gmra.mxu0 %v1252
      %v1464 = vpop.f32.mrf.mxu0
      %v1465 = vadd.f32 0.0, %v1464
      %v1466 = vpop.f32.mrf.mxu0
      %v1467 = vpop.f32.mrf.mxu0
      %v1468 = vpop.f32.mrf.mxu0
      %1469 = vmatprep.mubr.bf16.mxu0 0
      %1470 = vmatmul.mubr.bf16.gmra.mxu0 %v1253
      %v1471 = vpop.f32.mrf.mxu0
      %v1472 = vadd.f32 0.0, %v1471
      %v1473 = vpop.f32.mrf.mxu0
      %v1474 = vpop.f32.mrf.mxu0
      %v1475 = vadd.f32 0.0, %v1474
      %v1476 = vpop.f32.mrf.mxu0
      %1477 = vmatprep.mubr.bf16.mxu0 0
      %1478 = vmatmul.mubr.bf16.gmra.mxu0 %v1254
      %v1479 = vpop.f32.mrf.mxu0
      %v1480 = vpop.f32.mrf.mxu0
      %v1481 = vpop.f32.mrf.mxu0
      %v1482 = vadd.f32 0.0, %v1481
      %v1483 = vpop.f32.mrf.mxu0
      %1484 = vmatprep.mubr.bf16.mxu0 0
      %1485 = vmatmul.mubr.bf16.gmra.mxu0 %v1255
      %v1486 = vpop.f32.mrf.mxu0
      %v1487 = vadd.f32 0.0, %v1486
      %v1488 = vpop.f32.mrf.mxu0
      %v1489 = vpop.f32.mrf.mxu0
      %v1490 = vpop.f32.mrf.mxu0
      %1491 = vmatprep.mubr.bf16.mxu0 0
      %1492 = vmatmul.mubr.bf16.gmra.mxu0 %v1256
      %v1493 = vpop.f32.mrf.mxu0
      %v1494 = vadd.f32 0.0, %v1493
      %v1495 = vpop.f32.mrf.mxu0
      %v1496 = vpop.f32.mrf.mxu0
      %v1497 = vadd.f32 0.0, %v1496
      %v1498 = vpop.f32.mrf.mxu0
      %1499 = vmatprep.mubr.bf16.mxu0 0
      %1500 = vmatmul.mubr.bf16.gmra.mxu0 %v1257
      %v1501 = vpop.f32.mrf.mxu0
      %v1502 = vpop.f32.mrf.mxu0
      %v1503 = vpop.f32.mrf.mxu0
      %v1504 = vadd.f32 0.0, %v1503
      %v1505 = vpop.f32.mrf.mxu0
      %1506 = vmatprep.mubr.bf16.mxu0 0
      %1507 = vmatmul.mubr.bf16.gmra.mxu0 %v1258
      %v1508 = vpop.f32.mrf.mxu0
      %v1509 = vadd.f32 0.0, %v1508
      %v1510 = vpop.f32.mrf.mxu0
      %v1511 = vpop.f32.mrf.mxu0
      %v1512 = vpop.f32.mrf.mxu0
      %1513 = vmatprep.mubr.bf16.mxu0 0
      %1514 = vmatmul.mubr.bf16.gmra.mxu0 %v1259
      %v1515 = vpop.f32.mrf.mxu0
      %v1516 = vadd.f32 0.0, %v1515
      %v1517 = vpop.f32.mrf.mxu0
      %v1518 = vpop.f32.mrf.mxu0
      %v1519 = vadd.f32 0.0, %v1518
      %v1520 = vpop.f32.mrf.mxu0
      %1521 = vmatprep.mubr.bf16.mxu0 0
      %1522 = vmatmul.mubr.bf16.gmra.mxu0 %v1260
      %v1523 = vpop.f32.mrf.mxu0
      %v1524 = vpop.f32.mrf.mxu0
      %v1525 = vpop.f32.mrf.mxu0
      %v1526 = vadd.f32 0.0, %v1525
      %v1527 = vpop.f32.mrf.mxu0
      %1528 = vmatprep.mubr.bf16.mxu0 0
      %1529 = vmatmul.mubr.bf16.gmra.mxu0 %v1261
      %v1530 = vpop.f32.mrf.mxu0
      %v1531 = vadd.f32 0.0, %v1530
      %v1532 = vpop.f32.mrf.mxu0
      %v1533 = vpop.f32.mrf.mxu0
      %v1534 = vpop.f32.mrf.mxu0
      %1535 = vdwg.mxu0
      %v1536 = vadd.f32 %v1016, %v1362
      %v1537 = vadd.f32 %v1019, %v1365
      %v1538 = vadd.f32 %v1026, %v1372
      %v1539 = vadd.f32 %v1031, %v1377
      %v1540 = vadd.f32 %v1038, %v1384
      %v1541 = vadd.f32 %v1041, %v1387
      %v1542 = vadd.f32 %v1048, %v1394
      %v1543 = vadd.f32 %v1053, %v1399
      %v1544 = vadd.f32 %v1060, %v1406
      %v1545 = vadd.f32 %v1063, %v1409
      %v1546 = vadd.f32 %v1070, %v1416
      %v1547 = vadd.f32 %v1075, %v1421
      %v1548 = vadd.f32 %v1082, %v1428
      %v1549 = vadd.f32 %v1085, %v1431
      %v1550 = vadd.f32 %v1092, %v1438
      %v1551 = vadd.f32 %v1097, %v1443
      %v1552 = vadd.f32 %v1104, %v1450
      %v1553 = vadd.f32 %v1107, %v1453
      %v1554 = vadd.f32 %v1114, %v1460
      %v1555 = vadd.f32 %v1119, %v1465
      %v1556 = vadd.f32 %v1126, %v1472
      %v1557 = vadd.f32 %v1129, %v1475
      %v1558 = vadd.f32 %v1136, %v1482
      %v1559 = vadd.f32 %v1141, %v1487
      %v1560 = vadd.f32 %v1148, %v1494
      %v1561 = vadd.f32 %v1151, %v1497
      %v1562 = vadd.f32 %v1158, %v1504
      %v1563 = vadd.f32 %v1163, %v1509
      %v1564 = vadd.f32 %v1170, %v1516
      %v1565 = vadd.f32 %v1173, %v1519
      %v1566 = vadd.f32 %v1180, %v1526
      %v1567 = vadd.f32 %v1185, %v1531
      %v1568 = vld [vmem:[#allocation2 + $0x1f] sm:$0xff]
      %v1569 = vld [vmem:[#allocation2 + $0x27] sm:$0xff]
      %v1570 = vld [vmem:[#allocation2 + $0x2f] sm:$0xff]
      %v1571 = vld [vmem:[#allocation2 + $0x37] sm:$0xff]
      %v1572 = vld [vmem:[#allocation2 + $0x3f] sm:$0xff]
      %v1573 = vld [vmem:[#allocation2 + $0x47] sm:$0xff]
      %v1574 = vld [vmem:[#allocation2 + $0x4f] sm:$0xff]
      %v1575 = vld [vmem:[#allocation2 + $0x57] sm:$0xff]
      %v1576 = vld [vmem:[#allocation2 + $0x5f] sm:$0xff]
      %v1577 = vld [vmem:[#allocation2 + $0x67] sm:$0xff]
      %v1578 = vld [vmem:[#allocation2 + $0x6f] sm:$0xff]
      %v1579 = vld [vmem:[#allocation2 + $0x77] sm:$0xff]
      %v1580 = vld [vmem:[#allocation2 + $0x7f] sm:$0xff]
      %v1581 = vld [vmem:[#allocation2 + $0x87] sm:$0xff]
      %v1582 = vld [vmem:[#allocation2 + $0x8f] sm:$0xff]
      %v1583 = vld [vmem:[#allocation2 + $0x97] sm:$0xff]
      %v1584 = vld [vmem:[#allocation2 + $0x9f] sm:$0xff]
      %v1585 = vld [vmem:[#allocation2 + $0xa7] sm:$0xff]
      %v1586 = vld [vmem:[#allocation2 + $0xaf] sm:$0xff]
      %v1587 = vld [vmem:[#allocation2 + $0xb7] sm:$0xff]
      %v1588 = vld [vmem:[#allocation2 + $0xbf] sm:$0xff]
      %v1589 = vld [vmem:[#allocation2 + $0xc7] sm:$0xff]
      %v1590 = vld [vmem:[#allocation2 + $0xcf] sm:$0xff]
      %v1591 = vld [vmem:[#allocation2 + $0xd7] sm:$0xff]
      %v1592 = vld [vmem:[#allocation2 + $0xdf] sm:$0xff]
      %v1593 = vld [vmem:[#allocation2 + $0xe7] sm:$0xff]
      %v1594 = vld [vmem:[#allocation2 + $0xef] sm:$0xff]
      %v1595 = vld [vmem:[#allocation2 + $0xf7] sm:$0xff]
      %v1596 = vld [vmem:[#allocation2 + $0xff] sm:$0xff]
      %v1597 = vld [vmem:[#allocation2 + $0x107] sm:$0xff]
      %v1598 = vld [vmem:[#allocation2 + $0x10f] sm:$0xff]
      %v1599 = vld [vmem:[#allocation2 + $0x117] sm:$0xff]
      %v1600 = vld [vmem:[#allocation2 + $0x11f] sm:$0xff]
      %v1601 = vld [vmem:[#allocation2 + $0x127] sm:$0xff]
      %v1602 = vld [vmem:[#allocation2 + $0x12f] sm:$0xff]
      %v1603 = vld [vmem:[#allocation2 + $0x137] sm:$0xff]
      %v1604 = vld [vmem:[#allocation2 + $0x13f] sm:$0xff]
      %v1605 = vld [vmem:[#allocation2 + $0x147] sm:$0xff]
      %v1606 = vld [vmem:[#allocation2 + $0x14f] sm:$0xff]
      %v1607 = vld [vmem:[#allocation2 + $0x157] sm:$0xff]
      %v1608 = vld [vmem:[#allocation2 + $0x15f] sm:$0xff]
      %v1609 = vld [vmem:[#allocation2 + $0x167] sm:$0xff]
      %v1610 = vld [vmem:[#allocation2 + $0x16f] sm:$0xff]
      %v1611 = vld [vmem:[#allocation2 + $0x177] sm:$0xff]
      %v1612 = vld [vmem:[#allocation2 + $0x17f] sm:$0xff]
      %v1613 = vld [vmem:[#allocation2 + $0x187] sm:$0xff]
      %v1614 = vld [vmem:[#allocation2 + $0x18f] sm:$0xff]
      %v1615 = vld [vmem:[#allocation2 + $0x197] sm:$0xff]
      %v1616 = vpack.c.bf16 %v1569, %v1568
      %v1617 = vpack.c.bf16 %v1571, %v1570
      %v1618 = vpack.c.bf16 %v1573, %v1572
      %v1619 = vpack.c.bf16 %v1575, %v1574
      %v1620 = vpack.c.bf16 %v1577, %v1576
      %v1621 = vpack.c.bf16 %v1579, %v1578
      %v1622 = vpack.c.bf16 %v1581, %v1580
      %v1623 = vpack.c.bf16 %v1583, %v1582
      %v1624 = vpack.c.bf16 %v1585, %v1584
      %v1625 = vpack.c.bf16 %v1587, %v1586
      %v1626 = vpack.c.bf16 %v1589, %v1588
      %v1627 = vpack.c.bf16 %v1591, %v1590
      %v1628 = vpack.c.bf16 %v1593, %v1592
      %v1629 = vpack.c.bf16 %v1595, %v1594
      %v1630 = vpack.c.bf16 %v1597, %v1596
      %v1631 = vpack.c.bf16 %v1599, %v1598
      %v1632 = vpack.c.bf16 %v1601, %v1600
      %v1633 = vpack.c.bf16 %v1603, %v1602
      %v1634 = vpack.c.bf16 %v1605, %v1604
      %v1635 = vpack.c.bf16 %v1607, %v1606
      %v1636 = vpack.c.bf16 %v1609, %v1608
      %v1637 = vpack.c.bf16 %v1611, %v1610
      %v1638 = vpack.c.bf16 %v1613, %v1612
      %v1639 = vpack.c.bf16 %v1615, %v1614
      %s1640 = scalar_lea.vmem %s3, 192
      %v1641 = vld [vmem:[%s1640] sm:$0xf]
      %v1642 = vld [vmem:[%s1640 + $0x4] sm:$0xf]
      %v1643 = vld [vmem:[%s1640 + $0x8] sm:$0xf]
      %v1644 = vld [vmem:[%s1640 + $0xc] sm:$0xf]
      %v1645 = vld [vmem:[%s1640 + $0x10] sm:$0xf]
      %v1646 = vld [vmem:[%s1640 + $0x14] sm:$0xf]
      %v1647 = vld [vmem:[%s1640 + $0x18] sm:$0xf]
      %v1648 = vld [vmem:[%s1640 + $0x1c] sm:$0xf]
      %v1649 = vld [vmem:[%s1640 + $0x20] sm:$0xf]
      %v1650 = vld [vmem:[%s1640 + $0x24] sm:$0xf]
      %v1651 = vld [vmem:[%s1640 + $0x28] sm:$0xf]
      %v1652 = vld [vmem:[%s1640 + $0x2c] sm:$0xf]
      %v1653 = vld [vmem:[%s1640 + $0x30] sm:$0xf]
      %v1654 = vld [vmem:[%s1640 + $0x34] sm:$0xf]
      %v1655 = vld [vmem:[%s1640 + $0x38] sm:$0xf]
      %v1656 = vld [vmem:[%s1640 + $0x3c] sm:$0xf]
      %v1673 = vunpack.c.l.b16 %v1641
      %v1674 = vunpack.c.l.b16 %v1642
      %v1675 = vunpack.c.l.b16 %v1643
      %v1676 = vunpack.c.l.b16 %v1644
      %v1677 = vunpack.c.l.b16 %v1645
      %v1678 = vunpack.c.l.b16 %v1646
      %v1679 = vunpack.c.l.b16 %v1647
      %v1680 = vunpack.c.l.b16 %v1648
      %v1681 = vunpack.c.l.b16 %v1649
      %v1682 = vunpack.c.l.b16 %v1650
      %v1683 = vunpack.c.l.b16 %v1651
      %v1684 = vunpack.c.l.b16 %v1652
      %v1685 = vunpack.c.l.b16 %v1653
      %v1686 = vunpack.c.l.b16 %v1654
      %v1687 = vunpack.c.l.b16 %v1655
      %v1688 = vunpack.c.l.b16 %v1656
      %v1689 = vpack.c.b16 %v1674, %v1673
      %v1690 = vpack.c.b16 %v1676, %v1675
      %v1691 = vpack.c.b16 %v1678, %v1677
      %v1692 = vpack.c.b16 %v1680, %v1679
      %v1693 = vpack.c.b16 %v1682, %v1681
      %v1694 = vpack.c.b16 %v1684, %v1683
      %v1695 = vpack.c.b16 %v1686, %v1685
      %v1696 = vpack.c.b16 %v1688, %v1687
      %1705 = vmatprep.subr.bf16.mxu0 0
      %1706 = vmatpush1.bf16.msra.mxu0 %v1696
      %1707 = vmatprep.subr.bf16.mxu0 0
      %1708 = vmatpush1.bf16.msra.mxu0 %v1695
      %1709 = vmatprep.subr.bf16.mxu0 0
      %1710 = vmatpush1.bf16.msra.mxu0 %v1694
      %1711 = vmatprep.subr.bf16.mxu0 0
      %1712 = vmatpush1.bf16.msra.mxu0 %v1693
      %1713 = vmatprep.subr.bf16.mxu0 0
      %1714 = vmatpush1.bf16.msra.mxu0 %v1692
      %1715 = vmatprep.subr.bf16.mxu0 0
      %1716 = vmatpush1.bf16.msra.mxu0 %v1691
      %1717 = vmatprep.subr.bf16.mxu0 0
      %1718 = vmatpush1.bf16.msra.mxu0 %v1690
      %1719 = vmatprep.subr.bf16.mxu0 0
      %1720 = vmatpush1.bf16.msra.mxu0 %v1689
      %1721 = vmatprep.subr.bf16.mxu0 0
      %1722 = vmatpush2.bf16.msra.mxu0 0
      %1723 = vmatprep.subr.bf16.mxu0 0
      %1724 = vmatpush2.bf16.msra.mxu0 0
      %1725 = vmatprep.subr.bf16.mxu0 0
      %1726 = vmatpush2.bf16.msra.mxu0 0
      %1727 = vmatprep.subr.bf16.mxu0 0
      %1728 = vmatpush2.bf16.msra.mxu0 0
      %1729 = vmatprep.subr.bf16.mxu0 0
      %1730 = vmatpush2.bf16.msra.mxu0 0
      %1731 = vmatprep.subr.bf16.mxu0 0
      %1732 = vmatpush2.bf16.msra.mxu0 0
      %1733 = vmatprep.subr.bf16.mxu0 0
      %1734 = vmatpush2.bf16.msra.mxu0 0
      %1735 = vmatprep.subr.bf16.mxu0 0
      %1736 = vmatpush2.bf16.msra.mxu0 0
      %1737 = vmatprep.mubr.bf16.mxu0 0
      %1738 = vmatmul.mubr.bf16.gmra.mxu0 %v1616
      %v1739 = vpop.f32.mrf.mxu0
      %v1740 = vadd.f32 0.0, %v1739
      %v1741 = vpop.f32.mrf.mxu0
      %v1742 = vpop.f32.mrf.mxu0
      %v1743 = vadd.f32 0.0, %v1742
      %v1744 = vpop.f32.mrf.mxu0
      %1745 = vmatprep.mubr.bf16.mxu0 0
      %1746 = vmatmul.mubr.bf16.gmra.mxu0 %v1617
      %v1747 = vpop.f32.mrf.mxu0
      %v1748 = vpop.f32.mrf.mxu0
      %v1749 = vpop.f32.mrf.mxu0
      %v1750 = vadd.f32 0.0, %v1749
      %v1751 = vpop.f32.mrf.mxu0
      %1752 = vmatprep.mubr.bf16.mxu0 0
      %1753 = vmatmul.mubr.bf16.gmra.mxu0 %v1618
      %v1754 = vpop.f32.mrf.mxu0
      %v1755 = vadd.f32 0.0, %v1754
      %v1756 = vpop.f32.mrf.mxu0
      %v1757 = vpop.f32.mrf.mxu0
      %v1758 = vpop.f32.mrf.mxu0
      %1759 = vmatprep.mubr.bf16.mxu0 0
      %1760 = vmatmul.mubr.bf16.gmra.mxu0 %v1619
      %v1761 = vpop.f32.mrf.mxu0
      %v1762 = vadd.f32 0.0, %v1761
      %v1763 = vpop.f32.mrf.mxu0
      %v1764 = vpop.f32.mrf.mxu0
      %v1765 = vadd.f32 0.0, %v1764
      %v1766 = vpop.f32.mrf.mxu0
      %1767 = vmatprep.mubr.bf16.mxu0 0
      %1768 = vmatmul.mubr.bf16.gmra.mxu0 %v1620
      %v1769 = vpop.f32.mrf.mxu0
      %v1770 = vpop.f32.mrf.mxu0
      %v1771 = vpop.f32.mrf.mxu0
      %v1772 = vadd.f32 0.0, %v1771
      %v1773 = vpop.f32.mrf.mxu0
      %1774 = vmatprep.mubr.bf16.mxu0 0
      %1775 = vmatmul.mubr.bf16.gmra.mxu0 %v1621
      %v1776 = vpop.f32.mrf.mxu0
      %v1777 = vadd.f32 0.0, %v1776
      %v1778 = vpop.f32.mrf.mxu0
      %v1779 = vpop.f32.mrf.mxu0
      %v1780 = vpop.f32.mrf.mxu0
      %1781 = vmatprep.mubr.bf16.mxu0 0
      %1782 = vmatmul.mubr.bf16.gmra.mxu0 %v1622
      %v1783 = vpop.f32.mrf.mxu0
      %v1784 = vadd.f32 0.0, %v1783
      %v1785 = vpop.f32.mrf.mxu0
      %v1786 = vpop.f32.mrf.mxu0
      %v1787 = vadd.f32 0.0, %v1786
      %v1788 = vpop.f32.mrf.mxu0
      %1789 = vmatprep.mubr.bf16.mxu0 0
      %1790 = vmatmul.mubr.bf16.gmra.mxu0 %v1623
      %v1791 = vpop.f32.mrf.mxu0
      %v1792 = vpop.f32.mrf.mxu0
      %v1793 = vpop.f32.mrf.mxu0
      %v1794 = vadd.f32 0.0, %v1793
      %v1795 = vpop.f32.mrf.mxu0
      %1796 = vmatprep.mubr.bf16.mxu0 0
      %1797 = vmatmul.mubr.bf16.gmra.mxu0 %v1624
      %v1798 = vpop.f32.mrf.mxu0
      %v1799 = vadd.f32 0.0, %v1798
      %v1800 = vpop.f32.mrf.mxu0
      %v1801 = vpop.f32.mrf.mxu0
      %v1802 = vpop.f32.mrf.mxu0
      %1803 = vmatprep.mubr.bf16.mxu0 0
      %1804 = vmatmul.mubr.bf16.gmra.mxu0 %v1625
      %v1805 = vpop.f32.mrf.mxu0
      %v1806 = vadd.f32 0.0, %v1805
      %v1807 = vpop.f32.mrf.mxu0
      %v1808 = vpop.f32.mrf.mxu0
      %v1809 = vadd.f32 0.0, %v1808
      %v1810 = vpop.f32.mrf.mxu0
      %1811 = vmatprep.mubr.bf16.mxu0 0
      %1812 = vmatmul.mubr.bf16.gmra.mxu0 %v1626
      %v1813 = vpop.f32.mrf.mxu0
      %v1814 = vpop.f32.mrf.mxu0
      %v1815 = vpop.f32.mrf.mxu0
      %v1816 = vadd.f32 0.0, %v1815
      %v1817 = vpop.f32.mrf.mxu0
      %1818 = vmatprep.mubr.bf16.mxu0 0
      %1819 = vmatmul.mubr.bf16.gmra.mxu0 %v1627
      %v1820 = vpop.f32.mrf.mxu0
      %v1821 = vadd.f32 0.0, %v1820
      %v1822 = vpop.f32.mrf.mxu0
      %v1823 = vpop.f32.mrf.mxu0
      %v1824 = vpop.f32.mrf.mxu0
      %1825 = vmatprep.mubr.bf16.mxu0 0
      %1826 = vmatmul.mubr.bf16.gmra.mxu0 %v1628
      %v1827 = vpop.f32.mrf.mxu0
      %v1828 = vadd.f32 0.0, %v1827
      %v1829 = vpop.f32.mrf.mxu0
      %v1830 = vpop.f32.mrf.mxu0
      %v1831 = vadd.f32 0.0, %v1830
      %v1832 = vpop.f32.mrf.mxu0
      %1833 = vmatprep.mubr.bf16.mxu0 0
      %1834 = vmatmul.mubr.bf16.gmra.mxu0 %v1629
      %v1835 = vpop.f32.mrf.mxu0
      %v1836 = vpop.f32.mrf.mxu0
      %v1837 = vpop.f32.mrf.mxu0
      %v1838 = vadd.f32 0.0, %v1837
      %v1839 = vpop.f32.mrf.mxu0
      %1840 = vmatprep.mubr.bf16.mxu0 0
      %1841 = vmatmul.mubr.bf16.gmra.mxu0 %v1630
      %v1842 = vpop.f32.mrf.mxu0
      %v1843 = vadd.f32 0.0, %v1842
      %v1844 = vpop.f32.mrf.mxu0
      %v1845 = vpop.f32.mrf.mxu0
      %v1846 = vpop.f32.mrf.mxu0
      %1847 = vmatprep.mubr.bf16.mxu0 0
      %1848 = vmatmul.mubr.bf16.gmra.mxu0 %v1631
      %v1849 = vpop.f32.mrf.mxu0
      %v1850 = vadd.f32 0.0, %v1849
      %v1851 = vpop.f32.mrf.mxu0
      %v1852 = vpop.f32.mrf.mxu0
      %v1853 = vadd.f32 0.0, %v1852
      %v1854 = vpop.f32.mrf.mxu0
      %1855 = vmatprep.mubr.bf16.mxu0 0
      %1856 = vmatmul.mubr.bf16.gmra.mxu0 %v1632
      %v1857 = vpop.f32.mrf.mxu0
      %v1858 = vpop.f32.mrf.mxu0
      %v1859 = vpop.f32.mrf.mxu0
      %v1860 = vadd.f32 0.0, %v1859
      %v1861 = vpop.f32.mrf.mxu0
      %1862 = vmatprep.mubr.bf16.mxu0 0
      %1863 = vmatmul.mubr.bf16.gmra.mxu0 %v1633
      %v1864 = vpop.f32.mrf.mxu0
      %v1865 = vadd.f32 0.0, %v1864
      %v1866 = vpop.f32.mrf.mxu0
      %v1867 = vpop.f32.mrf.mxu0
      %v1868 = vpop.f32.mrf.mxu0
      %1869 = vmatprep.mubr.bf16.mxu0 0
      %1870 = vmatmul.mubr.bf16.gmra.mxu0 %v1634
      %v1871 = vpop.f32.mrf.mxu0
      %v1872 = vadd.f32 0.0, %v1871
      %v1873 = vpop.f32.mrf.mxu0
      %v1874 = vpop.f32.mrf.mxu0
      %v1875 = vadd.f32 0.0, %v1874
      %v1876 = vpop.f32.mrf.mxu0
      %1877 = vmatprep.mubr.bf16.mxu0 0
      %1878 = vmatmul.mubr.bf16.gmra.mxu0 %v1635
      %v1879 = vpop.f32.mrf.mxu0
      %v1880 = vpop.f32.mrf.mxu0
      %v1881 = vpop.f32.mrf.mxu0
      %v1882 = vadd.f32 0.0, %v1881
      %v1883 = vpop.f32.mrf.mxu0
      %1884 = vmatprep.mubr.bf16.mxu0 0
      %1885 = vmatmul.mubr.bf16.gmra.mxu0 %v1636
      %v1886 = vpop.f32.mrf.mxu0
      %v1887 = vadd.f32 0.0, %v1886
      %v1888 = vpop.f32.mrf.mxu0
      %v1889 = vpop.f32.mrf.mxu0
      %v1890 = vpop.f32.mrf.mxu0
      %1891 = vmatprep.mubr.bf16.mxu0 0
      %1892 = vmatmul.mubr.bf16.gmra.mxu0 %v1637
      %v1893 = vpop.f32.mrf.mxu0
      %v1894 = vadd.f32 0.0, %v1893
      %v1895 = vpop.f32.mrf.mxu0
      %v1896 = vpop.f32.mrf.mxu0
      %v1897 = vadd.f32 0.0, %v1896
      %v1898 = vpop.f32.mrf.mxu0
      %1899 = vmatprep.mubr.bf16.mxu0 0
      %1900 = vmatmul.mubr.bf16.gmra.mxu0 %v1638
      %v1901 = vpop.f32.mrf.mxu0
      %v1902 = vpop.f32.mrf.mxu0
      %v1903 = vpop.f32.mrf.mxu0
      %v1904 = vadd.f32 0.0, %v1903
      %v1905 = vpop.f32.mrf.mxu0
      %1906 = vmatprep.mubr.bf16.mxu0 0
      %1907 = vmatmul.mubr.bf16.gmra.mxu0 %v1639
      %v1908 = vpop.f32.mrf.mxu0
      %v1909 = vadd.f32 0.0, %v1908
      %v1910 = vpop.f32.mrf.mxu0
      %v1911 = vpop.f32.mrf.mxu0
      %v1912 = vpop.f32.mrf.mxu0
      %1913 = vdwg.mxu0
      %v1914 = vadd.f32 %v1536, %v1740
      %v1915 = vadd.f32 %v1537, %v1743
      %v1916 = vadd.f32 %v1538, %v1750
      %v1917 = vadd.f32 %v1539, %v1755
      %v1918 = vadd.f32 %v1540, %v1762
      %v1919 = vadd.f32 %v1541, %v1765
      %v1920 = vadd.f32 %v1542, %v1772
      %v1921 = vadd.f32 %v1543, %v1777
      %v1922 = vadd.f32 %v1544, %v1784
      %v1923 = vadd.f32 %v1545, %v1787
      %v1924 = vadd.f32 %v1546, %v1794
      %v1925 = vadd.f32 %v1547, %v1799
      %v1926 = vadd.f32 %v1548, %v1806
      %v1927 = vadd.f32 %v1549, %v1809
      %v1928 = vadd.f32 %v1550, %v1816
      %v1929 = vadd.f32 %v1551, %v1821
      %v1930 = vadd.f32 %v1552, %v1828
      %v1931 = vadd.f32 %v1553, %v1831
      %v1932 = vadd.f32 %v1554, %v1838
      %v1933 = vadd.f32 %v1555, %v1843
      %v1934 = vadd.f32 %v1556, %v1850
      %v1935 = vadd.f32 %v1557, %v1853
      %v1936 = vadd.f32 %v1558, %v1860
      %v1937 = vadd.f32 %v1559, %v1865
      %v1938 = vadd.f32 %v1560, %v1872
      %v1939 = vadd.f32 %v1561, %v1875
      %v1940 = vadd.f32 %v1562, %v1882
      %v1941 = vadd.f32 %v1563, %v1887
      %v1942 = vadd.f32 %v1564, %v1894
      %v1943 = vadd.f32 %v1565, %v1897
      %v1944 = vadd.f32 %v1566, %v1904
      %v1945 = vadd.f32 %v1567, %v1909
      %v1946 = vld [vmem:[#allocation2 + $0x20] sm:$0xff]
      %v1947 = vld [vmem:[#allocation2 + $0x28] sm:$0xff]
      %v1948 = vld [vmem:[#allocation2 + $0x30] sm:$0xff]
      %v1949 = vld [vmem:[#allocation2 + $0x38] sm:$0xff]
      %v1950 = vld [vmem:[#allocation2 + $0x40] sm:$0xff]
      %v1951 = vld [vmem:[#allocation2 + $0x48] sm:$0xff]
      %v1952 = vld [vmem:[#allocation2 + $0x50] sm:$0xff]
      %v1953 = vld [vmem:[#allocation2 + $0x58] sm:$0xff]
      %v1954 = vld [vmem:[#allocation2 + $0x60] sm:$0xff]
      %v1955 = vld [vmem:[#allocation2 + $0x68] sm:$0xff]
      %v1956 = vld [vmem:[#allocation2 + $0x70] sm:$0xff]
      %v1957 = vld [vmem:[#allocation2 + $0x78] sm:$0xff]
      %v1958 = vld [vmem:[#allocation2 + $0x80] sm:$0xff]
      %v1959 = vld [vmem:[#allocation2 + $0x88] sm:$0xff]
      %v1960 = vld [vmem:[#allocation2 + $0x90] sm:$0xff]
      %v1961 = vld [vmem:[#allocation2 + $0x98] sm:$0xff]
      %v1962 = vld [vmem:[#allocation2 + $0xa0] sm:$0xff]
      %v1963 = vld [vmem:[#allocation2 + $0xa8] sm:$0xff]
      %v1964 = vld [vmem:[#allocation2 + $0xb0] sm:$0xff]
      %v1965 = vld [vmem:[#allocation2 + $0xb8] sm:$0xff]
      %v1966 = vld [vmem:[#allocation2 + $0xc0] sm:$0xff]
      %v1967 = vld [vmem:[#allocation2 + $0xc8] sm:$0xff]
      %v1968 = vld [vmem:[#allocation2 + $0xd0] sm:$0xff]
      %v1969 = vld [vmem:[#allocation2 + $0xd8] sm:$0xff]
      %v1970 = vld [vmem:[#allocation2 + $0xe0] sm:$0xff]
      %v1971 = vld [vmem:[#allocation2 + $0xe8] sm:$0xff]
      %v1972 = vld [vmem:[#allocation2 + $0xf0] sm:$0xff]
      %v1973 = vld [vmem:[#allocation2 + $0xf8] sm:$0xff]
      %v1974 = vld [vmem:[#allocation2 + $0x100] sm:$0xff]
      %v1975 = vld [vmem:[#allocation2 + $0x108] sm:$0xff]
      %v1976 = vld [vmem:[#allocation2 + $0x110] sm:$0xff]
      %v1977 = vld [vmem:[#allocation2 + $0x118] sm:$0xff]
      %v1978 = vld [vmem:[#allocation2 + $0x120] sm:$0xff]
      %v1979 = vld [vmem:[#allocation2 + $0x128] sm:$0xff]
      %v1980 = vld [vmem:[#allocation2 + $0x130] sm:$0xff]
      %v1981 = vld [vmem:[#allocation2 + $0x138] sm:$0xff]
      %v1982 = vld [vmem:[#allocation2 + $0x140] sm:$0xff]
      %v1983 = vld [vmem:[#allocation2 + $0x148] sm:$0xff]
      %v1984 = vld [vmem:[#allocation2 + $0x150] sm:$0xff]
      %v1985 = vld [vmem:[#allocation2 + $0x158] sm:$0xff]
      %v1986 = vld [vmem:[#allocation2 + $0x160] sm:$0xff]
      %v1987 = vld [vmem:[#allocation2 + $0x168] sm:$0xff]
      %v1988 = vld [vmem:[#allocation2 + $0x170] sm:$0xff]
      %v1989 = vld [vmem:[#allocation2 + $0x178] sm:$0xff]
      %v1990 = vld [vmem:[#allocation2 + $0x180] sm:$0xff]
      %v1991 = vld [vmem:[#allocation2 + $0x188] sm:$0xff]
      %v1992 = vld [vmem:[#allocation2 + $0x190] sm:$0xff]
      %v1993 = vld [vmem:[#allocation2 + $0x198] sm:$0xff]
      %v1994 = vpack.c.bf16 %v1947, %v1946
      %v1995 = vpack.c.bf16 %v1949, %v1948
      %v1996 = vpack.c.bf16 %v1951, %v1950
      %v1997 = vpack.c.bf16 %v1953, %v1952
      %v1998 = vpack.c.bf16 %v1955, %v1954
      %v1999 = vpack.c.bf16 %v1957, %v1956
      %v2000 = vpack.c.bf16 %v1959, %v1958
      %v2001 = vpack.c.bf16 %v1961, %v1960
      %v2002 = vpack.c.bf16 %v1963, %v1962
      %v2003 = vpack.c.bf16 %v1965, %v1964
      %v2004 = vpack.c.bf16 %v1967, %v1966
      %v2005 = vpack.c.bf16 %v1969, %v1968
      %v2006 = vpack.c.bf16 %v1971, %v1970
      %v2007 = vpack.c.bf16 %v1973, %v1972
      %v2008 = vpack.c.bf16 %v1975, %v1974
      %v2009 = vpack.c.bf16 %v1977, %v1976
      %v2010 = vpack.c.bf16 %v1979, %v1978
      %v2011 = vpack.c.bf16 %v1981, %v1980
      %v2012 = vpack.c.bf16 %v1983, %v1982
      %v2013 = vpack.c.bf16 %v1985, %v1984
      %v2014 = vpack.c.bf16 %v1987, %v1986
      %v2015 = vpack.c.bf16 %v1989, %v1988
      %v2016 = vpack.c.bf16 %v1991, %v1990
      %v2017 = vpack.c.bf16 %v1993, %v1992
      %s2018 = scalar_lea.vmem %s3, 256
      %v2019 = vld [vmem:[%s2018] sm:$0xf]
      %v2020 = vld [vmem:[%s2018 + $0x4] sm:$0xf]
      %v2021 = vld [vmem:[%s2018 + $0x8] sm:$0xf]
      %v2022 = vld [vmem:[%s2018 + $0xc] sm:$0xf]
      %v2023 = vld [vmem:[%s2018 + $0x10] sm:$0xf]
      %v2024 = vld [vmem:[%s2018 + $0x14] sm:$0xf]
      %v2025 = vld [vmem:[%s2018 + $0x18] sm:$0xf]
      %v2026 = vld [vmem:[%s2018 + $0x1c] sm:$0xf]
      %v2027 = vld [vmem:[%s2018 + $0x20] sm:$0xf]
      %v2028 = vld [vmem:[%s2018 + $0x24] sm:$0xf]
      %v2029 = vld [vmem:[%s2018 + $0x28] sm:$0xf]
      %v2030 = vld [vmem:[%s2018 + $0x2c] sm:$0xf]
      %v2031 = vld [vmem:[%s2018 + $0x30] sm:$0xf]
      %v2032 = vld [vmem:[%s2018 + $0x34] sm:$0xf]
      %v2033 = vld [vmem:[%s2018 + $0x38] sm:$0xf]
      %v2034 = vld [vmem:[%s2018 + $0x3c] sm:$0xf]
      %v2051 = vunpack.c.l.b16 %v2019
      %v2052 = vunpack.c.l.b16 %v2020
      %v2053 = vunpack.c.l.b16 %v2021
      %v2054 = vunpack.c.l.b16 %v2022
      %v2055 = vunpack.c.l.b16 %v2023
      %v2056 = vunpack.c.l.b16 %v2024
      %v2057 = vunpack.c.l.b16 %v2025
      %v2058 = vunpack.c.l.b16 %v2026
      %v2059 = vunpack.c.l.b16 %v2027
      %v2060 = vunpack.c.l.b16 %v2028
      %v2061 = vunpack.c.l.b16 %v2029
      %v2062 = vunpack.c.l.b16 %v2030
      %v2063 = vunpack.c.l.b16 %v2031
      %v2064 = vunpack.c.l.b16 %v2032
      %v2065 = vunpack.c.l.b16 %v2033
      %v2066 = vunpack.c.l.b16 %v2034
      %v2067 = vpack.c.b16 %v2052, %v2051
      %v2068 = vpack.c.b16 %v2054, %v2053
      %v2069 = vpack.c.b16 %v2056, %v2055
      %v2070 = vpack.c.b16 %v2058, %v2057
      %v2071 = vpack.c.b16 %v2060, %v2059
      %v2072 = vpack.c.b16 %v2062, %v2061
      %v2073 = vpack.c.b16 %v2064, %v2063
      %v2074 = vpack.c.b16 %v2066, %v2065
      %2083 = vmatprep.subr.bf16.mxu0 0
      %2084 = vmatpush1.bf16.msra.mxu0 %v2074
      %2085 = vmatprep.subr.bf16.mxu0 0
      %2086 = vmatpush1.bf16.msra.mxu0 %v2073
      %2087 = vmatprep.subr.bf16.mxu0 0
      %2088 = vmatpush1.bf16.msra.mxu0 %v2072
      %2089 = vmatprep.subr.bf16.mxu0 0
      %2090 = vmatpush1.bf16.msra.mxu0 %v2071
      %2091 = vmatprep.subr.bf16.mxu0 0
      %2092 = vmatpush1.bf16.msra.mxu0 %v2070
      %2093 = vmatprep.subr.bf16.mxu0 0
      %2094 = vmatpush1.bf16.msra.mxu0 %v2069
      %2095 = vmatprep.subr.bf16.mxu0 0
      %2096 = vmatpush1.bf16.msra.mxu0 %v2068
      %2097 = vmatprep.subr.bf16.mxu0 0
      %2098 = vmatpush1.bf16.msra.mxu0 %v2067
      %2099 = vmatprep.subr.bf16.mxu0 0
      %2100 = vmatpush2.bf16.msra.mxu0 0
      %2101 = vmatprep.subr.bf16.mxu0 0
      %2102 = vmatpush2.bf16.msra.mxu0 0
      %2103 = vmatprep.subr.bf16.mxu0 0
      %2104 = vmatpush2.bf16.msra.mxu0 0
      %2105 = vmatprep.subr.bf16.mxu0 0
      %2106 = vmatpush2.bf16.msra.mxu0 0
      %2107 = vmatprep.subr.bf16.mxu0 0
      %2108 = vmatpush2.bf16.msra.mxu0 0
      %2109 = vmatprep.subr.bf16.mxu0 0
      %2110 = vmatpush2.bf16.msra.mxu0 0
      %2111 = vmatprep.subr.bf16.mxu0 0
      %2112 = vmatpush2.bf16.msra.mxu0 0
      %2113 = vmatprep.subr.bf16.mxu0 0
      %2114 = vmatpush2.bf16.msra.mxu0 0
      %2115 = vmatprep.mubr.bf16.mxu0 0
      %2116 = vmatmul.mubr.bf16.gmra.mxu0 %v1994
      %v2117 = vpop.f32.mrf.mxu0
      %v2118 = vadd.f32 0.0, %v2117
      %v2119 = vpop.f32.mrf.mxu0
      %v2120 = vpop.f32.mrf.mxu0
      %v2121 = vadd.f32 0.0, %v2120
      %v2122 = vpop.f32.mrf.mxu0
      %2123 = vmatprep.mubr.bf16.mxu0 0
      %2124 = vmatmul.mubr.bf16.gmra.mxu0 %v1995
      %v2125 = vpop.f32.mrf.mxu0
      %v2126 = vpop.f32.mrf.mxu0
      %v2127 = vpop.f32.mrf.mxu0
      %v2128 = vadd.f32 0.0, %v2127
      %v2129 = vpop.f32.mrf.mxu0
      %2130 = vmatprep.mubr.bf16.mxu0 0
      %2131 = vmatmul.mubr.bf16.gmra.mxu0 %v1996
      %v2132 = vpop.f32.mrf.mxu0
      %v2133 = vadd.f32 0.0, %v2132
      %v2134 = vpop.f32.mrf.mxu0
      %v2135 = vpop.f32.mrf.mxu0
      %v2136 = vpop.f32.mrf.mxu0
      %2137 = vmatprep.mubr.bf16.mxu0 0
      %2138 = vmatmul.mubr.bf16.gmra.mxu0 %v1997
      %v2139 = vpop.f32.mrf.mxu0
      %v2140 = vadd.f32 0.0, %v2139
      %v2141 = vpop.f32.mrf.mxu0
      %v2142 = vpop.f32.mrf.mxu0
      %v2143 = vadd.f32 0.0, %v2142
      %v2144 = vpop.f32.mrf.mxu0
      %2145 = vmatprep.mubr.bf16.mxu0 0
      %2146 = vmatmul.mubr.bf16.gmra.mxu0 %v1998
      %v2147 = vpop.f32.mrf.mxu0
      %v2148 = vpop.f32.mrf.mxu0
      %v2149 = vpop.f32.mrf.mxu0
      %v2150 = vadd.f32 0.0, %v2149
      %v2151 = vpop.f32.mrf.mxu0
      %2152 = vmatprep.mubr.bf16.mxu0 0
      %2153 = vmatmul.mubr.bf16.gmra.mxu0 %v1999
      %v2154 = vpop.f32.mrf.mxu0
      %v2155 = vadd.f32 0.0, %v2154
      %v2156 = vpop.f32.mrf.mxu0
      %v2157 = vpop.f32.mrf.mxu0
      %v2158 = vpop.f32.mrf.mxu0
      %2159 = vmatprep.mubr.bf16.mxu0 0
      %2160 = vmatmul.mubr.bf16.gmra.mxu0 %v2000
      %v2161 = vpop.f32.mrf.mxu0
      %v2162 = vadd.f32 0.0, %v2161
      %v2163 = vpop.f32.mrf.mxu0
      %v2164 = vpop.f32.mrf.mxu0
      %v2165 = vadd.f32 0.0, %v2164
      %v2166 = vpop.f32.mrf.mxu0
      %2167 = vmatprep.mubr.bf16.mxu0 0
      %2168 = vmatmul.mubr.bf16.gmra.mxu0 %v2001
      %v2169 = vpop.f32.mrf.mxu0
      %v2170 = vpop.f32.mrf.mxu0
      %v2171 = vpop.f32.mrf.mxu0
      %v2172 = vadd.f32 0.0, %v2171
      %v2173 = vpop.f32.mrf.mxu0
      %2174 = vmatprep.mubr.bf16.mxu0 0
      %2175 = vmatmul.mubr.bf16.gmra.mxu0 %v2002
      %v2176 = vpop.f32.mrf.mxu0
      %v2177 = vadd.f32 0.0, %v2176
      %v2178 = vpop.f32.mrf.mxu0
      %v2179 = vpop.f32.mrf.mxu0
      %v2180 = vpop.f32.mrf.mxu0
      %2181 = vmatprep.mubr.bf16.mxu0 0
      %2182 = vmatmul.mubr.bf16.gmra.mxu0 %v2003
      %v2183 = vpop.f32.mrf.mxu0
      %v2184 = vadd.f32 0.0, %v2183
      %v2185 = vpop.f32.mrf.mxu0
      %v2186 = vpop.f32.mrf.mxu0
      %v2187 = vadd.f32 0.0, %v2186
      %v2188 = vpop.f32.mrf.mxu0
      %2189 = vmatprep.mubr.bf16.mxu0 0
      %2190 = vmatmul.mubr.bf16.gmra.mxu0 %v2004
      %v2191 = vpop.f32.mrf.mxu0
      %v2192 = vpop.f32.mrf.mxu0
      %v2193 = vpop.f32.mrf.mxu0
      %v2194 = vadd.f32 0.0, %v2193
      %v2195 = vpop.f32.mrf.mxu0
      %2196 = vmatprep.mubr.bf16.mxu0 0
      %2197 = vmatmul.mubr.bf16.gmra.mxu0 %v2005
      %v2198 = vpop.f32.mrf.mxu0
      %v2199 = vadd.f32 0.0, %v2198
      %v2200 = vpop.f32.mrf.mxu0
      %v2201 = vpop.f32.mrf.mxu0
      %v2202 = vpop.f32.mrf.mxu0
      %2203 = vmatprep.mubr.bf16.mxu0 0
      %2204 = vmatmul.mubr.bf16.gmra.mxu0 %v2006
      %v2205 = vpop.f32.mrf.mxu0
      %v2206 = vadd.f32 0.0, %v2205
      %v2207 = vpop.f32.mrf.mxu0
      %v2208 = vpop.f32.mrf.mxu0
      %v2209 = vadd.f32 0.0, %v2208
      %v2210 = vpop.f32.mrf.mxu0
      %2211 = vmatprep.mubr.bf16.mxu0 0
      %2212 = vmatmul.mubr.bf16.gmra.mxu0 %v2007
      %v2213 = vpop.f32.mrf.mxu0
      %v2214 = vpop.f32.mrf.mxu0
      %v2215 = vpop.f32.mrf.mxu0
      %v2216 = vadd.f32 0.0, %v2215
      %v2217 = vpop.f32.mrf.mxu0
      %2218 = vmatprep.mubr.bf16.mxu0 0
      %2219 = vmatmul.mubr.bf16.gmra.mxu0 %v2008
      %v2220 = vpop.f32.mrf.mxu0
      %v2221 = vadd.f32 0.0, %v2220
      %v2222 = vpop.f32.mrf.mxu0
      %v2223 = vpop.f32.mrf.mxu0
      %v2224 = vpop.f32.mrf.mxu0
      %2225 = vmatprep.mubr.bf16.mxu0 0
      %2226 = vmatmul.mubr.bf16.gmra.mxu0 %v2009
      %v2227 = vpop.f32.mrf.mxu0
      %v2228 = vadd.f32 0.0, %v2227
      %v2229 = vpop.f32.mrf.mxu0
      %v2230 = vpop.f32.mrf.mxu0
      %v2231 = vadd.f32 0.0, %v2230
      %v2232 = vpop.f32.mrf.mxu0
      %2233 = vmatprep.mubr.bf16.mxu0 0
      %2234 = vmatmul.mubr.bf16.gmra.mxu0 %v2010
      %v2235 = vpop.f32.mrf.mxu0
      %v2236 = vpop.f32.mrf.mxu0
      %v2237 = vpop.f32.mrf.mxu0
      %v2238 = vadd.f32 0.0, %v2237
      %v2239 = vpop.f32.mrf.mxu0
      %2240 = vmatprep.mubr.bf16.mxu0 0
      %2241 = vmatmul.mubr.bf16.gmra.mxu0 %v2011
      %v2242 = vpop.f32.mrf.mxu0
      %v2243 = vadd.f32 0.0, %v2242
      %v2244 = vpop.f32.mrf.mxu0
      %v2245 = vpop.f32.mrf.mxu0
      %v2246 = vpop.f32.mrf.mxu0
      %2247 = vmatprep.mubr.bf16.mxu0 0
      %2248 = vmatmul.mubr.bf16.gmra.mxu0 %v2012
      %v2249 = vpop.f32.mrf.mxu0
      %v2250 = vadd.f32 0.0, %v2249
      %v2251 = vpop.f32.mrf.mxu0
      %v2252 = vpop.f32.mrf.mxu0
      %v2253 = vadd.f32 0.0, %v2252
      %v2254 = vpop.f32.mrf.mxu0
      %2255 = vmatprep.mubr.bf16.mxu0 0
      %2256 = vmatmul.mubr.bf16.gmra.mxu0 %v2013
      %v2257 = vpop.f32.mrf.mxu0
      %v2258 = vpop.f32.mrf.mxu0
      %v2259 = vpop.f32.mrf.mxu0
      %v2260 = vadd.f32 0.0, %v2259
      %v2261 = vpop.f32.mrf.mxu0
      %2262 = vmatprep.mubr.bf16.mxu0 0
      %2263 = vmatmul.mubr.bf16.gmra.mxu0 %v2014
      %v2264 = vpop.f32.mrf.mxu0
      %v2265 = vadd.f32 0.0, %v2264
      %v2266 = vpop.f32.mrf.mxu0
      %v2267 = vpop.f32.mrf.mxu0
      %v2268 = vpop.f32.mrf.mxu0
      %2269 = vmatprep.mubr.bf16.mxu0 0
      %2270 = vmatmul.mubr.bf16.gmra.mxu0 %v2015
      %v2271 = vpop.f32.mrf.mxu0
      %v2272 = vadd.f32 0.0, %v2271
      %v2273 = vpop.f32.mrf.mxu0
      %v2274 = vpop.f32.mrf.mxu0
      %v2275 = vadd.f32 0.0, %v2274
      %v2276 = vpop.f32.mrf.mxu0
      %2277 = vmatprep.mubr.bf16.mxu0 0
      %2278 = vmatmul.mubr.bf16.gmra.mxu0 %v2016
      %v2279 = vpop.f32.mrf.mxu0
      %v2280 = vpop.f32.mrf.mxu0
      %v2281 = vpop.f32.mrf.mxu0
      %v2282 = vadd.f32 0.0, %v2281
      %v2283 = vpop.f32.mrf.mxu0
      %2284 = vmatprep.mubr.bf16.mxu0 0
      %2285 = vmatmul.mubr.bf16.gmra.mxu0 %v2017
      %v2286 = vpop.f32.mrf.mxu0
      %v2287 = vadd.f32 0.0, %v2286
      %v2288 = vpop.f32.mrf.mxu0
      %v2289 = vpop.f32.mrf.mxu0
      %v2290 = vpop.f32.mrf.mxu0
      %2291 = vdwg.mxu0
      %v2292 = vadd.f32 %v1914, %v2118
      %v2293 = vadd.f32 %v1915, %v2121
      %v2294 = vadd.f32 %v1916, %v2128
      %v2295 = vadd.f32 %v1917, %v2133
      %v2296 = vadd.f32 %v1918, %v2140
      %v2297 = vadd.f32 %v1919, %v2143
      %v2298 = vadd.f32 %v1920, %v2150
      %v2299 = vadd.f32 %v1921, %v2155
      %v2300 = vadd.f32 %v1922, %v2162
      %v2301 = vadd.f32 %v1923, %v2165
      %v2302 = vadd.f32 %v1924, %v2172
      %v2303 = vadd.f32 %v1925, %v2177
      %v2304 = vadd.f32 %v1926, %v2184
      %v2305 = vadd.f32 %v1927, %v2187
      %v2306 = vadd.f32 %v1928, %v2194
      %v2307 = vadd.f32 %v1929, %v2199
      %v2308 = vadd.f32 %v1930, %v2206
      %v2309 = vadd.f32 %v1931, %v2209
      %v2310 = vadd.f32 %v1932, %v2216
      %v2311 = vadd.f32 %v1933, %v2221
      %v2312 = vadd.f32 %v1934, %v2228
      %v2313 = vadd.f32 %v1935, %v2231
      %v2314 = vadd.f32 %v1936, %v2238
      %v2315 = vadd.f32 %v1937, %v2243
      %v2316 = vadd.f32 %v1938, %v2250
      %v2317 = vadd.f32 %v1939, %v2253
      %v2318 = vadd.f32 %v1940, %v2260
      %v2319 = vadd.f32 %v1941, %v2265
      %v2320 = vadd.f32 %v1942, %v2272
      %v2321 = vadd.f32 %v1943, %v2275
      %v2322 = vadd.f32 %v1944, %v2282
      %v2323 = vadd.f32 %v1945, %v2287
      %v2324 = vld [vmem:[#allocation2 + $0x21] sm:$0xff]
      %v2325 = vld [vmem:[#allocation2 + $0x29] sm:$0xff]
      %v2326 = vld [vmem:[#allocation2 + $0x31] sm:$0xff]
      %v2327 = vld [vmem:[#allocation2 + $0x39] sm:$0xff]
      %v2328 = vld [vmem:[#allocation2 + $0x41] sm:$0xff]
      %v2329 = vld [vmem:[#allocation2 + $0x49] sm:$0xff]
      %v2330 = vld [vmem:[#allocation2 + $0x51] sm:$0xff]
      %v2331 = vld [vmem:[#allocation2 + $0x59] sm:$0xff]
      %v2332 = vld [vmem:[#allocation2 + $0x61] sm:$0xff]
      %v2333 = vld [vmem:[#allocation2 + $0x69] sm:$0xff]
      %v2334 = vld [vmem:[#allocation2 + $0x71] sm:$0xff]
      %v2335 = vld [vmem:[#allocation2 + $0x79] sm:$0xff]
      %v2336 = vld [vmem:[#allocation2 + $0x81] sm:$0xff]
      %v2337 = vld [vmem:[#allocation2 + $0x89] sm:$0xff]
      %v2338 = vld [vmem:[#allocation2 + $0x91] sm:$0xff]
      %v2339 = vld [vmem:[#allocation2 + $0x99] sm:$0xff]
      %v2340 = vld [vmem:[#allocation2 + $0xa1] sm:$0xff]
      %v2341 = vld [vmem:[#allocation2 + $0xa9] sm:$0xff]
      %v2342 = vld [vmem:[#allocation2 + $0xb1] sm:$0xff]
      %v2343 = vld [vmem:[#allocation2 + $0xb9] sm:$0xff]
      %v2344 = vld [vmem:[#allocation2 + $0xc1] sm:$0xff]
      %v2345 = vld [vmem:[#allocation2 + $0xc9] sm:$0xff]
      %v2346 = vld [vmem:[#allocation2 + $0xd1] sm:$0xff]
      %v2347 = vld [vmem:[#allocation2 + $0xd9] sm:$0xff]
      %v2348 = vld [vmem:[#allocation2 + $0xe1] sm:$0xff]
      %v2349 = vld [vmem:[#allocation2 + $0xe9] sm:$0xff]
      %v2350 = vld [vmem:[#allocation2 + $0xf1] sm:$0xff]
      %v2351 = vld [vmem:[#allocation2 + $0xf9] sm:$0xff]
      %v2352 = vld [vmem:[#allocation2 + $0x101] sm:$0xff]
      %v2353 = vld [vmem:[#allocation2 + $0x109] sm:$0xff]
      %v2354 = vld [vmem:[#allocation2 + $0x111] sm:$0xff]
      %v2355 = vld [vmem:[#allocation2 + $0x119] sm:$0xff]
      %v2356 = vld [vmem:[#allocation2 + $0x121] sm:$0xff]
      %v2357 = vld [vmem:[#allocation2 + $0x129] sm:$0xff]
      %v2358 = vld [vmem:[#allocation2 + $0x131] sm:$0xff]
      %v2359 = vld [vmem:[#allocation2 + $0x139] sm:$0xff]
      %v2360 = vld [vmem:[#allocation2 + $0x141] sm:$0xff]
      %v2361 = vld [vmem:[#allocation2 + $0x149] sm:$0xff]
      %v2362 = vld [vmem:[#allocation2 + $0x151] sm:$0xff]
      %v2363 = vld [vmem:[#allocation2 + $0x159] sm:$0xff]
      %v2364 = vld [vmem:[#allocation2 + $0x161] sm:$0xff]
      %v2365 = vld [vmem:[#allocation2 + $0x169] sm:$0xff]
      %v2366 = vld [vmem:[#allocation2 + $0x171] sm:$0xff]
      %v2367 = vld [vmem:[#allocation2 + $0x179] sm:$0xff]
      %v2368 = vld [vmem:[#allocation2 + $0x181] sm:$0xff]
      %v2369 = vld [vmem:[#allocation2 + $0x189] sm:$0xff]
      %v2370 = vld [vmem:[#allocation2 + $0x191] sm:$0xff]
      %v2371 = vld [vmem:[#allocation2 + $0x199] sm:$0xff]
      %v2372 = vpack.c.bf16 %v2325, %v2324
      %v2373 = vpack.c.bf16 %v2327, %v2326
      %v2374 = vpack.c.bf16 %v2329, %v2328
      %v2375 = vpack.c.bf16 %v2331, %v2330
      %v2376 = vpack.c.bf16 %v2333, %v2332
      %v2377 = vpack.c.bf16 %v2335, %v2334
      %v2378 = vpack.c.bf16 %v2337, %v2336
      %v2379 = vpack.c.bf16 %v2339, %v2338
      %v2380 = vpack.c.bf16 %v2341, %v2340
      %v2381 = vpack.c.bf16 %v2343, %v2342
      %v2382 = vpack.c.bf16 %v2345, %v2344
      %v2383 = vpack.c.bf16 %v2347, %v2346
      %v2384 = vpack.c.bf16 %v2349, %v2348
      %v2385 = vpack.c.bf16 %v2351, %v2350
      %v2386 = vpack.c.bf16 %v2353, %v2352
      %v2387 = vpack.c.bf16 %v2355, %v2354
      %v2388 = vpack.c.bf16 %v2357, %v2356
      %v2389 = vpack.c.bf16 %v2359, %v2358
      %v2390 = vpack.c.bf16 %v2361, %v2360
      %v2391 = vpack.c.bf16 %v2363, %v2362
      %v2392 = vpack.c.bf16 %v2365, %v2364
      %v2393 = vpack.c.bf16 %v2367, %v2366
      %v2394 = vpack.c.bf16 %v2369, %v2368
      %v2395 = vpack.c.bf16 %v2371, %v2370
      %s2396 = scalar_lea.vmem %s3, 320
      %v2397 = vld [vmem:[%s2396] sm:$0xf]
      %v2398 = vld [vmem:[%s2396 + $0x4] sm:$0xf]
      %v2399 = vld [vmem:[%s2396 + $0x8] sm:$0xf]
      %v2400 = vld [vmem:[%s2396 + $0xc] sm:$0xf]
      %v2401 = vld [vmem:[%s2396 + $0x10] sm:$0xf]
      %v2402 = vld [vmem:[%s2396 + $0x14] sm:$0xf]
      %v2403 = vld [vmem:[%s2396 + $0x18] sm:$0xf]
      %v2404 = vld [vmem:[%s2396 + $0x1c] sm:$0xf]
      %v2405 = vld [vmem:[%s2396 + $0x20] sm:$0xf]
      %v2406 = vld [vmem:[%s2396 + $0x24] sm:$0xf]
      %v2407 = vld [vmem:[%s2396 + $0x28] sm:$0xf]
      %v2408 = vld [vmem:[%s2396 + $0x2c] sm:$0xf]
      %v2409 = vld [vmem:[%s2396 + $0x30] sm:$0xf]
      %v2410 = vld [vmem:[%s2396 + $0x34] sm:$0xf]
      %v2411 = vld [vmem:[%s2396 + $0x38] sm:$0xf]
      %v2412 = vld [vmem:[%s2396 + $0x3c] sm:$0xf]
      %v2429 = vunpack.c.l.b16 %v2397
      %v2430 = vunpack.c.l.b16 %v2398
      %v2431 = vunpack.c.l.b16 %v2399
      %v2432 = vunpack.c.l.b16 %v2400
      %v2433 = vunpack.c.l.b16 %v2401
      %v2434 = vunpack.c.l.b16 %v2402
      %v2435 = vunpack.c.l.b16 %v2403
      %v2436 = vunpack.c.l.b16 %v2404
      %v2437 = vunpack.c.l.b16 %v2405
      %v2438 = vunpack.c.l.b16 %v2406
      %v2439 = vunpack.c.l.b16 %v2407
      %v2440 = vunpack.c.l.b16 %v2408
      %v2441 = vunpack.c.l.b16 %v2409
      %v2442 = vunpack.c.l.b16 %v2410
      %v2443 = vunpack.c.l.b16 %v2411
      %v2444 = vunpack.c.l.b16 %v2412
      %v2445 = vpack.c.b16 %v2430, %v2429
      %v2446 = vpack.c.b16 %v2432, %v2431
      %v2447 = vpack.c.b16 %v2434, %v2433
      %v2448 = vpack.c.b16 %v2436, %v2435
      %v2449 = vpack.c.b16 %v2438, %v2437
      %v2450 = vpack.c.b16 %v2440, %v2439
      %v2451 = vpack.c.b16 %v2442, %v2441
      %v2452 = vpack.c.b16 %v2444, %v2443
      %2461 = vmatprep.subr.bf16.mxu0 0
      %2462 = vmatpush1.bf16.msra.mxu0 %v2452
      %2463 = vmatprep.subr.bf16.mxu0 0
      %2464 = vmatpush1.bf16.msra.mxu0 %v2451
      %2465 = vmatprep.subr.bf16.mxu0 0
      %2466 = vmatpush1.bf16.msra.mxu0 %v2450
      %2467 = vmatprep.subr.bf16.mxu0 0
      %2468 = vmatpush1.bf16.msra.mxu0 %v2449
      %2469 = vmatprep.subr.bf16.mxu0 0
      %2470 = vmatpush1.bf16.msra.mxu0 %v2448
      %2471 = vmatprep.subr.bf16.mxu0 0
      %2472 = vmatpush1.bf16.msra.mxu0 %v2447
      %2473 = vmatprep.subr.bf16.mxu0 0
      %2474 = vmatpush1.bf16.msra.mxu0 %v2446
      %2475 = vmatprep.subr.bf16.mxu0 0
      %2476 = vmatpush1.bf16.msra.mxu0 %v2445
      %2477 = vmatprep.subr.bf16.mxu0 0
      %2478 = vmatpush2.bf16.msra.mxu0 0
      %2479 = vmatprep.subr.bf16.mxu0 0
      %2480 = vmatpush2.bf16.msra.mxu0 0
      %2481 = vmatprep.subr.bf16.mxu0 0
      %2482 = vmatpush2.bf16.msra.mxu0 0
      %2483 = vmatprep.subr.bf16.mxu0 0
      %2484 = vmatpush2.bf16.msra.mxu0 0
      %2485 = vmatprep.subr.bf16.mxu0 0
      %2486 = vmatpush2.bf16.msra.mxu0 0
      %2487 = vmatprep.subr.bf16.mxu0 0
      %2488 = vmatpush2.bf16.msra.mxu0 0
      %2489 = vmatprep.subr.bf16.mxu0 0
      %2490 = vmatpush2.bf16.msra.mxu0 0
      %2491 = vmatprep.subr.bf16.mxu0 0
      %2492 = vmatpush2.bf16.msra.mxu0 0
      %2493 = vmatprep.mubr.bf16.mxu0 0
      %2494 = vmatmul.mubr.bf16.gmra.mxu0 %v2372
      %v2495 = vpop.f32.mrf.mxu0
      %v2496 = vadd.f32 0.0, %v2495
      %v2497 = vpop.f32.mrf.mxu0
      %v2498 = vpop.f32.mrf.mxu0
      %v2499 = vadd.f32 0.0, %v2498
      %v2500 = vpop.f32.mrf.mxu0
      %2501 = vmatprep.mubr.bf16.mxu0 0
      %2502 = vmatmul.mubr.bf16.gmra.mxu0 %v2373
      %v2503 = vpop.f32.mrf.mxu0
      %v2504 = vpop.f32.mrf.mxu0
      %v2505 = vpop.f32.mrf.mxu0
      %v2506 = vadd.f32 0.0, %v2505
      %v2507 = vpop.f32.mrf.mxu0
      %2508 = vmatprep.mubr.bf16.mxu0 0
      %2509 = vmatmul.mubr.bf16.gmra.mxu0 %v2374
      %v2510 = vpop.f32.mrf.mxu0
      %v2511 = vadd.f32 0.0, %v2510
      %v2512 = vpop.f32.mrf.mxu0
      %v2513 = vpop.f32.mrf.mxu0
      %v2514 = vpop.f32.mrf.mxu0
      %2515 = vmatprep.mubr.bf16.mxu0 0
      %2516 = vmatmul.mubr.bf16.gmra.mxu0 %v2375
      %v2517 = vpop.f32.mrf.mxu0
      %v2518 = vadd.f32 0.0, %v2517
      %v2519 = vpop.f32.mrf.mxu0
      %v2520 = vpop.f32.mrf.mxu0
      %v2521 = vadd.f32 0.0, %v2520
      %v2522 = vpop.f32.mrf.mxu0
      %2523 = vmatprep.mubr.bf16.mxu0 0
      %2524 = vmatmul.mubr.bf16.gmra.mxu0 %v2376
      %v2525 = vpop.f32.mrf.mxu0
      %v2526 = vpop.f32.mrf.mxu0
      %v2527 = vpop.f32.mrf.mxu0
      %v2528 = vadd.f32 0.0, %v2527
      %v2529 = vpop.f32.mrf.mxu0
      %2530 = vmatprep.mubr.bf16.mxu0 0
      %2531 = vmatmul.mubr.bf16.gmra.mxu0 %v2377
      %v2532 = vpop.f32.mrf.mxu0
      %v2533 = vadd.f32 0.0, %v2532
      %v2534 = vpop.f32.mrf.mxu0
      %v2535 = vpop.f32.mrf.mxu0
      %v2536 = vpop.f32.mrf.mxu0
      %2537 = vmatprep.mubr.bf16.mxu0 0
      %2538 = vmatmul.mubr.bf16.gmra.mxu0 %v2378
      %v2539 = vpop.f32.mrf.mxu0
      %v2540 = vadd.f32 0.0, %v2539
      %v2541 = vpop.f32.mrf.mxu0
      %v2542 = vpop.f32.mrf.mxu0
      %v2543 = vadd.f32 0.0, %v2542
      %v2544 = vpop.f32.mrf.mxu0
      %2545 = vmatprep.mubr.bf16.mxu0 0
      %2546 = vmatmul.mubr.bf16.gmra.mxu0 %v2379
      %v2547 = vpop.f32.mrf.mxu0
      %v2548 = vpop.f32.mrf.mxu0
      %v2549 = vpop.f32.mrf.mxu0
      %v2550 = vadd.f32 0.0, %v2549
      %v2551 = vpop.f32.mrf.mxu0
      %2552 = vmatprep.mubr.bf16.mxu0 0
      %2553 = vmatmul.mubr.bf16.gmra.mxu0 %v2380
      %v2554 = vpop.f32.mrf.mxu0
      %v2555 = vadd.f32 0.0, %v2554
      %v2556 = vpop.f32.mrf.mxu0
      %v2557 = vpop.f32.mrf.mxu0
      %v2558 = vpop.f32.mrf.mxu0
      %2559 = vmatprep.mubr.bf16.mxu0 0
      %2560 = vmatmul.mubr.bf16.gmra.mxu0 %v2381
      %v2561 = vpop.f32.mrf.mxu0
      %v2562 = vadd.f32 0.0, %v2561
      %v2563 = vpop.f32.mrf.mxu0
      %v2564 = vpop.f32.mrf.mxu0
      %v2565 = vadd.f32 0.0, %v2564
      %v2566 = vpop.f32.mrf.mxu0
      %2567 = vmatprep.mubr.bf16.mxu0 0
      %2568 = vmatmul.mubr.bf16.gmra.mxu0 %v2382
      %v2569 = vpop.f32.mrf.mxu0
      %v2570 = vpop.f32.mrf.mxu0
      %v2571 = vpop.f32.mrf.mxu0
      %v2572 = vadd.f32 0.0, %v2571
      %v2573 = vpop.f32.mrf.mxu0
      %2574 = vmatprep.mubr.bf16.mxu0 0
      %2575 = vmatmul.mubr.bf16.gmra.mxu0 %v2383
      %v2576 = vpop.f32.mrf.mxu0
      %v2577 = vadd.f32 0.0, %v2576
      %v2578 = vpop.f32.mrf.mxu0
      %v2579 = vpop.f32.mrf.mxu0
      %v2580 = vpop.f32.mrf.mxu0
      %2581 = vmatprep.mubr.bf16.mxu0 0
      %2582 = vmatmul.mubr.bf16.gmra.mxu0 %v2384
      %v2583 = vpop.f32.mrf.mxu0
      %v2584 = vadd.f32 0.0, %v2583
      %v2585 = vpop.f32.mrf.mxu0
      %v2586 = vpop.f32.mrf.mxu0
      %v2587 = vadd.f32 0.0, %v2586
      %v2588 = vpop.f32.mrf.mxu0
      %2589 = vmatprep.mubr.bf16.mxu0 0
      %2590 = vmatmul.mubr.bf16.gmra.mxu0 %v2385
      %v2591 = vpop.f32.mrf.mxu0
      %v2592 = vpop.f32.mrf.mxu0
      %v2593 = vpop.f32.mrf.mxu0
      %v2594 = vadd.f32 0.0, %v2593
      %v2595 = vpop.f32.mrf.mxu0
      %2596 = vmatprep.mubr.bf16.mxu0 0
      %2597 = vmatmul.mubr.bf16.gmra.mxu0 %v2386
      %v2598 = vpop.f32.mrf.mxu0
      %v2599 = vadd.f32 0.0, %v2598
      %v2600 = vpop.f32.mrf.mxu0
      %v2601 = vpop.f32.mrf.mxu0
      %v2602 = vpop.f32.mrf.mxu0
      %2603 = vmatprep.mubr.bf16.mxu0 0
      %2604 = vmatmul.mubr.bf16.gmra.mxu0 %v2387
      %v2605 = vpop.f32.mrf.mxu0
      %v2606 = vadd.f32 0.0, %v2605
      %v2607 = vpop.f32.mrf.mxu0
      %v2608 = vpop.f32.mrf.mxu0
      %v2609 = vadd.f32 0.0, %v2608
      %v2610 = vpop.f32.mrf.mxu0
      %2611 = vmatprep.mubr.bf16.mxu0 0
      %2612 = vmatmul.mubr.bf16.gmra.mxu0 %v2388
      %v2613 = vpop.f32.mrf.mxu0
      %v2614 = vpop.f32.mrf.mxu0
      %v2615 = vpop.f32.mrf.mxu0
      %v2616 = vadd.f32 0.0, %v2615
      %v2617 = vpop.f32.mrf.mxu0
      %2618 = vmatprep.mubr.bf16.mxu0 0
      %2619 = vmatmul.mubr.bf16.gmra.mxu0 %v2389
      %v2620 = vpop.f32.mrf.mxu0
      %v2621 = vadd.f32 0.0, %v2620
      %v2622 = vpop.f32.mrf.mxu0
      %v2623 = vpop.f32.mrf.mxu0
      %v2624 = vpop.f32.mrf.mxu0
      %2625 = vmatprep.mubr.bf16.mxu0 0
      %2626 = vmatmul.mubr.bf16.gmra.mxu0 %v2390
      %v2627 = vpop.f32.mrf.mxu0
      %v2628 = vadd.f32 0.0, %v2627
      %v2629 = vpop.f32.mrf.mxu0
      %v2630 = vpop.f32.mrf.mxu0
      %v2631 = vadd.f32 0.0, %v2630
      %v2632 = vpop.f32.mrf.mxu0
      %2633 = vmatprep.mubr.bf16.mxu0 0
      %2634 = vmatmul.mubr.bf16.gmra.mxu0 %v2391
      %v2635 = vpop.f32.mrf.mxu0
      %v2636 = vpop.f32.mrf.mxu0
      %v2637 = vpop.f32.mrf.mxu0
      %v2638 = vadd.f32 0.0, %v2637
      %v2639 = vpop.f32.mrf.mxu0
      %2640 = vmatprep.mubr.bf16.mxu0 0
      %2641 = vmatmul.mubr.bf16.gmra.mxu0 %v2392
      %v2642 = vpop.f32.mrf.mxu0
      %v2643 = vadd.f32 0.0, %v2642
      %v2644 = vpop.f32.mrf.mxu0
      %v2645 = vpop.f32.mrf.mxu0
      %v2646 = vpop.f32.mrf.mxu0
      %2647 = vmatprep.mubr.bf16.mxu0 0
      %2648 = vmatmul.mubr.bf16.gmra.mxu0 %v2393
      %v2649 = vpop.f32.mrf.mxu0
      %v2650 = vadd.f32 0.0, %v2649
      %v2651 = vpop.f32.mrf.mxu0
      %v2652 = vpop.f32.mrf.mxu0
      %v2653 = vadd.f32 0.0, %v2652
      %v2654 = vpop.f32.mrf.mxu0
      %2655 = vmatprep.mubr.bf16.mxu0 0
      %2656 = vmatmul.mubr.bf16.gmra.mxu0 %v2394
      %v2657 = vpop.f32.mrf.mxu0
      %v2658 = vpop.f32.mrf.mxu0
      %v2659 = vpop.f32.mrf.mxu0
      %v2660 = vadd.f32 0.0, %v2659
      %v2661 = vpop.f32.mrf.mxu0
      %2662 = vmatprep.mubr.bf16.mxu0 0
      %2663 = vmatmul.mubr.bf16.gmra.mxu0 %v2395
      %v2664 = vpop.f32.mrf.mxu0
      %v2665 = vadd.f32 0.0, %v2664
      %v2666 = vpop.f32.mrf.mxu0
      %v2667 = vpop.f32.mrf.mxu0
      %v2668 = vpop.f32.mrf.mxu0
      %2669 = vdwg.mxu0
      %v2670 = vadd.f32 %v2292, %v2496
      %v2671 = vadd.f32 %v2293, %v2499
      %v2672 = vadd.f32 %v2294, %v2506
      %v2673 = vadd.f32 %v2295, %v2511
      %v2674 = vadd.f32 %v2296, %v2518
      %v2675 = vadd.f32 %v2297, %v2521
      %v2676 = vadd.f32 %v2298, %v2528
      %v2677 = vadd.f32 %v2299, %v2533
      %v2678 = vadd.f32 %v2300, %v2540
      %v2679 = vadd.f32 %v2301, %v2543
      %v2680 = vadd.f32 %v2302, %v2550
      %v2681 = vadd.f32 %v2303, %v2555
      %v2682 = vadd.f32 %v2304, %v2562
      %v2683 = vadd.f32 %v2305, %v2565
      %v2684 = vadd.f32 %v2306, %v2572
      %v2685 = vadd.f32 %v2307, %v2577
      %v2686 = vadd.f32 %v2308, %v2584
      %v2687 = vadd.f32 %v2309, %v2587
      %v2688 = vadd.f32 %v2310, %v2594
      %v2689 = vadd.f32 %v2311, %v2599
      %v2690 = vadd.f32 %v2312, %v2606
      %v2691 = vadd.f32 %v2313, %v2609
      %v2692 = vadd.f32 %v2314, %v2616
      %v2693 = vadd.f32 %v2315, %v2621
      %v2694 = vadd.f32 %v2316, %v2628
      %v2695 = vadd.f32 %v2317, %v2631
      %v2696 = vadd.f32 %v2318, %v2638
      %v2697 = vadd.f32 %v2319, %v2643
      %v2698 = vadd.f32 %v2320, %v2650
      %v2699 = vadd.f32 %v2321, %v2653
      %v2700 = vadd.f32 %v2322, %v2660
      %v2701 = vadd.f32 %v2323, %v2665
      %v2702 = vld [vmem:[#allocation2 + $0x37] sm:$0xff]
      %v2703 = vld [vmem:[#allocation2 + $0x3f] sm:$0xff]
      %v2704 = vld [vmem:[#allocation2 + $0x47] sm:$0xff]
      %v2705 = vld [vmem:[#allocation2 + $0x4f] sm:$0xff]
      %v2706 = vld [vmem:[#allocation2 + $0x57] sm:$0xff]
      %v2707 = vld [vmem:[#allocation2 + $0x5f] sm:$0xff]
      %v2708 = vld [vmem:[#allocation2 + $0x67] sm:$0xff]
      %v2709 = vld [vmem:[#allocation2 + $0x6f] sm:$0xff]
      %v2710 = vld [vmem:[#allocation2 + $0x77] sm:$0xff]
      %v2711 = vld [vmem:[#allocation2 + $0x7f] sm:$0xff]
      %v2712 = vld [vmem:[#allocation2 + $0x87] sm:$0xff]
      %v2713 = vld [vmem:[#allocation2 + $0x8f] sm:$0xff]
      %v2714 = vld [vmem:[#allocation2 + $0x97] sm:$0xff]
      %v2715 = vld [vmem:[#allocation2 + $0x9f] sm:$0xff]
      %v2716 = vld [vmem:[#allocation2 + $0xa7] sm:$0xff]
      %v2717 = vld [vmem:[#allocation2 + $0xaf] sm:$0xff]
      %v2718 = vld [vmem:[#allocation2 + $0xb7] sm:$0xff]
      %v2719 = vld [vmem:[#allocation2 + $0xbf] sm:$0xff]
      %v2720 = vld [vmem:[#allocation2 + $0xc7] sm:$0xff]
      %v2721 = vld [vmem:[#allocation2 + $0xcf] sm:$0xff]
      %v2722 = vld [vmem:[#allocation2 + $0xd7] sm:$0xff]
      %v2723 = vld [vmem:[#allocation2 + $0xdf] sm:$0xff]
      %v2724 = vld [vmem:[#allocation2 + $0xe7] sm:$0xff]
      %v2725 = vld [vmem:[#allocation2 + $0xef] sm:$0xff]
      %v2726 = vld [vmem:[#allocation2 + $0xf7] sm:$0xff]
      %v2727 = vld [vmem:[#allocation2 + $0xff] sm:$0xff]
      %v2728 = vld [vmem:[#allocation2 + $0x107] sm:$0xff]
      %v2729 = vld [vmem:[#allocation2 + $0x10f] sm:$0xff]
      %v2730 = vld [vmem:[#allocation2 + $0x117] sm:$0xff]
      %v2731 = vld [vmem:[#allocation2 + $0x11f] sm:$0xff]
      %v2732 = vld [vmem:[#allocation2 + $0x127] sm:$0xff]
      %v2733 = vld [vmem:[#allocation2 + $0x12f] sm:$0xff]
      %v2734 = vld [vmem:[#allocation2 + $0x137] sm:$0xff]
      %v2735 = vld [vmem:[#allocation2 + $0x13f] sm:$0xff]
      %v2736 = vld [vmem:[#allocation2 + $0x147] sm:$0xff]
      %v2737 = vld [vmem:[#allocation2 + $0x14f] sm:$0xff]
      %v2738 = vld [vmem:[#allocation2 + $0x157] sm:$0xff]
      %v2739 = vld [vmem:[#allocation2 + $0x15f] sm:$0xff]
      %v2740 = vld [vmem:[#allocation2 + $0x167] sm:$0xff]
      %v2741 = vld [vmem:[#allocation2 + $0x16f] sm:$0xff]
      %v2742 = vld [vmem:[#allocation2 + $0x177] sm:$0xff]
      %v2743 = vld [vmem:[#allocation2 + $0x17f] sm:$0xff]
      %v2744 = vld [vmem:[#allocation2 + $0x187] sm:$0xff]
      %v2745 = vld [vmem:[#allocation2 + $0x18f] sm:$0xff]
      %v2746 = vld [vmem:[#allocation2 + $0x197] sm:$0xff]
      %v2747 = vld [vmem:[#allocation2 + $0x19f] sm:$0xff]
      %v2748 = vld [vmem:[#allocation2 + $0x1a7] sm:$0xff]
      %v2749 = vld [vmem:[#allocation2 + $0x1af] sm:$0xff]
      %v2750 = vpack.c.bf16 %v2703, %v2702
      %v2751 = vpack.c.bf16 %v2705, %v2704
      %v2752 = vpack.c.bf16 %v2707, %v2706
      %v2753 = vpack.c.bf16 %v2709, %v2708
      %v2754 = vpack.c.bf16 %v2711, %v2710
      %v2755 = vpack.c.bf16 %v2713, %v2712
      %v2756 = vpack.c.bf16 %v2715, %v2714
      %v2757 = vpack.c.bf16 %v2717, %v2716
      %v2758 = vpack.c.bf16 %v2719, %v2718
      %v2759 = vpack.c.bf16 %v2721, %v2720
      %v2760 = vpack.c.bf16 %v2723, %v2722
      %v2761 = vpack.c.bf16 %v2725, %v2724
      %v2762 = vpack.c.bf16 %v2727, %v2726
      %v2763 = vpack.c.bf16 %v2729, %v2728
      %v2764 = vpack.c.bf16 %v2731, %v2730
      %v2765 = vpack.c.bf16 %v2733, %v2732
      %v2766 = vpack.c.bf16 %v2735, %v2734
      %v2767 = vpack.c.bf16 %v2737, %v2736
      %v2768 = vpack.c.bf16 %v2739, %v2738
      %v2769 = vpack.c.bf16 %v2741, %v2740
      %v2770 = vpack.c.bf16 %v2743, %v2742
      %v2771 = vpack.c.bf16 %v2745, %v2744
      %v2772 = vpack.c.bf16 %v2747, %v2746
      %v2773 = vpack.c.bf16 %v2749, %v2748
      %s2774 = scalar_lea.vmem %s3, 384
      %v2775 = vld [vmem:[%s2774] sm:$0xf]
      %v2776 = vld [vmem:[%s2774 + $0x4] sm:$0xf]
      %v2777 = vld [vmem:[%s2774 + $0x8] sm:$0xf]
      %v2778 = vld [vmem:[%s2774 + $0xc] sm:$0xf]
      %v2779 = vld [vmem:[%s2774 + $0x10] sm:$0xf]
      %v2780 = vld [vmem:[%s2774 + $0x14] sm:$0xf]
      %v2781 = vld [vmem:[%s2774 + $0x18] sm:$0xf]
      %v2782 = vld [vmem:[%s2774 + $0x1c] sm:$0xf]
      %v2783 = vld [vmem:[%s2774 + $0x20] sm:$0xf]
      %v2784 = vld [vmem:[%s2774 + $0x24] sm:$0xf]
      %v2785 = vld [vmem:[%s2774 + $0x28] sm:$0xf]
      %v2786 = vld [vmem:[%s2774 + $0x2c] sm:$0xf]
      %v2787 = vld [vmem:[%s2774 + $0x30] sm:$0xf]
      %v2788 = vld [vmem:[%s2774 + $0x34] sm:$0xf]
      %v2789 = vld [vmem:[%s2774 + $0x38] sm:$0xf]
      %v2790 = vld [vmem:[%s2774 + $0x3c] sm:$0xf]
      %v2807 = vunpack.c.l.b16 %v2775
      %v2808 = vunpack.c.l.b16 %v2776
      %v2809 = vunpack.c.l.b16 %v2777
      %v2810 = vunpack.c.l.b16 %v2778
      %v2811 = vunpack.c.l.b16 %v2779
      %v2812 = vunpack.c.l.b16 %v2780
      %v2813 = vunpack.c.l.b16 %v2781
      %v2814 = vunpack.c.l.b16 %v2782
      %v2815 = vunpack.c.l.b16 %v2783
      %v2816 = vunpack.c.l.b16 %v2784
      %v2817 = vunpack.c.l.b16 %v2785
      %v2818 = vunpack.c.l.b16 %v2786
      %v2819 = vunpack.c.l.b16 %v2787
      %v2820 = vunpack.c.l.b16 %v2788
      %v2821 = vunpack.c.l.b16 %v2789
      %v2822 = vunpack.c.l.b16 %v2790
      %v2823 = vpack.c.b16 %v2808, %v2807
      %v2824 = vpack.c.b16 %v2810, %v2809
      %v2825 = vpack.c.b16 %v2812, %v2811
      %v2826 = vpack.c.b16 %v2814, %v2813
      %v2827 = vpack.c.b16 %v2816, %v2815
      %v2828 = vpack.c.b16 %v2818, %v2817
      %v2829 = vpack.c.b16 %v2820, %v2819
      %v2830 = vpack.c.b16 %v2822, %v2821
      %2839 = vmatprep.subr.bf16.mxu0 0
      %2840 = vmatpush1.bf16.msra.mxu0 %v2830
      %2841 = vmatprep.subr.bf16.mxu0 0
      %2842 = vmatpush1.bf16.msra.mxu0 %v2829
      %2843 = vmatprep.subr.bf16.mxu0 0
      %2844 = vmatpush1.bf16.msra.mxu0 %v2828
      %2845 = vmatprep.subr.bf16.mxu0 0
      %2846 = vmatpush1.bf16.msra.mxu0 %v2827
      %2847 = vmatprep.subr.bf16.mxu0 0
      %2848 = vmatpush1.bf16.msra.mxu0 %v2826
      %2849 = vmatprep.subr.bf16.mxu0 0
      %2850 = vmatpush1.bf16.msra.mxu0 %v2825
      %2851 = vmatprep.subr.bf16.mxu0 0
      %2852 = vmatpush1.bf16.msra.mxu0 %v2824
      %2853 = vmatprep.subr.bf16.mxu0 0
      %2854 = vmatpush1.bf16.msra.mxu0 %v2823
      %2855 = vmatprep.subr.bf16.mxu0 0
      %2856 = vmatpush2.bf16.msra.mxu0 0
      %2857 = vmatprep.subr.bf16.mxu0 0
      %2858 = vmatpush2.bf16.msra.mxu0 0
      %2859 = vmatprep.subr.bf16.mxu0 0
      %2860 = vmatpush2.bf16.msra.mxu0 0
      %2861 = vmatprep.subr.bf16.mxu0 0
      %2862 = vmatpush2.bf16.msra.mxu0 0
      %2863 = vmatprep.subr.bf16.mxu0 0
      %2864 = vmatpush2.bf16.msra.mxu0 0
      %2865 = vmatprep.subr.bf16.mxu0 0
      %2866 = vmatpush2.bf16.msra.mxu0 0
      %2867 = vmatprep.subr.bf16.mxu0 0
      %2868 = vmatpush2.bf16.msra.mxu0 0
      %2869 = vmatprep.subr.bf16.mxu0 0
      %2870 = vmatpush2.bf16.msra.mxu0 0
      %2871 = vmatprep.mubr.bf16.mxu0 0
      %2872 = vmatmul.mubr.bf16.gmra.mxu0 %v2750
      %v2873 = vpop.f32.mrf.mxu0
      %v2874 = vadd.f32 0.0, %v2873
      %v2875 = vpop.f32.mrf.mxu0
      %v2876 = vpop.f32.mrf.mxu0
      %v2877 = vadd.f32 0.0, %v2876
      %v2878 = vpop.f32.mrf.mxu0
      %2879 = vmatprep.mubr.bf16.mxu0 0
      %2880 = vmatmul.mubr.bf16.gmra.mxu0 %v2751
      %v2881 = vpop.f32.mrf.mxu0
      %v2882 = vpop.f32.mrf.mxu0
      %v2883 = vpop.f32.mrf.mxu0
      %v2884 = vadd.f32 0.0, %v2883
      %v2885 = vpop.f32.mrf.mxu0
      %2886 = vmatprep.mubr.bf16.mxu0 0
      %2887 = vmatmul.mubr.bf16.gmra.mxu0 %v2752
      %v2888 = vpop.f32.mrf.mxu0
      %v2889 = vadd.f32 0.0, %v2888
      %v2890 = vpop.f32.mrf.mxu0
      %v2891 = vpop.f32.mrf.mxu0
      %v2892 = vpop.f32.mrf.mxu0
      %2893 = vmatprep.mubr.bf16.mxu0 0
      %2894 = vmatmul.mubr.bf16.gmra.mxu0 %v2753
      %v2895 = vpop.f32.mrf.mxu0
      %v2896 = vadd.f32 0.0, %v2895
      %v2897 = vpop.f32.mrf.mxu0
      %v2898 = vpop.f32.mrf.mxu0
      %v2899 = vadd.f32 0.0, %v2898
      %v2900 = vpop.f32.mrf.mxu0
      %2901 = vmatprep.mubr.bf16.mxu0 0
      %2902 = vmatmul.mubr.bf16.gmra.mxu0 %v2754
      %v2903 = vpop.f32.mrf.mxu0
      %v2904 = vpop.f32.mrf.mxu0
      %v2905 = vpop.f32.mrf.mxu0
      %v2906 = vadd.f32 0.0, %v2905
      %v2907 = vpop.f32.mrf.mxu0
      %2908 = vmatprep.mubr.bf16.mxu0 0
      %2909 = vmatmul.mubr.bf16.gmra.mxu0 %v2755
      %v2910 = vpop.f32.mrf.mxu0
      %v2911 = vadd.f32 0.0, %v2910
      %v2912 = vpop.f32.mrf.mxu0
      %v2913 = vpop.f32.mrf.mxu0
      %v2914 = vpop.f32.mrf.mxu0
      %2915 = vmatprep.mubr.bf16.mxu0 0
      %2916 = vmatmul.mubr.bf16.gmra.mxu0 %v2756
      %v2917 = vpop.f32.mrf.mxu0
      %v2918 = vadd.f32 0.0, %v2917
      %v2919 = vpop.f32.mrf.mxu0
      %v2920 = vpop.f32.mrf.mxu0
      %v2921 = vadd.f32 0.0, %v2920
      %v2922 = vpop.f32.mrf.mxu0
      %2923 = vmatprep.mubr.bf16.mxu0 0
      %2924 = vmatmul.mubr.bf16.gmra.mxu0 %v2757
      %v2925 = vpop.f32.mrf.mxu0
      %v2926 = vpop.f32.mrf.mxu0
      %v2927 = vpop.f32.mrf.mxu0
      %v2928 = vadd.f32 0.0, %v2927
      %v2929 = vpop.f32.mrf.mxu0
      %2930 = vmatprep.mubr.bf16.mxu0 0
      %2931 = vmatmul.mubr.bf16.gmra.mxu0 %v2758
      %v2932 = vpop.f32.mrf.mxu0
      %v2933 = vadd.f32 0.0, %v2932
      %v2934 = vpop.f32.mrf.mxu0
      %v2935 = vpop.f32.mrf.mxu0
      %v2936 = vpop.f32.mrf.mxu0
      %2937 = vmatprep.mubr.bf16.mxu0 0
      %2938 = vmatmul.mubr.bf16.gmra.mxu0 %v2759
      %v2939 = vpop.f32.mrf.mxu0
      %v2940 = vadd.f32 0.0, %v2939
      %v2941 = vpop.f32.mrf.mxu0
      %v2942 = vpop.f32.mrf.mxu0
      %v2943 = vadd.f32 0.0, %v2942
      %v2944 = vpop.f32.mrf.mxu0
      %2945 = vmatprep.mubr.bf16.mxu0 0
      %2946 = vmatmul.mubr.bf16.gmra.mxu0 %v2760
      %v2947 = vpop.f32.mrf.mxu0
      %v2948 = vpop.f32.mrf.mxu0
      %v2949 = vpop.f32.mrf.mxu0
      %v2950 = vadd.f32 0.0, %v2949
      %v2951 = vpop.f32.mrf.mxu0
      %2952 = vmatprep.mubr.bf16.mxu0 0
      %2953 = vmatmul.mubr.bf16.gmra.mxu0 %v2761
      %v2954 = vpop.f32.mrf.mxu0
      %v2955 = vadd.f32 0.0, %v2954
      %v2956 = vpop.f32.mrf.mxu0
      %v2957 = vpop.f32.mrf.mxu0
      %v2958 = vpop.f32.mrf.mxu0
      %2959 = vmatprep.mubr.bf16.mxu0 0
      %2960 = vmatmul.mubr.bf16.gmra.mxu0 %v2762
      %v2961 = vpop.f32.mrf.mxu0
      %v2962 = vadd.f32 0.0, %v2961
      %v2963 = vpop.f32.mrf.mxu0
      %v2964 = vpop.f32.mrf.mxu0
      %v2965 = vadd.f32 0.0, %v2964
      %v2966 = vpop.f32.mrf.mxu0
      %2967 = vmatprep.mubr.bf16.mxu0 0
      %2968 = vmatmul.mubr.bf16.gmra.mxu0 %v2763
      %v2969 = vpop.f32.mrf.mxu0
      %v2970 = vpop.f32.mrf.mxu0
      %v2971 = vpop.f32.mrf.mxu0
      %v2972 = vadd.f32 0.0, %v2971
      %v2973 = vpop.f32.mrf.mxu0
      %2974 = vmatprep.mubr.bf16.mxu0 0
      %2975 = vmatmul.mubr.bf16.gmra.mxu0 %v2764
      %v2976 = vpop.f32.mrf.mxu0
      %v2977 = vadd.f32 0.0, %v2976
      %v2978 = vpop.f32.mrf.mxu0
      %v2979 = vpop.f32.mrf.mxu0
      %v2980 = vpop.f32.mrf.mxu0
      %2981 = vmatprep.mubr.bf16.mxu0 0
      %2982 = vmatmul.mubr.bf16.gmra.mxu0 %v2765
      %v2983 = vpop.f32.mrf.mxu0
      %v2984 = vadd.f32 0.0, %v2983
      %v2985 = vpop.f32.mrf.mxu0
      %v2986 = vpop.f32.mrf.mxu0
      %v2987 = vadd.f32 0.0, %v2986
      %v2988 = vpop.f32.mrf.mxu0
      %2989 = vmatprep.mubr.bf16.mxu0 0
      %2990 = vmatmul.mubr.bf16.gmra.mxu0 %v2766
      %v2991 = vpop.f32.mrf.mxu0
      %v2992 = vpop.f32.mrf.mxu0
      %v2993 = vpop.f32.mrf.mxu0
      %v2994 = vadd.f32 0.0, %v2993
      %v2995 = vpop.f32.mrf.mxu0
      %2996 = vmatprep.mubr.bf16.mxu0 0
      %2997 = vmatmul.mubr.bf16.gmra.mxu0 %v2767
      %v2998 = vpop.f32.mrf.mxu0
      %v2999 = vadd.f32 0.0, %v2998
      %v3000 = vpop.f32.mrf.mxu0
      %v3001 = vpop.f32.mrf.mxu0
      %v3002 = vpop.f32.mrf.mxu0
      %3003 = vmatprep.mubr.bf16.mxu0 0
      %3004 = vmatmul.mubr.bf16.gmra.mxu0 %v2768
      %v3005 = vpop.f32.mrf.mxu0
      %v3006 = vadd.f32 0.0, %v3005
      %v3007 = vpop.f32.mrf.mxu0
      %v3008 = vpop.f32.mrf.mxu0
      %v3009 = vadd.f32 0.0, %v3008
      %v3010 = vpop.f32.mrf.mxu0
      %3011 = vmatprep.mubr.bf16.mxu0 0
      %3012 = vmatmul.mubr.bf16.gmra.mxu0 %v2769
      %v3013 = vpop.f32.mrf.mxu0
      %v3014 = vpop.f32.mrf.mxu0
      %v3015 = vpop.f32.mrf.mxu0
      %v3016 = vadd.f32 0.0, %v3015
      %v3017 = vpop.f32.mrf.mxu0
      %3018 = vmatprep.mubr.bf16.mxu0 0
      %3019 = vmatmul.mubr.bf16.gmra.mxu0 %v2770
      %v3020 = vpop.f32.mrf.mxu0
      %v3021 = vadd.f32 0.0, %v3020
      %v3022 = vpop.f32.mrf.mxu0
      %v3023 = vpop.f32.mrf.mxu0
      %v3024 = vpop.f32.mrf.mxu0
      %3025 = vmatprep.mubr.bf16.mxu0 0
      %3026 = vmatmul.mubr.bf16.gmra.mxu0 %v2771
      %v3027 = vpop.f32.mrf.mxu0
      %v3028 = vadd.f32 0.0, %v3027
      %v3029 = vpop.f32.mrf.mxu0
      %v3030 = vpop.f32.mrf.mxu0
      %v3031 = vadd.f32 0.0, %v3030
      %v3032 = vpop.f32.mrf.mxu0
      %3033 = vmatprep.mubr.bf16.mxu0 0
      %3034 = vmatmul.mubr.bf16.gmra.mxu0 %v2772
      %v3035 = vpop.f32.mrf.mxu0
      %v3036 = vpop.f32.mrf.mxu0
      %v3037 = vpop.f32.mrf.mxu0
      %v3038 = vadd.f32 0.0, %v3037
      %v3039 = vpop.f32.mrf.mxu0
      %3040 = vmatprep.mubr.bf16.mxu0 0
      %3041 = vmatmul.mubr.bf16.gmra.mxu0 %v2773
      %v3042 = vpop.f32.mrf.mxu0
      %v3043 = vadd.f32 0.0, %v3042
      %v3044 = vpop.f32.mrf.mxu0
      %v3045 = vpop.f32.mrf.mxu0
      %v3046 = vpop.f32.mrf.mxu0
      %3047 = vdwg.mxu0
      %v3048 = vadd.f32 %v2670, %v2874
      %v3049 = vadd.f32 %v2671, %v2877
      %v3050 = vadd.f32 %v2672, %v2884
      %v3051 = vadd.f32 %v2673, %v2889
      %v3052 = vadd.f32 %v2674, %v2896
      %v3053 = vadd.f32 %v2675, %v2899
      %v3054 = vadd.f32 %v2676, %v2906
      %v3055 = vadd.f32 %v2677, %v2911
      %v3056 = vadd.f32 %v2678, %v2918
      %v3057 = vadd.f32 %v2679, %v2921
      %v3058 = vadd.f32 %v2680, %v2928
      %v3059 = vadd.f32 %v2681, %v2933
      %v3060 = vadd.f32 %v2682, %v2940
      %v3061 = vadd.f32 %v2683, %v2943
      %v3062 = vadd.f32 %v2684, %v2950
      %v3063 = vadd.f32 %v2685, %v2955
      %v3064 = vadd.f32 %v2686, %v2962
      %v3065 = vadd.f32 %v2687, %v2965
      %v3066 = vadd.f32 %v2688, %v2972
      %v3067 = vadd.f32 %v2689, %v2977
      %v3068 = vadd.f32 %v2690, %v2984
      %v3069 = vadd.f32 %v2691, %v2987
      %v3070 = vadd.f32 %v2692, %v2994
      %v3071 = vadd.f32 %v2693, %v2999
      %v3072 = vadd.f32 %v2694, %v3006
      %v3073 = vadd.f32 %v2695, %v3009
      %v3074 = vadd.f32 %v2696, %v3016
      %v3075 = vadd.f32 %v2697, %v3021
      %v3076 = vadd.f32 %v2698, %v3028
      %v3077 = vadd.f32 %v2699, %v3031
      %v3078 = vadd.f32 %v2700, %v3038
      %v3079 = vadd.f32 %v2701, %v3043
      %v3080 = vld [vmem:[#allocation2 + $0x38] sm:$0xff]
      %v3081 = vld [vmem:[#allocation2 + $0x40] sm:$0xff]
      %v3082 = vld [vmem:[#allocation2 + $0x48] sm:$0xff]
      %v3083 = vld [vmem:[#allocation2 + $0x50] sm:$0xff]
      %v3084 = vld [vmem:[#allocation2 + $0x58] sm:$0xff]
      %v3085 = vld [vmem:[#allocation2 + $0x60] sm:$0xff]
      %v3086 = vld [vmem:[#allocation2 + $0x68] sm:$0xff]
      %v3087 = vld [vmem:[#allocation2 + $0x70] sm:$0xff]
      %v3088 = vld [vmem:[#allocation2 + $0x78] sm:$0xff]
      %v3089 = vld [vmem:[#allocation2 + $0x80] sm:$0xff]
      %v3090 = vld [vmem:[#allocation2 + $0x88] sm:$0xff]
      %v3091 = vld [vmem:[#allocation2 + $0x90] sm:$0xff]
      %v3092 = vld [vmem:[#allocation2 + $0x98] sm:$0xff]
      %v3093 = vld [vmem:[#allocation2 + $0xa0] sm:$0xff]
      %v3094 = vld [vmem:[#allocation2 + $0xa8] sm:$0xff]
      %v3095 = vld [vmem:[#allocation2 + $0xb0] sm:$0xff]
      %v3096 = vld [vmem:[#allocation2 + $0xb8] sm:$0xff]
      %v3097 = vld [vmem:[#allocation2 + $0xc0] sm:$0xff]
      %v3098 = vld [vmem:[#allocation2 + $0xc8] sm:$0xff]
      %v3099 = vld [vmem:[#allocation2 + $0xd0] sm:$0xff]
      %v3100 = vld [vmem:[#allocation2 + $0xd8] sm:$0xff]
      %v3101 = vld [vmem:[#allocation2 + $0xe0] sm:$0xff]
      %v3102 = vld [vmem:[#allocation2 + $0xe8] sm:$0xff]
      %v3103 = vld [vmem:[#allocation2 + $0xf0] sm:$0xff]
      %v3104 = vld [vmem:[#allocation2 + $0xf8] sm:$0xff]
      %v3105 = vld [vmem:[#allocation2 + $0x100] sm:$0xff]
      %v3106 = vld [vmem:[#allocation2 + $0x108] sm:$0xff]
      %v3107 = vld [vmem:[#allocation2 + $0x110] sm:$0xff]
      %v3108 = vld [vmem:[#allocation2 + $0x118] sm:$0xff]
      %v3109 = vld [vmem:[#allocation2 + $0x120] sm:$0xff]
      %v3110 = vld [vmem:[#allocation2 + $0x128] sm:$0xff]
      %v3111 = vld [vmem:[#allocation2 + $0x130] sm:$0xff]
      %v3112 = vld [vmem:[#allocation2 + $0x138] sm:$0xff]
      %v3113 = vld [vmem:[#allocation2 + $0x140] sm:$0xff]
      %v3114 = vld [vmem:[#allocation2 + $0x148] sm:$0xff]
      %v3115 = vld [vmem:[#allocation2 + $0x150] sm:$0xff]
      %v3116 = vld [vmem:[#allocation2 + $0x158] sm:$0xff]
      %v3117 = vld [vmem:[#allocation2 + $0x160] sm:$0xff]
      %v3118 = vld [vmem:[#allocation2 + $0x168] sm:$0xff]
      %v3119 = vld [vmem:[#allocation2 + $0x170] sm:$0xff]
      %v3120 = vld [vmem:[#allocation2 + $0x178] sm:$0xff]
      %v3121 = vld [vmem:[#allocation2 + $0x180] sm:$0xff]
      %v3122 = vld [vmem:[#allocation2 + $0x188] sm:$0xff]
      %v3123 = vld [vmem:[#allocation2 + $0x190] sm:$0xff]
      %v3124 = vld [vmem:[#allocation2 + $0x198] sm:$0xff]
      %v3125 = vld [vmem:[#allocation2 + $0x1a0] sm:$0xff]
      %v3126 = vld [vmem:[#allocation2 + $0x1a8] sm:$0xff]
      %v3127 = vld [vmem:[#allocation2 + $0x1b0] sm:$0xff]
      %v3128 = vpack.c.bf16 %v3081, %v3080
      %v3129 = vpack.c.bf16 %v3083, %v3082
      %v3130 = vpack.c.bf16 %v3085, %v3084
      %v3131 = vpack.c.bf16 %v3087, %v3086
      %v3132 = vpack.c.bf16 %v3089, %v3088
      %v3133 = vpack.c.bf16 %v3091, %v3090
      %v3134 = vpack.c.bf16 %v3093, %v3092
      %v3135 = vpack.c.bf16 %v3095, %v3094
      %v3136 = vpack.c.bf16 %v3097, %v3096
      %v3137 = vpack.c.bf16 %v3099, %v3098
      %v3138 = vpack.c.bf16 %v3101, %v3100
      %v3139 = vpack.c.bf16 %v3103, %v3102
      %v3140 = vpack.c.bf16 %v3105, %v3104
      %v3141 = vpack.c.bf16 %v3107, %v3106
      %v3142 = vpack.c.bf16 %v3109, %v3108
      %v3143 = vpack.c.bf16 %v3111, %v3110
      %v3144 = vpack.c.bf16 %v3113, %v3112
      %v3145 = vpack.c.bf16 %v3115, %v3114
      %v3146 = vpack.c.bf16 %v3117, %v3116
      %v3147 = vpack.c.bf16 %v3119, %v3118
      %v3148 = vpack.c.bf16 %v3121, %v3120
      %v3149 = vpack.c.bf16 %v3123, %v3122
      %v3150 = vpack.c.bf16 %v3125, %v3124
      %v3151 = vpack.c.bf16 %v3127, %v3126
      %s3152 = scalar_lea.vmem %s3, 448
      %v3153 = vld [vmem:[%s3152] sm:$0xf]
      %v3154 = vld [vmem:[%s3152 + $0x4] sm:$0xf]
      %v3155 = vld [vmem:[%s3152 + $0x8] sm:$0xf]
      %v3156 = vld [vmem:[%s3152 + $0xc] sm:$0xf]
      %v3157 = vld [vmem:[%s3152 + $0x10] sm:$0xf]
      %v3158 = vld [vmem:[%s3152 + $0x14] sm:$0xf]
      %v3159 = vld [vmem:[%s3152 + $0x18] sm:$0xf]
      %v3160 = vld [vmem:[%s3152 + $0x1c] sm:$0xf]
      %v3161 = vld [vmem:[%s3152 + $0x20] sm:$0xf]
      %v3162 = vld [vmem:[%s3152 + $0x24] sm:$0xf]
      %v3163 = vld [vmem:[%s3152 + $0x28] sm:$0xf]
      %v3164 = vld [vmem:[%s3152 + $0x2c] sm:$0xf]
      %v3165 = vld [vmem:[%s3152 + $0x30] sm:$0xf]
      %v3166 = vld [vmem:[%s3152 + $0x34] sm:$0xf]
      %v3167 = vld [vmem:[%s3152 + $0x38] sm:$0xf]
      %v3168 = vld [vmem:[%s3152 + $0x3c] sm:$0xf]
      %v3185 = vunpack.c.l.b16 %v3153
      %v3186 = vunpack.c.l.b16 %v3154
      %v3187 = vunpack.c.l.b16 %v3155
      %v3188 = vunpack.c.l.b16 %v3156
      %v3189 = vunpack.c.l.b16 %v3157
      %v3190 = vunpack.c.l.b16 %v3158
      %v3191 = vunpack.c.l.b16 %v3159
      %v3192 = vunpack.c.l.b16 %v3160
      %v3193 = vunpack.c.l.b16 %v3161
      %v3194 = vunpack.c.l.b16 %v3162
      %v3195 = vunpack.c.l.b16 %v3163
      %v3196 = vunpack.c.l.b16 %v3164
      %v3197 = vunpack.c.l.b16 %v3165
      %v3198 = vunpack.c.l.b16 %v3166
      %v3199 = vunpack.c.l.b16 %v3167
      %v3200 = vunpack.c.l.b16 %v3168
      %v3201 = vpack.c.b16 %v3186, %v3185
      %v3202 = vpack.c.b16 %v3188, %v3187
      %v3203 = vpack.c.b16 %v3190, %v3189
      %v3204 = vpack.c.b16 %v3192, %v3191
      %v3205 = vpack.c.b16 %v3194, %v3193
      %v3206 = vpack.c.b16 %v3196, %v3195
      %v3207 = vpack.c.b16 %v3198, %v3197
      %v3208 = vpack.c.b16 %v3200, %v3199
      %3217 = vmatprep.subr.bf16.mxu0 0
      %3218 = vmatpush1.bf16.msra.mxu0 %v3208
      %3219 = vmatprep.subr.bf16.mxu0 0
      %3220 = vmatpush1.bf16.msra.mxu0 %v3207
      %3221 = vmatprep.subr.bf16.mxu0 0
      %3222 = vmatpush1.bf16.msra.mxu0 %v3206
      %3223 = vmatprep.subr.bf16.mxu0 0
      %3224 = vmatpush1.bf16.msra.mxu0 %v3205
      %3225 = vmatprep.subr.bf16.mxu0 0
      %3226 = vmatpush1.bf16.msra.mxu0 %v3204
      %3227 = vmatprep.subr.bf16.mxu0 0
      %3228 = vmatpush1.bf16.msra.mxu0 %v3203
      %3229 = vmatprep.subr.bf16.mxu0 0
      %3230 = vmatpush1.bf16.msra.mxu0 %v3202
      %3231 = vmatprep.subr.bf16.mxu0 0
      %3232 = vmatpush1.bf16.msra.mxu0 %v3201
      %3233 = vmatprep.subr.bf16.mxu0 0
      %3234 = vmatpush2.bf16.msra.mxu0 0
      %3235 = vmatprep.subr.bf16.mxu0 0
      %3236 = vmatpush2.bf16.msra.mxu0 0
      %3237 = vmatprep.subr.bf16.mxu0 0
      %3238 = vmatpush2.bf16.msra.mxu0 0
      %3239 = vmatprep.subr.bf16.mxu0 0
      %3240 = vmatpush2.bf16.msra.mxu0 0
      %3241 = vmatprep.subr.bf16.mxu0 0
      %3242 = vmatpush2.bf16.msra.mxu0 0
      %3243 = vmatprep.subr.bf16.mxu0 0
      %3244 = vmatpush2.bf16.msra.mxu0 0
      %3245 = vmatprep.subr.bf16.mxu0 0
      %3246 = vmatpush2.bf16.msra.mxu0 0
      %3247 = vmatprep.subr.bf16.mxu0 0
      %3248 = vmatpush2.bf16.msra.mxu0 0
      %3249 = vmatprep.mubr.bf16.mxu0 0
      %3250 = vmatmul.mubr.bf16.gmra.mxu0 %v3128
      %v3251 = vpop.f32.mrf.mxu0
      %v3252 = vadd.f32 0.0, %v3251
      %v3253 = vpop.f32.mrf.mxu0
      %v3254 = vpop.f32.mrf.mxu0
      %v3255 = vadd.f32 0.0, %v3254
      %v3256 = vpop.f32.mrf.mxu0
      %3257 = vmatprep.mubr.bf16.mxu0 0
      %3258 = vmatmul.mubr.bf16.gmra.mxu0 %v3129
      %v3259 = vpop.f32.mrf.mxu0
      %v3260 = vpop.f32.mrf.mxu0
      %v3261 = vpop.f32.mrf.mxu0
      %v3262 = vadd.f32 0.0, %v3261
      %v3263 = vpop.f32.mrf.mxu0
      %3264 = vmatprep.mubr.bf16.mxu0 0
      %3265 = vmatmul.mubr.bf16.gmra.mxu0 %v3130
      %v3266 = vpop.f32.mrf.mxu0
      %v3267 = vadd.f32 0.0, %v3266
      %v3268 = vpop.f32.mrf.mxu0
      %v3269 = vpop.f32.mrf.mxu0
      %v3270 = vpop.f32.mrf.mxu0
      %3271 = vmatprep.mubr.bf16.mxu0 0
      %3272 = vmatmul.mubr.bf16.gmra.mxu0 %v3131
      %v3273 = vpop.f32.mrf.mxu0
      %v3274 = vadd.f32 0.0, %v3273
      %v3275 = vpop.f32.mrf.mxu0
      %v3276 = vpop.f32.mrf.mxu0
      %v3277 = vadd.f32 0.0, %v3276
      %v3278 = vpop.f32.mrf.mxu0
      %3279 = vmatprep.mubr.bf16.mxu0 0
      %3280 = vmatmul.mubr.bf16.gmra.mxu0 %v3132
      %v3281 = vpop.f32.mrf.mxu0
      %v3282 = vpop.f32.mrf.mxu0
      %v3283 = vpop.f32.mrf.mxu0
      %v3284 = vadd.f32 0.0, %v3283
      %v3285 = vpop.f32.mrf.mxu0
      %3286 = vmatprep.mubr.bf16.mxu0 0
      %3287 = vmatmul.mubr.bf16.gmra.mxu0 %v3133
      %v3288 = vpop.f32.mrf.mxu0
      %v3289 = vadd.f32 0.0, %v3288
      %v3290 = vpop.f32.mrf.mxu0
      %v3291 = vpop.f32.mrf.mxu0
      %v3292 = vpop.f32.mrf.mxu0
      %3293 = vmatprep.mubr.bf16.mxu0 0
      %3294 = vmatmul.mubr.bf16.gmra.mxu0 %v3134
      %v3295 = vpop.f32.mrf.mxu0
      %v3296 = vadd.f32 0.0, %v3295
      %v3297 = vpop.f32.mrf.mxu0
      %v3298 = vpop.f32.mrf.mxu0
      %v3299 = vadd.f32 0.0, %v3298
      %v3300 = vpop.f32.mrf.mxu0
      %3301 = vmatprep.mubr.bf16.mxu0 0
      %3302 = vmatmul.mubr.bf16.gmra.mxu0 %v3135
      %v3303 = vpop.f32.mrf.mxu0
      %v3304 = vpop.f32.mrf.mxu0
      %v3305 = vpop.f32.mrf.mxu0
      %v3306 = vadd.f32 0.0, %v3305
      %v3307 = vpop.f32.mrf.mxu0
      %3308 = vmatprep.mubr.bf16.mxu0 0
      %3309 = vmatmul.mubr.bf16.gmra.mxu0 %v3136
      %v3310 = vpop.f32.mrf.mxu0
      %v3311 = vadd.f32 0.0, %v3310
      %v3312 = vpop.f32.mrf.mxu0
      %v3313 = vpop.f32.mrf.mxu0
      %v3314 = vpop.f32.mrf.mxu0
      %3315 = vmatprep.mubr.bf16.mxu0 0
      %3316 = vmatmul.mubr.bf16.gmra.mxu0 %v3137
      %v3317 = vpop.f32.mrf.mxu0
      %v3318 = vadd.f32 0.0, %v3317
      %v3319 = vpop.f32.mrf.mxu0
      %v3320 = vpop.f32.mrf.mxu0
      %v3321 = vadd.f32 0.0, %v3320
      %v3322 = vpop.f32.mrf.mxu0
      %3323 = vmatprep.mubr.bf16.mxu0 0
      %3324 = vmatmul.mubr.bf16.gmra.mxu0 %v3138
      %v3325 = vpop.f32.mrf.mxu0
      %v3326 = vpop.f32.mrf.mxu0
      %v3327 = vpop.f32.mrf.mxu0
      %v3328 = vadd.f32 0.0, %v3327
      %v3329 = vpop.f32.mrf.mxu0
      %3330 = vmatprep.mubr.bf16.mxu0 0
      %3331 = vmatmul.mubr.bf16.gmra.mxu0 %v3139
      %v3332 = vpop.f32.mrf.mxu0
      %v3333 = vadd.f32 0.0, %v3332
      %v3334 = vpop.f32.mrf.mxu0
      %v3335 = vpop.f32.mrf.mxu0
      %v3336 = vpop.f32.mrf.mxu0
      %3337 = vmatprep.mubr.bf16.mxu0 0
      %3338 = vmatmul.mubr.bf16.gmra.mxu0 %v3140
      %v3339 = vpop.f32.mrf.mxu0
      %v3340 = vadd.f32 0.0, %v3339
      %v3341 = vpop.f32.mrf.mxu0
      %v3342 = vpop.f32.mrf.mxu0
      %v3343 = vadd.f32 0.0, %v3342
      %v3344 = vpop.f32.mrf.mxu0
      %3345 = vmatprep.mubr.bf16.mxu0 0
      %3346 = vmatmul.mubr.bf16.gmra.mxu0 %v3141
      %v3347 = vpop.f32.mrf.mxu0
      %v3348 = vpop.f32.mrf.mxu0
      %v3349 = vpop.f32.mrf.mxu0
      %v3350 = vadd.f32 0.0, %v3349
      %v3351 = vpop.f32.mrf.mxu0
      %3352 = vmatprep.mubr.bf16.mxu0 0
      %3353 = vmatmul.mubr.bf16.gmra.mxu0 %v3142
      %v3354 = vpop.f32.mrf.mxu0
      %v3355 = vadd.f32 0.0, %v3354
      %v3356 = vpop.f32.mrf.mxu0
      %v3357 = vpop.f32.mrf.mxu0
      %v3358 = vpop.f32.mrf.mxu0
      %3359 = vmatprep.mubr.bf16.mxu0 0
      %3360 = vmatmul.mubr.bf16.gmra.mxu0 %v3143
      %v3361 = vpop.f32.mrf.mxu0
      %v3362 = vadd.f32 0.0, %v3361
      %v3363 = vpop.f32.mrf.mxu0
      %v3364 = vpop.f32.mrf.mxu0
      %v3365 = vadd.f32 0.0, %v3364
      %v3366 = vpop.f32.mrf.mxu0
      %3367 = vmatprep.mubr.bf16.mxu0 0
      %3368 = vmatmul.mubr.bf16.gmra.mxu0 %v3144
      %v3369 = vpop.f32.mrf.mxu0
      %v3370 = vpop.f32.mrf.mxu0
      %v3371 = vpop.f32.mrf.mxu0
      %v3372 = vadd.f32 0.0, %v3371
      %v3373 = vpop.f32.mrf.mxu0
      %3374 = vmatprep.mubr.bf16.mxu0 0
      %3375 = vmatmul.mubr.bf16.gmra.mxu0 %v3145
      %v3376 = vpop.f32.mrf.mxu0
      %v3377 = vadd.f32 0.0, %v3376
      %v3378 = vpop.f32.mrf.mxu0
      %v3379 = vpop.f32.mrf.mxu0
      %v3380 = vpop.f32.mrf.mxu0
      %3381 = vmatprep.mubr.bf16.mxu0 0
      %3382 = vmatmul.mubr.bf16.gmra.mxu0 %v3146
      %v3383 = vpop.f32.mrf.mxu0
      %v3384 = vadd.f32 0.0, %v3383
      %v3385 = vpop.f32.mrf.mxu0
      %v3386 = vpop.f32.mrf.mxu0
      %v3387 = vadd.f32 0.0, %v3386
      %v3388 = vpop.f32.mrf.mxu0
      %3389 = vmatprep.mubr.bf16.mxu0 0
      %3390 = vmatmul.mubr.bf16.gmra.mxu0 %v3147
      %v3391 = vpop.f32.mrf.mxu0
      %v3392 = vpop.f32.mrf.mxu0
      %v3393 = vpop.f32.mrf.mxu0
      %v3394 = vadd.f32 0.0, %v3393
      %v3395 = vpop.f32.mrf.mxu0
      %3396 = vmatprep.mubr.bf16.mxu0 0
      %3397 = vmatmul.mubr.bf16.gmra.mxu0 %v3148
      %v3398 = vpop.f32.mrf.mxu0
      %v3399 = vadd.f32 0.0, %v3398
      %v3400 = vpop.f32.mrf.mxu0
      %v3401 = vpop.f32.mrf.mxu0
      %v3402 = vpop.f32.mrf.mxu0
      %3403 = vmatprep.mubr.bf16.mxu0 0
      %3404 = vmatmul.mubr.bf16.gmra.mxu0 %v3149
      %v3405 = vpop.f32.mrf.mxu0
      %v3406 = vadd.f32 0.0, %v3405
      %v3407 = vpop.f32.mrf.mxu0
      %v3408 = vpop.f32.mrf.mxu0
      %v3409 = vadd.f32 0.0, %v3408
      %v3410 = vpop.f32.mrf.mxu0
      %3411 = vmatprep.mubr.bf16.mxu0 0
      %3412 = vmatmul.mubr.bf16.gmra.mxu0 %v3150
      %v3413 = vpop.f32.mrf.mxu0
      %v3414 = vpop.f32.mrf.mxu0
      %v3415 = vpop.f32.mrf.mxu0
      %v3416 = vadd.f32 0.0, %v3415
      %v3417 = vpop.f32.mrf.mxu0
      %3418 = vmatprep.mubr.bf16.mxu0 0
      %3419 = vmatmul.mubr.bf16.gmra.mxu0 %v3151
      %v3420 = vpop.f32.mrf.mxu0
      %v3421 = vadd.f32 0.0, %v3420
      %v3422 = vpop.f32.mrf.mxu0
      %v3423 = vpop.f32.mrf.mxu0
      %v3424 = vpop.f32.mrf.mxu0
      %3425 = vdwg.mxu0
      %v3426 = vadd.f32 %v3048, %v3252
      %v3427 = vadd.f32 %v3049, %v3255
      %v3428 = vadd.f32 %v3050, %v3262
      %v3429 = vadd.f32 %v3051, %v3267
      %v3430 = vadd.f32 %v3052, %v3274
      %v3431 = vadd.f32 %v3053, %v3277
      %v3432 = vadd.f32 %v3054, %v3284
      %v3433 = vadd.f32 %v3055, %v3289
      %v3434 = vadd.f32 %v3056, %v3296
      %v3435 = vadd.f32 %v3057, %v3299
      %v3436 = vadd.f32 %v3058, %v3306
      %v3437 = vadd.f32 %v3059, %v3311
      %v3438 = vadd.f32 %v3060, %v3318
      %v3439 = vadd.f32 %v3061, %v3321
      %v3440 = vadd.f32 %v3062, %v3328
      %v3441 = vadd.f32 %v3063, %v3333
      %v3442 = vadd.f32 %v3064, %v3340
      %v3443 = vadd.f32 %v3065, %v3343
      %v3444 = vadd.f32 %v3066, %v3350
      %v3445 = vadd.f32 %v3067, %v3355
      %v3446 = vadd.f32 %v3068, %v3362
      %v3447 = vadd.f32 %v3069, %v3365
      %v3448 = vadd.f32 %v3070, %v3372
      %v3449 = vadd.f32 %v3071, %v3377
      %v3450 = vadd.f32 %v3072, %v3384
      %v3451 = vadd.f32 %v3073, %v3387
      %v3452 = vadd.f32 %v3074, %v3394
      %v3453 = vadd.f32 %v3075, %v3399
      %v3454 = vadd.f32 %v3076, %v3406
      %v3455 = vadd.f32 %v3077, %v3409
      %v3456 = vadd.f32 %v3078, %v3416
      %v3457 = vadd.f32 %v3079, %v3421
      %v3458 = vld [vmem:[#allocation2 + $0x39] sm:$0xff]
      %v3459 = vld [vmem:[#allocation2 + $0x41] sm:$0xff]
      %v3460 = vld [vmem:[#allocation2 + $0x49] sm:$0xff]
      %v3461 = vld [vmem:[#allocation2 + $0x51] sm:$0xff]
      %v3462 = vld [vmem:[#allocation2 + $0x59] sm:$0xff]
      %v3463 = vld [vmem:[#allocation2 + $0x61] sm:$0xff]
      %v3464 = vld [vmem:[#allocation2 + $0x69] sm:$0xff]
      %v3465 = vld [vmem:[#allocation2 + $0x71] sm:$0xff]
      %v3466 = vld [vmem:[#allocation2 + $0x79] sm:$0xff]
      %v3467 = vld [vmem:[#allocation2 + $0x81] sm:$0xff]
      %v3468 = vld [vmem:[#allocation2 + $0x89] sm:$0xff]
      %v3469 = vld [vmem:[#allocation2 + $0x91] sm:$0xff]
      %v3470 = vld [vmem:[#allocation2 + $0x99] sm:$0xff]
      %v3471 = vld [vmem:[#allocation2 + $0xa1] sm:$0xff]
      %v3472 = vld [vmem:[#allocation2 + $0xa9] sm:$0xff]
      %v3473 = vld [vmem:[#allocation2 + $0xb1] sm:$0xff]
      %v3474 = vld [vmem:[#allocation2 + $0xb9] sm:$0xff]
      %v3475 = vld [vmem:[#allocation2 + $0xc1] sm:$0xff]
      %v3476 = vld [vmem:[#allocation2 + $0xc9] sm:$0xff]
      %v3477 = vld [vmem:[#allocation2 + $0xd1] sm:$0xff]
      %v3478 = vld [vmem:[#allocation2 + $0xd9] sm:$0xff]
      %v3479 = vld [vmem:[#allocation2 + $0xe1] sm:$0xff]
      %v3480 = vld [vmem:[#allocation2 + $0xe9] sm:$0xff]
      %v3481 = vld [vmem:[#allocation2 + $0xf1] sm:$0xff]
      %v3482 = vld [vmem:[#allocation2 + $0xf9] sm:$0xff]
      %v3483 = vld [vmem:[#allocation2 + $0x101] sm:$0xff]
      %v3484 = vld [vmem:[#allocation2 + $0x109] sm:$0xff]
      %v3485 = vld [vmem:[#allocation2 + $0x111] sm:$0xff]
      %v3486 = vld [vmem:[#allocation2 + $0x119] sm:$0xff]
      %v3487 = vld [vmem:[#allocation2 + $0x121] sm:$0xff]
      %v3488 = vld [vmem:[#allocation2 + $0x129] sm:$0xff]
      %v3489 = vld [vmem:[#allocation2 + $0x131] sm:$0xff]
      %v3490 = vld [vmem:[#allocation2 + $0x139] sm:$0xff]
      %v3491 = vld [vmem:[#allocation2 + $0x141] sm:$0xff]
      %v3492 = vld [vmem:[#allocation2 + $0x149] sm:$0xff]
      %v3493 = vld [vmem:[#allocation2 + $0x151] sm:$0xff]
      %v3494 = vld [vmem:[#allocation2 + $0x159] sm:$0xff]
      %v3495 = vld [vmem:[#allocation2 + $0x161] sm:$0xff]
      %v3496 = vld [vmem:[#allocation2 + $0x169] sm:$0xff]
      %v3497 = vld [vmem:[#allocation2 + $0x171] sm:$0xff]
      %v3498 = vld [vmem:[#allocation2 + $0x179] sm:$0xff]
      %v3499 = vld [vmem:[#allocation2 + $0x181] sm:$0xff]
      %v3500 = vld [vmem:[#allocation2 + $0x189] sm:$0xff]
      %v3501 = vld [vmem:[#allocation2 + $0x191] sm:$0xff]
      %v3502 = vld [vmem:[#allocation2 + $0x199] sm:$0xff]
      %v3503 = vld [vmem:[#allocation2 + $0x1a1] sm:$0xff]
      %v3504 = vld [vmem:[#allocation2 + $0x1a9] sm:$0xff]
      %v3505 = vld [vmem:[#allocation2 + $0x1b1] sm:$0xff]
      %v3506 = vpack.c.bf16 %v3459, %v3458
      %v3507 = vpack.c.bf16 %v3461, %v3460
      %v3508 = vpack.c.bf16 %v3463, %v3462
      %v3509 = vpack.c.bf16 %v3465, %v3464
      %v3510 = vpack.c.bf16 %v3467, %v3466
      %v3511 = vpack.c.bf16 %v3469, %v3468
      %v3512 = vpack.c.bf16 %v3471, %v3470
      %v3513 = vpack.c.bf16 %v3473, %v3472
      %v3514 = vpack.c.bf16 %v3475, %v3474
      %v3515 = vpack.c.bf16 %v3477, %v3476
      %v3516 = vpack.c.bf16 %v3479, %v3478
      %v3517 = vpack.c.bf16 %v3481, %v3480
      %v3518 = vpack.c.bf16 %v3483, %v3482
      %v3519 = vpack.c.bf16 %v3485, %v3484
      %v3520 = vpack.c.bf16 %v3487, %v3486
      %v3521 = vpack.c.bf16 %v3489, %v3488
      %v3522 = vpack.c.bf16 %v3491, %v3490
      %v3523 = vpack.c.bf16 %v3493, %v3492
      %v3524 = vpack.c.bf16 %v3495, %v3494
      %v3525 = vpack.c.bf16 %v3497, %v3496
      %v3526 = vpack.c.bf16 %v3499, %v3498
      %v3527 = vpack.c.bf16 %v3501, %v3500
      %v3528 = vpack.c.bf16 %v3503, %v3502
      %v3529 = vpack.c.bf16 %v3505, %v3504
      %s3530 = scalar_lea.vmem %s3, 512
      %v3531 = vld [vmem:[%s3530] sm:$0xf]
      %v3532 = vld [vmem:[%s3530 + $0x4] sm:$0xf]
      %v3533 = vld [vmem:[%s3530 + $0x8] sm:$0xf]
      %v3534 = vld [vmem:[%s3530 + $0xc] sm:$0xf]
      %v3535 = vld [vmem:[%s3530 + $0x10] sm:$0xf]
      %v3536 = vld [vmem:[%s3530 + $0x14] sm:$0xf]
      %v3537 = vld [vmem:[%s3530 + $0x18] sm:$0xf]
      %v3538 = vld [vmem:[%s3530 + $0x1c] sm:$0xf]
      %v3539 = vld [vmem:[%s3530 + $0x20] sm:$0xf]
      %v3540 = vld [vmem:[%s3530 + $0x24] sm:$0xf]
      %v3541 = vld [vmem:[%s3530 + $0x28] sm:$0xf]
      %v3542 = vld [vmem:[%s3530 + $0x2c] sm:$0xf]
      %v3543 = vld [vmem:[%s3530 + $0x30] sm:$0xf]
      %v3544 = vld [vmem:[%s3530 + $0x34] sm:$0xf]
      %v3545 = vld [vmem:[%s3530 + $0x38] sm:$0xf]
      %v3546 = vld [vmem:[%s3530 + $0x3c] sm:$0xf]
      %v3563 = vunpack.c.l.b16 %v3531
      %v3564 = vunpack.c.l.b16 %v3532
      %v3565 = vunpack.c.l.b16 %v3533
      %v3566 = vunpack.c.l.b16 %v3534
      %v3567 = vunpack.c.l.b16 %v3535
      %v3568 = vunpack.c.l.b16 %v3536
      %v3569 = vunpack.c.l.b16 %v3537
      %v3570 = vunpack.c.l.b16 %v3538
      %v3571 = vunpack.c.l.b16 %v3539
      %v3572 = vunpack.c.l.b16 %v3540
      %v3573 = vunpack.c.l.b16 %v3541
      %v3574 = vunpack.c.l.b16 %v3542
      %v3575 = vunpack.c.l.b16 %v3543
      %v3576 = vunpack.c.l.b16 %v3544
      %v3577 = vunpack.c.l.b16 %v3545
      %v3578 = vunpack.c.l.b16 %v3546
      %v3579 = vpack.c.b16 %v3564, %v3563
      %v3580 = vpack.c.b16 %v3566, %v3565
      %v3581 = vpack.c.b16 %v3568, %v3567
      %v3582 = vpack.c.b16 %v3570, %v3569
      %v3583 = vpack.c.b16 %v3572, %v3571
      %v3584 = vpack.c.b16 %v3574, %v3573
      %v3585 = vpack.c.b16 %v3576, %v3575
      %v3586 = vpack.c.b16 %v3578, %v3577
      %3595 = vmatprep.subr.bf16.mxu0 0
      %3596 = vmatpush1.bf16.msra.mxu0 %v3586
      %3597 = vmatprep.subr.bf16.mxu0 0
      %3598 = vmatpush1.bf16.msra.mxu0 %v3585
      %3599 = vmatprep.subr.bf16.mxu0 0
      %3600 = vmatpush1.bf16.msra.mxu0 %v3584
      %3601 = vmatprep.subr.bf16.mxu0 0
      %3602 = vmatpush1.bf16.msra.mxu0 %v3583
      %3603 = vmatprep.subr.bf16.mxu0 0
      %3604 = vmatpush1.bf16.msra.mxu0 %v3582
      %3605 = vmatprep.subr.bf16.mxu0 0
      %3606 = vmatpush1.bf16.msra.mxu0 %v3581
      %3607 = vmatprep.subr.bf16.mxu0 0
      %3608 = vmatpush1.bf16.msra.mxu0 %v3580
      %3609 = vmatprep.subr.bf16.mxu0 0
      %3610 = vmatpush1.bf16.msra.mxu0 %v3579
      %3611 = vmatprep.subr.bf16.mxu0 0
      %3612 = vmatpush2.bf16.msra.mxu0 0
      %3613 = vmatprep.subr.bf16.mxu0 0
      %3614 = vmatpush2.bf16.msra.mxu0 0
      %3615 = vmatprep.subr.bf16.mxu0 0
      %3616 = vmatpush2.bf16.msra.mxu0 0
      %3617 = vmatprep.subr.bf16.mxu0 0
      %3618 = vmatpush2.bf16.msra.mxu0 0
      %3619 = vmatprep.subr.bf16.mxu0 0
      %3620 = vmatpush2.bf16.msra.mxu0 0
      %3621 = vmatprep.subr.bf16.mxu0 0
      %3622 = vmatpush2.bf16.msra.mxu0 0
      %3623 = vmatprep.subr.bf16.mxu0 0
      %3624 = vmatpush2.bf16.msra.mxu0 0
      %3625 = vmatprep.subr.bf16.mxu0 0
      %3626 = vmatpush2.bf16.msra.mxu0 0
      %3627 = vmatprep.mubr.bf16.mxu0 0
      %3628 = vmatmul.mubr.bf16.gmra.mxu0 %v3506
      %v3629 = vpop.f32.mrf.mxu0
      %v3630 = vadd.f32 0.0, %v3629
      %v3631 = vpop.f32.mrf.mxu0
      %v3632 = vpop.f32.mrf.mxu0
      %v3633 = vadd.f32 0.0, %v3632
      %v3634 = vpop.f32.mrf.mxu0
      %3635 = vmatprep.mubr.bf16.mxu0 0
      %3636 = vmatmul.mubr.bf16.gmra.mxu0 %v3507
      %v3637 = vpop.f32.mrf.mxu0
      %v3638 = vpop.f32.mrf.mxu0
      %v3639 = vpop.f32.mrf.mxu0
      %v3640 = vadd.f32 0.0, %v3639
      %v3641 = vpop.f32.mrf.mxu0
      %3642 = vmatprep.mubr.bf16.mxu0 0
      %3643 = vmatmul.mubr.bf16.gmra.mxu0 %v3508
      %v3644 = vpop.f32.mrf.mxu0
      %v3645 = vadd.f32 0.0, %v3644
      %v3646 = vpop.f32.mrf.mxu0
      %v3647 = vpop.f32.mrf.mxu0
      %v3648 = vpop.f32.mrf.mxu0
      %3649 = vmatprep.mubr.bf16.mxu0 0
      %3650 = vmatmul.mubr.bf16.gmra.mxu0 %v3509
      %v3651 = vpop.f32.mrf.mxu0
      %v3652 = vadd.f32 0.0, %v3651
      %v3653 = vpop.f32.mrf.mxu0
      %v3654 = vpop.f32.mrf.mxu0
      %v3655 = vadd.f32 0.0, %v3654
      %v3656 = vpop.f32.mrf.mxu0
      %3657 = vmatprep.mubr.bf16.mxu0 0
      %3658 = vmatmul.mubr.bf16.gmra.mxu0 %v3510
      %v3659 = vpop.f32.mrf.mxu0
      %v3660 = vpop.f32.mrf.mxu0
      %v3661 = vpop.f32.mrf.mxu0
      %v3662 = vadd.f32 0.0, %v3661
      %v3663 = vpop.f32.mrf.mxu0
      %3664 = vmatprep.mubr.bf16.mxu0 0
      %3665 = vmatmul.mubr.bf16.gmra.mxu0 %v3511
      %v3666 = vpop.f32.mrf.mxu0
      %v3667 = vadd.f32 0.0, %v3666
      %v3668 = vpop.f32.mrf.mxu0
      %v3669 = vpop.f32.mrf.mxu0
      %v3670 = vpop.f32.mrf.mxu0
      %3671 = vmatprep.mubr.bf16.mxu0 0
      %3672 = vmatmul.mubr.bf16.gmra.mxu0 %v3512
      %v3673 = vpop.f32.mrf.mxu0
      %v3674 = vadd.f32 0.0, %v3673
      %v3675 = vpop.f32.mrf.mxu0
      %v3676 = vpop.f32.mrf.mxu0
      %v3677 = vadd.f32 0.0, %v3676
      %v3678 = vpop.f32.mrf.mxu0
      %3679 = vmatprep.mubr.bf16.mxu0 0
      %3680 = vmatmul.mubr.bf16.gmra.mxu0 %v3513
      %v3681 = vpop.f32.mrf.mxu0
      %v3682 = vpop.f32.mrf.mxu0
      %v3683 = vpop.f32.mrf.mxu0
      %v3684 = vadd.f32 0.0, %v3683
      %v3685 = vpop.f32.mrf.mxu0
      %3686 = vmatprep.mubr.bf16.mxu0 0
      %3687 = vmatmul.mubr.bf16.gmra.mxu0 %v3514
      %v3688 = vpop.f32.mrf.mxu0
      %v3689 = vadd.f32 0.0, %v3688
      %v3690 = vpop.f32.mrf.mxu0
      %v3691 = vpop.f32.mrf.mxu0
      %v3692 = vpop.f32.mrf.mxu0
      %3693 = vmatprep.mubr.bf16.mxu0 0
      %3694 = vmatmul.mubr.bf16.gmra.mxu0 %v3515
      %v3695 = vpop.f32.mrf.mxu0
      %v3696 = vadd.f32 0.0, %v3695
      %v3697 = vpop.f32.mrf.mxu0
      %v3698 = vpop.f32.mrf.mxu0
      %v3699 = vadd.f32 0.0, %v3698
      %v3700 = vpop.f32.mrf.mxu0
      %3701 = vmatprep.mubr.bf16.mxu0 0
      %3702 = vmatmul.mubr.bf16.gmra.mxu0 %v3516
      %v3703 = vpop.f32.mrf.mxu0
      %v3704 = vpop.f32.mrf.mxu0
      %v3705 = vpop.f32.mrf.mxu0
      %v3706 = vadd.f32 0.0, %v3705
      %v3707 = vpop.f32.mrf.mxu0
      %3708 = vmatprep.mubr.bf16.mxu0 0
      %3709 = vmatmul.mubr.bf16.gmra.mxu0 %v3517
      %v3710 = vpop.f32.mrf.mxu0
      %v3711 = vadd.f32 0.0, %v3710
      %v3712 = vpop.f32.mrf.mxu0
      %v3713 = vpop.f32.mrf.mxu0
      %v3714 = vpop.f32.mrf.mxu0
      %3715 = vmatprep.mubr.bf16.mxu0 0
      %3716 = vmatmul.mubr.bf16.gmra.mxu0 %v3518
      %v3717 = vpop.f32.mrf.mxu0
      %v3718 = vadd.f32 0.0, %v3717
      %v3719 = vpop.f32.mrf.mxu0
      %v3720 = vpop.f32.mrf.mxu0
      %v3721 = vadd.f32 0.0, %v3720
      %v3722 = vpop.f32.mrf.mxu0
      %3723 = vmatprep.mubr.bf16.mxu0 0
      %3724 = vmatmul.mubr.bf16.gmra.mxu0 %v3519
      %v3725 = vpop.f32.mrf.mxu0
      %v3726 = vpop.f32.mrf.mxu0
      %v3727 = vpop.f32.mrf.mxu0
      %v3728 = vadd.f32 0.0, %v3727
      %v3729 = vpop.f32.mrf.mxu0
      %3730 = vmatprep.mubr.bf16.mxu0 0
      %3731 = vmatmul.mubr.bf16.gmra.mxu0 %v3520
      %v3732 = vpop.f32.mrf.mxu0
      %v3733 = vadd.f32 0.0, %v3732
      %v3734 = vpop.f32.mrf.mxu0
      %v3735 = vpop.f32.mrf.mxu0
      %v3736 = vpop.f32.mrf.mxu0
      %3737 = vmatprep.mubr.bf16.mxu0 0
      %3738 = vmatmul.mubr.bf16.gmra.mxu0 %v3521
      %v3739 = vpop.f32.mrf.mxu0
      %v3740 = vadd.f32 0.0, %v3739
      %v3741 = vpop.f32.mrf.mxu0
      %v3742 = vpop.f32.mrf.mxu0
      %v3743 = vadd.f32 0.0, %v3742
      %v3744 = vpop.f32.mrf.mxu0
      %3745 = vmatprep.mubr.bf16.mxu0 0
      %3746 = vmatmul.mubr.bf16.gmra.mxu0 %v3522
      %v3747 = vpop.f32.mrf.mxu0
      %v3748 = vpop.f32.mrf.mxu0
      %v3749 = vpop.f32.mrf.mxu0
      %v3750 = vadd.f32 0.0, %v3749
      %v3751 = vpop.f32.mrf.mxu0
      %3752 = vmatprep.mubr.bf16.mxu0 0
      %3753 = vmatmul.mubr.bf16.gmra.mxu0 %v3523
      %v3754 = vpop.f32.mrf.mxu0
      %v3755 = vadd.f32 0.0, %v3754
      %v3756 = vpop.f32.mrf.mxu0
      %v3757 = vpop.f32.mrf.mxu0
      %v3758 = vpop.f32.mrf.mxu0
      %3759 = vmatprep.mubr.bf16.mxu0 0
      %3760 = vmatmul.mubr.bf16.gmra.mxu0 %v3524
      %v3761 = vpop.f32.mrf.mxu0
      %v3762 = vadd.f32 0.0, %v3761
      %v3763 = vpop.f32.mrf.mxu0
      %v3764 = vpop.f32.mrf.mxu0
      %v3765 = vadd.f32 0.0, %v3764
      %v3766 = vpop.f32.mrf.mxu0
      %3767 = vmatprep.mubr.bf16.mxu0 0
      %3768 = vmatmul.mubr.bf16.gmra.mxu0 %v3525
      %v3769 = vpop.f32.mrf.mxu0
      %v3770 = vpop.f32.mrf.mxu0
      %v3771 = vpop.f32.mrf.mxu0
      %v3772 = vadd.f32 0.0, %v3771
      %v3773 = vpop.f32.mrf.mxu0
      %3774 = vmatprep.mubr.bf16.mxu0 0
      %3775 = vmatmul.mubr.bf16.gmra.mxu0 %v3526
      %v3776 = vpop.f32.mrf.mxu0
      %v3777 = vadd.f32 0.0, %v3776
      %v3778 = vpop.f32.mrf.mxu0
      %v3779 = vpop.f32.mrf.mxu0
      %v3780 = vpop.f32.mrf.mxu0
      %3781 = vmatprep.mubr.bf16.mxu0 0
      %3782 = vmatmul.mubr.bf16.gmra.mxu0 %v3527
      %v3783 = vpop.f32.mrf.mxu0
      %v3784 = vadd.f32 0.0, %v3783
      %v3785 = vpop.f32.mrf.mxu0
      %v3786 = vpop.f32.mrf.mxu0
      %v3787 = vadd.f32 0.0, %v3786
      %v3788 = vpop.f32.mrf.mxu0
      %3789 = vmatprep.mubr.bf16.mxu0 0
      %3790 = vmatmul.mubr.bf16.gmra.mxu0 %v3528
      %v3791 = vpop.f32.mrf.mxu0
      %v3792 = vpop.f32.mrf.mxu0
      %v3793 = vpop.f32.mrf.mxu0
      %v3794 = vadd.f32 0.0, %v3793
      %v3795 = vpop.f32.mrf.mxu0
      %3796 = vmatprep.mubr.bf16.mxu0 0
      %3797 = vmatmul.mubr.bf16.gmra.mxu0 %v3529
      %v3798 = vpop.f32.mrf.mxu0
      %v3799 = vadd.f32 0.0, %v3798
      %v3800 = vpop.f32.mrf.mxu0
      %v3801 = vpop.f32.mrf.mxu0
      %v3802 = vpop.f32.mrf.mxu0
      %3803 = vdwg.mxu0
      %v3804 = vadd.f32 %v3426, %v3630
      %v3805 = vadd.f32 %v3427, %v3633
      %v3806 = vadd.f32 %v3428, %v3640
      %v3807 = vadd.f32 %v3429, %v3645
      %v3808 = vadd.f32 %v3430, %v3652
      %v3809 = vadd.f32 %v3431, %v3655
      %v3810 = vadd.f32 %v3432, %v3662
      %v3811 = vadd.f32 %v3433, %v3667
      %v3812 = vadd.f32 %v3434, %v3674
      %v3813 = vadd.f32 %v3435, %v3677
      %v3814 = vadd.f32 %v3436, %v3684
      %v3815 = vadd.f32 %v3437, %v3689
      %v3816 = vadd.f32 %v3438, %v3696
      %v3817 = vadd.f32 %v3439, %v3699
      %v3818 = vadd.f32 %v3440, %v3706
      %v3819 = vadd.f32 %v3441, %v3711
      %v3820 = vadd.f32 %v3442, %v3718
      %v3821 = vadd.f32 %v3443, %v3721
      %v3822 = vadd.f32 %v3444, %v3728
      %v3823 = vadd.f32 %v3445, %v3733
      %v3824 = vadd.f32 %v3446, %v3740
      %v3825 = vadd.f32 %v3447, %v3743
      %v3826 = vadd.f32 %v3448, %v3750
      %v3827 = vadd.f32 %v3449, %v3755
      %v3828 = vadd.f32 %v3450, %v3762
      %v3829 = vadd.f32 %v3451, %v3765
      %v3830 = vadd.f32 %v3452, %v3772
      %v3831 = vadd.f32 %v3453, %v3777
      %v3832 = vadd.f32 %v3454, %v3784
      %v3833 = vadd.f32 %v3455, %v3787
      %v3834 = vadd.f32 %v3456, %v3794
      %v3835 = vadd.f32 %v3457, %v3799
      %v3836 = vpack.c.bf16 %v3805, %v3804
      %v3837 = vpack.c.bf16 %v3807, %v3806
      %v3838 = vpack.c.bf16 %v3809, %v3808
      %v3839 = vpack.c.bf16 %v3811, %v3810
      %v3840 = vpack.c.bf16 %v3813, %v3812
      %v3841 = vpack.c.bf16 %v3815, %v3814
      %v3842 = vpack.c.bf16 %v3817, %v3816
      %v3843 = vpack.c.bf16 %v3819, %v3818
      %v3844 = vpack.c.bf16 %v3821, %v3820
      %v3845 = vpack.c.bf16 %v3823, %v3822
      %v3846 = vpack.c.bf16 %v3825, %v3824
      %v3847 = vpack.c.bf16 %v3827, %v3826
      %v3848 = vpack.c.bf16 %v3829, %v3828
      %v3849 = vpack.c.bf16 %v3831, %v3830
      %v3850 = vpack.c.bf16 %v3833, %v3832
      %v3851 = vpack.c.bf16 %v3835, %v3834
      %v3868 = vunpack.c.l.b16 %v3836
      %v3869 = vunpack.c.h.b16 %v3836
      %v3870 = vunpack.c.l.b16 %v3837
      %v3871 = vunpack.c.h.b16 %v3837
      %v3872 = vunpack.c.l.b16 %v3838
      %v3873 = vunpack.c.h.b16 %v3838
      %v3874 = vunpack.c.l.b16 %v3839
      %v3875 = vunpack.c.h.b16 %v3839
      %v3876 = vunpack.c.l.b16 %v3840
      %v3877 = vunpack.c.h.b16 %v3840
      %v3878 = vunpack.c.l.b16 %v3841
      %v3879 = vunpack.c.h.b16 %v3841
      %v3880 = vunpack.c.l.b16 %v3842
      %v3881 = vunpack.c.h.b16 %v3842
      %v3882 = vunpack.c.l.b16 %v3843
      %v3883 = vunpack.c.h.b16 %v3843
      %v3884 = vunpack.c.l.b16 %v3844
      %v3885 = vunpack.c.h.b16 %v3844
      %v3886 = vunpack.c.l.b16 %v3845
      %v3887 = vunpack.c.h.b16 %v3845
      %v3888 = vunpack.c.l.b16 %v3846
      %v3889 = vunpack.c.h.b16 %v3846
      %v3890 = vunpack.c.l.b16 %v3847
      %v3891 = vunpack.c.h.b16 %v3847
      %v3892 = vunpack.c.l.b16 %v3848
      %v3893 = vunpack.c.h.b16 %v3848
      %v3894 = vunpack.c.l.b16 %v3849
      %v3895 = vunpack.c.h.b16 %v3849
      %v3896 = vunpack.c.l.b16 %v3850
      %v3897 = vunpack.c.h.b16 %v3850
      %v3898 = vunpack.c.l.b16 %v3851
      %v3899 = vunpack.c.h.b16 %v3851
      %v3900 = vpack.c.b16 %v3868, %v3868
      %v3901 = vpack.c.b16 %v3869, %v3869
      %v3902 = vpack.c.b16 %v3870, %v3870
      %v3903 = vpack.c.b16 %v3871, %v3871
      %v3904 = vpack.c.b16 %v3872, %v3872
      %v3905 = vpack.c.b16 %v3873, %v3873
      %v3906 = vpack.c.b16 %v3874, %v3874
      %v3907 = vpack.c.b16 %v3875, %v3875
      %v3908 = vpack.c.b16 %v3876, %v3876
      %v3909 = vpack.c.b16 %v3877, %v3877
      %v3910 = vpack.c.b16 %v3878, %v3878
      %v3911 = vpack.c.b16 %v3879, %v3879
      %v3912 = vpack.c.b16 %v3880, %v3880
      %v3913 = vpack.c.b16 %v3881, %v3881
      %v3914 = vpack.c.b16 %v3882, %v3882
      %v3915 = vpack.c.b16 %v3883, %v3883
      %v3916 = vpack.c.b16 %v3884, %v3884
      %v3917 = vpack.c.b16 %v3885, %v3885
      %v3918 = vpack.c.b16 %v3886, %v3886
      %v3919 = vpack.c.b16 %v3887, %v3887
      %v3920 = vpack.c.b16 %v3888, %v3888
      %v3921 = vpack.c.b16 %v3889, %v3889
      %v3922 = vpack.c.b16 %v3890, %v3890
      %v3923 = vpack.c.b16 %v3891, %v3891
      %v3924 = vpack.c.b16 %v3892, %v3892
      %v3925 = vpack.c.b16 %v3893, %v3893
      %v3926 = vpack.c.b16 %v3894, %v3894
      %v3927 = vpack.c.b16 %v3895, %v3895
      %v3928 = vpack.c.b16 %v3896, %v3896
      %v3929 = vpack.c.b16 %v3897, %v3897
      %v3930 = vpack.c.b16 %v3898, %v3898
      %v3931 = vpack.c.b16 %v3899, %v3899
      %3964 = vst [vmem:[%s231] sm:$0xf] %v3900
      %3965 = vst [vmem:[%s231 + $0x4] sm:$0xf] %v3901
      %3966 = vst [vmem:[%s231 + $0x8] sm:$0xf] %v3902
      %3967 = vst [vmem:[%s231 + $0xc] sm:$0xf] %v3903
      %3968 = vst [vmem:[%s231 + $0x10] sm:$0xf] %v3904
      %3969 = vst [vmem:[%s231 + $0x14] sm:$0xf] %v3905
      %3970 = vst [vmem:[%s231 + $0x18] sm:$0xf] %v3906
      %3971 = vst [vmem:[%s231 + $0x1c] sm:$0xf] %v3907
      %3972 = vst [vmem:[%s231 + $0x20] sm:$0xf] %v3908
      %3973 = vst [vmem:[%s231 + $0x24] sm:$0xf] %v3909
      %3974 = vst [vmem:[%s231 + $0x28] sm:$0xf] %v3910
      %3975 = vst [vmem:[%s231 + $0x2c] sm:$0xf] %v3911
      %3976 = vst [vmem:[%s231 + $0x30] sm:$0xf] %v3912
      %3977 = vst [vmem:[%s231 + $0x34] sm:$0xf] %v3913
      %3978 = vst [vmem:[%s231 + $0x38] sm:$0xf] %v3914
      %3979 = vst [vmem:[%s231 + $0x3c] sm:$0xf] %v3915
      %3980 = vst [vmem:[%s231 + $0x40] sm:$0xf] %v3916
      %3981 = vst [vmem:[%s231 + $0x44] sm:$0xf] %v3917
      %3982 = vst [vmem:[%s231 + $0x48] sm:$0xf] %v3918
      %3983 = vst [vmem:[%s231 + $0x4c] sm:$0xf] %v3919
      %3984 = vst [vmem:[%s231 + $0x50] sm:$0xf] %v3920
      %3985 = vst [vmem:[%s231 + $0x54] sm:$0xf] %v3921
      %3986 = vst [vmem:[%s231 + $0x58] sm:$0xf] %v3922
      %3987 = vst [vmem:[%s231 + $0x5c] sm:$0xf] %v3923
      %3988 = vst [vmem:[%s231 + $0x60] sm:$0xf] %v3924
      %3989 = vst [vmem:[%s231 + $0x64] sm:$0xf] %v3925
      %3990 = vst [vmem:[%s231 + $0x68] sm:$0xf] %v3926
      %3991 = vst [vmem:[%s231 + $0x6c] sm:$0xf] %v3927
      %3992 = vst [vmem:[%s231 + $0x70] sm:$0xf] %v3928
      %3993 = vst [vmem:[%s231 + $0x74] sm:$0xf] %v3929
      %3994 = vst [vmem:[%s231 + $0x78] sm:$0xf] %v3930
      %3995 = vst [vmem:[%s231 + $0x7c] sm:$0xf] %v3931
      %v3996 = vadd.f32 %v3804, %v3806
      %v3997 = vadd.f32 %v3996, %v3808
      %v3998 = vadd.f32 %v3997, %v3810
      %v3999 = vadd.f32 %v3998, %v3812
      %v4000 = vadd.f32 %v3999, %v3814
      %v4001 = vadd.f32 %v4000, %v3816
      %v4002 = vadd.f32 %v4001, %v3818
      %v4003 = vadd.f32 %v4002, %v3820
      %v4004 = vadd.f32 %v4003, %v3822
      %v4005 = vadd.f32 %v4004, %v3824
      %v4006 = vadd.f32 %v4005, %v3826
      %v4007 = vadd.f32 %v4006, %v3828
      %v4008 = vadd.f32 %v4007, %v3830
      %v4009 = vadd.f32 %v4008, %v3832
      %v4010 = vadd.f32 %v4009, %v3834
      %v4011 = vadd.f32 %v3805, %v3807
      %v4012 = vadd.f32 %v4011, %v3809
      %v4013 = vadd.f32 %v4012, %v3811
      %v4014 = vadd.f32 %v4013, %v3813
      %v4015 = vadd.f32 %v4014, %v3815
      %v4016 = vadd.f32 %v4015, %v3817
      %v4017 = vadd.f32 %v4016, %v3819
      %v4018 = vadd.f32 %v4017, %v3821
      %v4019 = vadd.f32 %v4018, %v3823
      %v4020 = vadd.f32 %v4019, %v3825
      %v4021 = vadd.f32 %v4020, %v3827
      %v4022 = vadd.f32 %v4021, %v3829
      %v4023 = vadd.f32 %v4022, %v3831
      %v4024 = vadd.f32 %v4023, %v3833
      %v4025 = vadd.f32 %v4024, %v3835
      %v4026 = vadd.f32 %v4010, %v4025
      %v4027 = vrot.slane %v4026, 4
      %v4028 = vadd.f32 %v4026, %v4027
      %v4029 = vrot.slane %v4028, 2
      %v4030 = vadd.f32 %v4028, %v4029
      %v4031 = vrot.slane %v4030, 1
      %v4032 = vadd.f32 %v4030, %v4031
      %v4033 = vmul.f32 %v3804, %v3804
      %v4034 = vmul.f32 %v3805, %v3805
      %v4035 = vmul.f32 %v3806, %v3806
      %v4036 = vmul.f32 %v3807, %v3807
      %v4037 = vmul.f32 %v3808, %v3808
      %v4038 = vmul.f32 %v3809, %v3809
      %v4039 = vmul.f32 %v3810, %v3810
      %v4040 = vmul.f32 %v3811, %v3811
      %v4041 = vmul.f32 %v3812, %v3812
      %v4042 = vmul.f32 %v3813, %v3813
      %v4043 = vmul.f32 %v3814, %v3814
      %v4044 = vmul.f32 %v3815, %v3815
      %v4045 = vmul.f32 %v3816, %v3816
      %v4046 = vmul.f32 %v3817, %v3817
      %v4047 = vmul.f32 %v3818, %v3818
      %v4048 = vmul.f32 %v3819, %v3819
      %v4049 = vmul.f32 %v3820, %v3820
      %v4050 = vmul.f32 %v3821, %v3821
      %v4051 = vmul.f32 %v3822, %v3822
      %v4052 = vmul.f32 %v3823, %v3823
      %v4053 = vmul.f32 %v3824, %v3824
      %v4054 = vmul.f32 %v3825, %v3825
      %v4055 = vmul.f32 %v3826, %v3826
      %v4056 = vmul.f32 %v3827, %v3827
      %v4057 = vmul.f32 %v3828, %v3828
      %v4058 = vmul.f32 %v3829, %v3829
      %v4059 = vmul.f32 %v3830, %v3830
      %v4060 = vmul.f32 %v3831, %v3831
      %v4061 = vmul.f32 %v3832, %v3832
      %v4062 = vmul.f32 %v3833, %v3833
      %v4063 = vmul.f32 %v3834, %v3834
      %v4064 = vmul.f32 %v3835, %v3835
      %v4065 = vadd.f32 %v4033, %v4035
      %v4066 = vadd.f32 %v4065, %v4037
      %v4067 = vadd.f32 %v4066, %v4039
      %v4068 = vadd.f32 %v4067, %v4041
      %v4069 = vadd.f32 %v4068, %v4043
      %v4070 = vadd.f32 %v4069, %v4045
      %v4071 = vadd.f32 %v4070, %v4047
      %v4072 = vadd.f32 %v4071, %v4049
      %v4073 = vadd.f32 %v4072, %v4051
      %v4074 = vadd.f32 %v4073, %v4053
      %v4075 = vadd.f32 %v4074, %v4055
      %v4076 = vadd.f32 %v4075, %v4057
      %v4077 = vadd.f32 %v4076, %v4059
      %v4078 = vadd.f32 %v4077, %v4061
      %v4079 = vadd.f32 %v4078, %v4063
      %v4080 = vadd.f32 %v4034, %v4036
      %v4081 = vadd.f32 %v4080, %v4038
      %v4082 = vadd.f32 %v4081, %v4040
      %v4083 = vadd.f32 %v4082, %v4042
      %v4084 = vadd.f32 %v4083, %v4044
      %v4085 = vadd.f32 %v4084, %v4046
      %v4086 = vadd.f32 %v4085, %v4048
      %v4087 = vadd.f32 %v4086, %v4050
      %v4088 = vadd.f32 %v4087, %v4052
      %v4089 = vadd.f32 %v4088, %v4054
      %v4090 = vadd.f32 %v4089, %v4056
      %v4091 = vadd.f32 %v4090, %v4058
      %v4092 = vadd.f32 %v4091, %v4060
      %v4093 = vadd.f32 %v4092, %v4062
      %v4094 = vadd.f32 %v4093, %v4064
      %v4095 = vadd.f32 %v4079, %v4094
      %v4096 = vrot.slane %v4095, 4
      %v4097 = vadd.f32 %v4095, %v4096
      %v4098 = vrot.slane %v4097, 2
      %v4099 = vadd.f32 %v4097, %v4098
      %v4100 = vrot.slane %v4099, 1
      %v4101 = vadd.f32 %v4099, %v4100
      %vm4102 = vcmask 1040384
      %v4103 = vsel %vm4102, %v4032, %v4101
      %vm4104 = vcmask 1041408
      %v4105 = vsel %vm4104, %v4103, 0.0
      %4106 = vst [vmem:[%s235] sm:$0xff] %v4105
      %p4107 = scmp.lt.s32.totalorder %s17, 1
      %s4108 = scalar_select %p4107, %s17, 1
      %s4109 = smul.addr %s4108, 32
      %s4110 = smul.addr %s4109, 4
      %s4111 = scalar_lea.vmem %s4, %s4110
      %p4112 = scmp.lt.s32.totalorder %s17, 1
      %s4113 = scalar_select %p4112, %s17, 1
      %s4114 = smul.addr %s4113, 8
      %s4115 = scalar_lea.vmem %s5, %s4114
      // Predicated region
      $region37: #{bottleneck_forward.5} parent=35 // pred_check
        %p4116 = pneg %p124
      $region38: #{bottleneck_forward.5} parent=35 // pred_check_branch
        %4118 = sbr.rel (%p4116) target = $region40
      $region39: #{bottleneck_forward.5} parent=35 // pred_region
        _
      $region40: #{bottleneck_forward.5} parent=35 // pred_fallthru
        _
      // Predicated region
      $region41: #{bottleneck_forward.5} parent=35 // pred_check
        %p4119 = pneg %p150
      $region42: #{bottleneck_forward.5} parent=35 // pred_check_branch
        %4121 = sbr.rel (%p4119) target = $region44
      $region43: #{bottleneck_forward.5} parent=35 // pred_region
        _
      $region44: #{bottleneck_forward.5} parent=35 // pred_fallthru
        _
    $region36: #{bottleneck_forward.5} parent=5 // pred_fallthru
      _
    %p4122 = scmp.le.s32.totalorder 2, %s12
    // Predicated region
    $region45: #{bottleneck_forward.5} parent=5 // pred_check
      %p4123 = pneg %p4122
    $region46: #{bottleneck_forward.5} parent=5 // pred_check_branch
      %4125 = sbr.rel (%p4123) target = $region48
    $region47: #{bottleneck_forward.5} parent=5 // pred_region
      %s4126 = ssub.s32 %s12, 2
      // Predicated region
      $region49: #{bottleneck_forward.5} parent=47 // pred_check
        %p4127 = pneg %p130
      $region50: #{bottleneck_forward.5} parent=47 // pred_check_branch
        %4129 = sbr.rel (%p4127) target = $region52
      $region51: #{bottleneck_forward.5} parent=47 // pred_region
        %p4130 = scmp.lt.s32.totalorder %s18, 1
        %s4131 = scalar_select %p4130, %s18, 1
        %s4132 = smul.addr %s4131, 32
        %s4133 = smul.addr %s4132, 4
        %s4134 = scalar_lea.vmem %s4, %s4133
      $region52: #{bottleneck_forward.5} parent=47 // pred_fallthru
        _
      // Predicated region
      $region53: #{bottleneck_forward.5} parent=47 // pred_check
        %p4135 = pneg %p156
      $region54: #{bottleneck_forward.5} parent=47 // pred_check_branch
        %4137 = sbr.rel (%p4135) target = $region56
      $region55: #{bottleneck_forward.5} parent=47 // pred_region
        %p4138 = scmp.lt.s32.totalorder %s18, 1
        %s4139 = scalar_select %p4138, %s18, 1
        %s4140 = smul.addr %s4139, 8
        %s4141 = scalar_lea.vmem %s5, %s4140
      $region56: #{bottleneck_forward.5} parent=47 // pred_fallthru
        _
    $region48: #{bottleneck_forward.5} parent=5 // pred_fallthru
      _
  $region6: #{bottleneck_forward.5} parent=0 // loop_footer
    %s16 = sadd.s32 1, %s12
  $region7: #{bottleneck_forward.5} parent=0 // loop_footer_branch
    %11 = sbr.rel target = $region3
  $region8: #{bottleneck_forward.5} parent=0 // loop_exit
    _

</llo_original>
